<compile_context>
chip_gen: v7x
topology: tpu7x:2x2x1
jax: 0.10.0
libtpu: 0.0.40
codegen_flags: <defaults>
</compile_context>

<pallas_src>
import jax
import jax.numpy as jnp
from jax.experimental import pallas as pl
from jax.experimental.pallas import tpu as pltpu

# ----------------------------- config (small) --------------------------------
EMB_DIM = 8                      # config.embedding_dim
FIRST_FC = 32                    # config.first_fc_hidden_dim
SECOND_FC = 32                   # config.second_fc_hidden_dim
ADV = True                       # config.adv
NUM_RATE, NUM_GENRE, NUM_DIRECTOR, NUM_ACTOR = 6, 25, 2186, 8030
NUM_GENDER, NUM_AGE, NUM_OCC, NUM_AREA = 2, 7, 21, 3402

NUM_FEATS = 10246                # width of the raw int feature row
GENRE_LO, GENRE_HI = 1, 26
DIR_LO, DIR_HI = 26, 2212
ACT_LO, ACT_HI = 2212, 10242     # multi-hot region ends at 10242 (ids follow)

FC1_IN = EMB_DIM * 8             # 64
FC_USER_IN = EMB_DIM * 4         # 32
RU_DIM = EMB_DIM + FC_USER_IN    # rate_e ++ user_emb = 40

# packed MLP parameter layout (rows of the (P_ROWS, 128) f32 buffer)
# layer A input rows 0:64 = [rate(8), user(32), genre(8), dir(8), act(8)]
RA_B = 64                        # layer A bias row
RB_W, RB_B = 72, 200             # layer B weights rows 72:200, bias row 200
RC_W, RC_B = 208, 336            # layer C weights rows 208:336, bias row 336
P_ROWS = 344                     # multiple of 8 sublanes

BLOCK_B = 128                    # max batch rows per grid step (multiple of 8)
K_CHUNK = 1024                   # lane-aligned K chunk for the projection matmul


def _round_up(n, m):
    return ((n + m - 1) // m) * m


def _k_edges(total, chunk):
    """Static, lane-aligned chunk edges over [0, total)."""
    edges = list(range(0, total, chunk))
    if edges[-1] != total:
        edges.append(total)
    return edges


_K_EDGES = _k_edges(ACT_HI, K_CHUNK)   # [0, 1024, ..., 10240, 10242]


def _choose_bb(batch, block_b=BLOCK_B):
    """Batch rows per grid step: multiple of 8, <= block_b, and >= 2 grid
    steps whenever batch >= 16 so both TensorCores (v7x) get work."""
    bp8 = _round_up(max(batch, 1), 8)
    if bp8 <= 8:
        return 8
    half = _round_up((bp8 + 1) // 2, 8)
    return max(8, min(block_b, half))


# ------------------------------ Pallas kernel --------------------------------
def melu_kernel(x_ref, ru_ref, wbig_ref, mlp_ref, out_ref):
    bb = x_ref.shape[0]
    f32 = jnp.float32
    bf16 = jnp.bfloat16

    # ---- fused multi-hot projections + counts: x @ W_big (bf16 MXU), K-chunked
    acc = jnp.zeros((bb, 32), f32)
    for k0, k1 in zip(_K_EDGES[:-1], _K_EDGES[1:]):        # static, unrolled
        if k1 - k0 >= 8:
            # 0/1 multi-hot values are exact in bf16; accumulate in f32.
            xs = x_ref[:, k0:k1].astype(f32).astype(bf16)
            acc = acc + jnp.dot(xs, wbig_ref[k0:k1, :],
                                preferred_element_type=f32)
        else:
            # tiny tail (2 cols): VPU outer-product adds, no masked-K MXU push
            for c in range(k0, k1):
                acc = acc + (x_ref[:, c:c + 1].astype(f32)
                             * wbig_ref[c:c + 1, :].astype(f32))

    # mean pooling.  The PyTorch reference divides unguarded (NaN on all-zero
    # rows); max(count, 1) is identical for any row with count >= 1.
    rg = pl.reciprocal(jnp.maximum(acc[:, 24:25], 1.0), approx=True)
    rd = pl.reciprocal(jnp.maximum(acc[:, 25:26], 1.0), approx=True)
    ra = pl.reciprocal(jnp.maximum(acc[:, 26:27], 1.0), approx=True)
    genre_e = acc[:, 0:8] * rg
    dir_e = acc[:, 8:16] * rd
    act_e = acc[:, 16:24] * ra

    # ---- layer A: fc1 -> cols 0:32, fc_user_1 -> cols 32:64 (fused, 128 wide)
    ha = (jnp.dot(ru_ref[...], mlp_ref[0:RU_DIM, :], preferred_element_type=f32)
          + jnp.dot(genre_e, mlp_ref[40:48, :], preferred_element_type=f32)
          + jnp.dot(dir_e, mlp_ref[48:56, :], preferred_element_type=f32)
          + jnp.dot(act_e, mlp_ref[56:64, :], preferred_element_type=f32)
          + mlp_ref[RA_B:RA_B + 1, :])
    h = jnp.maximum(ha, 0.0)             # [:,0:32]=h1, [:,32:64]=hu, rest 0

    # ---- layer B: fc2 on cols 0:32; identity block passes hu through 32:64
    h2 = jnp.maximum(
        jnp.dot(h, mlp_ref[RB_W:RB_B, :], preferred_element_type=f32)
        + mlp_ref[RB_B:RB_B + 1, :], 0.0)

    # ---- layer C: linear_out -> col 0, fc_user_out -> cols 1:3 (lane-dense)
    out_ref[...] = (jnp.dot(h2, mlp_ref[RC_W:RC_B, :],
                            preferred_element_type=f32)
                    + mlp_ref[RC_B:RC_B + 1, :])


def melu_fused(x_int, ru, w_big, mlp_pack, *, block_b=BLOCK_B):
    B = x_int.shape[0]
    bb = _choose_bb(B, block_b)
    grid = pl.cdiv(B, bb)                 # no wrapper-side re-pad of x

    flops = 2 * B * ACT_HI * 32 + 2 * B * (64 * 128 + 128 * 128 * 2)
    bytes_acc = (B * NUM_FEATS * 4 + NUM_FEATS * 32 * 2
                 + B * RU_DIM * 4 + P_ROWS * 128 * 4 + B * 128 * 4)

    slab = pl.pallas_call(
        melu_kernel,
        out_shape=jax.ShapeDtypeStruct((B, 128), jnp.float32),
        grid_spec=pltpu.PrefetchScalarGridSpec(
            num_scalar_prefetch=0,
            grid=(grid,),
            in_specs=[
                pl.BlockSpec((bb, NUM_FEATS), lambda i: (i, 0)),   # raw int row
                pl.BlockSpec((bb, RU_DIM), lambda i: (i, 0)),      # rate++user
                pl.BlockSpec((NUM_FEATS, 32), lambda i: (0, 0)),   # W_big bf16 (resident)
                pl.BlockSpec((P_ROWS, 128), lambda i: (0, 0)),     # packed MLP (resident)
            ],
            out_specs=pl.BlockSpec((bb, 128), lambda i: (i, 0)),
        ),
        compiler_params=pltpu.CompilerParams(
            dimension_semantics=("parallel",),        # shard grid across TCs
            vmem_limit_bytes=32 * 1024 * 1024),       # bb=128 also fits v5e
        cost_estimate=pl.CostEstimate(
            flops=flops, transcendentals=3 * B, bytes_accessed=bytes_acc),
    )(x_int, ru, w_big, mlp_pack)
    return slab


# ------------------------------ forward (glue) --------------------------------
def melu_forward(x_int, p):
    # tiny id-embedding gathers (plain-JAX glue)
    gender_idx = x_int[:, 10242]
    rate_e = p["emb_rate"][x_int[:, 0]]
    user_e = jnp.concatenate(
        [p["emb_gender"][gender_idx],
         p["emb_age"][x_int[:, 10243]],
         p["emb_occ"][x_int[:, 10244]],
         p["emb_area"][x_int[:, 10245]]], axis=1)
    ru = jnp.concatenate([rate_e, user_e], axis=1)           # (B, 40)

    slab = melu_fused(x_int, ru, p["w_big"], p["mlp_pack"])
    out = slab[:, 0:1]
    if not ADV:
        return out
    logits = slab[:, 1:1 + NUM_GENDER]
    # nn.CrossEntropyLoss (mean reduction) on the adversarial gender logits.
    log_z = jax.nn.logsumexp(logits, axis=1)
    picked = jnp.take_along_axis(logits, gender_idx[:, None], axis=1)[:, 0]
    adv_loss = jnp.mean(log_z - picked)
    return out, adv_loss


# --------------------------- parameter packing --------------------------------
def _pack_params(p):
    # block-diagonal projection weight + "ones" count columns, stored as bf16
    w_big = jnp.zeros((NUM_FEATS, 32), jnp.float32)
    w_big = w_big.at[GENRE_LO:GENRE_HI, 0:8].set(p["w_genre"])
    w_big = w_big.at[DIR_LO:DIR_HI, 8:16].set(p["w_director"])
    w_big = w_big.at[ACT_LO:ACT_HI, 16:24].set(p["w_actor"])
    w_big = w_big.at[GENRE_LO:GENRE_HI, 24].set(1.0)
    w_big = w_big.at[DIR_LO:DIR_HI, 25].set(1.0)
    w_big = w_big.at[ACT_LO:ACT_HI, 26].set(1.0)
    w_big = w_big.astype(jnp.bfloat16)    # id rows 10242:10246 stay exactly 0

    # packed MLP: final_part + user_part fused into three 128-wide layers (f32)
    P = jnp.zeros((P_ROWS, 128), jnp.float32)
    # layer A rows 0:64 = [rate(8), user(32), genre(8), dir(8), act(8)]
    P = P.at[0:8, 0:FIRST_FC].set(p["w1"][0:8])            # rate -> fc1
    P = P.at[8:40, 0:FIRST_FC].set(p["w1"][32:64])         # user -> fc1
    P = P.at[8:40, 32:32 + FIRST_FC].set(p["wu1"])         # user -> fc_user_1
    P = P.at[40:48, 0:FIRST_FC].set(p["w1"][8:16])         # genre -> fc1
    P = P.at[48:56, 0:FIRST_FC].set(p["w1"][16:24])        # dir -> fc1
    P = P.at[56:64, 0:FIRST_FC].set(p["w1"][24:32])        # act -> fc1
    P = P.at[RA_B, 0:FIRST_FC].set(p["b1"][0])
    P = P.at[RA_B, 32:32 + FIRST_FC].set(p["bu1"][0])
    # layer B: fc2 -> cols 0:32 ; identity pass-through of hu in cols 32:64
    P = P.at[RB_W:RB_W + FIRST_FC, 0:SECOND_FC].set(p["w2"])
    P = P.at[RB_W + 32:RB_W + 64, 32:64].set(jnp.eye(32, dtype=jnp.float32))
    P = P.at[RB_B, 0:SECOND_FC].set(p["b2"][0])
    # layer C: linear_out -> col 0 ; fc_user_out -> cols 1:1+NUM_GENDER
    P = P.at[RC_W:RC_W + SECOND_FC, 0].set(p["w3"][:, 0])
    P = P.at[RC_W + 32:RC_W + 64, 1:1 + NUM_GENDER].set(p["wu2"])
    P = P.at[RC_B, 0].set(p["b3"][0, 0])
    P = P.at[RC_B, 1:1 + NUM_GENDER].set(p["bu2"][0])
    return w_big, P


def _linear(key, fan_in, fan_out):
    kw, kb = jax.random.split(key)
    bound = 1.0 / jnp.sqrt(float(fan_in))
    w = jax.random.uniform(kw, (fan_in, fan_out), jnp.float32, -bound, bound)
    b = jax.random.uniform(kb, (1, fan_out), jnp.float32, -bound, bound)
    return w, b


def make_params(key):
    ks = jax.random.split(key, 16)
    p = {}
    # item embeddings
    p["emb_rate"] = jax.random.normal(ks[0], (NUM_RATE, EMB_DIM), jnp.float32)
    p["w_genre"] = jax.random.normal(ks[1], (NUM_GENRE, EMB_DIM), jnp.float32) * 0.1
    p["w_director"] = jax.random.normal(ks[2], (NUM_DIRECTOR, EMB_DIM), jnp.float32) * 0.1
    p["w_actor"] = jax.random.normal(ks[3], (NUM_ACTOR, EMB_DIM), jnp.float32) * 0.1
    # user embeddings
    p["emb_gender"] = jax.random.normal(ks[4], (NUM_GENDER, EMB_DIM), jnp.float32)
    p["emb_age"] = jax.random.normal(ks[5], (NUM_AGE, EMB_DIM), jnp.float32)
    p["emb_occ"] = jax.random.normal(ks[6], (NUM_OCC, EMB_DIM), jnp.float32)
    p["emb_area"] = jax.random.normal(ks[7], (NUM_AREA, EMB_DIM), jnp.float32)
    # final_part
    p["w1"], p["b1"] = _linear(ks[8], FC1_IN, FIRST_FC)
    p["w2"], p["b2"] = _linear(ks[9], FIRST_FC, SECOND_FC)
    p["w3"], p["b3"] = _linear(ks[10], SECOND_FC, 1)
    # user_part (adv)
    p["wu1"], p["bu1"] = _linear(ks[11], FC_USER_IN, FIRST_FC)
    p["wu2"], p["bu2"] = _linear(ks[12], FIRST_FC, NUM_GENDER)
    # packed once, outside the jitted forward
    p["w_big"], p["mlp_pack"] = _pack_params(p)
    return p


# --------------------------- pure-JAX reference -------------------------------
def melu_reference(x_int, p):
    genre = x_int[:, GENRE_LO:GENRE_HI].astype(jnp.float32)
    director = x_int[:, DIR_LO:DIR_HI].astype(jnp.float32)
    actor = x_int[:, ACT_LO:ACT_HI].astype(jnp.float32)
    gender_idx = x_int[:, 10242]

    rate_e = p["emb_rate"][x_int[:, 0]]
    genre_e = (genre @ p["w_genre"]) / jnp.sum(genre, axis=1, keepdims=True)
    dir_e = (director @ p["w_director"]) / jnp.sum(director, axis=1, keepdims=True)
    act_e = (actor @ p["w_actor"]) / jnp.sum(actor, axis=1, keepdims=True)
    item_emb = jnp.concatenate([rate_e, genre_e, dir_e, act_e], axis=1)
    user_emb = jnp.concatenate(
        [p["emb_gender"][gender_idx], p["emb_age"][x_int[:, 10243]],
         p["emb_occ"][x_int[:, 10244]], p["emb_area"][x_int[:, 10245]]], axis=1)

    xc = jnp.concatenate([item_emb, user_emb], axis=1)
    h1 = jnp.maximum(xc @ p["w1"] + p["b1"], 0.0)
    h2 = jnp.maximum(h1 @ p["w2"] + p["b2"], 0.0)
    out = h2 @ p["w3"] + p["b3"]
    hu = jnp.maximum(user_emb @ p["wu1"] + p["bu1"], 0.0)
    logits = hu @ p["wu2"] + p["bu2"]
    log_z = jax.nn.logsumexp(logits, axis=1)
    picked = jnp.take_along_axis(logits, gender_idx[:, None], axis=1)[:, 0]
    return out, jnp.mean(log_z - picked)


# ------------------------------- demo input ------------------------------------
def make_input(key, batch):
    ks = jax.random.split(key, 8)
    rate = jax.random.randint(ks[0], (batch, 1), 0, NUM_RATE)
    genre = (jax.random.uniform(ks[1], (batch, NUM_GENRE)) < 0.2).astype(jnp.int32)
    genre = genre.at[:, 0].set(1)                        # avoid zero-sum rows
    director = (jax.random.uniform(ks[2], (batch, NUM_DIRECTOR)) < 0.003).astype(jnp.int32)
    director = director.at[:, 0].set(1)
    actor = (jax.random.uniform(ks[3], (batch, NUM_ACTOR)) < 0.001).astype(jnp.int32)
    actor = actor.at[:, 0].set(1)
    gender = jax.random.randint(ks[4], (batch, 1), 0, NUM_GENDER)
    age = jax.random.randint(ks[5], (batch, 1), 0, NUM_AGE)
    occ = jax.random.randint(ks[6], (batch, 1), 0, NUM_OCC)
    area = jax.random.randint(ks[7], (batch, 1), 0, NUM_AREA)
    return jnp.concatenate(
        [rate, genre, director, actor, gender, age, occ, area], axis=1
    ).astype(jnp.int32)


if __name__ == "__main__":
    key = jax.random.PRNGKey(0)
    k_param, k_data = jax.random.split(key)
    params = make_params(k_param)
    x = make_input(k_data, batch=8)                      # (8, 10246) int32

    fwd = jax.jit(melu_forward)
    out, adv_loss = fwd(x, params)
    jax.block_until_ready((out, adv_loss))
    assert out.shape == (8, 1) and out.dtype == jnp.float32
    assert adv_loss.shape == ()

    # validate against the plain-JAX reference of the PyTorch forward
    ref_out, ref_loss = jax.jit(melu_reference)(x, params)
    assert jnp.allclose(out, ref_out, rtol=1e-2, atol=1e-2)
    assert jnp.allclose(adv_loss, ref_loss, rtol=1e-2, atol=1e-2)
    print("KERNEL_OK")
</pallas_src>

<mosaic_0001>
module attributes {stable_mosaic.version = 11 : i64} {
  func.func @melu_kernel(%arg0: i32, %arg1: memref<8x10246xi32, #tpu.memory_space<vmem>>, %arg2: memref<8x40xf32, #tpu.memory_space<vmem>>, %arg3: memref<10246x32xbf16, #tpu.memory_space<vmem>>, %arg4: memref<344x128xf32, #tpu.memory_space<vmem>>, %arg5: memref<8x128xf32, #tpu.memory_space<vmem>>) attributes {dimension_semantics = [#tpu.dimension_semantics<parallel>], iteration_bounds = array<i64: 1>, scalar_prefetch = 0 : i64, scratch_operands = 0 : i64, tpu.core_type = #tpu.core_type<tc>, window_params = [{transform_indices = @transform_0, window_bounds = array<i64: 8, 10246>}, {transform_indices = @transform_1, window_bounds = array<i64: 8, 40>}, {pipeline_mode = #tpu.pipeline_mode<synchronous>, transform_indices = @transform_2, window_bounds = array<i64: 10246, 32>}, {pipeline_mode = #tpu.pipeline_mode<synchronous>, transform_indices = @transform_3, window_bounds = array<i64: 344, 128>}, {transform_indices = @transform_4, window_bounds = array<i64: 8, 128>}]} {
    %cst = arith.constant 0.000000e+00 : f32
    %0 = vector.broadcast %cst : f32 to vector<8x32xf32>
    %c0 = arith.constant 0 : index
    %c0_0 = arith.constant 0 : index
    %1 = vector.load %arg1[%c0, %c0_0] : memref<8x10246xi32, #tpu.memory_space<vmem>>, vector<8x1024xi32>
    %2 = arith.sitofp %1 : vector<8x1024xi32> to vector<8x1024xf32>
    %3 = arith.truncf %2 : vector<8x1024xf32> to vector<8x1024xbf16>
    %c0_1 = arith.constant 0 : index
    %c0_2 = arith.constant 0 : index
    %4 = vector.load %arg3[%c0_1, %c0_2] : memref<10246x32xbf16, #tpu.memory_space<vmem>>, vector<1024x32xbf16>
    %cst_3 = arith.constant dense<0.000000e+00> : vector<8x32xf32>
    %5 = tpu.matmul %3, %4, %cst_3 {dimension_numbers = #tpu.dot_dimension_numbers<[1], [0], [0], [1], [0, 0, 1, 1], [], []>} : vector<8x1024xbf16>, vector<1024x32xbf16>, vector<8x32xf32> -> vector<8x32xf32>
    %6 = arith.addf %0, %5 : vector<8x32xf32>
    %c0_4 = arith.constant 0 : index
    %c1024 = arith.constant 1024 : index
    %7 = vector.load %arg1[%c0_4, %c1024] : memref<8x10246xi32, #tpu.memory_space<vmem>>, vector<8x1024xi32>
    %8 = arith.sitofp %7 : vector<8x1024xi32> to vector<8x1024xf32>
    %9 = arith.truncf %8 : vector<8x1024xf32> to vector<8x1024xbf16>
    %c1024_5 = arith.constant 1024 : index
    %c0_6 = arith.constant 0 : index
    %10 = vector.load %arg3[%c1024_5, %c0_6] : memref<10246x32xbf16, #tpu.memory_space<vmem>>, vector<1024x32xbf16>
    %cst_7 = arith.constant dense<0.000000e+00> : vector<8x32xf32>
    %11 = tpu.matmul %9, %10, %cst_7 {dimension_numbers = #tpu.dot_dimension_numbers<[1], [0], [0], [1], [0, 0, 1, 1], [], []>} : vector<8x1024xbf16>, vector<1024x32xbf16>, vector<8x32xf32> -> vector<8x32xf32>
    %12 = arith.addf %6, %11 : vector<8x32xf32>
    %c0_8 = arith.constant 0 : index
    %c2048 = arith.constant 2048 : index
    %13 = vector.load %arg1[%c0_8, %c2048] : memref<8x10246xi32, #tpu.memory_space<vmem>>, vector<8x1024xi32>
    %14 = arith.sitofp %13 : vector<8x1024xi32> to vector<8x1024xf32>
    %15 = arith.truncf %14 : vector<8x1024xf32> to vector<8x1024xbf16>
    %c2048_9 = arith.constant 2048 : index
    %c0_10 = arith.constant 0 : index
    %16 = vector.load %arg3[%c2048_9, %c0_10] : memref<10246x32xbf16, #tpu.memory_space<vmem>>, vector<1024x32xbf16>
    %cst_11 = arith.constant dense<0.000000e+00> : vector<8x32xf32>
    %17 = tpu.matmul %15, %16, %cst_11 {dimension_numbers = #tpu.dot_dimension_numbers<[1], [0], [0], [1], [0, 0, 1, 1], [], []>} : vector<8x1024xbf16>, vector<1024x32xbf16>, vector<8x32xf32> -> vector<8x32xf32>
    %18 = arith.addf %12, %17 : vector<8x32xf32>
    %c0_12 = arith.constant 0 : index
    %c3072 = arith.constant 3072 : index
    %19 = vector.load %arg1[%c0_12, %c3072] : memref<8x10246xi32, #tpu.memory_space<vmem>>, vector<8x1024xi32>
    %20 = arith.sitofp %19 : vector<8x1024xi32> to vector<8x1024xf32>
    %21 = arith.truncf %20 : vector<8x1024xf32> to vector<8x1024xbf16>
    %c3072_13 = arith.constant 3072 : index
    %c0_14 = arith.constant 0 : index
    %22 = vector.load %arg3[%c3072_13, %c0_14] : memref<10246x32xbf16, #tpu.memory_space<vmem>>, vector<1024x32xbf16>
    %cst_15 = arith.constant dense<0.000000e+00> : vector<8x32xf32>
    %23 = tpu.matmul %21, %22, %cst_15 {dimension_numbers = #tpu.dot_dimension_numbers<[1], [0], [0], [1], [0, 0, 1, 1], [], []>} : vector<8x1024xbf16>, vector<1024x32xbf16>, vector<8x32xf32> -> vector<8x32xf32>
    %24 = arith.addf %18, %23 : vector<8x32xf32>
    %c0_16 = arith.constant 0 : index
    %c4096 = arith.constant 4096 : index
    %25 = vector.load %arg1[%c0_16, %c4096] : memref<8x10246xi32, #tpu.memory_space<vmem>>, vector<8x1024xi32>
    %26 = arith.sitofp %25 : vector<8x1024xi32> to vector<8x1024xf32>
    %27 = arith.truncf %26 : vector<8x1024xf32> to vector<8x1024xbf16>
    %c4096_17 = arith.constant 4096 : index
    %c0_18 = arith.constant 0 : index
    %28 = vector.load %arg3[%c4096_17, %c0_18] : memref<10246x32xbf16, #tpu.memory_space<vmem>>, vector<1024x32xbf16>
    %cst_19 = arith.constant dense<0.000000e+00> : vector<8x32xf32>
    %29 = tpu.matmul %27, %28, %cst_19 {dimension_numbers = #tpu.dot_dimension_numbers<[1], [0], [0], [1], [0, 0, 1, 1], [], []>} : vector<8x1024xbf16>, vector<1024x32xbf16>, vector<8x32xf32> -> vector<8x32xf32>
    %30 = arith.addf %24, %29 : vector<8x32xf32>
    %c0_20 = arith.constant 0 : index
    %c5120 = arith.constant 5120 : index
    %31 = vector.load %arg1[%c0_20, %c5120] : memref<8x10246xi32, #tpu.memory_space<vmem>>, vector<8x1024xi32>
    %32 = arith.sitofp %31 : vector<8x1024xi32> to vector<8x1024xf32>
    %33 = arith.truncf %32 : vector<8x1024xf32> to vector<8x1024xbf16>
    %c5120_21 = arith.constant 5120 : index
    %c0_22 = arith.constant 0 : index
    %34 = vector.load %arg3[%c5120_21, %c0_22] : memref<10246x32xbf16, #tpu.memory_space<vmem>>, vector<1024x32xbf16>
    %cst_23 = arith.constant dense<0.000000e+00> : vector<8x32xf32>
    %35 = tpu.matmul %33, %34, %cst_23 {dimension_numbers = #tpu.dot_dimension_numbers<[1], [0], [0], [1], [0, 0, 1, 1], [], []>} : vector<8x1024xbf16>, vector<1024x32xbf16>, vector<8x32xf32> -> vector<8x32xf32>
    %36 = arith.addf %30, %35 : vector<8x32xf32>
    %c0_24 = arith.constant 0 : index
    %c6144 = arith.constant 6144 : index
    %37 = vector.load %arg1[%c0_24, %c6144] : memref<8x10246xi32, #tpu.memory_space<vmem>>, vector<8x1024xi32>
    %38 = arith.sitofp %37 : vector<8x1024xi32> to vector<8x1024xf32>
    %39 = arith.truncf %38 : vector<8x1024xf32> to vector<8x1024xbf16>
    %c6144_25 = arith.constant 6144 : index
    %c0_26 = arith.constant 0 : index
    %40 = vector.load %arg3[%c6144_25, %c0_26] : memref<10246x32xbf16, #tpu.memory_space<vmem>>, vector<1024x32xbf16>
    %cst_27 = arith.constant dense<0.000000e+00> : vector<8x32xf32>
    %41 = tpu.matmul %39, %40, %cst_27 {dimension_numbers = #tpu.dot_dimension_numbers<[1], [0], [0], [1], [0, 0, 1, 1], [], []>} : vector<8x1024xbf16>, vector<1024x32xbf16>, vector<8x32xf32> -> vector<8x32xf32>
    %42 = arith.addf %36, %41 : vector<8x32xf32>
    %c0_28 = arith.constant 0 : index
    %c7168 = arith.constant 7168 : index
    %43 = vector.load %arg1[%c0_28, %c7168] : memref<8x10246xi32, #tpu.memory_space<vmem>>, vector<8x1024xi32>
    %44 = arith.sitofp %43 : vector<8x1024xi32> to vector<8x1024xf32>
    %45 = arith.truncf %44 : vector<8x1024xf32> to vector<8x1024xbf16>
    %c7168_29 = arith.constant 7168 : index
    %c0_30 = arith.constant 0 : index
    %46 = vector.load %arg3[%c7168_29, %c0_30] : memref<10246x32xbf16, #tpu.memory_space<vmem>>, vector<1024x32xbf16>
    %cst_31 = arith.constant dense<0.000000e+00> : vector<8x32xf32>
    %47 = tpu.matmul %45, %46, %cst_31 {dimension_numbers = #tpu.dot_dimension_numbers<[1], [0], [0], [1], [0, 0, 1, 1], [], []>} : vector<8x1024xbf16>, vector<1024x32xbf16>, vector<8x32xf32> -> vector<8x32xf32>
    %48 = arith.addf %42, %47 : vector<8x32xf32>
    %c0_32 = arith.constant 0 : index
    %c8192 = arith.constant 8192 : index
    %49 = vector.load %arg1[%c0_32, %c8192] : memref<8x10246xi32, #tpu.memory_space<vmem>>, vector<8x1024xi32>
    %50 = arith.sitofp %49 : vector<8x1024xi32> to vector<8x1024xf32>
    %51 = arith.truncf %50 : vector<8x1024xf32> to vector<8x1024xbf16>
    %c8192_33 = arith.constant 8192 : index
    %c0_34 = arith.constant 0 : index
    %52 = vector.load %arg3[%c8192_33, %c0_34] : memref<10246x32xbf16, #tpu.memory_space<vmem>>, vector<1024x32xbf16>
    %cst_35 = arith.constant dense<0.000000e+00> : vector<8x32xf32>
    %53 = tpu.matmul %51, %52, %cst_35 {dimension_numbers = #tpu.dot_dimension_numbers<[1], [0], [0], [1], [0, 0, 1, 1], [], []>} : vector<8x1024xbf16>, vector<1024x32xbf16>, vector<8x32xf32> -> vector<8x32xf32>
    %54 = arith.addf %48, %53 : vector<8x32xf32>
    %c0_36 = arith.constant 0 : index
    %c9216 = arith.constant 9216 : index
    %55 = vector.load %arg1[%c0_36, %c9216] : memref<8x10246xi32, #tpu.memory_space<vmem>>, vector<8x1024xi32>
    %56 = arith.sitofp %55 : vector<8x1024xi32> to vector<8x1024xf32>
    %57 = arith.truncf %56 : vector<8x1024xf32> to vector<8x1024xbf16>
    %c9216_37 = arith.constant 9216 : index
    %c0_38 = arith.constant 0 : index
    %58 = vector.load %arg3[%c9216_37, %c0_38] : memref<10246x32xbf16, #tpu.memory_space<vmem>>, vector<1024x32xbf16>
    %cst_39 = arith.constant dense<0.000000e+00> : vector<8x32xf32>
    %59 = tpu.matmul %57, %58, %cst_39 {dimension_numbers = #tpu.dot_dimension_numbers<[1], [0], [0], [1], [0, 0, 1, 1], [], []>} : vector<8x1024xbf16>, vector<1024x32xbf16>, vector<8x32xf32> -> vector<8x32xf32>
    %60 = arith.addf %54, %59 : vector<8x32xf32>
    %c0_40 = arith.constant 0 : index
    %c10240 = arith.constant 10240 : index
    %61 = vector.load %arg1[%c0_40, %c10240] : memref<8x10246xi32, #tpu.memory_space<vmem>>, vector<8x1xi32>
    %62 = arith.sitofp %61 : vector<8x1xi32> to vector<8x1xf32>
    %c10240_41 = arith.constant 10240 : index
    %c0_42 = arith.constant 0 : index
    %63 = vector.load %arg3[%c10240_41, %c0_42] : memref<10246x32xbf16, #tpu.memory_space<vmem>>, vector<1x32xbf16>
    %64 = arith.extf %63 : vector<1x32xbf16> to vector<1x32xf32>
    %65 = vector.broadcast %62 : vector<8x1xf32> to vector<8x32xf32>
    %66 = vector.broadcast %64 : vector<1x32xf32> to vector<8x32xf32>
    %67 = arith.mulf %65, %66 : vector<8x32xf32>
    %68 = arith.addf %60, %67 : vector<8x32xf32>
    %c0_43 = arith.constant 0 : index
    %c10241 = arith.constant 10241 : index
    %69 = vector.load %arg1[%c0_43, %c10241] : memref<8x10246xi32, #tpu.memory_space<vmem>>, vector<8x1xi32>
    %70 = arith.sitofp %69 : vector<8x1xi32> to vector<8x1xf32>
    %c10241_44 = arith.constant 10241 : index
    %c0_45 = arith.constant 0 : index
    %71 = vector.load %arg3[%c10241_44, %c0_45] : memref<10246x32xbf16, #tpu.memory_space<vmem>>, vector<1x32xbf16>
    %72 = arith.extf %71 : vector<1x32xbf16> to vector<1x32xf32>
    %73 = vector.broadcast %70 : vector<8x1xf32> to vector<8x32xf32>
    %74 = vector.broadcast %72 : vector<1x32xf32> to vector<8x32xf32>
    %75 = arith.mulf %73, %74 : vector<8x32xf32>
    %76 = arith.addf %68, %75 : vector<8x32xf32>
    %77 = vector.extract_strided_slice %76 {offsets = [0, 24], sizes = [8, 1], strides = [1, 1]} : vector<8x32xf32> to vector<8x1xf32>
    %cst_46 = arith.constant 1.000000e+00 : f32
    %78 = vector.broadcast %cst_46 : f32 to vector<8x1xf32>
    %79 = arith.maximumf %77, %78 : vector<8x1xf32>
    %80 = tpu.reciprocal %79 {approx = true} : vector<8x1xf32> -> vector<8x1xf32>
    %81 = vector.extract_strided_slice %76 {offsets = [0, 25], sizes = [8, 1], strides = [1, 1]} : vector<8x32xf32> to vector<8x1xf32>
    %cst_47 = arith.constant 1.000000e+00 : f32
    %82 = vector.broadcast %cst_47 : f32 to vector<8x1xf32>
    %83 = arith.maximumf %81, %82 : vector<8x1xf32>
    %84 = tpu.reciprocal %83 {approx = true} : vector<8x1xf32> -> vector<8x1xf32>
    %85 = vector.extract_strided_slice %76 {offsets = [0, 26], sizes = [8, 1], strides = [1, 1]} : vector<8x32xf32> to vector<8x1xf32>
    %cst_48 = arith.constant 1.000000e+00 : f32
    %86 = vector.broadcast %cst_48 : f32 to vector<8x1xf32>
    %87 = arith.maximumf %85, %86 : vector<8x1xf32>
    %88 = tpu.reciprocal %87 {approx = true} : vector<8x1xf32> -> vector<8x1xf32>
    %89 = vector.extract_strided_slice %76 {offsets = [0, 0], sizes = [8, 8], strides = [1, 1]} : vector<8x32xf32> to vector<8x8xf32>
    %90 = vector.broadcast %80 : vector<8x1xf32> to vector<8x8xf32>
    %91 = arith.mulf %89, %90 : vector<8x8xf32>
    %92 = vector.extract_strided_slice %76 {offsets = [0, 8], sizes = [8, 8], strides = [1, 1]} : vector<8x32xf32> to vector<8x8xf32>
    %93 = vector.broadcast %84 : vector<8x1xf32> to vector<8x8xf32>
    %94 = arith.mulf %92, %93 : vector<8x8xf32>
    %95 = vector.extract_strided_slice %76 {offsets = [0, 16], sizes = [8, 8], strides = [1, 1]} : vector<8x32xf32> to vector<8x8xf32>
    %96 = vector.broadcast %88 : vector<8x1xf32> to vector<8x8xf32>
    %97 = arith.mulf %95, %96 : vector<8x8xf32>
    %c0_49 = arith.constant 0 : index
    %c0_50 = arith.constant 0 : index
    %98 = vector.load %arg2[%c0_49, %c0_50] : memref<8x40xf32, #tpu.memory_space<vmem>>, vector<8x40xf32>
    %c0_51 = arith.constant 0 : index
    %c0_52 = arith.constant 0 : index
    %99 = vector.load %arg4[%c0_51, %c0_52] : memref<344x128xf32, #tpu.memory_space<vmem>>, vector<40x128xf32>
    %cst_53 = arith.constant dense<0.000000e+00> : vector<8x128xf32>
    %100 = tpu.matmul %98, %99, %cst_53 {dimension_numbers = #tpu.dot_dimension_numbers<[1], [0], [0], [1], [0, 0, 1, 1], [], []>} : vector<8x40xf32>, vector<40x128xf32>, vector<8x128xf32> -> vector<8x128xf32>
    %c40 = arith.constant 40 : index
    %c0_54 = arith.constant 0 : index
    %101 = vector.load %arg4[%c40, %c0_54] : memref<344x128xf32, #tpu.memory_space<vmem>>, vector<8x128xf32>
    %cst_55 = arith.constant dense<0.000000e+00> : vector<8x128xf32>
    %102 = tpu.matmul %91, %101, %cst_55 {dimension_numbers = #tpu.dot_dimension_numbers<[1], [0], [0], [1], [0, 0, 1, 1], [], []>} : vector<8x8xf32>, vector<8x128xf32>, vector<8x128xf32> -> vector<8x128xf32>
    %103 = arith.addf %100, %102 : vector<8x128xf32>
    %c48 = arith.constant 48 : index
    %c0_56 = arith.constant 0 : index
    %104 = vector.load %arg4[%c48, %c0_56] : memref<344x128xf32, #tpu.memory_space<vmem>>, vector<8x128xf32>
    %cst_57 = arith.constant dense<0.000000e+00> : vector<8x128xf32>
    %105 = tpu.matmul %94, %104, %cst_57 {dimension_numbers = #tpu.dot_dimension_numbers<[1], [0], [0], [1], [0, 0, 1, 1], [], []>} : vector<8x8xf32>, vector<8x128xf32>, vector<8x128xf32> -> vector<8x128xf32>
    %106 = arith.addf %103, %105 : vector<8x128xf32>
    %c56 = arith.constant 56 : index
    %c0_58 = arith.constant 0 : index
    %107 = vector.load %arg4[%c56, %c0_58] : memref<344x128xf32, #tpu.memory_space<vmem>>, vector<8x128xf32>
    %cst_59 = arith.constant dense<0.000000e+00> : vector<8x128xf32>
    %108 = tpu.matmul %97, %107, %cst_59 {dimension_numbers = #tpu.dot_dimension_numbers<[1], [0], [0], [1], [0, 0, 1, 1], [], []>} : vector<8x8xf32>, vector<8x128xf32>, vector<8x128xf32> -> vector<8x128xf32>
    %109 = arith.addf %106, %108 : vector<8x128xf32>
    %c64 = arith.constant 64 : index
    %c0_60 = arith.constant 0 : index
    %110 = vector.load %arg4[%c64, %c0_60] : memref<344x128xf32, #tpu.memory_space<vmem>>, vector<1x128xf32>
    %111 = vector.broadcast %110 : vector<1x128xf32> to vector<8x128xf32>
    %112 = arith.addf %109, %111 : vector<8x128xf32>
    %cst_61 = arith.constant 0.000000e+00 : f32
    %113 = vector.broadcast %cst_61 : f32 to vector<8x128xf32>
    %114 = arith.maximumf %112, %113 : vector<8x128xf32>
    %c72 = arith.constant 72 : index
    %c0_62 = arith.constant 0 : index
    %115 = vector.load %arg4[%c72, %c0_62] : memref<344x128xf32, #tpu.memory_space<vmem>>, vector<128x128xf32>
    %cst_63 = arith.constant dense<0.000000e+00> : vector<8x128xf32>
    %116 = tpu.matmul %114, %115, %cst_63 {dimension_numbers = #tpu.dot_dimension_numbers<[1], [0], [0], [1], [0, 0, 1, 1], [], []>} : vector<8x128xf32>, vector<128x128xf32>, vector<8x128xf32> -> vector<8x128xf32>
    %c200 = arith.constant 200 : index
    %c0_64 = arith.constant 0 : index
    %117 = vector.load %arg4[%c200, %c0_64] : memref<344x128xf32, #tpu.memory_space<vmem>>, vector<1x128xf32>
    %118 = vector.broadcast %117 : vector<1x128xf32> to vector<8x128xf32>
    %119 = arith.addf %116, %118 : vector<8x128xf32>
    %cst_65 = arith.constant 0.000000e+00 : f32
    %120 = vector.broadcast %cst_65 : f32 to vector<8x128xf32>
    %121 = arith.maximumf %119, %120 : vector<8x128xf32>
    %c208 = arith.constant 208 : index
    %c0_66 = arith.constant 0 : index
    %122 = vector.load %arg4[%c208, %c0_66] : memref<344x128xf32, #tpu.memory_space<vmem>>, vector<128x128xf32>
    %cst_67 = arith.constant dense<0.000000e+00> : vector<8x128xf32>
    %123 = tpu.matmul %121, %122, %cst_67 {dimension_numbers = #tpu.dot_dimension_numbers<[1], [0], [0], [1], [0, 0, 1, 1], [], []>} : vector<8x128xf32>, vector<128x128xf32>, vector<8x128xf32> -> vector<8x128xf32>
    %c336 = arith.constant 336 : index
    %c0_68 = arith.constant 0 : index
    %124 = vector.load %arg4[%c336, %c0_68] : memref<344x128xf32, #tpu.memory_space<vmem>>, vector<1x128xf32>
    %125 = vector.broadcast %124 : vector<1x128xf32> to vector<8x128xf32>
    %126 = arith.addf %123, %125 : vector<8x128xf32>
    %c0_69 = arith.constant 0 : index
    %c0_70 = arith.constant 0 : index
    %127 = vector.load %arg5[%c0_69, %c0_70] : memref<8x128xf32, #tpu.memory_space<vmem>>, vector<8x128xf32>
    tpu.vector_store %arg5[%c0_69, %c0_70], %126 {strides = array<i32>} : memref<8x128xf32, #tpu.memory_space<vmem>>, vector<8x128xf32>,
    return
  }
  func.func @transform_0(%arg0: i32) -> (i32, i32) {
    %c0_i32 = arith.constant 0 : i32
    %c0_i32_0 = arith.constant 0 : i32
    return %arg0, %c0_i32 : i32, i32
  }
  func.func @transform_1(%arg0: i32) -> (i32, i32) {
    %c0_i32 = arith.constant 0 : i32
    %c0_i32_0 = arith.constant 0 : i32
    return %arg0, %c0_i32 : i32, i32
  }
  func.func @transform_2(%arg0: i32) -> (i32, i32) {
    %c0_i32 = arith.constant 0 : i32
    %c0_i32_0 = arith.constant 0 : i32
    %c0_i32_1 = arith.constant 0 : i32
    return %c0_i32, %c0_i32_0 : i32, i32
  }
  func.func @transform_3(%arg0: i32) -> (i32, i32) {
    %c0_i32 = arith.constant 0 : i32
    %c0_i32_0 = arith.constant 0 : i32
    %c0_i32_1 = arith.constant 0 : i32
    return %c0_i32, %c0_i32_0 : i32, i32
  }
  func.func @transform_4(%arg0: i32) -> (i32, i32) {
    %c0_i32 = arith.constant 0 : i32
    %c0_i32_0 = arith.constant 0 : i32
    return %arg0, %c0_i32 : i32, i32
  }
}

</mosaic_0001>

<llo_original>
// kernel: melu_forward.1
$region0: #{melu_forward.1}
  #allocation0 [shape = 'u32[]', space=smem, size = 0x4, offset = 0x4, fixed_abs, tag = 'smem constant byte address 0x4 - core index']
  #allocation1 [shape = 'u32[144,128]{1,0:T(1,128)}', space=vmem, size = 0x12000, scoped, tag = 'internal scratch']
  %s0 = inlined_call_operand.vmem [shape: s32[8,10246], index: 0, kind: input, shape index: {}]
  %s1 = inlined_call_operand.vmem [shape: f32[8,40], index: 1, kind: input, shape index: {}]
  %s2 = inlined_call_operand.vmem [shape: bf16[10246,32], index: 2, kind: input, shape index: {}]
  %s3 = inlined_call_operand.vmem [shape: f32[344,128], index: 3, kind: input, shape index: {}]
  %s4 = inlined_call_operand.vmem [shape: f32[8,128], index: 4, kind: output, shape index: {}]
  %s5 = sld [smem:[#allocation0]]
  $region26: #{melu_forward.1} parent=0
    _
  %s7 = ssub.s32 1, %s5
  %s8 = scalar_select 0, %s7, %s5
  // Predicated region
  $region2: #{melu_forward.1} parent=0 // pred_check
    _
  $region3: #{melu_forward.1} parent=0 // pred_check_branch
    %10 = sbr.rel (0) target = $region5
  $region4: #{melu_forward.1} parent=0 // pred_region
    _
  $region5: #{melu_forward.1} parent=0 // pred_fallthru
    _
  // Predicated region
  $region6: #{melu_forward.1} parent=0 // pred_check
    _
  $region7: #{melu_forward.1} parent=0 // pred_check_branch
    %12 = sbr.rel (0) target = $region9
  $region8: #{melu_forward.1} parent=0 // pred_region
    _
  $region9: #{melu_forward.1} parent=0 // pred_fallthru
    _
  // Predicated region
  $region10: #{melu_forward.1} parent=0 // pred_check
    _
  $region11: #{melu_forward.1} parent=0 // pred_check_branch
    %14 = sbr.rel (0) target = $region13
  $region12: #{melu_forward.1} parent=0 // pred_region
    _
  $region13: #{melu_forward.1} parent=0 // pred_fallthru
    _
  // Predicated region
  $region14: #{melu_forward.1} parent=0 // pred_check
    _
  $region15: #{melu_forward.1} parent=0 // pred_check_branch
    %16 = sbr.rel (0) target = $region17
  $region16: #{melu_forward.1} parent=0 // pred_region
    _
  $region17: #{melu_forward.1} parent=0 // pred_fallthru
    _
  %v18 = vld [vmem:[%s0] sm:$0xff]
  %v19 = vld [vmem:[%s0 + $0x8] sm:$0xff]
  %v20 = vld [vmem:[%s0 + $0x10] sm:$0xff]
  %v21 = vld [vmem:[%s0 + $0x18] sm:$0xff]
  %v22 = vld [vmem:[%s0 + $0x20] sm:$0xff]
  %v23 = vld [vmem:[%s0 + $0x28] sm:$0xff]
  %v24 = vld [vmem:[%s0 + $0x30] sm:$0xff]
  %v25 = vld [vmem:[%s0 + $0x38] sm:$0xff]
  %v26 = vcvt.s32.f32 %v18
  %v27 = vcvt.s32.f32 %v19
  %v28 = vcvt.s32.f32 %v20
  %v29 = vcvt.s32.f32 %v21
  %v30 = vcvt.s32.f32 %v22
  %v31 = vcvt.s32.f32 %v23
  %v32 = vcvt.s32.f32 %v24
  %v33 = vcvt.s32.f32 %v25
  %v34 = vpack.c.bf16 %v26, %v26
  %v35 = vpack.c.bf16 %v27, %v27
  %v36 = vpack.c.bf16 %v28, %v28
  %v37 = vpack.c.bf16 %v29, %v29
  %v38 = vpack.c.bf16 %v30, %v30
  %v39 = vpack.c.bf16 %v31, %v31
  %v40 = vpack.c.bf16 %v32, %v32
  %v41 = vpack.c.bf16 %v33, %v33
  %v42 = vld [vmem:[%s2] sm:$0xf]
  %v43 = vld [vmem:[%s2 + $0x4] sm:$0xf]
  %v44 = vld [vmem:[%s2 + $0x8] sm:$0xf]
  %v45 = vld [vmem:[%s2 + $0xc] sm:$0xf]
  %v46 = vld [vmem:[%s2 + $0x10] sm:$0xf]
  %v47 = vld [vmem:[%s2 + $0x14] sm:$0xf]
  %v48 = vld [vmem:[%s2 + $0x18] sm:$0xf]
  %v49 = vld [vmem:[%s2 + $0x1c] sm:$0xf]
  %v50 = vld [vmem:[%s2 + $0x20] sm:$0xf]
  %v51 = vld [vmem:[%s2 + $0x24] sm:$0xf]
  %v52 = vld [vmem:[%s2 + $0x28] sm:$0xf]
  %v53 = vld [vmem:[%s2 + $0x2c] sm:$0xf]
  %v54 = vld [vmem:[%s2 + $0x30] sm:$0xf]
  %v55 = vld [vmem:[%s2 + $0x34] sm:$0xf]
  %v56 = vld [vmem:[%s2 + $0x38] sm:$0xf]
  %v57 = vld [vmem:[%s2 + $0x3c] sm:$0xf]
  %v58 = vld [vmem:[%s2 + $0x40] sm:$0xf]
  %v59 = vld [vmem:[%s2 + $0x44] sm:$0xf]
  %v60 = vld [vmem:[%s2 + $0x48] sm:$0xf]
  %v61 = vld [vmem:[%s2 + $0x4c] sm:$0xf]
  %v62 = vld [vmem:[%s2 + $0x50] sm:$0xf]
  %v63 = vld [vmem:[%s2 + $0x54] sm:$0xf]
  %v64 = vld [vmem:[%s2 + $0x58] sm:$0xf]
  %v65 = vld [vmem:[%s2 + $0x5c] sm:$0xf]
  %v66 = vld [vmem:[%s2 + $0x60] sm:$0xf]
  %v67 = vld [vmem:[%s2 + $0x64] sm:$0xf]
  %v68 = vld [vmem:[%s2 + $0x68] sm:$0xf]
  %v69 = vld [vmem:[%s2 + $0x6c] sm:$0xf]
  %v70 = vld [vmem:[%s2 + $0x70] sm:$0xf]
  %v71 = vld [vmem:[%s2 + $0x74] sm:$0xf]
  %v72 = vld [vmem:[%s2 + $0x78] sm:$0xf]
  %v73 = vld [vmem:[%s2 + $0x7c] sm:$0xf]
  %v74 = vld [vmem:[%s2 + $0x80] sm:$0xf]
  %v75 = vld [vmem:[%s2 + $0x84] sm:$0xf]
  %v76 = vld [vmem:[%s2 + $0x88] sm:$0xf]
  %v77 = vld [vmem:[%s2 + $0x8c] sm:$0xf]
  %v78 = vld [vmem:[%s2 + $0x90] sm:$0xf]
  %v79 = vld [vmem:[%s2 + $0x94] sm:$0xf]
  %v80 = vld [vmem:[%s2 + $0x98] sm:$0xf]
  %v81 = vld [vmem:[%s2 + $0x9c] sm:$0xf]
  %v82 = vld [vmem:[%s2 + $0xa0] sm:$0xf]
  %v83 = vld [vmem:[%s2 + $0xa4] sm:$0xf]
  %v84 = vld [vmem:[%s2 + $0xa8] sm:$0xf]
  %v85 = vld [vmem:[%s2 + $0xac] sm:$0xf]
  %v86 = vld [vmem:[%s2 + $0xb0] sm:$0xf]
  %v87 = vld [vmem:[%s2 + $0xb4] sm:$0xf]
  %v88 = vld [vmem:[%s2 + $0xb8] sm:$0xf]
  %v89 = vld [vmem:[%s2 + $0xbc] sm:$0xf]
  %v90 = vld [vmem:[%s2 + $0xc0] sm:$0xf]
  %v91 = vld [vmem:[%s2 + $0xc4] sm:$0xf]
  %v92 = vld [vmem:[%s2 + $0xc8] sm:$0xf]
  %v93 = vld [vmem:[%s2 + $0xcc] sm:$0xf]
  %v94 = vld [vmem:[%s2 + $0xd0] sm:$0xf]
  %v95 = vld [vmem:[%s2 + $0xd4] sm:$0xf]
  %v96 = vld [vmem:[%s2 + $0xd8] sm:$0xf]
  %v97 = vld [vmem:[%s2 + $0xdc] sm:$0xf]
  %v98 = vld [vmem:[%s2 + $0xe0] sm:$0xf]
  %v99 = vld [vmem:[%s2 + $0xe4] sm:$0xf]
  %v100 = vld [vmem:[%s2 + $0xe8] sm:$0xf]
  %v101 = vld [vmem:[%s2 + $0xec] sm:$0xf]
  %v102 = vld [vmem:[%s2 + $0xf0] sm:$0xf]
  %v103 = vld [vmem:[%s2 + $0xf4] sm:$0xf]
  %v104 = vld [vmem:[%s2 + $0xf8] sm:$0xf]
  %v105 = vld [vmem:[%s2 + $0xfc] sm:$0xf]
  %v106 = vld [vmem:[%s2 + $0x100] sm:$0xf]
  %v107 = vld [vmem:[%s2 + $0x104] sm:$0xf]
  %v108 = vld [vmem:[%s2 + $0x108] sm:$0xf]
  %v109 = vld [vmem:[%s2 + $0x10c] sm:$0xf]
  %v110 = vld [vmem:[%s2 + $0x110] sm:$0xf]
  %v111 = vld [vmem:[%s2 + $0x114] sm:$0xf]
  %v112 = vld [vmem:[%s2 + $0x118] sm:$0xf]
  %v113 = vld [vmem:[%s2 + $0x11c] sm:$0xf]
  %v114 = vld [vmem:[%s2 + $0x120] sm:$0xf]
  %v115 = vld [vmem:[%s2 + $0x124] sm:$0xf]
  %v116 = vld [vmem:[%s2 + $0x128] sm:$0xf]
  %v117 = vld [vmem:[%s2 + $0x12c] sm:$0xf]
  %v118 = vld [vmem:[%s2 + $0x130] sm:$0xf]
  %v119 = vld [vmem:[%s2 + $0x134] sm:$0xf]
  %v120 = vld [vmem:[%s2 + $0x138] sm:$0xf]
  %v121 = vld [vmem:[%s2 + $0x13c] sm:$0xf]
  %v122 = vld [vmem:[%s2 + $0x140] sm:$0xf]
  %v123 = vld [vmem:[%s2 + $0x144] sm:$0xf]
  %v124 = vld [vmem:[%s2 + $0x148] sm:$0xf]
  %v125 = vld [vmem:[%s2 + $0x14c] sm:$0xf]
  %v126 = vld [vmem:[%s2 + $0x150] sm:$0xf]
  %v127 = vld [vmem:[%s2 + $0x154] sm:$0xf]
  %v128 = vld [vmem:[%s2 + $0x158] sm:$0xf]
  %v129 = vld [vmem:[%s2 + $0x15c] sm:$0xf]
  %v130 = vld [vmem:[%s2 + $0x160] sm:$0xf]
  %v131 = vld [vmem:[%s2 + $0x164] sm:$0xf]
  %v132 = vld [vmem:[%s2 + $0x168] sm:$0xf]
  %v133 = vld [vmem:[%s2 + $0x16c] sm:$0xf]
  %v134 = vld [vmem:[%s2 + $0x170] sm:$0xf]
  %v135 = vld [vmem:[%s2 + $0x174] sm:$0xf]
  %v136 = vld [vmem:[%s2 + $0x178] sm:$0xf]
  %v137 = vld [vmem:[%s2 + $0x17c] sm:$0xf]
  %v138 = vld [vmem:[%s2 + $0x180] sm:$0xf]
  %v139 = vld [vmem:[%s2 + $0x184] sm:$0xf]
  %v140 = vld [vmem:[%s2 + $0x188] sm:$0xf]
  %v141 = vld [vmem:[%s2 + $0x18c] sm:$0xf]
  %v142 = vld [vmem:[%s2 + $0x190] sm:$0xf]
  %v143 = vld [vmem:[%s2 + $0x194] sm:$0xf]
  %v144 = vld [vmem:[%s2 + $0x198] sm:$0xf]
  %v145 = vld [vmem:[%s2 + $0x19c] sm:$0xf]
  %v146 = vld [vmem:[%s2 + $0x1a0] sm:$0xf]
  %v147 = vld [vmem:[%s2 + $0x1a4] sm:$0xf]
  %v148 = vld [vmem:[%s2 + $0x1a8] sm:$0xf]
  %v149 = vld [vmem:[%s2 + $0x1ac] sm:$0xf]
  %v150 = vld [vmem:[%s2 + $0x1b0] sm:$0xf]
  %v151 = vld [vmem:[%s2 + $0x1b4] sm:$0xf]
  %v152 = vld [vmem:[%s2 + $0x1b8] sm:$0xf]
  %v153 = vld [vmem:[%s2 + $0x1bc] sm:$0xf]
  %v154 = vld [vmem:[%s2 + $0x1c0] sm:$0xf]
  %v155 = vld [vmem:[%s2 + $0x1c4] sm:$0xf]
  %v156 = vld [vmem:[%s2 + $0x1c8] sm:$0xf]
  %v157 = vld [vmem:[%s2 + $0x1cc] sm:$0xf]
  %v158 = vld [vmem:[%s2 + $0x1d0] sm:$0xf]
  %v159 = vld [vmem:[%s2 + $0x1d4] sm:$0xf]
  %v160 = vld [vmem:[%s2 + $0x1d8] sm:$0xf]
  %v161 = vld [vmem:[%s2 + $0x1dc] sm:$0xf]
  %v162 = vld [vmem:[%s2 + $0x1e0] sm:$0xf]
  %v163 = vld [vmem:[%s2 + $0x1e4] sm:$0xf]
  %v164 = vld [vmem:[%s2 + $0x1e8] sm:$0xf]
  %v165 = vld [vmem:[%s2 + $0x1ec] sm:$0xf]
  %v166 = vld [vmem:[%s2 + $0x1f0] sm:$0xf]
  %v167 = vld [vmem:[%s2 + $0x1f4] sm:$0xf]
  %v168 = vld [vmem:[%s2 + $0x1f8] sm:$0xf]
  %v169 = vld [vmem:[%s2 + $0x1fc] sm:$0xf]
  %v170 = vld [vmem:[%s0 + $0x40] sm:$0xff]
  %v171 = vld [vmem:[%s0 + $0x48] sm:$0xff]
  %v172 = vld [vmem:[%s0 + $0x50] sm:$0xff]
  %v173 = vld [vmem:[%s0 + $0x58] sm:$0xff]
  %v174 = vld [vmem:[%s0 + $0x60] sm:$0xff]
  %v175 = vld [vmem:[%s0 + $0x68] sm:$0xff]
  %v176 = vld [vmem:[%s0 + $0x70] sm:$0xff]
  %v177 = vld [vmem:[%s0 + $0x78] sm:$0xff]
  %v178 = vcvt.s32.f32 %v170
  %v179 = vcvt.s32.f32 %v171
  %v180 = vcvt.s32.f32 %v172
  %v181 = vcvt.s32.f32 %v173
  %v182 = vcvt.s32.f32 %v174
  %v183 = vcvt.s32.f32 %v175
  %v184 = vcvt.s32.f32 %v176
  %v185 = vcvt.s32.f32 %v177
  %v186 = vpack.c.bf16 %v178, %v178
  %v187 = vpack.c.bf16 %v179, %v179
  %v188 = vpack.c.bf16 %v180, %v180
  %v189 = vpack.c.bf16 %v181, %v181
  %v190 = vpack.c.bf16 %v182, %v182
  %v191 = vpack.c.bf16 %v183, %v183
  %v192 = vpack.c.bf16 %v184, %v184
  %v193 = vpack.c.bf16 %v185, %v185
  %v194 = vld [vmem:[%s2 + $0x200] sm:$0xf]
  %v195 = vld [vmem:[%s2 + $0x204] sm:$0xf]
  %v196 = vld [vmem:[%s2 + $0x208] sm:$0xf]
  %v197 = vld [vmem:[%s2 + $0x20c] sm:$0xf]
  %v198 = vld [vmem:[%s2 + $0x210] sm:$0xf]
  %v199 = vld [vmem:[%s2 + $0x214] sm:$0xf]
  %v200 = vld [vmem:[%s2 + $0x218] sm:$0xf]
  %v201 = vld [vmem:[%s2 + $0x21c] sm:$0xf]
  %v202 = vld [vmem:[%s2 + $0x220] sm:$0xf]
  %v203 = vld [vmem:[%s2 + $0x224] sm:$0xf]
  %v204 = vld [vmem:[%s2 + $0x228] sm:$0xf]
  %v205 = vld [vmem:[%s2 + $0x22c] sm:$0xf]
  %v206 = vld [vmem:[%s2 + $0x230] sm:$0xf]
  %v207 = vld [vmem:[%s2 + $0x234] sm:$0xf]
  %v208 = vld [vmem:[%s2 + $0x238] sm:$0xf]
  %v209 = vld [vmem:[%s2 + $0x23c] sm:$0xf]
  %v210 = vld [vmem:[%s2 + $0x240] sm:$0xf]
  %v211 = vld [vmem:[%s2 + $0x244] sm:$0xf]
  %v212 = vld [vmem:[%s2 + $0x248] sm:$0xf]
  %v213 = vld [vmem:[%s2 + $0x24c] sm:$0xf]
  %v214 = vld [vmem:[%s2 + $0x250] sm:$0xf]
  %v215 = vld [vmem:[%s2 + $0x254] sm:$0xf]
  %v216 = vld [vmem:[%s2 + $0x258] sm:$0xf]
  %v217 = vld [vmem:[%s2 + $0x25c] sm:$0xf]
  %v218 = vld [vmem:[%s2 + $0x260] sm:$0xf]
  %v219 = vld [vmem:[%s2 + $0x264] sm:$0xf]
  %v220 = vld [vmem:[%s2 + $0x268] sm:$0xf]
  %v221 = vld [vmem:[%s2 + $0x26c] sm:$0xf]
  %v222 = vld [vmem:[%s2 + $0x270] sm:$0xf]
  %v223 = vld [vmem:[%s2 + $0x274] sm:$0xf]
  %v224 = vld [vmem:[%s2 + $0x278] sm:$0xf]
  %v225 = vld [vmem:[%s2 + $0x27c] sm:$0xf]
  %v226 = vld [vmem:[%s2 + $0x280] sm:$0xf]
  %v227 = vld [vmem:[%s2 + $0x284] sm:$0xf]
  %v228 = vld [vmem:[%s2 + $0x288] sm:$0xf]
  %v229 = vld [vmem:[%s2 + $0x28c] sm:$0xf]
  %v230 = vld [vmem:[%s2 + $0x290] sm:$0xf]
  %v231 = vld [vmem:[%s2 + $0x294] sm:$0xf]
  %v232 = vld [vmem:[%s2 + $0x298] sm:$0xf]
  %v233 = vld [vmem:[%s2 + $0x29c] sm:$0xf]
  %v234 = vld [vmem:[%s2 + $0x2a0] sm:$0xf]
  %v235 = vld [vmem:[%s2 + $0x2a4] sm:$0xf]
  %v236 = vld [vmem:[%s2 + $0x2a8] sm:$0xf]
  %v237 = vld [vmem:[%s2 + $0x2ac] sm:$0xf]
  %v238 = vld [vmem:[%s2 + $0x2b0] sm:$0xf]
  %v239 = vld [vmem:[%s2 + $0x2b4] sm:$0xf]
  %v240 = vld [vmem:[%s2 + $0x2b8] sm:$0xf]
  %v241 = vld [vmem:[%s2 + $0x2bc] sm:$0xf]
  %v242 = vld [vmem:[%s2 + $0x2c0] sm:$0xf]
  %v243 = vld [vmem:[%s2 + $0x2c4] sm:$0xf]
  %v244 = vld [vmem:[%s2 + $0x2c8] sm:$0xf]
  %v245 = vld [vmem:[%s2 + $0x2cc] sm:$0xf]
  %v246 = vld [vmem:[%s2 + $0x2d0] sm:$0xf]
  %v247 = vld [vmem:[%s2 + $0x2d4] sm:$0xf]
  %v248 = vld [vmem:[%s2 + $0x2d8] sm:$0xf]
  %v249 = vld [vmem:[%s2 + $0x2dc] sm:$0xf]
  %v250 = vld [vmem:[%s2 + $0x2e0] sm:$0xf]
  %v251 = vld [vmem:[%s2 + $0x2e4] sm:$0xf]
  %v252 = vld [vmem:[%s2 + $0x2e8] sm:$0xf]
  %v253 = vld [vmem:[%s2 + $0x2ec] sm:$0xf]
  %v254 = vld [vmem:[%s2 + $0x2f0] sm:$0xf]
  %v255 = vld [vmem:[%s2 + $0x2f4] sm:$0xf]
  %v256 = vld [vmem:[%s2 + $0x2f8] sm:$0xf]
  %v257 = vld [vmem:[%s2 + $0x2fc] sm:$0xf]
  %v258 = vld [vmem:[%s2 + $0x300] sm:$0xf]
  %v259 = vld [vmem:[%s2 + $0x304] sm:$0xf]
  %v260 = vld [vmem:[%s2 + $0x308] sm:$0xf]
  %v261 = vld [vmem:[%s2 + $0x30c] sm:$0xf]
  %v262 = vld [vmem:[%s2 + $0x310] sm:$0xf]
  %v263 = vld [vmem:[%s2 + $0x314] sm:$0xf]
  %v264 = vld [vmem:[%s2 + $0x318] sm:$0xf]
  %v265 = vld [vmem:[%s2 + $0x31c] sm:$0xf]
  %v266 = vld [vmem:[%s2 + $0x320] sm:$0xf]
  %v267 = vld [vmem:[%s2 + $0x324] sm:$0xf]
  %v268 = vld [vmem:[%s2 + $0x328] sm:$0xf]
  %v269 = vld [vmem:[%s2 + $0x32c] sm:$0xf]
  %v270 = vld [vmem:[%s2 + $0x330] sm:$0xf]
  %v271 = vld [vmem:[%s2 + $0x334] sm:$0xf]
  %v272 = vld [vmem:[%s2 + $0x338] sm:$0xf]
  %v273 = vld [vmem:[%s2 + $0x33c] sm:$0xf]
  %v274 = vld [vmem:[%s2 + $0x340] sm:$0xf]
  %v275 = vld [vmem:[%s2 + $0x344] sm:$0xf]
  %v276 = vld [vmem:[%s2 + $0x348] sm:$0xf]
  %v277 = vld [vmem:[%s2 + $0x34c] sm:$0xf]
  %v278 = vld [vmem:[%s2 + $0x350] sm:$0xf]
  %v279 = vld [vmem:[%s2 + $0x354] sm:$0xf]
  %v280 = vld [vmem:[%s2 + $0x358] sm:$0xf]
  %v281 = vld [vmem:[%s2 + $0x35c] sm:$0xf]
  %v282 = vld [vmem:[%s2 + $0x360] sm:$0xf]
  %v283 = vld [vmem:[%s2 + $0x364] sm:$0xf]
  %v284 = vld [vmem:[%s2 + $0x368] sm:$0xf]
  %v285 = vld [vmem:[%s2 + $0x36c] sm:$0xf]
  %v286 = vld [vmem:[%s2 + $0x370] sm:$0xf]
  %v287 = vld [vmem:[%s2 + $0x374] sm:$0xf]
  %v288 = vld [vmem:[%s2 + $0x378] sm:$0xf]
  %v289 = vld [vmem:[%s2 + $0x37c] sm:$0xf]
  %v290 = vld [vmem:[%s2 + $0x380] sm:$0xf]
  %v291 = vld [vmem:[%s2 + $0x384] sm:$0xf]
  %v292 = vld [vmem:[%s2 + $0x388] sm:$0xf]
  %v293 = vld [vmem:[%s2 + $0x38c] sm:$0xf]
  %v294 = vld [vmem:[%s2 + $0x390] sm:$0xf]
  %v295 = vld [vmem:[%s2 + $0x394] sm:$0xf]
  %v296 = vld [vmem:[%s2 + $0x398] sm:$0xf]
  %v297 = vld [vmem:[%s2 + $0x39c] sm:$0xf]
  %v298 = vld [vmem:[%s2 + $0x3a0] sm:$0xf]
  %v299 = vld [vmem:[%s2 + $0x3a4] sm:$0xf]
  %v300 = vld [vmem:[%s2 + $0x3a8] sm:$0xf]
  %v301 = vld [vmem:[%s2 + $0x3ac] sm:$0xf]
  %v302 = vld [vmem:[%s2 + $0x3b0] sm:$0xf]
  %v303 = vld [vmem:[%s2 + $0x3b4] sm:$0xf]
  %v304 = vld [vmem:[%s2 + $0x3b8] sm:$0xf]
  %v305 = vld [vmem:[%s2 + $0x3bc] sm:$0xf]
  %v306 = vld [vmem:[%s2 + $0x3c0] sm:$0xf]
  %v307 = vld [vmem:[%s2 + $0x3c4] sm:$0xf]
  %v308 = vld [vmem:[%s2 + $0x3c8] sm:$0xf]
  %v309 = vld [vmem:[%s2 + $0x3cc] sm:$0xf]
  %v310 = vld [vmem:[%s2 + $0x3d0] sm:$0xf]
  %v311 = vld [vmem:[%s2 + $0x3d4] sm:$0xf]
  %v312 = vld [vmem:[%s2 + $0x3d8] sm:$0xf]
  %v313 = vld [vmem:[%s2 + $0x3dc] sm:$0xf]
  %v314 = vld [vmem:[%s2 + $0x3e0] sm:$0xf]
  %v315 = vld [vmem:[%s2 + $0x3e4] sm:$0xf]
  %v316 = vld [vmem:[%s2 + $0x3e8] sm:$0xf]
  %v317 = vld [vmem:[%s2 + $0x3ec] sm:$0xf]
  %v318 = vld [vmem:[%s2 + $0x3f0] sm:$0xf]
  %v319 = vld [vmem:[%s2 + $0x3f4] sm:$0xf]
  %v320 = vld [vmem:[%s2 + $0x3f8] sm:$0xf]
  %v321 = vld [vmem:[%s2 + $0x3fc] sm:$0xf]
  %v450 = vunpack.c.l.b16 %v194
  %v451 = vunpack.c.l.b16 %v195
  %v452 = vunpack.c.l.b16 %v196
  %v453 = vunpack.c.l.b16 %v197
  %v454 = vunpack.c.l.b16 %v198
  %v455 = vunpack.c.l.b16 %v199
  %v456 = vunpack.c.l.b16 %v200
  %v457 = vunpack.c.l.b16 %v201
  %v458 = vunpack.c.l.b16 %v202
  %v459 = vunpack.c.l.b16 %v203
  %v460 = vunpack.c.l.b16 %v204
  %v461 = vunpack.c.l.b16 %v205
  %v462 = vunpack.c.l.b16 %v206
  %v463 = vunpack.c.l.b16 %v207
  %v464 = vunpack.c.l.b16 %v208
  %v465 = vunpack.c.l.b16 %v209
  %v466 = vunpack.c.l.b16 %v210
  %v467 = vunpack.c.l.b16 %v211
  %v468 = vunpack.c.l.b16 %v212
  %v469 = vunpack.c.l.b16 %v213
  %v470 = vunpack.c.l.b16 %v214
  %v471 = vunpack.c.l.b16 %v215
  %v472 = vunpack.c.l.b16 %v216
  %v473 = vunpack.c.l.b16 %v217
  %v474 = vunpack.c.l.b16 %v218
  %v475 = vunpack.c.l.b16 %v219
  %v476 = vunpack.c.l.b16 %v220
  %v477 = vunpack.c.l.b16 %v221
  %v478 = vunpack.c.l.b16 %v222
  %v479 = vunpack.c.l.b16 %v223
  %v480 = vunpack.c.l.b16 %v224
  %v481 = vunpack.c.l.b16 %v225
  %v482 = vunpack.c.l.b16 %v226
  %v483 = vunpack.c.l.b16 %v227
  %v484 = vunpack.c.l.b16 %v228
  %v485 = vunpack.c.l.b16 %v229
  %v486 = vunpack.c.l.b16 %v230
  %v487 = vunpack.c.l.b16 %v231
  %v488 = vunpack.c.l.b16 %v232
  %v489 = vunpack.c.l.b16 %v233
  %v490 = vunpack.c.l.b16 %v234
  %v491 = vunpack.c.l.b16 %v235
  %v492 = vunpack.c.l.b16 %v236
  %v493 = vunpack.c.l.b16 %v237
  %v494 = vunpack.c.l.b16 %v238
  %v495 = vunpack.c.l.b16 %v239
  %v496 = vunpack.c.l.b16 %v240
  %v497 = vunpack.c.l.b16 %v241
  %v498 = vunpack.c.l.b16 %v242
  %v499 = vunpack.c.l.b16 %v243
  %v500 = vunpack.c.l.b16 %v244
  %v501 = vunpack.c.l.b16 %v245
  %v502 = vunpack.c.l.b16 %v246
  %v503 = vunpack.c.l.b16 %v247
  %v504 = vunpack.c.l.b16 %v248
  %v505 = vunpack.c.l.b16 %v249
  %v506 = vunpack.c.l.b16 %v250
  %v507 = vunpack.c.l.b16 %v251
  %v508 = vunpack.c.l.b16 %v252
  %v509 = vunpack.c.l.b16 %v253
  %v510 = vunpack.c.l.b16 %v254
  %v511 = vunpack.c.l.b16 %v255
  %v512 = vunpack.c.l.b16 %v256
  %v513 = vunpack.c.l.b16 %v257
  %v514 = vunpack.c.l.b16 %v258
  %v515 = vunpack.c.l.b16 %v259
  %v516 = vunpack.c.l.b16 %v260
  %v517 = vunpack.c.l.b16 %v261
  %v518 = vunpack.c.l.b16 %v262
  %v519 = vunpack.c.l.b16 %v263
  %v520 = vunpack.c.l.b16 %v264
  %v521 = vunpack.c.l.b16 %v265
  %v522 = vunpack.c.l.b16 %v266
  %v523 = vunpack.c.l.b16 %v267
  %v524 = vunpack.c.l.b16 %v268
  %v525 = vunpack.c.l.b16 %v269
  %v526 = vunpack.c.l.b16 %v270
  %v527 = vunpack.c.l.b16 %v271
  %v528 = vunpack.c.l.b16 %v272
  %v529 = vunpack.c.l.b16 %v273
  %v530 = vunpack.c.l.b16 %v274
  %v531 = vunpack.c.l.b16 %v275
  %v532 = vunpack.c.l.b16 %v276
  %v533 = vunpack.c.l.b16 %v277
  %v534 = vunpack.c.l.b16 %v278
  %v535 = vunpack.c.l.b16 %v279
  %v536 = vunpack.c.l.b16 %v280
  %v537 = vunpack.c.l.b16 %v281
  %v538 = vunpack.c.l.b16 %v282
  %v539 = vunpack.c.l.b16 %v283
  %v540 = vunpack.c.l.b16 %v284
  %v541 = vunpack.c.l.b16 %v285
  %v542 = vunpack.c.l.b16 %v286
  %v543 = vunpack.c.l.b16 %v287
  %v544 = vunpack.c.l.b16 %v288
  %v545 = vunpack.c.l.b16 %v289
  %v546 = vunpack.c.l.b16 %v290
  %v547 = vunpack.c.l.b16 %v291
  %v548 = vunpack.c.l.b16 %v292
  %v549 = vunpack.c.l.b16 %v293
  %v550 = vunpack.c.l.b16 %v294
  %v551 = vunpack.c.l.b16 %v295
  %v552 = vunpack.c.l.b16 %v296
  %v553 = vunpack.c.l.b16 %v297
  %v554 = vunpack.c.l.b16 %v298
  %v555 = vunpack.c.l.b16 %v299
  %v556 = vunpack.c.l.b16 %v300
  %v557 = vunpack.c.l.b16 %v301
  %v558 = vunpack.c.l.b16 %v302
  %v559 = vunpack.c.l.b16 %v303
  %v560 = vunpack.c.l.b16 %v304
  %v561 = vunpack.c.l.b16 %v305
  %v562 = vunpack.c.l.b16 %v306
  %v563 = vunpack.c.l.b16 %v307
  %v564 = vunpack.c.l.b16 %v308
  %v565 = vunpack.c.l.b16 %v309
  %v566 = vunpack.c.l.b16 %v310
  %v567 = vunpack.c.l.b16 %v311
  %v568 = vunpack.c.l.b16 %v312
  %v569 = vunpack.c.l.b16 %v313
  %v570 = vunpack.c.l.b16 %v314
  %v571 = vunpack.c.l.b16 %v315
  %v572 = vunpack.c.l.b16 %v316
  %v573 = vunpack.c.l.b16 %v317
  %v574 = vunpack.c.l.b16 %v318
  %v575 = vunpack.c.l.b16 %v319
  %v576 = vunpack.c.l.b16 %v320
  %v577 = vunpack.c.l.b16 %v321
  %v578 = vpack.c.b16 %v451, %v450
  %v579 = vpack.c.b16 %v453, %v452
  %v580 = vpack.c.b16 %v455, %v454
  %v581 = vpack.c.b16 %v457, %v456
  %v582 = vpack.c.b16 %v459, %v458
  %v583 = vpack.c.b16 %v461, %v460
  %v584 = vpack.c.b16 %v463, %v462
  %v585 = vpack.c.b16 %v465, %v464
  %v586 = vpack.c.b16 %v467, %v466
  %v587 = vpack.c.b16 %v469, %v468
  %v588 = vpack.c.b16 %v471, %v470
  %v589 = vpack.c.b16 %v473, %v472
  %v590 = vpack.c.b16 %v475, %v474
  %v591 = vpack.c.b16 %v477, %v476
  %v592 = vpack.c.b16 %v479, %v478
  %v593 = vpack.c.b16 %v481, %v480
  %v594 = vpack.c.b16 %v483, %v482
  %v595 = vpack.c.b16 %v485, %v484
  %v596 = vpack.c.b16 %v487, %v486
  %v597 = vpack.c.b16 %v489, %v488
  %v598 = vpack.c.b16 %v491, %v490
  %v599 = vpack.c.b16 %v493, %v492
  %v600 = vpack.c.b16 %v495, %v494
  %v601 = vpack.c.b16 %v497, %v496
  %v602 = vpack.c.b16 %v499, %v498
  %v603 = vpack.c.b16 %v501, %v500
  %v604 = vpack.c.b16 %v503, %v502
  %v605 = vpack.c.b16 %v505, %v504
  %v606 = vpack.c.b16 %v507, %v506
  %v607 = vpack.c.b16 %v509, %v508
  %v608 = vpack.c.b16 %v511, %v510
  %v609 = vpack.c.b16 %v513, %v512
  %v610 = vpack.c.b16 %v515, %v514
  %v611 = vpack.c.b16 %v517, %v516
  %v612 = vpack.c.b16 %v519, %v518
  %v613 = vpack.c.b16 %v521, %v520
  %v614 = vpack.c.b16 %v523, %v522
  %v615 = vpack.c.b16 %v525, %v524
  %v616 = vpack.c.b16 %v527, %v526
  %v617 = vpack.c.b16 %v529, %v528
  %v618 = vpack.c.b16 %v531, %v530
  %v619 = vpack.c.b16 %v533, %v532
  %v620 = vpack.c.b16 %v535, %v534
  %v621 = vpack.c.b16 %v537, %v536
  %v622 = vpack.c.b16 %v539, %v538
  %v623 = vpack.c.b16 %v541, %v540
  %v624 = vpack.c.b16 %v543, %v542
  %v625 = vpack.c.b16 %v545, %v544
  %v626 = vpack.c.b16 %v547, %v546
  %v627 = vpack.c.b16 %v549, %v548
  %v628 = vpack.c.b16 %v551, %v550
  %v629 = vpack.c.b16 %v553, %v552
  %v630 = vpack.c.b16 %v555, %v554
  %v631 = vpack.c.b16 %v557, %v556
  %v632 = vpack.c.b16 %v559, %v558
  %v633 = vpack.c.b16 %v561, %v560
  %v634 = vpack.c.b16 %v563, %v562
  %v635 = vpack.c.b16 %v565, %v564
  %v636 = vpack.c.b16 %v567, %v566
  %v637 = vpack.c.b16 %v569, %v568
  %v638 = vpack.c.b16 %v571, %v570
  %v639 = vpack.c.b16 %v573, %v572
  %v640 = vpack.c.b16 %v575, %v574
  %v641 = vpack.c.b16 %v577, %v576
  %706 = vmatprep.subr.bf16.mxu0 0
  %707 = vmatpush1.bf16.msra.mxu0 %v578
  %708 = vmatprep.subr.bf16.mxu0 0
  %709 = vmatpush1.bf16.msra.mxu0 %v579
  %710 = vmatprep.subr.bf16.mxu0 0
  %711 = vmatpush1.bf16.msra.mxu0 %v580
  %712 = vmatprep.subr.bf16.mxu0 0
  %713 = vmatpush1.bf16.msra.mxu0 %v581
  %714 = vmatprep.subr.bf16.mxu0 0
  %715 = vmatpush1.bf16.msra.mxu0 %v582
  %716 = vmatprep.subr.bf16.mxu0 0
  %717 = vmatpush1.bf16.msra.mxu0 %v583
  %718 = vmatprep.subr.bf16.mxu0 0
  %719 = vmatpush1.bf16.msra.mxu0 %v584
  %720 = vmatprep.subr.bf16.mxu0 0
  %721 = vmatpush1.bf16.msra.mxu0 %v585
  %722 = vmatprep.subr.bf16.mxu0 0
  %723 = vmatpush1.bf16.msra.mxu0 %v586
  %724 = vmatprep.subr.bf16.mxu0 0
  %725 = vmatpush1.bf16.msra.mxu0 %v587
  %726 = vmatprep.subr.bf16.mxu0 0
  %727 = vmatpush1.bf16.msra.mxu0 %v588
  %728 = vmatprep.subr.bf16.mxu0 0
  %729 = vmatpush1.bf16.msra.mxu0 %v589
  %730 = vmatprep.subr.bf16.mxu0 0
  %731 = vmatpush1.bf16.msra.mxu0 %v590
  %732 = vmatprep.subr.bf16.mxu0 0
  %733 = vmatpush1.bf16.msra.mxu0 %v591
  %734 = vmatprep.subr.bf16.mxu0 0
  %735 = vmatpush1.bf16.msra.mxu0 %v592
  %736 = vmatprep.subr.bf16.mxu0 0
  %737 = vmatpush1.bf16.msra.mxu0 %v593
  %738 = vmatprep.mubr.bf16.mxu0 %v187
  %739 = vmatmul.mubr.bf16.gmra.mrb[0].mxu0 %v186
  %v740 = vpop.f32.mrb[0].mxu0
  %v741 = vadd.f32 0.0, %v740
  %v742 = vpop.f32.mrb[0].mxu0
  %v743 = vpop.f32.mrb[0].mxu0
  %v744 = vpop.f32.mrb[0].mxu0
  %745 = vdwg.mxu0
  %746 = vmatprep.subr.bf16.mxu0 0
  %747 = vmatpush1.bf16.msra.mxu0 %v594
  %748 = vmatprep.subr.bf16.mxu0 0
  %749 = vmatpush1.bf16.msra.mxu0 %v595
  %750 = vmatprep.subr.bf16.mxu0 0
  %751 = vmatpush1.bf16.msra.mxu0 %v596
  %752 = vmatprep.subr.bf16.mxu0 0
  %753 = vmatpush1.bf16.msra.mxu0 %v597
  %754 = vmatprep.subr.bf16.mxu0 0
  %755 = vmatpush1.bf16.msra.mxu0 %v598
  %756 = vmatprep.subr.bf16.mxu0 0
  %757 = vmatpush1.bf16.msra.mxu0 %v599
  %758 = vmatprep.subr.bf16.mxu0 0
  %759 = vmatpush1.bf16.msra.mxu0 %v600
  %760 = vmatprep.subr.bf16.mxu0 0
  %761 = vmatpush1.bf16.msra.mxu0 %v601
  %762 = vmatprep.subr.bf16.mxu0 0
  %763 = vmatpush1.bf16.msra.mxu0 %v602
  %764 = vmatprep.subr.bf16.mxu0 0
  %765 = vmatpush1.bf16.msra.mxu0 %v603
  %766 = vmatprep.subr.bf16.mxu0 0
  %767 = vmatpush1.bf16.msra.mxu0 %v604
  %768 = vmatprep.subr.bf16.mxu0 0
  %769 = vmatpush1.bf16.msra.mxu0 %v605
  %770 = vmatprep.subr.bf16.mxu0 0
  %771 = vmatpush1.bf16.msra.mxu0 %v606
  %772 = vmatprep.subr.bf16.mxu0 0
  %773 = vmatpush1.bf16.msra.mxu0 %v607
  %774 = vmatprep.subr.bf16.mxu0 0
  %775 = vmatpush1.bf16.msra.mxu0 %v608
  %776 = vmatprep.subr.bf16.mxu0 0
  %777 = vmatpush1.bf16.msra.mxu0 %v609
  %778 = vmatprep.mubr.bf16.mxu0 %v189
  %779 = vmatmul.mubr.bf16.gmra.mrb[0].mxu0 %v188
  %v780 = vpop.f32.mrb[0].mxu0
  %v781 = vadd.f32 %v741, %v780
  %v782 = vpop.f32.mrb[0].mxu0
  %v783 = vpop.f32.mrb[0].mxu0
  %v784 = vpop.f32.mrb[0].mxu0
  %785 = vdwg.mxu0
  %786 = vmatprep.subr.bf16.mxu0 0
  %787 = vmatpush1.bf16.msra.mxu0 %v610
  %788 = vmatprep.subr.bf16.mxu0 0
  %789 = vmatpush1.bf16.msra.mxu0 %v611
  %790 = vmatprep.subr.bf16.mxu0 0
  %791 = vmatpush1.bf16.msra.mxu0 %v612
  %792 = vmatprep.subr.bf16.mxu0 0
  %793 = vmatpush1.bf16.msra.mxu0 %v613
  %794 = vmatprep.subr.bf16.mxu0 0
  %795 = vmatpush1.bf16.msra.mxu0 %v614
  %796 = vmatprep.subr.bf16.mxu0 0
  %797 = vmatpush1.bf16.msra.mxu0 %v615
  %798 = vmatprep.subr.bf16.mxu0 0
  %799 = vmatpush1.bf16.msra.mxu0 %v616
  %800 = vmatprep.subr.bf16.mxu0 0
  %801 = vmatpush1.bf16.msra.mxu0 %v617
  %802 = vmatprep.subr.bf16.mxu0 0
  %803 = vmatpush1.bf16.msra.mxu0 %v618
  %804 = vmatprep.subr.bf16.mxu0 0
  %805 = vmatpush1.bf16.msra.mxu0 %v619
  %806 = vmatprep.subr.bf16.mxu0 0
  %807 = vmatpush1.bf16.msra.mxu0 %v620
  %808 = vmatprep.subr.bf16.mxu0 0
  %809 = vmatpush1.bf16.msra.mxu0 %v621
  %810 = vmatprep.subr.bf16.mxu0 0
  %811 = vmatpush1.bf16.msra.mxu0 %v622
  %812 = vmatprep.subr.bf16.mxu0 0
  %813 = vmatpush1.bf16.msra.mxu0 %v623
  %814 = vmatprep.subr.bf16.mxu0 0
  %815 = vmatpush1.bf16.msra.mxu0 %v624
  %816 = vmatprep.subr.bf16.mxu0 0
  %817 = vmatpush1.bf16.msra.mxu0 %v625
  %818 = vmatprep.mubr.bf16.mxu0 %v191
  %819 = vmatmul.mubr.bf16.gmra.mrb[0].mxu0 %v190
  %v820 = vpop.f32.mrb[0].mxu0
  %v821 = vadd.f32 %v781, %v820
  %v822 = vpop.f32.mrb[0].mxu0
  %v823 = vpop.f32.mrb[0].mxu0
  %v824 = vpop.f32.mrb[0].mxu0
  %825 = vdwg.mxu0
  %826 = vmatprep.subr.bf16.mxu0 0
  %827 = vmatpush1.bf16.msra.mxu0 %v626
  %828 = vmatprep.subr.bf16.mxu0 0
  %829 = vmatpush1.bf16.msra.mxu0 %v627
  %830 = vmatprep.subr.bf16.mxu0 0
  %831 = vmatpush1.bf16.msra.mxu0 %v628
  %832 = vmatprep.subr.bf16.mxu0 0
  %833 = vmatpush1.bf16.msra.mxu0 %v629
  %834 = vmatprep.subr.bf16.mxu0 0
  %835 = vmatpush1.bf16.msra.mxu0 %v630
  %836 = vmatprep.subr.bf16.mxu0 0
  %837 = vmatpush1.bf16.msra.mxu0 %v631
  %838 = vmatprep.subr.bf16.mxu0 0
  %839 = vmatpush1.bf16.msra.mxu0 %v632
  %840 = vmatprep.subr.bf16.mxu0 0
  %841 = vmatpush1.bf16.msra.mxu0 %v633
  %842 = vmatprep.subr.bf16.mxu0 0
  %843 = vmatpush1.bf16.msra.mxu0 %v634
  %844 = vmatprep.subr.bf16.mxu0 0
  %845 = vmatpush1.bf16.msra.mxu0 %v635
  %846 = vmatprep.subr.bf16.mxu0 0
  %847 = vmatpush1.bf16.msra.mxu0 %v636
  %848 = vmatprep.subr.bf16.mxu0 0
  %849 = vmatpush1.bf16.msra.mxu0 %v637
  %850 = vmatprep.subr.bf16.mxu0 0
  %851 = vmatpush1.bf16.msra.mxu0 %v638
  %852 = vmatprep.subr.bf16.mxu0 0
  %853 = vmatpush1.bf16.msra.mxu0 %v639
  %854 = vmatprep.subr.bf16.mxu0 0
  %855 = vmatpush1.bf16.msra.mxu0 %v640
  %856 = vmatprep.subr.bf16.mxu0 0
  %857 = vmatpush1.bf16.msra.mxu0 %v641
  %858 = vmatprep.mubr.bf16.mxu0 %v193
  %859 = vmatmul.mubr.bf16.gmra.mrb[0].mxu0 %v192
  %v860 = vpop.f32.mrb[0].mxu0
  %v861 = vadd.f32 %v821, %v860
  %v862 = vpop.f32.mrb[0].mxu0
  %v863 = vpop.f32.mrb[0].mxu0
  %v864 = vpop.f32.mrb[0].mxu0
  %865 = vdwg.mxu0
  %v994 = vunpack.c.l.b16 %v42
  %v995 = vunpack.c.l.b16 %v43
  %v996 = vunpack.c.l.b16 %v44
  %v997 = vunpack.c.l.b16 %v45
  %v998 = vunpack.c.l.b16 %v46
  %v999 = vunpack.c.l.b16 %v47
  %v1000 = vunpack.c.l.b16 %v48
  %v1001 = vunpack.c.l.b16 %v49
  %v1002 = vunpack.c.l.b16 %v50
  %v1003 = vunpack.c.l.b16 %v51
  %v1004 = vunpack.c.l.b16 %v52
  %v1005 = vunpack.c.l.b16 %v53
  %v1006 = vunpack.c.l.b16 %v54
  %v1007 = vunpack.c.l.b16 %v55
  %v1008 = vunpack.c.l.b16 %v56
  %v1009 = vunpack.c.l.b16 %v57
  %v1010 = vunpack.c.l.b16 %v58
  %v1011 = vunpack.c.l.b16 %v59
  %v1012 = vunpack.c.l.b16 %v60
  %v1013 = vunpack.c.l.b16 %v61
  %v1014 = vunpack.c.l.b16 %v62
  %v1015 = vunpack.c.l.b16 %v63
  %v1016 = vunpack.c.l.b16 %v64
  %v1017 = vunpack.c.l.b16 %v65
  %v1018 = vunpack.c.l.b16 %v66
  %v1019 = vunpack.c.l.b16 %v67
  %v1020 = vunpack.c.l.b16 %v68
  %v1021 = vunpack.c.l.b16 %v69
  %v1022 = vunpack.c.l.b16 %v70
  %v1023 = vunpack.c.l.b16 %v71
  %v1024 = vunpack.c.l.b16 %v72
  %v1025 = vunpack.c.l.b16 %v73
  %v1026 = vunpack.c.l.b16 %v74
  %v1027 = vunpack.c.l.b16 %v75
  %v1028 = vunpack.c.l.b16 %v76
  %v1029 = vunpack.c.l.b16 %v77
  %v1030 = vunpack.c.l.b16 %v78
  %v1031 = vunpack.c.l.b16 %v79
  %v1032 = vunpack.c.l.b16 %v80
  %v1033 = vunpack.c.l.b16 %v81
  %v1034 = vunpack.c.l.b16 %v82
  %v1035 = vunpack.c.l.b16 %v83
  %v1036 = vunpack.c.l.b16 %v84
  %v1037 = vunpack.c.l.b16 %v85
  %v1038 = vunpack.c.l.b16 %v86
  %v1039 = vunpack.c.l.b16 %v87
  %v1040 = vunpack.c.l.b16 %v88
  %v1041 = vunpack.c.l.b16 %v89
  %v1042 = vunpack.c.l.b16 %v90
  %v1043 = vunpack.c.l.b16 %v91
  %v1044 = vunpack.c.l.b16 %v92
  %v1045 = vunpack.c.l.b16 %v93
  %v1046 = vunpack.c.l.b16 %v94
  %v1047 = vunpack.c.l.b16 %v95
  %v1048 = vunpack.c.l.b16 %v96
  %v1049 = vunpack.c.l.b16 %v97
  %v1050 = vunpack.c.l.b16 %v98
  %v1051 = vunpack.c.l.b16 %v99
  %v1052 = vunpack.c.l.b16 %v100
  %v1053 = vunpack.c.l.b16 %v101
  %v1054 = vunpack.c.l.b16 %v102
  %v1055 = vunpack.c.l.b16 %v103
  %v1056 = vunpack.c.l.b16 %v104
  %v1057 = vunpack.c.l.b16 %v105
  %v1058 = vunpack.c.l.b16 %v106
  %v1059 = vunpack.c.l.b16 %v107
  %v1060 = vunpack.c.l.b16 %v108
  %v1061 = vunpack.c.l.b16 %v109
  %v1062 = vunpack.c.l.b16 %v110
  %v1063 = vunpack.c.l.b16 %v111
  %v1064 = vunpack.c.l.b16 %v112
  %v1065 = vunpack.c.l.b16 %v113
  %v1066 = vunpack.c.l.b16 %v114
  %v1067 = vunpack.c.l.b16 %v115
  %v1068 = vunpack.c.l.b16 %v116
  %v1069 = vunpack.c.l.b16 %v117
  %v1070 = vunpack.c.l.b16 %v118
  %v1071 = vunpack.c.l.b16 %v119
  %v1072 = vunpack.c.l.b16 %v120
  %v1073 = vunpack.c.l.b16 %v121
  %v1074 = vunpack.c.l.b16 %v122
  %v1075 = vunpack.c.l.b16 %v123
  %v1076 = vunpack.c.l.b16 %v124
  %v1077 = vunpack.c.l.b16 %v125
  %v1078 = vunpack.c.l.b16 %v126
  %v1079 = vunpack.c.l.b16 %v127
  %v1080 = vunpack.c.l.b16 %v128
  %v1081 = vunpack.c.l.b16 %v129
  %v1082 = vunpack.c.l.b16 %v130
  %v1083 = vunpack.c.l.b16 %v131
  %v1084 = vunpack.c.l.b16 %v132
  %v1085 = vunpack.c.l.b16 %v133
  %v1086 = vunpack.c.l.b16 %v134
  %v1087 = vunpack.c.l.b16 %v135
  %v1088 = vunpack.c.l.b16 %v136
  %v1089 = vunpack.c.l.b16 %v137
  %v1090 = vunpack.c.l.b16 %v138
  %v1091 = vunpack.c.l.b16 %v139
  %v1092 = vunpack.c.l.b16 %v140
  %v1093 = vunpack.c.l.b16 %v141
  %v1094 = vunpack.c.l.b16 %v142
  %v1095 = vunpack.c.l.b16 %v143
  %v1096 = vunpack.c.l.b16 %v144
  %v1097 = vunpack.c.l.b16 %v145
  %v1098 = vunpack.c.l.b16 %v146
  %v1099 = vunpack.c.l.b16 %v147
  %v1100 = vunpack.c.l.b16 %v148
  %v1101 = vunpack.c.l.b16 %v149
  %v1102 = vunpack.c.l.b16 %v150
  %v1103 = vunpack.c.l.b16 %v151
  %v1104 = vunpack.c.l.b16 %v152
  %v1105 = vunpack.c.l.b16 %v153
  %v1106 = vunpack.c.l.b16 %v154
  %v1107 = vunpack.c.l.b16 %v155
  %v1108 = vunpack.c.l.b16 %v156
  %v1109 = vunpack.c.l.b16 %v157
  %v1110 = vunpack.c.l.b16 %v158
  %v1111 = vunpack.c.l.b16 %v159
  %v1112 = vunpack.c.l.b16 %v160
  %v1113 = vunpack.c.l.b16 %v161
  %v1114 = vunpack.c.l.b16 %v162
  %v1115 = vunpack.c.l.b16 %v163
  %v1116 = vunpack.c.l.b16 %v164
  %v1117 = vunpack.c.l.b16 %v165
  %v1118 = vunpack.c.l.b16 %v166
  %v1119 = vunpack.c.l.b16 %v167
  %v1120 = vunpack.c.l.b16 %v168
  %v1121 = vunpack.c.l.b16 %v169
  %v1122 = vpack.c.b16 %v995, %v994
  %v1123 = vpack.c.b16 %v997, %v996
  %v1124 = vpack.c.b16 %v999, %v998
  %v1125 = vpack.c.b16 %v1001, %v1000
  %v1126 = vpack.c.b16 %v1003, %v1002
  %v1127 = vpack.c.b16 %v1005, %v1004
  %v1128 = vpack.c.b16 %v1007, %v1006
  %v1129 = vpack.c.b16 %v1009, %v1008
  %v1130 = vpack.c.b16 %v1011, %v1010
  %v1131 = vpack.c.b16 %v1013, %v1012
  %v1132 = vpack.c.b16 %v1015, %v1014
  %v1133 = vpack.c.b16 %v1017, %v1016
  %v1134 = vpack.c.b16 %v1019, %v1018
  %v1135 = vpack.c.b16 %v1021, %v1020
  %v1136 = vpack.c.b16 %v1023, %v1022
  %v1137 = vpack.c.b16 %v1025, %v1024
  %v1138 = vpack.c.b16 %v1027, %v1026
  %v1139 = vpack.c.b16 %v1029, %v1028
  %v1140 = vpack.c.b16 %v1031, %v1030
  %v1141 = vpack.c.b16 %v1033, %v1032
  %v1142 = vpack.c.b16 %v1035, %v1034
  %v1143 = vpack.c.b16 %v1037, %v1036
  %v1144 = vpack.c.b16 %v1039, %v1038
  %v1145 = vpack.c.b16 %v1041, %v1040
  %v1146 = vpack.c.b16 %v1043, %v1042
  %v1147 = vpack.c.b16 %v1045, %v1044
  %v1148 = vpack.c.b16 %v1047, %v1046
  %v1149 = vpack.c.b16 %v1049, %v1048
  %v1150 = vpack.c.b16 %v1051, %v1050
  %v1151 = vpack.c.b16 %v1053, %v1052
  %v1152 = vpack.c.b16 %v1055, %v1054
  %v1153 = vpack.c.b16 %v1057, %v1056
  %v1154 = vpack.c.b16 %v1059, %v1058
  %v1155 = vpack.c.b16 %v1061, %v1060
  %v1156 = vpack.c.b16 %v1063, %v1062
  %v1157 = vpack.c.b16 %v1065, %v1064
  %v1158 = vpack.c.b16 %v1067, %v1066
  %v1159 = vpack.c.b16 %v1069, %v1068
  %v1160 = vpack.c.b16 %v1071, %v1070
  %v1161 = vpack.c.b16 %v1073, %v1072
  %v1162 = vpack.c.b16 %v1075, %v1074
  %v1163 = vpack.c.b16 %v1077, %v1076
  %v1164 = vpack.c.b16 %v1079, %v1078
  %v1165 = vpack.c.b16 %v1081, %v1080
  %v1166 = vpack.c.b16 %v1083, %v1082
  %v1167 = vpack.c.b16 %v1085, %v1084
  %v1168 = vpack.c.b16 %v1087, %v1086
  %v1169 = vpack.c.b16 %v1089, %v1088
  %v1170 = vpack.c.b16 %v1091, %v1090
  %v1171 = vpack.c.b16 %v1093, %v1092
  %v1172 = vpack.c.b16 %v1095, %v1094
  %v1173 = vpack.c.b16 %v1097, %v1096
  %v1174 = vpack.c.b16 %v1099, %v1098
  %v1175 = vpack.c.b16 %v1101, %v1100
  %v1176 = vpack.c.b16 %v1103, %v1102
  %v1177 = vpack.c.b16 %v1105, %v1104
  %v1178 = vpack.c.b16 %v1107, %v1106
  %v1179 = vpack.c.b16 %v1109, %v1108
  %v1180 = vpack.c.b16 %v1111, %v1110
  %v1181 = vpack.c.b16 %v1113, %v1112
  %v1182 = vpack.c.b16 %v1115, %v1114
  %v1183 = vpack.c.b16 %v1117, %v1116
  %v1184 = vpack.c.b16 %v1119, %v1118
  %v1185 = vpack.c.b16 %v1121, %v1120
  %1250 = vmatprep.subr.bf16.mxu0 0
  %1251 = vmatpush1.bf16.msra.mxu0 %v1122
  %1252 = vmatprep.subr.bf16.mxu0 0
  %1253 = vmatpush1.bf16.msra.mxu0 %v1123
  %1254 = vmatprep.subr.bf16.mxu0 0
  %1255 = vmatpush1.bf16.msra.mxu0 %v1124
  %1256 = vmatprep.subr.bf16.mxu0 0
  %1257 = vmatpush1.bf16.msra.mxu0 %v1125
  %1258 = vmatprep.subr.bf16.mxu0 0
  %1259 = vmatpush1.bf16.msra.mxu0 %v1126
  %1260 = vmatprep.subr.bf16.mxu0 0
  %1261 = vmatpush1.bf16.msra.mxu0 %v1127
  %1262 = vmatprep.subr.bf16.mxu0 0
  %1263 = vmatpush1.bf16.msra.mxu0 %v1128
  %1264 = vmatprep.subr.bf16.mxu0 0
  %1265 = vmatpush1.bf16.msra.mxu0 %v1129
  %1266 = vmatprep.subr.bf16.mxu0 0
  %1267 = vmatpush1.bf16.msra.mxu0 %v1130
  %1268 = vmatprep.subr.bf16.mxu0 0
  %1269 = vmatpush1.bf16.msra.mxu0 %v1131
  %1270 = vmatprep.subr.bf16.mxu0 0
  %1271 = vmatpush1.bf16.msra.mxu0 %v1132
  %1272 = vmatprep.subr.bf16.mxu0 0
  %1273 = vmatpush1.bf16.msra.mxu0 %v1133
  %1274 = vmatprep.subr.bf16.mxu0 0
  %1275 = vmatpush1.bf16.msra.mxu0 %v1134
  %1276 = vmatprep.subr.bf16.mxu0 0
  %1277 = vmatpush1.bf16.msra.mxu0 %v1135
  %1278 = vmatprep.subr.bf16.mxu0 0
  %1279 = vmatpush1.bf16.msra.mxu0 %v1136
  %1280 = vmatprep.subr.bf16.mxu0 0
  %1281 = vmatpush1.bf16.msra.mxu0 %v1137
  %1282 = vmatprep.mubr.bf16.mxu0 %v35
  %1283 = vmatmul.mubr.bf16.gmra.mrb[0].mxu0 %v34
  %v1284 = vpop.f32.mrb[0].mxu0
  %v1285 = vadd.f32 %v861, %v1284
  %v1286 = vpop.f32.mrb[0].mxu0
  %v1287 = vpop.f32.mrb[0].mxu0
  %v1288 = vpop.f32.mrb[0].mxu0
  %1289 = vdwg.mxu0
  %1290 = vmatprep.subr.bf16.mxu0 0
  %1291 = vmatpush1.bf16.msra.mxu0 %v1138
  %1292 = vmatprep.subr.bf16.mxu0 0
  %1293 = vmatpush1.bf16.msra.mxu0 %v1139
  %1294 = vmatprep.subr.bf16.mxu0 0
  %1295 = vmatpush1.bf16.msra.mxu0 %v1140
  %1296 = vmatprep.subr.bf16.mxu0 0
  %1297 = vmatpush1.bf16.msra.mxu0 %v1141
  %1298 = vmatprep.subr.bf16.mxu0 0
  %1299 = vmatpush1.bf16.msra.mxu0 %v1142
  %1300 = vmatprep.subr.bf16.mxu0 0
  %1301 = vmatpush1.bf16.msra.mxu0 %v1143
  %1302 = vmatprep.subr.bf16.mxu0 0
  %1303 = vmatpush1.bf16.msra.mxu0 %v1144
  %1304 = vmatprep.subr.bf16.mxu0 0
  %1305 = vmatpush1.bf16.msra.mxu0 %v1145
  %1306 = vmatprep.subr.bf16.mxu0 0
  %1307 = vmatpush1.bf16.msra.mxu0 %v1146
  %1308 = vmatprep.subr.bf16.mxu0 0
  %1309 = vmatpush1.bf16.msra.mxu0 %v1147
  %1310 = vmatprep.subr.bf16.mxu0 0
  %1311 = vmatpush1.bf16.msra.mxu0 %v1148
  %1312 = vmatprep.subr.bf16.mxu0 0
  %1313 = vmatpush1.bf16.msra.mxu0 %v1149
  %1314 = vmatprep.subr.bf16.mxu0 0
  %1315 = vmatpush1.bf16.msra.mxu0 %v1150
  %1316 = vmatprep.subr.bf16.mxu0 0
  %1317 = vmatpush1.bf16.msra.mxu0 %v1151
  %1318 = vmatprep.subr.bf16.mxu0 0
  %1319 = vmatpush1.bf16.msra.mxu0 %v1152
  %1320 = vmatprep.subr.bf16.mxu0 0
  %1321 = vmatpush1.bf16.msra.mxu0 %v1153
  %1322 = vmatprep.mubr.bf16.mxu0 %v37
  %1323 = vmatmul.mubr.bf16.gmra.mrb[0].mxu0 %v36
  %v1324 = vpop.f32.mrb[0].mxu0
  %v1325 = vadd.f32 %v1285, %v1324
  %v1326 = vpop.f32.mrb[0].mxu0
  %v1327 = vpop.f32.mrb[0].mxu0
  %v1328 = vpop.f32.mrb[0].mxu0
  %1329 = vdwg.mxu0
  %1330 = vmatprep.subr.bf16.mxu0 0
  %1331 = vmatpush1.bf16.msra.mxu0 %v1154
  %1332 = vmatprep.subr.bf16.mxu0 0
  %1333 = vmatpush1.bf16.msra.mxu0 %v1155
  %1334 = vmatprep.subr.bf16.mxu0 0
  %1335 = vmatpush1.bf16.msra.mxu0 %v1156
  %1336 = vmatprep.subr.bf16.mxu0 0
  %1337 = vmatpush1.bf16.msra.mxu0 %v1157
  %1338 = vmatprep.subr.bf16.mxu0 0
  %1339 = vmatpush1.bf16.msra.mxu0 %v1158
  %1340 = vmatprep.subr.bf16.mxu0 0
  %1341 = vmatpush1.bf16.msra.mxu0 %v1159
  %1342 = vmatprep.subr.bf16.mxu0 0
  %1343 = vmatpush1.bf16.msra.mxu0 %v1160
  %1344 = vmatprep.subr.bf16.mxu0 0
  %1345 = vmatpush1.bf16.msra.mxu0 %v1161
  %1346 = vmatprep.subr.bf16.mxu0 0
  %1347 = vmatpush1.bf16.msra.mxu0 %v1162
  %1348 = vmatprep.subr.bf16.mxu0 0
  %1349 = vmatpush1.bf16.msra.mxu0 %v1163
  %1350 = vmatprep.subr.bf16.mxu0 0
  %1351 = vmatpush1.bf16.msra.mxu0 %v1164
  %1352 = vmatprep.subr.bf16.mxu0 0
  %1353 = vmatpush1.bf16.msra.mxu0 %v1165
  %1354 = vmatprep.subr.bf16.mxu0 0
  %1355 = vmatpush1.bf16.msra.mxu0 %v1166
  %1356 = vmatprep.subr.bf16.mxu0 0
  %1357 = vmatpush1.bf16.msra.mxu0 %v1167
  %1358 = vmatprep.subr.bf16.mxu0 0
  %1359 = vmatpush1.bf16.msra.mxu0 %v1168
  %1360 = vmatprep.subr.bf16.mxu0 0
  %1361 = vmatpush1.bf16.msra.mxu0 %v1169
  %1362 = vmatprep.mubr.bf16.mxu0 %v39
  %1363 = vmatmul.mubr.bf16.gmra.mrb[0].mxu0 %v38
  %v1364 = vpop.f32.mrb[0].mxu0
  %v1365 = vadd.f32 %v1325, %v1364
  %v1366 = vpop.f32.mrb[0].mxu0
  %v1367 = vpop.f32.mrb[0].mxu0
  %v1368 = vpop.f32.mrb[0].mxu0
  %1369 = vdwg.mxu0
  %1370 = vmatprep.subr.bf16.mxu0 0
  %1371 = vmatpush1.bf16.msra.mxu0 %v1170
  %1372 = vmatprep.subr.bf16.mxu0 0
  %1373 = vmatpush1.bf16.msra.mxu0 %v1171
  %1374 = vmatprep.subr.bf16.mxu0 0
  %1375 = vmatpush1.bf16.msra.mxu0 %v1172
  %1376 = vmatprep.subr.bf16.mxu0 0
  %1377 = vmatpush1.bf16.msra.mxu0 %v1173
  %1378 = vmatprep.subr.bf16.mxu0 0
  %1379 = vmatpush1.bf16.msra.mxu0 %v1174
  %1380 = vmatprep.subr.bf16.mxu0 0
  %1381 = vmatpush1.bf16.msra.mxu0 %v1175
  %1382 = vmatprep.subr.bf16.mxu0 0
  %1383 = vmatpush1.bf16.msra.mxu0 %v1176
  %1384 = vmatprep.subr.bf16.mxu0 0
  %1385 = vmatpush1.bf16.msra.mxu0 %v1177
  %1386 = vmatprep.subr.bf16.mxu0 0
  %1387 = vmatpush1.bf16.msra.mxu0 %v1178
  %1388 = vmatprep.subr.bf16.mxu0 0
  %1389 = vmatpush1.bf16.msra.mxu0 %v1179
  %1390 = vmatprep.subr.bf16.mxu0 0
  %1391 = vmatpush1.bf16.msra.mxu0 %v1180
  %1392 = vmatprep.subr.bf16.mxu0 0
  %1393 = vmatpush1.bf16.msra.mxu0 %v1181
  %1394 = vmatprep.subr.bf16.mxu0 0
  %1395 = vmatpush1.bf16.msra.mxu0 %v1182
  %1396 = vmatprep.subr.bf16.mxu0 0
  %1397 = vmatpush1.bf16.msra.mxu0 %v1183
  %1398 = vmatprep.subr.bf16.mxu0 0
  %1399 = vmatpush1.bf16.msra.mxu0 %v1184
  %1400 = vmatprep.subr.bf16.mxu0 0
  %1401 = vmatpush1.bf16.msra.mxu0 %v1185
  %1402 = vmatprep.mubr.bf16.mxu0 %v41
  %1403 = vmatmul.mubr.bf16.gmra.mrb[0].mxu0 %v40
  %v1404 = vpop.f32.mrb[0].mxu0
  %v1405 = vadd.f32 %v1365, %v1404
  %v1406 = vpop.f32.mrb[0].mxu0
  %v1407 = vpop.f32.mrb[0].mxu0
  %v1408 = vpop.f32.mrb[0].mxu0
  %1409 = vdwg.mxu0
  %v1410 = vld [vmem:[%s0 + $0x80] sm:$0xff]
  %v1411 = vld [vmem:[%s0 + $0x88] sm:$0xff]
  %v1412 = vld [vmem:[%s0 + $0x90] sm:$0xff]
  %v1413 = vld [vmem:[%s0 + $0x98] sm:$0xff]
  %v1414 = vld [vmem:[%s0 + $0xa0] sm:$0xff]
  %v1415 = vld [vmem:[%s0 + $0xa8] sm:$0xff]
  %v1416 = vld [vmem:[%s0 + $0xb0] sm:$0xff]
  %v1417 = vld [vmem:[%s0 + $0xb8] sm:$0xff]
  %v1418 = vcvt.s32.f32 %v1410
  %v1419 = vcvt.s32.f32 %v1411
  %v1420 = vcvt.s32.f32 %v1412
  %v1421 = vcvt.s32.f32 %v1413
  %v1422 = vcvt.s32.f32 %v1414
  %v1423 = vcvt.s32.f32 %v1415
  %v1424 = vcvt.s32.f32 %v1416
  %v1425 = vcvt.s32.f32 %v1417
  %v1426 = vpack.c.bf16 %v1418, %v1418
  %v1427 = vpack.c.bf16 %v1419, %v1419
  %v1428 = vpack.c.bf16 %v1420, %v1420
  %v1429 = vpack.c.bf16 %v1421, %v1421
  %v1430 = vpack.c.bf16 %v1422, %v1422
  %v1431 = vpack.c.bf16 %v1423, %v1423
  %v1432 = vpack.c.bf16 %v1424, %v1424
  %v1433 = vpack.c.bf16 %v1425, %v1425
  %v1434 = vld [vmem:[%s2 + $0x400] sm:$0xf]
  %v1435 = vld [vmem:[%s2 + $0x404] sm:$0xf]
  %v1436 = vld [vmem:[%s2 + $0x408] sm:$0xf]
  %v1437 = vld [vmem:[%s2 + $0x40c] sm:$0xf]
  %v1438 = vld [vmem:[%s2 + $0x410] sm:$0xf]
  %v1439 = vld [vmem:[%s2 + $0x414] sm:$0xf]
  %v1440 = vld [vmem:[%s2 + $0x418] sm:$0xf]
  %v1441 = vld [vmem:[%s2 + $0x41c] sm:$0xf]
  %v1442 = vld [vmem:[%s2 + $0x420] sm:$0xf]
  %v1443 = vld [vmem:[%s2 + $0x424] sm:$0xf]
  %v1444 = vld [vmem:[%s2 + $0x428] sm:$0xf]
  %v1445 = vld [vmem:[%s2 + $0x42c] sm:$0xf]
  %v1446 = vld [vmem:[%s2 + $0x430] sm:$0xf]
  %v1447 = vld [vmem:[%s2 + $0x434] sm:$0xf]
  %v1448 = vld [vmem:[%s2 + $0x438] sm:$0xf]
  %v1449 = vld [vmem:[%s2 + $0x43c] sm:$0xf]
  %v1450 = vld [vmem:[%s2 + $0x440] sm:$0xf]
  %v1451 = vld [vmem:[%s2 + $0x444] sm:$0xf]
  %v1452 = vld [vmem:[%s2 + $0x448] sm:$0xf]
  %v1453 = vld [vmem:[%s2 + $0x44c] sm:$0xf]
  %v1454 = vld [vmem:[%s2 + $0x450] sm:$0xf]
  %v1455 = vld [vmem:[%s2 + $0x454] sm:$0xf]
  %v1456 = vld [vmem:[%s2 + $0x458] sm:$0xf]
  %v1457 = vld [vmem:[%s2 + $0x45c] sm:$0xf]
  %v1458 = vld [vmem:[%s2 + $0x460] sm:$0xf]
  %v1459 = vld [vmem:[%s2 + $0x464] sm:$0xf]
  %v1460 = vld [vmem:[%s2 + $0x468] sm:$0xf]
  %v1461 = vld [vmem:[%s2 + $0x46c] sm:$0xf]
  %v1462 = vld [vmem:[%s2 + $0x470] sm:$0xf]
  %v1463 = vld [vmem:[%s2 + $0x474] sm:$0xf]
  %v1464 = vld [vmem:[%s2 + $0x478] sm:$0xf]
  %v1465 = vld [vmem:[%s2 + $0x47c] sm:$0xf]
  %v1466 = vld [vmem:[%s2 + $0x480] sm:$0xf]
  %v1467 = vld [vmem:[%s2 + $0x484] sm:$0xf]
  %v1468 = vld [vmem:[%s2 + $0x488] sm:$0xf]
  %v1469 = vld [vmem:[%s2 + $0x48c] sm:$0xf]
  %v1470 = vld [vmem:[%s2 + $0x490] sm:$0xf]
  %v1471 = vld [vmem:[%s2 + $0x494] sm:$0xf]
  %v1472 = vld [vmem:[%s2 + $0x498] sm:$0xf]
  %v1473 = vld [vmem:[%s2 + $0x49c] sm:$0xf]
  %v1474 = vld [vmem:[%s2 + $0x4a0] sm:$0xf]
  %v1475 = vld [vmem:[%s2 + $0x4a4] sm:$0xf]
  %v1476 = vld [vmem:[%s2 + $0x4a8] sm:$0xf]
  %v1477 = vld [vmem:[%s2 + $0x4ac] sm:$0xf]
  %v1478 = vld [vmem:[%s2 + $0x4b0] sm:$0xf]
  %v1479 = vld [vmem:[%s2 + $0x4b4] sm:$0xf]
  %v1480 = vld [vmem:[%s2 + $0x4b8] sm:$0xf]
  %v1481 = vld [vmem:[%s2 + $0x4bc] sm:$0xf]
  %v1482 = vld [vmem:[%s2 + $0x4c0] sm:$0xf]
  %v1483 = vld [vmem:[%s2 + $0x4c4] sm:$0xf]
  %v1484 = vld [vmem:[%s2 + $0x4c8] sm:$0xf]
  %v1485 = vld [vmem:[%s2 + $0x4cc] sm:$0xf]
  %v1486 = vld [vmem:[%s2 + $0x4d0] sm:$0xf]
  %v1487 = vld [vmem:[%s2 + $0x4d4] sm:$0xf]
  %v1488 = vld [vmem:[%s2 + $0x4d8] sm:$0xf]
  %v1489 = vld [vmem:[%s2 + $0x4dc] sm:$0xf]
  %v1490 = vld [vmem:[%s2 + $0x4e0] sm:$0xf]
  %v1491 = vld [vmem:[%s2 + $0x4e4] sm:$0xf]
  %v1492 = vld [vmem:[%s2 + $0x4e8] sm:$0xf]
  %v1493 = vld [vmem:[%s2 + $0x4ec] sm:$0xf]
  %v1494 = vld [vmem:[%s2 + $0x4f0] sm:$0xf]
  %v1495 = vld [vmem:[%s2 + $0x4f4] sm:$0xf]
  %v1496 = vld [vmem:[%s2 + $0x4f8] sm:$0xf]
  %v1497 = vld [vmem:[%s2 + $0x4fc] sm:$0xf]
  %v1498 = vld [vmem:[%s2 + $0x500] sm:$0xf]
  %v1499 = vld [vmem:[%s2 + $0x504] sm:$0xf]
  %v1500 = vld [vmem:[%s2 + $0x508] sm:$0xf]
  %v1501 = vld [vmem:[%s2 + $0x50c] sm:$0xf]
  %v1502 = vld [vmem:[%s2 + $0x510] sm:$0xf]
  %v1503 = vld [vmem:[%s2 + $0x514] sm:$0xf]
  %v1504 = vld [vmem:[%s2 + $0x518] sm:$0xf]
  %v1505 = vld [vmem:[%s2 + $0x51c] sm:$0xf]
  %v1506 = vld [vmem:[%s2 + $0x520] sm:$0xf]
  %v1507 = vld [vmem:[%s2 + $0x524] sm:$0xf]
  %v1508 = vld [vmem:[%s2 + $0x528] sm:$0xf]
  %v1509 = vld [vmem:[%s2 + $0x52c] sm:$0xf]
  %v1510 = vld [vmem:[%s2 + $0x530] sm:$0xf]
  %v1511 = vld [vmem:[%s2 + $0x534] sm:$0xf]
  %v1512 = vld [vmem:[%s2 + $0x538] sm:$0xf]
  %v1513 = vld [vmem:[%s2 + $0x53c] sm:$0xf]
  %v1514 = vld [vmem:[%s2 + $0x540] sm:$0xf]
  %v1515 = vld [vmem:[%s2 + $0x544] sm:$0xf]
  %v1516 = vld [vmem:[%s2 + $0x548] sm:$0xf]
  %v1517 = vld [vmem:[%s2 + $0x54c] sm:$0xf]
  %v1518 = vld [vmem:[%s2 + $0x550] sm:$0xf]
  %v1519 = vld [vmem:[%s2 + $0x554] sm:$0xf]
  %v1520 = vld [vmem:[%s2 + $0x558] sm:$0xf]
  %v1521 = vld [vmem:[%s2 + $0x55c] sm:$0xf]
  %v1522 = vld [vmem:[%s2 + $0x560] sm:$0xf]
  %v1523 = vld [vmem:[%s2 + $0x564] sm:$0xf]
  %v1524 = vld [vmem:[%s2 + $0x568] sm:$0xf]
  %v1525 = vld [vmem:[%s2 + $0x56c] sm:$0xf]
  %v1526 = vld [vmem:[%s2 + $0x570] sm:$0xf]
  %v1527 = vld [vmem:[%s2 + $0x574] sm:$0xf]
  %v1528 = vld [vmem:[%s2 + $0x578] sm:$0xf]
  %v1529 = vld [vmem:[%s2 + $0x57c] sm:$0xf]
  %v1530 = vld [vmem:[%s2 + $0x580] sm:$0xf]
  %v1531 = vld [vmem:[%s2 + $0x584] sm:$0xf]
  %v1532 = vld [vmem:[%s2 + $0x588] sm:$0xf]
  %v1533 = vld [vmem:[%s2 + $0x58c] sm:$0xf]
  %v1534 = vld [vmem:[%s2 + $0x590] sm:$0xf]
  %v1535 = vld [vmem:[%s2 + $0x594] sm:$0xf]
  %v1536 = vld [vmem:[%s2 + $0x598] sm:$0xf]
  %v1537 = vld [vmem:[%s2 + $0x59c] sm:$0xf]
  %v1538 = vld [vmem:[%s2 + $0x5a0] sm:$0xf]
  %v1539 = vld [vmem:[%s2 + $0x5a4] sm:$0xf]
  %v1540 = vld [vmem:[%s2 + $0x5a8] sm:$0xf]
  %v1541 = vld [vmem:[%s2 + $0x5ac] sm:$0xf]
  %v1542 = vld [vmem:[%s2 + $0x5b0] sm:$0xf]
  %v1543 = vld [vmem:[%s2 + $0x5b4] sm:$0xf]
  %v1544 = vld [vmem:[%s2 + $0x5b8] sm:$0xf]
  %v1545 = vld [vmem:[%s2 + $0x5bc] sm:$0xf]
  %v1546 = vld [vmem:[%s2 + $0x5c0] sm:$0xf]
  %v1547 = vld [vmem:[%s2 + $0x5c4] sm:$0xf]
  %v1548 = vld [vmem:[%s2 + $0x5c8] sm:$0xf]
  %v1549 = vld [vmem:[%s2 + $0x5cc] sm:$0xf]
  %v1550 = vld [vmem:[%s2 + $0x5d0] sm:$0xf]
  %v1551 = vld [vmem:[%s2 + $0x5d4] sm:$0xf]
  %v1552 = vld [vmem:[%s2 + $0x5d8] sm:$0xf]
  %v1553 = vld [vmem:[%s2 + $0x5dc] sm:$0xf]
  %v1554 = vld [vmem:[%s2 + $0x5e0] sm:$0xf]
  %v1555 = vld [vmem:[%s2 + $0x5e4] sm:$0xf]
  %v1556 = vld [vmem:[%s2 + $0x5e8] sm:$0xf]
  %v1557 = vld [vmem:[%s2 + $0x5ec] sm:$0xf]
  %v1558 = vld [vmem:[%s2 + $0x5f0] sm:$0xf]
  %v1559 = vld [vmem:[%s2 + $0x5f4] sm:$0xf]
  %v1560 = vld [vmem:[%s2 + $0x5f8] sm:$0xf]
  %v1561 = vld [vmem:[%s2 + $0x5fc] sm:$0xf]
  %v1690 = vunpack.c.l.b16 %v1434
  %v1691 = vunpack.c.l.b16 %v1435
  %v1692 = vunpack.c.l.b16 %v1436
  %v1693 = vunpack.c.l.b16 %v1437
  %v1694 = vunpack.c.l.b16 %v1438
  %v1695 = vunpack.c.l.b16 %v1439
  %v1696 = vunpack.c.l.b16 %v1440
  %v1697 = vunpack.c.l.b16 %v1441
  %v1698 = vunpack.c.l.b16 %v1442
  %v1699 = vunpack.c.l.b16 %v1443
  %v1700 = vunpack.c.l.b16 %v1444
  %v1701 = vunpack.c.l.b16 %v1445
  %v1702 = vunpack.c.l.b16 %v1446
  %v1703 = vunpack.c.l.b16 %v1447
  %v1704 = vunpack.c.l.b16 %v1448
  %v1705 = vunpack.c.l.b16 %v1449
  %v1706 = vunpack.c.l.b16 %v1450
  %v1707 = vunpack.c.l.b16 %v1451
  %v1708 = vunpack.c.l.b16 %v1452
  %v1709 = vunpack.c.l.b16 %v1453
  %v1710 = vunpack.c.l.b16 %v1454
  %v1711 = vunpack.c.l.b16 %v1455
  %v1712 = vunpack.c.l.b16 %v1456
  %v1713 = vunpack.c.l.b16 %v1457
  %v1714 = vunpack.c.l.b16 %v1458
  %v1715 = vunpack.c.l.b16 %v1459
  %v1716 = vunpack.c.l.b16 %v1460
  %v1717 = vunpack.c.l.b16 %v1461
  %v1718 = vunpack.c.l.b16 %v1462
  %v1719 = vunpack.c.l.b16 %v1463
  %v1720 = vunpack.c.l.b16 %v1464
  %v1721 = vunpack.c.l.b16 %v1465
  %v1722 = vunpack.c.l.b16 %v1466
  %v1723 = vunpack.c.l.b16 %v1467
  %v1724 = vunpack.c.l.b16 %v1468
  %v1725 = vunpack.c.l.b16 %v1469
  %v1726 = vunpack.c.l.b16 %v1470
  %v1727 = vunpack.c.l.b16 %v1471
  %v1728 = vunpack.c.l.b16 %v1472
  %v1729 = vunpack.c.l.b16 %v1473
  %v1730 = vunpack.c.l.b16 %v1474
  %v1731 = vunpack.c.l.b16 %v1475
  %v1732 = vunpack.c.l.b16 %v1476
  %v1733 = vunpack.c.l.b16 %v1477
  %v1734 = vunpack.c.l.b16 %v1478
  %v1735 = vunpack.c.l.b16 %v1479
  %v1736 = vunpack.c.l.b16 %v1480
  %v1737 = vunpack.c.l.b16 %v1481
  %v1738 = vunpack.c.l.b16 %v1482
  %v1739 = vunpack.c.l.b16 %v1483
  %v1740 = vunpack.c.l.b16 %v1484
  %v1741 = vunpack.c.l.b16 %v1485
  %v1742 = vunpack.c.l.b16 %v1486
  %v1743 = vunpack.c.l.b16 %v1487
  %v1744 = vunpack.c.l.b16 %v1488
  %v1745 = vunpack.c.l.b16 %v1489
  %v1746 = vunpack.c.l.b16 %v1490
  %v1747 = vunpack.c.l.b16 %v1491
  %v1748 = vunpack.c.l.b16 %v1492
  %v1749 = vunpack.c.l.b16 %v1493
  %v1750 = vunpack.c.l.b16 %v1494
  %v1751 = vunpack.c.l.b16 %v1495
  %v1752 = vunpack.c.l.b16 %v1496
  %v1753 = vunpack.c.l.b16 %v1497
  %v1754 = vunpack.c.l.b16 %v1498
  %v1755 = vunpack.c.l.b16 %v1499
  %v1756 = vunpack.c.l.b16 %v1500
  %v1757 = vunpack.c.l.b16 %v1501
  %v1758 = vunpack.c.l.b16 %v1502
  %v1759 = vunpack.c.l.b16 %v1503
  %v1760 = vunpack.c.l.b16 %v1504
  %v1761 = vunpack.c.l.b16 %v1505
  %v1762 = vunpack.c.l.b16 %v1506
  %v1763 = vunpack.c.l.b16 %v1507
  %v1764 = vunpack.c.l.b16 %v1508
  %v1765 = vunpack.c.l.b16 %v1509
  %v1766 = vunpack.c.l.b16 %v1510
  %v1767 = vunpack.c.l.b16 %v1511
  %v1768 = vunpack.c.l.b16 %v1512
  %v1769 = vunpack.c.l.b16 %v1513
  %v1770 = vunpack.c.l.b16 %v1514
  %v1771 = vunpack.c.l.b16 %v1515
  %v1772 = vunpack.c.l.b16 %v1516
  %v1773 = vunpack.c.l.b16 %v1517
  %v1774 = vunpack.c.l.b16 %v1518
  %v1775 = vunpack.c.l.b16 %v1519
  %v1776 = vunpack.c.l.b16 %v1520
  %v1777 = vunpack.c.l.b16 %v1521
  %v1778 = vunpack.c.l.b16 %v1522
  %v1779 = vunpack.c.l.b16 %v1523
  %v1780 = vunpack.c.l.b16 %v1524
  %v1781 = vunpack.c.l.b16 %v1525
  %v1782 = vunpack.c.l.b16 %v1526
  %v1783 = vunpack.c.l.b16 %v1527
  %v1784 = vunpack.c.l.b16 %v1528
  %v1785 = vunpack.c.l.b16 %v1529
  %v1786 = vunpack.c.l.b16 %v1530
  %v1787 = vunpack.c.l.b16 %v1531
  %v1788 = vunpack.c.l.b16 %v1532
  %v1789 = vunpack.c.l.b16 %v1533
  %v1790 = vunpack.c.l.b16 %v1534
  %v1791 = vunpack.c.l.b16 %v1535
  %v1792 = vunpack.c.l.b16 %v1536
  %v1793 = vunpack.c.l.b16 %v1537
  %v1794 = vunpack.c.l.b16 %v1538
  %v1795 = vunpack.c.l.b16 %v1539
  %v1796 = vunpack.c.l.b16 %v1540
  %v1797 = vunpack.c.l.b16 %v1541
  %v1798 = vunpack.c.l.b16 %v1542
  %v1799 = vunpack.c.l.b16 %v1543
  %v1800 = vunpack.c.l.b16 %v1544
  %v1801 = vunpack.c.l.b16 %v1545
  %v1802 = vunpack.c.l.b16 %v1546
  %v1803 = vunpack.c.l.b16 %v1547
  %v1804 = vunpack.c.l.b16 %v1548
  %v1805 = vunpack.c.l.b16 %v1549
  %v1806 = vunpack.c.l.b16 %v1550
  %v1807 = vunpack.c.l.b16 %v1551
  %v1808 = vunpack.c.l.b16 %v1552
  %v1809 = vunpack.c.l.b16 %v1553
  %v1810 = vunpack.c.l.b16 %v1554
  %v1811 = vunpack.c.l.b16 %v1555
  %v1812 = vunpack.c.l.b16 %v1556
  %v1813 = vunpack.c.l.b16 %v1557
  %v1814 = vunpack.c.l.b16 %v1558
  %v1815 = vunpack.c.l.b16 %v1559
  %v1816 = vunpack.c.l.b16 %v1560
  %v1817 = vunpack.c.l.b16 %v1561
  %v1818 = vpack.c.b16 %v1691, %v1690
  %v1819 = vpack.c.b16 %v1693, %v1692
  %v1820 = vpack.c.b16 %v1695, %v1694
  %v1821 = vpack.c.b16 %v1697, %v1696
  %v1822 = vpack.c.b16 %v1699, %v1698
  %v1823 = vpack.c.b16 %v1701, %v1700
  %v1824 = vpack.c.b16 %v1703, %v1702
  %v1825 = vpack.c.b16 %v1705, %v1704
  %v1826 = vpack.c.b16 %v1707, %v1706
  %v1827 = vpack.c.b16 %v1709, %v1708
  %v1828 = vpack.c.b16 %v1711, %v1710
  %v1829 = vpack.c.b16 %v1713, %v1712
  %v1830 = vpack.c.b16 %v1715, %v1714
  %v1831 = vpack.c.b16 %v1717, %v1716
  %v1832 = vpack.c.b16 %v1719, %v1718
  %v1833 = vpack.c.b16 %v1721, %v1720
  %v1834 = vpack.c.b16 %v1723, %v1722
  %v1835 = vpack.c.b16 %v1725, %v1724
  %v1836 = vpack.c.b16 %v1727, %v1726
  %v1837 = vpack.c.b16 %v1729, %v1728
  %v1838 = vpack.c.b16 %v1731, %v1730
  %v1839 = vpack.c.b16 %v1733, %v1732
  %v1840 = vpack.c.b16 %v1735, %v1734
  %v1841 = vpack.c.b16 %v1737, %v1736
  %v1842 = vpack.c.b16 %v1739, %v1738
  %v1843 = vpack.c.b16 %v1741, %v1740
  %v1844 = vpack.c.b16 %v1743, %v1742
  %v1845 = vpack.c.b16 %v1745, %v1744
  %v1846 = vpack.c.b16 %v1747, %v1746
  %v1847 = vpack.c.b16 %v1749, %v1748
  %v1848 = vpack.c.b16 %v1751, %v1750
  %v1849 = vpack.c.b16 %v1753, %v1752
  %v1850 = vpack.c.b16 %v1755, %v1754
  %v1851 = vpack.c.b16 %v1757, %v1756
  %v1852 = vpack.c.b16 %v1759, %v1758
  %v1853 = vpack.c.b16 %v1761, %v1760
  %v1854 = vpack.c.b16 %v1763, %v1762
  %v1855 = vpack.c.b16 %v1765, %v1764
  %v1856 = vpack.c.b16 %v1767, %v1766
  %v1857 = vpack.c.b16 %v1769, %v1768
  %v1858 = vpack.c.b16 %v1771, %v1770
  %v1859 = vpack.c.b16 %v1773, %v1772
  %v1860 = vpack.c.b16 %v1775, %v1774
  %v1861 = vpack.c.b16 %v1777, %v1776
  %v1862 = vpack.c.b16 %v1779, %v1778
  %v1863 = vpack.c.b16 %v1781, %v1780
  %v1864 = vpack.c.b16 %v1783, %v1782
  %v1865 = vpack.c.b16 %v1785, %v1784
  %v1866 = vpack.c.b16 %v1787, %v1786
  %v1867 = vpack.c.b16 %v1789, %v1788
  %v1868 = vpack.c.b16 %v1791, %v1790
  %v1869 = vpack.c.b16 %v1793, %v1792
  %v1870 = vpack.c.b16 %v1795, %v1794
  %v1871 = vpack.c.b16 %v1797, %v1796
  %v1872 = vpack.c.b16 %v1799, %v1798
  %v1873 = vpack.c.b16 %v1801, %v1800
  %v1874 = vpack.c.b16 %v1803, %v1802
  %v1875 = vpack.c.b16 %v1805, %v1804
  %v1876 = vpack.c.b16 %v1807, %v1806
  %v1877 = vpack.c.b16 %v1809, %v1808
  %v1878 = vpack.c.b16 %v1811, %v1810
  %v1879 = vpack.c.b16 %v1813, %v1812
  %v1880 = vpack.c.b16 %v1815, %v1814
  %v1881 = vpack.c.b16 %v1817, %v1816
  %1946 = vmatprep.subr.bf16.mxu0 0
  %1947 = vmatpush1.bf16.msra.mxu0 %v1818
  %1948 = vmatprep.subr.bf16.mxu0 0
  %1949 = vmatpush1.bf16.msra.mxu0 %v1819
  %1950 = vmatprep.subr.bf16.mxu0 0
  %1951 = vmatpush1.bf16.msra.mxu0 %v1820
  %1952 = vmatprep.subr.bf16.mxu0 0
  %1953 = vmatpush1.bf16.msra.mxu0 %v1821
  %1954 = vmatprep.subr.bf16.mxu0 0
  %1955 = vmatpush1.bf16.msra.mxu0 %v1822
  %1956 = vmatprep.subr.bf16.mxu0 0
  %1957 = vmatpush1.bf16.msra.mxu0 %v1823
  %1958 = vmatprep.subr.bf16.mxu0 0
  %1959 = vmatpush1.bf16.msra.mxu0 %v1824
  %1960 = vmatprep.subr.bf16.mxu0 0
  %1961 = vmatpush1.bf16.msra.mxu0 %v1825
  %1962 = vmatprep.subr.bf16.mxu0 0
  %1963 = vmatpush1.bf16.msra.mxu0 %v1826
  %1964 = vmatprep.subr.bf16.mxu0 0
  %1965 = vmatpush1.bf16.msra.mxu0 %v1827
  %1966 = vmatprep.subr.bf16.mxu0 0
  %1967 = vmatpush1.bf16.msra.mxu0 %v1828
  %1968 = vmatprep.subr.bf16.mxu0 0
  %1969 = vmatpush1.bf16.msra.mxu0 %v1829
  %1970 = vmatprep.subr.bf16.mxu0 0
  %1971 = vmatpush1.bf16.msra.mxu0 %v1830
  %1972 = vmatprep.subr.bf16.mxu0 0
  %1973 = vmatpush1.bf16.msra.mxu0 %v1831
  %1974 = vmatprep.subr.bf16.mxu0 0
  %1975 = vmatpush1.bf16.msra.mxu0 %v1832
  %1976 = vmatprep.subr.bf16.mxu0 0
  %1977 = vmatpush1.bf16.msra.mxu0 %v1833
  %1978 = vmatprep.mubr.bf16.mxu0 %v1427
  %1979 = vmatmul.mubr.bf16.gmra.mrb[0].mxu0 %v1426
  %v1980 = vpop.f32.mrb[0].mxu0
  %v1981 = vadd.f32 0.0, %v1980
  %v1982 = vpop.f32.mrb[0].mxu0
  %v1983 = vpop.f32.mrb[0].mxu0
  %v1984 = vpop.f32.mrb[0].mxu0
  %1985 = vdwg.mxu0
  %1986 = vmatprep.subr.bf16.mxu0 0
  %1987 = vmatpush1.bf16.msra.mxu0 %v1834
  %1988 = vmatprep.subr.bf16.mxu0 0
  %1989 = vmatpush1.bf16.msra.mxu0 %v1835
  %1990 = vmatprep.subr.bf16.mxu0 0
  %1991 = vmatpush1.bf16.msra.mxu0 %v1836
  %1992 = vmatprep.subr.bf16.mxu0 0
  %1993 = vmatpush1.bf16.msra.mxu0 %v1837
  %1994 = vmatprep.subr.bf16.mxu0 0
  %1995 = vmatpush1.bf16.msra.mxu0 %v1838
  %1996 = vmatprep.subr.bf16.mxu0 0
  %1997 = vmatpush1.bf16.msra.mxu0 %v1839
  %1998 = vmatprep.subr.bf16.mxu0 0
  %1999 = vmatpush1.bf16.msra.mxu0 %v1840
  %2000 = vmatprep.subr.bf16.mxu0 0
  %2001 = vmatpush1.bf16.msra.mxu0 %v1841
  %2002 = vmatprep.subr.bf16.mxu0 0
  %2003 = vmatpush1.bf16.msra.mxu0 %v1842
  %2004 = vmatprep.subr.bf16.mxu0 0
  %2005 = vmatpush1.bf16.msra.mxu0 %v1843
  %2006 = vmatprep.subr.bf16.mxu0 0
  %2007 = vmatpush1.bf16.msra.mxu0 %v1844
  %2008 = vmatprep.subr.bf16.mxu0 0
  %2009 = vmatpush1.bf16.msra.mxu0 %v1845
  %2010 = vmatprep.subr.bf16.mxu0 0
  %2011 = vmatpush1.bf16.msra.mxu0 %v1846
  %2012 = vmatprep.subr.bf16.mxu0 0
  %2013 = vmatpush1.bf16.msra.mxu0 %v1847
  %2014 = vmatprep.subr.bf16.mxu0 0
  %2015 = vmatpush1.bf16.msra.mxu0 %v1848
  %2016 = vmatprep.subr.bf16.mxu0 0
  %2017 = vmatpush1.bf16.msra.mxu0 %v1849
  %2018 = vmatprep.mubr.bf16.mxu0 %v1429
  %2019 = vmatmul.mubr.bf16.gmra.mrb[0].mxu0 %v1428
  %v2020 = vpop.f32.mrb[0].mxu0
  %v2021 = vadd.f32 %v1981, %v2020
  %v2022 = vpop.f32.mrb[0].mxu0
  %v2023 = vpop.f32.mrb[0].mxu0
  %v2024 = vpop.f32.mrb[0].mxu0
  %2025 = vdwg.mxu0
  %2026 = vmatprep.subr.bf16.mxu0 0
  %2027 = vmatpush1.bf16.msra.mxu0 %v1850
  %2028 = vmatprep.subr.bf16.mxu0 0
  %2029 = vmatpush1.bf16.msra.mxu0 %v1851
  %2030 = vmatprep.subr.bf16.mxu0 0
  %2031 = vmatpush1.bf16.msra.mxu0 %v1852
  %2032 = vmatprep.subr.bf16.mxu0 0
  %2033 = vmatpush1.bf16.msra.mxu0 %v1853
  %2034 = vmatprep.subr.bf16.mxu0 0
  %2035 = vmatpush1.bf16.msra.mxu0 %v1854
  %2036 = vmatprep.subr.bf16.mxu0 0
  %2037 = vmatpush1.bf16.msra.mxu0 %v1855
  %2038 = vmatprep.subr.bf16.mxu0 0
  %2039 = vmatpush1.bf16.msra.mxu0 %v1856
  %2040 = vmatprep.subr.bf16.mxu0 0
  %2041 = vmatpush1.bf16.msra.mxu0 %v1857
  %2042 = vmatprep.subr.bf16.mxu0 0
  %2043 = vmatpush1.bf16.msra.mxu0 %v1858
  %2044 = vmatprep.subr.bf16.mxu0 0
  %2045 = vmatpush1.bf16.msra.mxu0 %v1859
  %2046 = vmatprep.subr.bf16.mxu0 0
  %2047 = vmatpush1.bf16.msra.mxu0 %v1860
  %2048 = vmatprep.subr.bf16.mxu0 0
  %2049 = vmatpush1.bf16.msra.mxu0 %v1861
  %2050 = vmatprep.subr.bf16.mxu0 0
  %2051 = vmatpush1.bf16.msra.mxu0 %v1862
  %2052 = vmatprep.subr.bf16.mxu0 0
  %2053 = vmatpush1.bf16.msra.mxu0 %v1863
  %2054 = vmatprep.subr.bf16.mxu0 0
  %2055 = vmatpush1.bf16.msra.mxu0 %v1864
  %2056 = vmatprep.subr.bf16.mxu0 0
  %2057 = vmatpush1.bf16.msra.mxu0 %v1865
  %2058 = vmatprep.mubr.bf16.mxu0 %v1431
  %2059 = vmatmul.mubr.bf16.gmra.mrb[0].mxu0 %v1430
  %v2060 = vpop.f32.mrb[0].mxu0
  %v2061 = vadd.f32 %v2021, %v2060
  %v2062 = vpop.f32.mrb[0].mxu0
  %v2063 = vpop.f32.mrb[0].mxu0
  %v2064 = vpop.f32.mrb[0].mxu0
  %2065 = vdwg.mxu0
  %2066 = vmatprep.subr.bf16.mxu0 0
  %2067 = vmatpush1.bf16.msra.mxu0 %v1866
  %2068 = vmatprep.subr.bf16.mxu0 0
  %2069 = vmatpush1.bf16.msra.mxu0 %v1867
  %2070 = vmatprep.subr.bf16.mxu0 0
  %2071 = vmatpush1.bf16.msra.mxu0 %v1868
  %2072 = vmatprep.subr.bf16.mxu0 0
  %2073 = vmatpush1.bf16.msra.mxu0 %v1869
  %2074 = vmatprep.subr.bf16.mxu0 0
  %2075 = vmatpush1.bf16.msra.mxu0 %v1870
  %2076 = vmatprep.subr.bf16.mxu0 0
  %2077 = vmatpush1.bf16.msra.mxu0 %v1871
  %2078 = vmatprep.subr.bf16.mxu0 0
  %2079 = vmatpush1.bf16.msra.mxu0 %v1872
  %2080 = vmatprep.subr.bf16.mxu0 0
  %2081 = vmatpush1.bf16.msra.mxu0 %v1873
  %2082 = vmatprep.subr.bf16.mxu0 0
  %2083 = vmatpush1.bf16.msra.mxu0 %v1874
  %2084 = vmatprep.subr.bf16.mxu0 0
  %2085 = vmatpush1.bf16.msra.mxu0 %v1875
  %2086 = vmatprep.subr.bf16.mxu0 0
  %2087 = vmatpush1.bf16.msra.mxu0 %v1876
  %2088 = vmatprep.subr.bf16.mxu0 0
  %2089 = vmatpush1.bf16.msra.mxu0 %v1877
  %2090 = vmatprep.subr.bf16.mxu0 0
  %2091 = vmatpush1.bf16.msra.mxu0 %v1878
  %2092 = vmatprep.subr.bf16.mxu0 0
  %2093 = vmatpush1.bf16.msra.mxu0 %v1879
  %2094 = vmatprep.subr.bf16.mxu0 0
  %2095 = vmatpush1.bf16.msra.mxu0 %v1880
  %2096 = vmatprep.subr.bf16.mxu0 0
  %2097 = vmatpush1.bf16.msra.mxu0 %v1881
  %2098 = vmatprep.mubr.bf16.mxu0 %v1433
  %2099 = vmatmul.mubr.bf16.gmra.mrb[0].mxu0 %v1432
  %v2100 = vpop.f32.mrb[0].mxu0
  %v2101 = vadd.f32 %v2061, %v2100
  %v2102 = vpop.f32.mrb[0].mxu0
  %v2103 = vpop.f32.mrb[0].mxu0
  %v2104 = vpop.f32.mrb[0].mxu0
  %2105 = vdwg.mxu0
  %v2106 = vadd.f32 %v1405, %v2101
  %v2107 = vld [vmem:[%s0 + $0xc0] sm:$0xff]
  %v2108 = vld [vmem:[%s0 + $0xc8] sm:$0xff]
  %v2109 = vld [vmem:[%s0 + $0xd0] sm:$0xff]
  %v2110 = vld [vmem:[%s0 + $0xd8] sm:$0xff]
  %v2111 = vld [vmem:[%s0 + $0xe0] sm:$0xff]
  %v2112 = vld [vmem:[%s0 + $0xe8] sm:$0xff]
  %v2113 = vld [vmem:[%s0 + $0xf0] sm:$0xff]
  %v2114 = vld [vmem:[%s0 + $0xf8] sm:$0xff]
  %v2115 = vcvt.s32.f32 %v2107
  %v2116 = vcvt.s32.f32 %v2108
  %v2117 = vcvt.s32.f32 %v2109
  %v2118 = vcvt.s32.f32 %v2110
  %v2119 = vcvt.s32.f32 %v2111
  %v2120 = vcvt.s32.f32 %v2112
  %v2121 = vcvt.s32.f32 %v2113
  %v2122 = vcvt.s32.f32 %v2114
  %v2123 = vpack.c.bf16 %v2115, %v2115
  %v2124 = vpack.c.bf16 %v2116, %v2116
  %v2125 = vpack.c.bf16 %v2117, %v2117
  %v2126 = vpack.c.bf16 %v2118, %v2118
  %v2127 = vpack.c.bf16 %v2119, %v2119
  %v2128 = vpack.c.bf16 %v2120, %v2120
  %v2129 = vpack.c.bf16 %v2121, %v2121
  %v2130 = vpack.c.bf16 %v2122, %v2122
  %v2131 = vld [vmem:[%s2 + $0x600] sm:$0xf]
  %v2132 = vld [vmem:[%s2 + $0x604] sm:$0xf]
  %v2133 = vld [vmem:[%s2 + $0x608] sm:$0xf]
  %v2134 = vld [vmem:[%s2 + $0x60c] sm:$0xf]
  %v2135 = vld [vmem:[%s2 + $0x610] sm:$0xf]
  %v2136 = vld [vmem:[%s2 + $0x614] sm:$0xf]
  %v2137 = vld [vmem:[%s2 + $0x618] sm:$0xf]
  %v2138 = vld [vmem:[%s2 + $0x61c] sm:$0xf]
  %v2139 = vld [vmem:[%s2 + $0x620] sm:$0xf]
  %v2140 = vld [vmem:[%s2 + $0x624] sm:$0xf]
  %v2141 = vld [vmem:[%s2 + $0x628] sm:$0xf]
  %v2142 = vld [vmem:[%s2 + $0x62c] sm:$0xf]
  %v2143 = vld [vmem:[%s2 + $0x630] sm:$0xf]
  %v2144 = vld [vmem:[%s2 + $0x634] sm:$0xf]
  %v2145 = vld [vmem:[%s2 + $0x638] sm:$0xf]
  %v2146 = vld [vmem:[%s2 + $0x63c] sm:$0xf]
  %v2147 = vld [vmem:[%s2 + $0x640] sm:$0xf]
  %v2148 = vld [vmem:[%s2 + $0x644] sm:$0xf]
  %v2149 = vld [vmem:[%s2 + $0x648] sm:$0xf]
  %v2150 = vld [vmem:[%s2 + $0x64c] sm:$0xf]
  %v2151 = vld [vmem:[%s2 + $0x650] sm:$0xf]
  %v2152 = vld [vmem:[%s2 + $0x654] sm:$0xf]
  %v2153 = vld [vmem:[%s2 + $0x658] sm:$0xf]
  %v2154 = vld [vmem:[%s2 + $0x65c] sm:$0xf]
  %v2155 = vld [vmem:[%s2 + $0x660] sm:$0xf]
  %v2156 = vld [vmem:[%s2 + $0x664] sm:$0xf]
  %v2157 = vld [vmem:[%s2 + $0x668] sm:$0xf]
  %v2158 = vld [vmem:[%s2 + $0x66c] sm:$0xf]
  %v2159 = vld [vmem:[%s2 + $0x670] sm:$0xf]
  %v2160 = vld [vmem:[%s2 + $0x674] sm:$0xf]
  %v2161 = vld [vmem:[%s2 + $0x678] sm:$0xf]
  %v2162 = vld [vmem:[%s2 + $0x67c] sm:$0xf]
  %v2163 = vld [vmem:[%s2 + $0x680] sm:$0xf]
  %v2164 = vld [vmem:[%s2 + $0x684] sm:$0xf]
  %v2165 = vld [vmem:[%s2 + $0x688] sm:$0xf]
  %v2166 = vld [vmem:[%s2 + $0x68c] sm:$0xf]
  %v2167 = vld [vmem:[%s2 + $0x690] sm:$0xf]
  %v2168 = vld [vmem:[%s2 + $0x694] sm:$0xf]
  %v2169 = vld [vmem:[%s2 + $0x698] sm:$0xf]
  %v2170 = vld [vmem:[%s2 + $0x69c] sm:$0xf]
  %v2171 = vld [vmem:[%s2 + $0x6a0] sm:$0xf]
  %v2172 = vld [vmem:[%s2 + $0x6a4] sm:$0xf]
  %v2173 = vld [vmem:[%s2 + $0x6a8] sm:$0xf]
  %v2174 = vld [vmem:[%s2 + $0x6ac] sm:$0xf]
  %v2175 = vld [vmem:[%s2 + $0x6b0] sm:$0xf]
  %v2176 = vld [vmem:[%s2 + $0x6b4] sm:$0xf]
  %v2177 = vld [vmem:[%s2 + $0x6b8] sm:$0xf]
  %v2178 = vld [vmem:[%s2 + $0x6bc] sm:$0xf]
  %v2179 = vld [vmem:[%s2 + $0x6c0] sm:$0xf]
  %v2180 = vld [vmem:[%s2 + $0x6c4] sm:$0xf]
  %v2181 = vld [vmem:[%s2 + $0x6c8] sm:$0xf]
  %v2182 = vld [vmem:[%s2 + $0x6cc] sm:$0xf]
  %v2183 = vld [vmem:[%s2 + $0x6d0] sm:$0xf]
  %v2184 = vld [vmem:[%s2 + $0x6d4] sm:$0xf]
  %v2185 = vld [vmem:[%s2 + $0x6d8] sm:$0xf]
  %v2186 = vld [vmem:[%s2 + $0x6dc] sm:$0xf]
  %v2187 = vld [vmem:[%s2 + $0x6e0] sm:$0xf]
  %v2188 = vld [vmem:[%s2 + $0x6e4] sm:$0xf]
  %v2189 = vld [vmem:[%s2 + $0x6e8] sm:$0xf]
  %v2190 = vld [vmem:[%s2 + $0x6ec] sm:$0xf]
  %v2191 = vld [vmem:[%s2 + $0x6f0] sm:$0xf]
  %v2192 = vld [vmem:[%s2 + $0x6f4] sm:$0xf]
  %v2193 = vld [vmem:[%s2 + $0x6f8] sm:$0xf]
  %v2194 = vld [vmem:[%s2 + $0x6fc] sm:$0xf]
  %v2195 = vld [vmem:[%s2 + $0x700] sm:$0xf]
  %v2196 = vld [vmem:[%s2 + $0x704] sm:$0xf]
  %v2197 = vld [vmem:[%s2 + $0x708] sm:$0xf]
  %v2198 = vld [vmem:[%s2 + $0x70c] sm:$0xf]
  %v2199 = vld [vmem:[%s2 + $0x710] sm:$0xf]
  %v2200 = vld [vmem:[%s2 + $0x714] sm:$0xf]
  %v2201 = vld [vmem:[%s2 + $0x718] sm:$0xf]
  %v2202 = vld [vmem:[%s2 + $0x71c] sm:$0xf]
  %v2203 = vld [vmem:[%s2 + $0x720] sm:$0xf]
  %v2204 = vld [vmem:[%s2 + $0x724] sm:$0xf]
  %v2205 = vld [vmem:[%s2 + $0x728] sm:$0xf]
  %v2206 = vld [vmem:[%s2 + $0x72c] sm:$0xf]
  %v2207 = vld [vmem:[%s2 + $0x730] sm:$0xf]
  %v2208 = vld [vmem:[%s2 + $0x734] sm:$0xf]
  %v2209 = vld [vmem:[%s2 + $0x738] sm:$0xf]
  %v2210 = vld [vmem:[%s2 + $0x73c] sm:$0xf]
  %v2211 = vld [vmem:[%s2 + $0x740] sm:$0xf]
  %v2212 = vld [vmem:[%s2 + $0x744] sm:$0xf]
  %v2213 = vld [vmem:[%s2 + $0x748] sm:$0xf]
  %v2214 = vld [vmem:[%s2 + $0x74c] sm:$0xf]
  %v2215 = vld [vmem:[%s2 + $0x750] sm:$0xf]
  %v2216 = vld [vmem:[%s2 + $0x754] sm:$0xf]
  %v2217 = vld [vmem:[%s2 + $0x758] sm:$0xf]
  %v2218 = vld [vmem:[%s2 + $0x75c] sm:$0xf]
  %v2219 = vld [vmem:[%s2 + $0x760] sm:$0xf]
  %v2220 = vld [vmem:[%s2 + $0x764] sm:$0xf]
  %v2221 = vld [vmem:[%s2 + $0x768] sm:$0xf]
  %v2222 = vld [vmem:[%s2 + $0x76c] sm:$0xf]
  %v2223 = vld [vmem:[%s2 + $0x770] sm:$0xf]
  %v2224 = vld [vmem:[%s2 + $0x774] sm:$0xf]
  %v2225 = vld [vmem:[%s2 + $0x778] sm:$0xf]
  %v2226 = vld [vmem:[%s2 + $0x77c] sm:$0xf]
  %v2227 = vld [vmem:[%s2 + $0x780] sm:$0xf]
  %v2228 = vld [vmem:[%s2 + $0x784] sm:$0xf]
  %v2229 = vld [vmem:[%s2 + $0x788] sm:$0xf]
  %v2230 = vld [vmem:[%s2 + $0x78c] sm:$0xf]
  %v2231 = vld [vmem:[%s2 + $0x790] sm:$0xf]
  %v2232 = vld [vmem:[%s2 + $0x794] sm:$0xf]
  %v2233 = vld [vmem:[%s2 + $0x798] sm:$0xf]
  %v2234 = vld [vmem:[%s2 + $0x79c] sm:$0xf]
  %v2235 = vld [vmem:[%s2 + $0x7a0] sm:$0xf]
  %v2236 = vld [vmem:[%s2 + $0x7a4] sm:$0xf]
  %v2237 = vld [vmem:[%s2 + $0x7a8] sm:$0xf]
  %v2238 = vld [vmem:[%s2 + $0x7ac] sm:$0xf]
  %v2239 = vld [vmem:[%s2 + $0x7b0] sm:$0xf]
  %v2240 = vld [vmem:[%s2 + $0x7b4] sm:$0xf]
  %v2241 = vld [vmem:[%s2 + $0x7b8] sm:$0xf]
  %v2242 = vld [vmem:[%s2 + $0x7bc] sm:$0xf]
  %v2243 = vld [vmem:[%s2 + $0x7c0] sm:$0xf]
  %v2244 = vld [vmem:[%s2 + $0x7c4] sm:$0xf]
  %v2245 = vld [vmem:[%s2 + $0x7c8] sm:$0xf]
  %v2246 = vld [vmem:[%s2 + $0x7cc] sm:$0xf]
  %v2247 = vld [vmem:[%s2 + $0x7d0] sm:$0xf]
  %v2248 = vld [vmem:[%s2 + $0x7d4] sm:$0xf]
  %v2249 = vld [vmem:[%s2 + $0x7d8] sm:$0xf]
  %v2250 = vld [vmem:[%s2 + $0x7dc] sm:$0xf]
  %v2251 = vld [vmem:[%s2 + $0x7e0] sm:$0xf]
  %v2252 = vld [vmem:[%s2 + $0x7e4] sm:$0xf]
  %v2253 = vld [vmem:[%s2 + $0x7e8] sm:$0xf]
  %v2254 = vld [vmem:[%s2 + $0x7ec] sm:$0xf]
  %v2255 = vld [vmem:[%s2 + $0x7f0] sm:$0xf]
  %v2256 = vld [vmem:[%s2 + $0x7f4] sm:$0xf]
  %v2257 = vld [vmem:[%s2 + $0x7f8] sm:$0xf]
  %v2258 = vld [vmem:[%s2 + $0x7fc] sm:$0xf]
  %v2387 = vunpack.c.l.b16 %v2131
  %v2388 = vunpack.c.l.b16 %v2132
  %v2389 = vunpack.c.l.b16 %v2133
  %v2390 = vunpack.c.l.b16 %v2134
  %v2391 = vunpack.c.l.b16 %v2135
  %v2392 = vunpack.c.l.b16 %v2136
  %v2393 = vunpack.c.l.b16 %v2137
  %v2394 = vunpack.c.l.b16 %v2138
  %v2395 = vunpack.c.l.b16 %v2139
  %v2396 = vunpack.c.l.b16 %v2140
  %v2397 = vunpack.c.l.b16 %v2141
  %v2398 = vunpack.c.l.b16 %v2142
  %v2399 = vunpack.c.l.b16 %v2143
  %v2400 = vunpack.c.l.b16 %v2144
  %v2401 = vunpack.c.l.b16 %v2145
  %v2402 = vunpack.c.l.b16 %v2146
  %v2403 = vunpack.c.l.b16 %v2147
  %v2404 = vunpack.c.l.b16 %v2148
  %v2405 = vunpack.c.l.b16 %v2149
  %v2406 = vunpack.c.l.b16 %v2150
  %v2407 = vunpack.c.l.b16 %v2151
  %v2408 = vunpack.c.l.b16 %v2152
  %v2409 = vunpack.c.l.b16 %v2153
  %v2410 = vunpack.c.l.b16 %v2154
  %v2411 = vunpack.c.l.b16 %v2155
  %v2412 = vunpack.c.l.b16 %v2156
  %v2413 = vunpack.c.l.b16 %v2157
  %v2414 = vunpack.c.l.b16 %v2158
  %v2415 = vunpack.c.l.b16 %v2159
  %v2416 = vunpack.c.l.b16 %v2160
  %v2417 = vunpack.c.l.b16 %v2161
  %v2418 = vunpack.c.l.b16 %v2162
  %v2419 = vunpack.c.l.b16 %v2163
  %v2420 = vunpack.c.l.b16 %v2164
  %v2421 = vunpack.c.l.b16 %v2165
  %v2422 = vunpack.c.l.b16 %v2166
  %v2423 = vunpack.c.l.b16 %v2167
  %v2424 = vunpack.c.l.b16 %v2168
  %v2425 = vunpack.c.l.b16 %v2169
  %v2426 = vunpack.c.l.b16 %v2170
  %v2427 = vunpack.c.l.b16 %v2171
  %v2428 = vunpack.c.l.b16 %v2172
  %v2429 = vunpack.c.l.b16 %v2173
  %v2430 = vunpack.c.l.b16 %v2174
  %v2431 = vunpack.c.l.b16 %v2175
  %v2432 = vunpack.c.l.b16 %v2176
  %v2433 = vunpack.c.l.b16 %v2177
  %v2434 = vunpack.c.l.b16 %v2178
  %v2435 = vunpack.c.l.b16 %v2179
  %v2436 = vunpack.c.l.b16 %v2180
  %v2437 = vunpack.c.l.b16 %v2181
  %v2438 = vunpack.c.l.b16 %v2182
  %v2439 = vunpack.c.l.b16 %v2183
  %v2440 = vunpack.c.l.b16 %v2184
  %v2441 = vunpack.c.l.b16 %v2185
  %v2442 = vunpack.c.l.b16 %v2186
  %v2443 = vunpack.c.l.b16 %v2187
  %v2444 = vunpack.c.l.b16 %v2188
  %v2445 = vunpack.c.l.b16 %v2189
  %v2446 = vunpack.c.l.b16 %v2190
  %v2447 = vunpack.c.l.b16 %v2191
  %v2448 = vunpack.c.l.b16 %v2192
  %v2449 = vunpack.c.l.b16 %v2193
  %v2450 = vunpack.c.l.b16 %v2194
  %v2451 = vunpack.c.l.b16 %v2195
  %v2452 = vunpack.c.l.b16 %v2196
  %v2453 = vunpack.c.l.b16 %v2197
  %v2454 = vunpack.c.l.b16 %v2198
  %v2455 = vunpack.c.l.b16 %v2199
  %v2456 = vunpack.c.l.b16 %v2200
  %v2457 = vunpack.c.l.b16 %v2201
  %v2458 = vunpack.c.l.b16 %v2202
  %v2459 = vunpack.c.l.b16 %v2203
  %v2460 = vunpack.c.l.b16 %v2204
  %v2461 = vunpack.c.l.b16 %v2205
  %v2462 = vunpack.c.l.b16 %v2206
  %v2463 = vunpack.c.l.b16 %v2207
  %v2464 = vunpack.c.l.b16 %v2208
  %v2465 = vunpack.c.l.b16 %v2209
  %v2466 = vunpack.c.l.b16 %v2210
  %v2467 = vunpack.c.l.b16 %v2211
  %v2468 = vunpack.c.l.b16 %v2212
  %v2469 = vunpack.c.l.b16 %v2213
  %v2470 = vunpack.c.l.b16 %v2214
  %v2471 = vunpack.c.l.b16 %v2215
  %v2472 = vunpack.c.l.b16 %v2216
  %v2473 = vunpack.c.l.b16 %v2217
  %v2474 = vunpack.c.l.b16 %v2218
  %v2475 = vunpack.c.l.b16 %v2219
  %v2476 = vunpack.c.l.b16 %v2220
  %v2477 = vunpack.c.l.b16 %v2221
  %v2478 = vunpack.c.l.b16 %v2222
  %v2479 = vunpack.c.l.b16 %v2223
  %v2480 = vunpack.c.l.b16 %v2224
  %v2481 = vunpack.c.l.b16 %v2225
  %v2482 = vunpack.c.l.b16 %v2226
  %v2483 = vunpack.c.l.b16 %v2227
  %v2484 = vunpack.c.l.b16 %v2228
  %v2485 = vunpack.c.l.b16 %v2229
  %v2486 = vunpack.c.l.b16 %v2230
  %v2487 = vunpack.c.l.b16 %v2231
  %v2488 = vunpack.c.l.b16 %v2232
  %v2489 = vunpack.c.l.b16 %v2233
  %v2490 = vunpack.c.l.b16 %v2234
  %v2491 = vunpack.c.l.b16 %v2235
  %v2492 = vunpack.c.l.b16 %v2236
  %v2493 = vunpack.c.l.b16 %v2237
  %v2494 = vunpack.c.l.b16 %v2238
  %v2495 = vunpack.c.l.b16 %v2239
  %v2496 = vunpack.c.l.b16 %v2240
  %v2497 = vunpack.c.l.b16 %v2241
  %v2498 = vunpack.c.l.b16 %v2242
  %v2499 = vunpack.c.l.b16 %v2243
  %v2500 = vunpack.c.l.b16 %v2244
  %v2501 = vunpack.c.l.b16 %v2245
  %v2502 = vunpack.c.l.b16 %v2246
  %v2503 = vunpack.c.l.b16 %v2247
  %v2504 = vunpack.c.l.b16 %v2248
  %v2505 = vunpack.c.l.b16 %v2249
  %v2506 = vunpack.c.l.b16 %v2250
  %v2507 = vunpack.c.l.b16 %v2251
  %v2508 = vunpack.c.l.b16 %v2252
  %v2509 = vunpack.c.l.b16 %v2253
  %v2510 = vunpack.c.l.b16 %v2254
  %v2511 = vunpack.c.l.b16 %v2255
  %v2512 = vunpack.c.l.b16 %v2256
  %v2513 = vunpack.c.l.b16 %v2257
  %v2514 = vunpack.c.l.b16 %v2258
  %v2515 = vpack.c.b16 %v2388, %v2387
  %v2516 = vpack.c.b16 %v2390, %v2389
  %v2517 = vpack.c.b16 %v2392, %v2391
  %v2518 = vpack.c.b16 %v2394, %v2393
  %v2519 = vpack.c.b16 %v2396, %v2395
  %v2520 = vpack.c.b16 %v2398, %v2397
  %v2521 = vpack.c.b16 %v2400, %v2399
  %v2522 = vpack.c.b16 %v2402, %v2401
  %v2523 = vpack.c.b16 %v2404, %v2403
  %v2524 = vpack.c.b16 %v2406, %v2405
  %v2525 = vpack.c.b16 %v2408, %v2407
  %v2526 = vpack.c.b16 %v2410, %v2409
  %v2527 = vpack.c.b16 %v2412, %v2411
  %v2528 = vpack.c.b16 %v2414, %v2413
  %v2529 = vpack.c.b16 %v2416, %v2415
  %v2530 = vpack.c.b16 %v2418, %v2417
  %v2531 = vpack.c.b16 %v2420, %v2419
  %v2532 = vpack.c.b16 %v2422, %v2421
  %v2533 = vpack.c.b16 %v2424, %v2423
  %v2534 = vpack.c.b16 %v2426, %v2425
  %v2535 = vpack.c.b16 %v2428, %v2427
  %v2536 = vpack.c.b16 %v2430, %v2429
  %v2537 = vpack.c.b16 %v2432, %v2431
  %v2538 = vpack.c.b16 %v2434, %v2433
  %v2539 = vpack.c.b16 %v2436, %v2435
  %v2540 = vpack.c.b16 %v2438, %v2437
  %v2541 = vpack.c.b16 %v2440, %v2439
  %v2542 = vpack.c.b16 %v2442, %v2441
  %v2543 = vpack.c.b16 %v2444, %v2443
  %v2544 = vpack.c.b16 %v2446, %v2445
  %v2545 = vpack.c.b16 %v2448, %v2447
  %v2546 = vpack.c.b16 %v2450, %v2449
  %v2547 = vpack.c.b16 %v2452, %v2451
  %v2548 = vpack.c.b16 %v2454, %v2453
  %v2549 = vpack.c.b16 %v2456, %v2455
  %v2550 = vpack.c.b16 %v2458, %v2457
  %v2551 = vpack.c.b16 %v2460, %v2459
  %v2552 = vpack.c.b16 %v2462, %v2461
  %v2553 = vpack.c.b16 %v2464, %v2463
  %v2554 = vpack.c.b16 %v2466, %v2465
  %v2555 = vpack.c.b16 %v2468, %v2467
  %v2556 = vpack.c.b16 %v2470, %v2469
  %v2557 = vpack.c.b16 %v2472, %v2471
  %v2558 = vpack.c.b16 %v2474, %v2473
  %v2559 = vpack.c.b16 %v2476, %v2475
  %v2560 = vpack.c.b16 %v2478, %v2477
  %v2561 = vpack.c.b16 %v2480, %v2479
  %v2562 = vpack.c.b16 %v2482, %v2481
  %v2563 = vpack.c.b16 %v2484, %v2483
  %v2564 = vpack.c.b16 %v2486, %v2485
  %v2565 = vpack.c.b16 %v2488, %v2487
  %v2566 = vpack.c.b16 %v2490, %v2489
  %v2567 = vpack.c.b16 %v2492, %v2491
  %v2568 = vpack.c.b16 %v2494, %v2493
  %v2569 = vpack.c.b16 %v2496, %v2495
  %v2570 = vpack.c.b16 %v2498, %v2497
  %v2571 = vpack.c.b16 %v2500, %v2499
  %v2572 = vpack.c.b16 %v2502, %v2501
  %v2573 = vpack.c.b16 %v2504, %v2503
  %v2574 = vpack.c.b16 %v2506, %v2505
  %v2575 = vpack.c.b16 %v2508, %v2507
  %v2576 = vpack.c.b16 %v2510, %v2509
  %v2577 = vpack.c.b16 %v2512, %v2511
  %v2578 = vpack.c.b16 %v2514, %v2513
  %2643 = vmatprep.subr.bf16.mxu0 0
  %2644 = vmatpush1.bf16.msra.mxu0 %v2515
  %2645 = vmatprep.subr.bf16.mxu0 0
  %2646 = vmatpush1.bf16.msra.mxu0 %v2516
  %2647 = vmatprep.subr.bf16.mxu0 0
  %2648 = vmatpush1.bf16.msra.mxu0 %v2517
  %2649 = vmatprep.subr.bf16.mxu0 0
  %2650 = vmatpush1.bf16.msra.mxu0 %v2518
  %2651 = vmatprep.subr.bf16.mxu0 0
  %2652 = vmatpush1.bf16.msra.mxu0 %v2519
  %2653 = vmatprep.subr.bf16.mxu0 0
  %2654 = vmatpush1.bf16.msra.mxu0 %v2520
  %2655 = vmatprep.subr.bf16.mxu0 0
  %2656 = vmatpush1.bf16.msra.mxu0 %v2521
  %2657 = vmatprep.subr.bf16.mxu0 0
  %2658 = vmatpush1.bf16.msra.mxu0 %v2522
  %2659 = vmatprep.subr.bf16.mxu0 0
  %2660 = vmatpush1.bf16.msra.mxu0 %v2523
  %2661 = vmatprep.subr.bf16.mxu0 0
  %2662 = vmatpush1.bf16.msra.mxu0 %v2524
  %2663 = vmatprep.subr.bf16.mxu0 0
  %2664 = vmatpush1.bf16.msra.mxu0 %v2525
  %2665 = vmatprep.subr.bf16.mxu0 0
  %2666 = vmatpush1.bf16.msra.mxu0 %v2526
  %2667 = vmatprep.subr.bf16.mxu0 0
  %2668 = vmatpush1.bf16.msra.mxu0 %v2527
  %2669 = vmatprep.subr.bf16.mxu0 0
  %2670 = vmatpush1.bf16.msra.mxu0 %v2528
  %2671 = vmatprep.subr.bf16.mxu0 0
  %2672 = vmatpush1.bf16.msra.mxu0 %v2529
  %2673 = vmatprep.subr.bf16.mxu0 0
  %2674 = vmatpush1.bf16.msra.mxu0 %v2530
  %2675 = vmatprep.mubr.bf16.mxu0 %v2124
  %2676 = vmatmul.mubr.bf16.gmra.mrb[0].mxu0 %v2123
  %v2677 = vpop.f32.mrb[0].mxu0
  %v2678 = vadd.f32 0.0, %v2677
  %v2679 = vpop.f32.mrb[0].mxu0
  %v2680 = vpop.f32.mrb[0].mxu0
  %v2681 = vpop.f32.mrb[0].mxu0
  %2682 = vdwg.mxu0
  %2683 = vmatprep.subr.bf16.mxu0 0
  %2684 = vmatpush1.bf16.msra.mxu0 %v2531
  %2685 = vmatprep.subr.bf16.mxu0 0
  %2686 = vmatpush1.bf16.msra.mxu0 %v2532
  %2687 = vmatprep.subr.bf16.mxu0 0
  %2688 = vmatpush1.bf16.msra.mxu0 %v2533
  %2689 = vmatprep.subr.bf16.mxu0 0
  %2690 = vmatpush1.bf16.msra.mxu0 %v2534
  %2691 = vmatprep.subr.bf16.mxu0 0
  %2692 = vmatpush1.bf16.msra.mxu0 %v2535
  %2693 = vmatprep.subr.bf16.mxu0 0
  %2694 = vmatpush1.bf16.msra.mxu0 %v2536
  %2695 = vmatprep.subr.bf16.mxu0 0
  %2696 = vmatpush1.bf16.msra.mxu0 %v2537
  %2697 = vmatprep.subr.bf16.mxu0 0
  %2698 = vmatpush1.bf16.msra.mxu0 %v2538
  %2699 = vmatprep.subr.bf16.mxu0 0
  %2700 = vmatpush1.bf16.msra.mxu0 %v2539
  %2701 = vmatprep.subr.bf16.mxu0 0
  %2702 = vmatpush1.bf16.msra.mxu0 %v2540
  %2703 = vmatprep.subr.bf16.mxu0 0
  %2704 = vmatpush1.bf16.msra.mxu0 %v2541
  %2705 = vmatprep.subr.bf16.mxu0 0
  %2706 = vmatpush1.bf16.msra.mxu0 %v2542
  %2707 = vmatprep.subr.bf16.mxu0 0
  %2708 = vmatpush1.bf16.msra.mxu0 %v2543
  %2709 = vmatprep.subr.bf16.mxu0 0
  %2710 = vmatpush1.bf16.msra.mxu0 %v2544
  %2711 = vmatprep.subr.bf16.mxu0 0
  %2712 = vmatpush1.bf16.msra.mxu0 %v2545
  %2713 = vmatprep.subr.bf16.mxu0 0
  %2714 = vmatpush1.bf16.msra.mxu0 %v2546
  %2715 = vmatprep.mubr.bf16.mxu0 %v2126
  %2716 = vmatmul.mubr.bf16.gmra.mrb[0].mxu0 %v2125
  %v2717 = vpop.f32.mrb[0].mxu0
  %v2718 = vadd.f32 %v2678, %v2717
  %v2719 = vpop.f32.mrb[0].mxu0
  %v2720 = vpop.f32.mrb[0].mxu0
  %v2721 = vpop.f32.mrb[0].mxu0
  %2722 = vdwg.mxu0
  %2723 = vmatprep.subr.bf16.mxu0 0
  %2724 = vmatpush1.bf16.msra.mxu0 %v2547
  %2725 = vmatprep.subr.bf16.mxu0 0
  %2726 = vmatpush1.bf16.msra.mxu0 %v2548
  %2727 = vmatprep.subr.bf16.mxu0 0
  %2728 = vmatpush1.bf16.msra.mxu0 %v2549
  %2729 = vmatprep.subr.bf16.mxu0 0
  %2730 = vmatpush1.bf16.msra.mxu0 %v2550
  %2731 = vmatprep.subr.bf16.mxu0 0
  %2732 = vmatpush1.bf16.msra.mxu0 %v2551
  %2733 = vmatprep.subr.bf16.mxu0 0
  %2734 = vmatpush1.bf16.msra.mxu0 %v2552
  %2735 = vmatprep.subr.bf16.mxu0 0
  %2736 = vmatpush1.bf16.msra.mxu0 %v2553
  %2737 = vmatprep.subr.bf16.mxu0 0
  %2738 = vmatpush1.bf16.msra.mxu0 %v2554
  %2739 = vmatprep.subr.bf16.mxu0 0
  %2740 = vmatpush1.bf16.msra.mxu0 %v2555
  %2741 = vmatprep.subr.bf16.mxu0 0
  %2742 = vmatpush1.bf16.msra.mxu0 %v2556
  %2743 = vmatprep.subr.bf16.mxu0 0
  %2744 = vmatpush1.bf16.msra.mxu0 %v2557
  %2745 = vmatprep.subr.bf16.mxu0 0
  %2746 = vmatpush1.bf16.msra.mxu0 %v2558
  %2747 = vmatprep.subr.bf16.mxu0 0
  %2748 = vmatpush1.bf16.msra.mxu0 %v2559
  %2749 = vmatprep.subr.bf16.mxu0 0
  %2750 = vmatpush1.bf16.msra.mxu0 %v2560
  %2751 = vmatprep.subr.bf16.mxu0 0
  %2752 = vmatpush1.bf16.msra.mxu0 %v2561
  %2753 = vmatprep.subr.bf16.mxu0 0
  %2754 = vmatpush1.bf16.msra.mxu0 %v2562
  %2755 = vmatprep.mubr.bf16.mxu0 %v2128
  %2756 = vmatmul.mubr.bf16.gmra.mrb[0].mxu0 %v2127
  %v2757 = vpop.f32.mrb[0].mxu0
  %v2758 = vadd.f32 %v2718, %v2757
  %v2759 = vpop.f32.mrb[0].mxu0
  %v2760 = vpop.f32.mrb[0].mxu0
  %v2761 = vpop.f32.mrb[0].mxu0
  %2762 = vdwg.mxu0
  %2763 = vmatprep.subr.bf16.mxu0 0
  %2764 = vmatpush1.bf16.msra.mxu0 %v2563
  %2765 = vmatprep.subr.bf16.mxu0 0
  %2766 = vmatpush1.bf16.msra.mxu0 %v2564
  %2767 = vmatprep.subr.bf16.mxu0 0
  %2768 = vmatpush1.bf16.msra.mxu0 %v2565
  %2769 = vmatprep.subr.bf16.mxu0 0
  %2770 = vmatpush1.bf16.msra.mxu0 %v2566
  %2771 = vmatprep.subr.bf16.mxu0 0
  %2772 = vmatpush1.bf16.msra.mxu0 %v2567
  %2773 = vmatprep.subr.bf16.mxu0 0
  %2774 = vmatpush1.bf16.msra.mxu0 %v2568
  %2775 = vmatprep.subr.bf16.mxu0 0
  %2776 = vmatpush1.bf16.msra.mxu0 %v2569
  %2777 = vmatprep.subr.bf16.mxu0 0
  %2778 = vmatpush1.bf16.msra.mxu0 %v2570
  %2779 = vmatprep.subr.bf16.mxu0 0
  %2780 = vmatpush1.bf16.msra.mxu0 %v2571
  %2781 = vmatprep.subr.bf16.mxu0 0
  %2782 = vmatpush1.bf16.msra.mxu0 %v2572
  %2783 = vmatprep.subr.bf16.mxu0 0
  %2784 = vmatpush1.bf16.msra.mxu0 %v2573
  %2785 = vmatprep.subr.bf16.mxu0 0
  %2786 = vmatpush1.bf16.msra.mxu0 %v2574
  %2787 = vmatprep.subr.bf16.mxu0 0
  %2788 = vmatpush1.bf16.msra.mxu0 %v2575
  %2789 = vmatprep.subr.bf16.mxu0 0
  %2790 = vmatpush1.bf16.msra.mxu0 %v2576
  %2791 = vmatprep.subr.bf16.mxu0 0
  %2792 = vmatpush1.bf16.msra.mxu0 %v2577
  %2793 = vmatprep.subr.bf16.mxu0 0
  %2794 = vmatpush1.bf16.msra.mxu0 %v2578
  %2795 = vmatprep.mubr.bf16.mxu0 %v2130
  %2796 = vmatmul.mubr.bf16.gmra.mrb[0].mxu0 %v2129
  %v2797 = vpop.f32.mrb[0].mxu0
  %v2798 = vadd.f32 %v2758, %v2797
  %v2799 = vpop.f32.mrb[0].mxu0
  %v2800 = vpop.f32.mrb[0].mxu0
  %v2801 = vpop.f32.mrb[0].mxu0
  %2802 = vdwg.mxu0
  %v2803 = vadd.f32 %v2106, %v2798
  %v2804 = vld [vmem:[%s0 + $0x100] sm:$0xff]
  %v2805 = vld [vmem:[%s0 + $0x108] sm:$0xff]
  %v2806 = vld [vmem:[%s0 + $0x110] sm:$0xff]
  %v2807 = vld [vmem:[%s0 + $0x118] sm:$0xff]
  %v2808 = vld [vmem:[%s0 + $0x120] sm:$0xff]
  %v2809 = vld [vmem:[%s0 + $0x128] sm:$0xff]
  %v2810 = vld [vmem:[%s0 + $0x130] sm:$0xff]
  %v2811 = vld [vmem:[%s0 + $0x138] sm:$0xff]
  %v2812 = vcvt.s32.f32 %v2804
  %v2813 = vcvt.s32.f32 %v2805
  %v2814 = vcvt.s32.f32 %v2806
  %v2815 = vcvt.s32.f32 %v2807
  %v2816 = vcvt.s32.f32 %v2808
  %v2817 = vcvt.s32.f32 %v2809
  %v2818 = vcvt.s32.f32 %v2810
  %v2819 = vcvt.s32.f32 %v2811
  %v2820 = vpack.c.bf16 %v2812, %v2812
  %v2821 = vpack.c.bf16 %v2813, %v2813
  %v2822 = vpack.c.bf16 %v2814, %v2814
  %v2823 = vpack.c.bf16 %v2815, %v2815
  %v2824 = vpack.c.bf16 %v2816, %v2816
  %v2825 = vpack.c.bf16 %v2817, %v2817
  %v2826 = vpack.c.bf16 %v2818, %v2818
  %v2827 = vpack.c.bf16 %v2819, %v2819
  %v2828 = vld [vmem:[%s2 + $0x800] sm:$0xf]
  %v2829 = vld [vmem:[%s2 + $0x804] sm:$0xf]
  %v2830 = vld [vmem:[%s2 + $0x808] sm:$0xf]
  %v2831 = vld [vmem:[%s2 + $0x80c] sm:$0xf]
  %v2832 = vld [vmem:[%s2 + $0x810] sm:$0xf]
  %v2833 = vld [vmem:[%s2 + $0x814] sm:$0xf]
  %v2834 = vld [vmem:[%s2 + $0x818] sm:$0xf]
  %v2835 = vld [vmem:[%s2 + $0x81c] sm:$0xf]
  %v2836 = vld [vmem:[%s2 + $0x820] sm:$0xf]
  %v2837 = vld [vmem:[%s2 + $0x824] sm:$0xf]
  %v2838 = vld [vmem:[%s2 + $0x828] sm:$0xf]
  %v2839 = vld [vmem:[%s2 + $0x82c] sm:$0xf]
  %v2840 = vld [vmem:[%s2 + $0x830] sm:$0xf]
  %v2841 = vld [vmem:[%s2 + $0x834] sm:$0xf]
  %v2842 = vld [vmem:[%s2 + $0x838] sm:$0xf]
  %v2843 = vld [vmem:[%s2 + $0x83c] sm:$0xf]
  %v2844 = vld [vmem:[%s2 + $0x840] sm:$0xf]
  %v2845 = vld [vmem:[%s2 + $0x844] sm:$0xf]
  %v2846 = vld [vmem:[%s2 + $0x848] sm:$0xf]
  %v2847 = vld [vmem:[%s2 + $0x84c] sm:$0xf]
  %v2848 = vld [vmem:[%s2 + $0x850] sm:$0xf]
  %v2849 = vld [vmem:[%s2 + $0x854] sm:$0xf]
  %v2850 = vld [vmem:[%s2 + $0x858] sm:$0xf]
  %v2851 = vld [vmem:[%s2 + $0x85c] sm:$0xf]
  %v2852 = vld [vmem:[%s2 + $0x860] sm:$0xf]
  %v2853 = vld [vmem:[%s2 + $0x864] sm:$0xf]
  %v2854 = vld [vmem:[%s2 + $0x868] sm:$0xf]
  %v2855 = vld [vmem:[%s2 + $0x86c] sm:$0xf]
  %v2856 = vld [vmem:[%s2 + $0x870] sm:$0xf]
  %v2857 = vld [vmem:[%s2 + $0x874] sm:$0xf]
  %v2858 = vld [vmem:[%s2 + $0x878] sm:$0xf]
  %v2859 = vld [vmem:[%s2 + $0x87c] sm:$0xf]
  %v2860 = vld [vmem:[%s2 + $0x880] sm:$0xf]
  %v2861 = vld [vmem:[%s2 + $0x884] sm:$0xf]
  %v2862 = vld [vmem:[%s2 + $0x888] sm:$0xf]
  %v2863 = vld [vmem:[%s2 + $0x88c] sm:$0xf]
  %v2864 = vld [vmem:[%s2 + $0x890] sm:$0xf]
  %v2865 = vld [vmem:[%s2 + $0x894] sm:$0xf]
  %v2866 = vld [vmem:[%s2 + $0x898] sm:$0xf]
  %v2867 = vld [vmem:[%s2 + $0x89c] sm:$0xf]
  %v2868 = vld [vmem:[%s2 + $0x8a0] sm:$0xf]
  %v2869 = vld [vmem:[%s2 + $0x8a4] sm:$0xf]
  %v2870 = vld [vmem:[%s2 + $0x8a8] sm:$0xf]
  %v2871 = vld [vmem:[%s2 + $0x8ac] sm:$0xf]
  %v2872 = vld [vmem:[%s2 + $0x8b0] sm:$0xf]
  %v2873 = vld [vmem:[%s2 + $0x8b4] sm:$0xf]
  %v2874 = vld [vmem:[%s2 + $0x8b8] sm:$0xf]
  %v2875 = vld [vmem:[%s2 + $0x8bc] sm:$0xf]
  %v2876 = vld [vmem:[%s2 + $0x8c0] sm:$0xf]
  %v2877 = vld [vmem:[%s2 + $0x8c4] sm:$0xf]
  %v2878 = vld [vmem:[%s2 + $0x8c8] sm:$0xf]
  %v2879 = vld [vmem:[%s2 + $0x8cc] sm:$0xf]
  %v2880 = vld [vmem:[%s2 + $0x8d0] sm:$0xf]
  %v2881 = vld [vmem:[%s2 + $0x8d4] sm:$0xf]
  %v2882 = vld [vmem:[%s2 + $0x8d8] sm:$0xf]
  %v2883 = vld [vmem:[%s2 + $0x8dc] sm:$0xf]
  %v2884 = vld [vmem:[%s2 + $0x8e0] sm:$0xf]
  %v2885 = vld [vmem:[%s2 + $0x8e4] sm:$0xf]
  %v2886 = vld [vmem:[%s2 + $0x8e8] sm:$0xf]
  %v2887 = vld [vmem:[%s2 + $0x8ec] sm:$0xf]
  %v2888 = vld [vmem:[%s2 + $0x8f0] sm:$0xf]
  %v2889 = vld [vmem:[%s2 + $0x8f4] sm:$0xf]
  %v2890 = vld [vmem:[%s2 + $0x8f8] sm:$0xf]
  %v2891 = vld [vmem:[%s2 + $0x8fc] sm:$0xf]
  %v2892 = vld [vmem:[%s2 + $0x900] sm:$0xf]
  %v2893 = vld [vmem:[%s2 + $0x904] sm:$0xf]
  %v2894 = vld [vmem:[%s2 + $0x908] sm:$0xf]
  %v2895 = vld [vmem:[%s2 + $0x90c] sm:$0xf]
  %v2896 = vld [vmem:[%s2 + $0x910] sm:$0xf]
  %v2897 = vld [vmem:[%s2 + $0x914] sm:$0xf]
  %v2898 = vld [vmem:[%s2 + $0x918] sm:$0xf]
  %v2899 = vld [vmem:[%s2 + $0x91c] sm:$0xf]
  %v2900 = vld [vmem:[%s2 + $0x920] sm:$0xf]
  %v2901 = vld [vmem:[%s2 + $0x924] sm:$0xf]
  %v2902 = vld [vmem:[%s2 + $0x928] sm:$0xf]
  %v2903 = vld [vmem:[%s2 + $0x92c] sm:$0xf]
  %v2904 = vld [vmem:[%s2 + $0x930] sm:$0xf]
  %v2905 = vld [vmem:[%s2 + $0x934] sm:$0xf]
  %v2906 = vld [vmem:[%s2 + $0x938] sm:$0xf]
  %v2907 = vld [vmem:[%s2 + $0x93c] sm:$0xf]
  %v2908 = vld [vmem:[%s2 + $0x940] sm:$0xf]
  %v2909 = vld [vmem:[%s2 + $0x944] sm:$0xf]
  %v2910 = vld [vmem:[%s2 + $0x948] sm:$0xf]
  %v2911 = vld [vmem:[%s2 + $0x94c] sm:$0xf]
  %v2912 = vld [vmem:[%s2 + $0x950] sm:$0xf]
  %v2913 = vld [vmem:[%s2 + $0x954] sm:$0xf]
  %v2914 = vld [vmem:[%s2 + $0x958] sm:$0xf]
  %v2915 = vld [vmem:[%s2 + $0x95c] sm:$0xf]
  %v2916 = vld [vmem:[%s2 + $0x960] sm:$0xf]
  %v2917 = vld [vmem:[%s2 + $0x964] sm:$0xf]
  %v2918 = vld [vmem:[%s2 + $0x968] sm:$0xf]
  %v2919 = vld [vmem:[%s2 + $0x96c] sm:$0xf]
  %v2920 = vld [vmem:[%s2 + $0x970] sm:$0xf]
  %v2921 = vld [vmem:[%s2 + $0x974] sm:$0xf]
  %v2922 = vld [vmem:[%s2 + $0x978] sm:$0xf]
  %v2923 = vld [vmem:[%s2 + $0x97c] sm:$0xf]
  %v2924 = vld [vmem:[%s2 + $0x980] sm:$0xf]
  %v2925 = vld [vmem:[%s2 + $0x984] sm:$0xf]
  %v2926 = vld [vmem:[%s2 + $0x988] sm:$0xf]
  %v2927 = vld [vmem:[%s2 + $0x98c] sm:$0xf]
  %v2928 = vld [vmem:[%s2 + $0x990] sm:$0xf]
  %v2929 = vld [vmem:[%s2 + $0x994] sm:$0xf]
  %v2930 = vld [vmem:[%s2 + $0x998] sm:$0xf]
  %v2931 = vld [vmem:[%s2 + $0x99c] sm:$0xf]
  %v2932 = vld [vmem:[%s2 + $0x9a0] sm:$0xf]
  %v2933 = vld [vmem:[%s2 + $0x9a4] sm:$0xf]
  %v2934 = vld [vmem:[%s2 + $0x9a8] sm:$0xf]
  %v2935 = vld [vmem:[%s2 + $0x9ac] sm:$0xf]
  %v2936 = vld [vmem:[%s2 + $0x9b0] sm:$0xf]
  %v2937 = vld [vmem:[%s2 + $0x9b4] sm:$0xf]
  %v2938 = vld [vmem:[%s2 + $0x9b8] sm:$0xf]
  %v2939 = vld [vmem:[%s2 + $0x9bc] sm:$0xf]
  %v2940 = vld [vmem:[%s2 + $0x9c0] sm:$0xf]
  %v2941 = vld [vmem:[%s2 + $0x9c4] sm:$0xf]
  %v2942 = vld [vmem:[%s2 + $0x9c8] sm:$0xf]
  %v2943 = vld [vmem:[%s2 + $0x9cc] sm:$0xf]
  %v2944 = vld [vmem:[%s2 + $0x9d0] sm:$0xf]
  %v2945 = vld [vmem:[%s2 + $0x9d4] sm:$0xf]
  %v2946 = vld [vmem:[%s2 + $0x9d8] sm:$0xf]
  %v2947 = vld [vmem:[%s2 + $0x9dc] sm:$0xf]
  %v2948 = vld [vmem:[%s2 + $0x9e0] sm:$0xf]
  %v2949 = vld [vmem:[%s2 + $0x9e4] sm:$0xf]
  %v2950 = vld [vmem:[%s2 + $0x9e8] sm:$0xf]
  %v2951 = vld [vmem:[%s2 + $0x9ec] sm:$0xf]
  %v2952 = vld [vmem:[%s2 + $0x9f0] sm:$0xf]
  %v2953 = vld [vmem:[%s2 + $0x9f4] sm:$0xf]
  %v2954 = vld [vmem:[%s2 + $0x9f8] sm:$0xf]
  %v2955 = vld [vmem:[%s2 + $0x9fc] sm:$0xf]
  %v3084 = vunpack.c.l.b16 %v2828
  %v3085 = vunpack.c.l.b16 %v2829
  %v3086 = vunpack.c.l.b16 %v2830
  %v3087 = vunpack.c.l.b16 %v2831
  %v3088 = vunpack.c.l.b16 %v2832
  %v3089 = vunpack.c.l.b16 %v2833
  %v3090 = vunpack.c.l.b16 %v2834
  %v3091 = vunpack.c.l.b16 %v2835
  %v3092 = vunpack.c.l.b16 %v2836
  %v3093 = vunpack.c.l.b16 %v2837
  %v3094 = vunpack.c.l.b16 %v2838
  %v3095 = vunpack.c.l.b16 %v2839
  %v3096 = vunpack.c.l.b16 %v2840
  %v3097 = vunpack.c.l.b16 %v2841
  %v3098 = vunpack.c.l.b16 %v2842
  %v3099 = vunpack.c.l.b16 %v2843
  %v3100 = vunpack.c.l.b16 %v2844
  %v3101 = vunpack.c.l.b16 %v2845
  %v3102 = vunpack.c.l.b16 %v2846
  %v3103 = vunpack.c.l.b16 %v2847
  %v3104 = vunpack.c.l.b16 %v2848
  %v3105 = vunpack.c.l.b16 %v2849
  %v3106 = vunpack.c.l.b16 %v2850
  %v3107 = vunpack.c.l.b16 %v2851
  %v3108 = vunpack.c.l.b16 %v2852
  %v3109 = vunpack.c.l.b16 %v2853
  %v3110 = vunpack.c.l.b16 %v2854
  %v3111 = vunpack.c.l.b16 %v2855
  %v3112 = vunpack.c.l.b16 %v2856
  %v3113 = vunpack.c.l.b16 %v2857
  %v3114 = vunpack.c.l.b16 %v2858
  %v3115 = vunpack.c.l.b16 %v2859
  %v3116 = vunpack.c.l.b16 %v2860
  %v3117 = vunpack.c.l.b16 %v2861
  %v3118 = vunpack.c.l.b16 %v2862
  %v3119 = vunpack.c.l.b16 %v2863
  %v3120 = vunpack.c.l.b16 %v2864
  %v3121 = vunpack.c.l.b16 %v2865
  %v3122 = vunpack.c.l.b16 %v2866
  %v3123 = vunpack.c.l.b16 %v2867
  %v3124 = vunpack.c.l.b16 %v2868
  %v3125 = vunpack.c.l.b16 %v2869
  %v3126 = vunpack.c.l.b16 %v2870
  %v3127 = vunpack.c.l.b16 %v2871
  %v3128 = vunpack.c.l.b16 %v2872
  %v3129 = vunpack.c.l.b16 %v2873
  %v3130 = vunpack.c.l.b16 %v2874
  %v3131 = vunpack.c.l.b16 %v2875
  %v3132 = vunpack.c.l.b16 %v2876
  %v3133 = vunpack.c.l.b16 %v2877
  %v3134 = vunpack.c.l.b16 %v2878
  %v3135 = vunpack.c.l.b16 %v2879
  %v3136 = vunpack.c.l.b16 %v2880
  %v3137 = vunpack.c.l.b16 %v2881
  %v3138 = vunpack.c.l.b16 %v2882
  %v3139 = vunpack.c.l.b16 %v2883
  %v3140 = vunpack.c.l.b16 %v2884
  %v3141 = vunpack.c.l.b16 %v2885
  %v3142 = vunpack.c.l.b16 %v2886
  %v3143 = vunpack.c.l.b16 %v2887
  %v3144 = vunpack.c.l.b16 %v2888
  %v3145 = vunpack.c.l.b16 %v2889
  %v3146 = vunpack.c.l.b16 %v2890
  %v3147 = vunpack.c.l.b16 %v2891
  %v3148 = vunpack.c.l.b16 %v2892
  %v3149 = vunpack.c.l.b16 %v2893
  %v3150 = vunpack.c.l.b16 %v2894
  %v3151 = vunpack.c.l.b16 %v2895
  %v3152 = vunpack.c.l.b16 %v2896
  %v3153 = vunpack.c.l.b16 %v2897
  %v3154 = vunpack.c.l.b16 %v2898
  %v3155 = vunpack.c.l.b16 %v2899
  %v3156 = vunpack.c.l.b16 %v2900
  %v3157 = vunpack.c.l.b16 %v2901
  %v3158 = vunpack.c.l.b16 %v2902
  %v3159 = vunpack.c.l.b16 %v2903
  %v3160 = vunpack.c.l.b16 %v2904
  %v3161 = vunpack.c.l.b16 %v2905
  %v3162 = vunpack.c.l.b16 %v2906
  %v3163 = vunpack.c.l.b16 %v2907
  %v3164 = vunpack.c.l.b16 %v2908
  %v3165 = vunpack.c.l.b16 %v2909
  %v3166 = vunpack.c.l.b16 %v2910
  %v3167 = vunpack.c.l.b16 %v2911
  %v3168 = vunpack.c.l.b16 %v2912
  %v3169 = vunpack.c.l.b16 %v2913
  %v3170 = vunpack.c.l.b16 %v2914
  %v3171 = vunpack.c.l.b16 %v2915
  %v3172 = vunpack.c.l.b16 %v2916
  %v3173 = vunpack.c.l.b16 %v2917
  %v3174 = vunpack.c.l.b16 %v2918
  %v3175 = vunpack.c.l.b16 %v2919
  %v3176 = vunpack.c.l.b16 %v2920
  %v3177 = vunpack.c.l.b16 %v2921
  %v3178 = vunpack.c.l.b16 %v2922
  %v3179 = vunpack.c.l.b16 %v2923
  %v3180 = vunpack.c.l.b16 %v2924
  %v3181 = vunpack.c.l.b16 %v2925
  %v3182 = vunpack.c.l.b16 %v2926
  %v3183 = vunpack.c.l.b16 %v2927
  %v3184 = vunpack.c.l.b16 %v2928
  %v3185 = vunpack.c.l.b16 %v2929
  %v3186 = vunpack.c.l.b16 %v2930
  %v3187 = vunpack.c.l.b16 %v2931
  %v3188 = vunpack.c.l.b16 %v2932
  %v3189 = vunpack.c.l.b16 %v2933
  %v3190 = vunpack.c.l.b16 %v2934
  %v3191 = vunpack.c.l.b16 %v2935
  %v3192 = vunpack.c.l.b16 %v2936
  %v3193 = vunpack.c.l.b16 %v2937
  %v3194 = vunpack.c.l.b16 %v2938
  %v3195 = vunpack.c.l.b16 %v2939
  %v3196 = vunpack.c.l.b16 %v2940
  %v3197 = vunpack.c.l.b16 %v2941
  %v3198 = vunpack.c.l.b16 %v2942
  %v3199 = vunpack.c.l.b16 %v2943
  %v3200 = vunpack.c.l.b16 %v2944
  %v3201 = vunpack.c.l.b16 %v2945
  %v3202 = vunpack.c.l.b16 %v2946
  %v3203 = vunpack.c.l.b16 %v2947
  %v3204 = vunpack.c.l.b16 %v2948
  %v3205 = vunpack.c.l.b16 %v2949
  %v3206 = vunpack.c.l.b16 %v2950
  %v3207 = vunpack.c.l.b16 %v2951
  %v3208 = vunpack.c.l.b16 %v2952
  %v3209 = vunpack.c.l.b16 %v2953
  %v3210 = vunpack.c.l.b16 %v2954
  %v3211 = vunpack.c.l.b16 %v2955
  %v3212 = vpack.c.b16 %v3085, %v3084
  %v3213 = vpack.c.b16 %v3087, %v3086
  %v3214 = vpack.c.b16 %v3089, %v3088
  %v3215 = vpack.c.b16 %v3091, %v3090
  %v3216 = vpack.c.b16 %v3093, %v3092
  %v3217 = vpack.c.b16 %v3095, %v3094
  %v3218 = vpack.c.b16 %v3097, %v3096
  %v3219 = vpack.c.b16 %v3099, %v3098
  %v3220 = vpack.c.b16 %v3101, %v3100
  %v3221 = vpack.c.b16 %v3103, %v3102
  %v3222 = vpack.c.b16 %v3105, %v3104
  %v3223 = vpack.c.b16 %v3107, %v3106
  %v3224 = vpack.c.b16 %v3109, %v3108
  %v3225 = vpack.c.b16 %v3111, %v3110
  %v3226 = vpack.c.b16 %v3113, %v3112
  %v3227 = vpack.c.b16 %v3115, %v3114
  %v3228 = vpack.c.b16 %v3117, %v3116
  %v3229 = vpack.c.b16 %v3119, %v3118
  %v3230 = vpack.c.b16 %v3121, %v3120
  %v3231 = vpack.c.b16 %v3123, %v3122
  %v3232 = vpack.c.b16 %v3125, %v3124
  %v3233 = vpack.c.b16 %v3127, %v3126
  %v3234 = vpack.c.b16 %v3129, %v3128
  %v3235 = vpack.c.b16 %v3131, %v3130
  %v3236 = vpack.c.b16 %v3133, %v3132
  %v3237 = vpack.c.b16 %v3135, %v3134
  %v3238 = vpack.c.b16 %v3137, %v3136
  %v3239 = vpack.c.b16 %v3139, %v3138
  %v3240 = vpack.c.b16 %v3141, %v3140
  %v3241 = vpack.c.b16 %v3143, %v3142
  %v3242 = vpack.c.b16 %v3145, %v3144
  %v3243 = vpack.c.b16 %v3147, %v3146
  %v3244 = vpack.c.b16 %v3149, %v3148
  %v3245 = vpack.c.b16 %v3151, %v3150
  %v3246 = vpack.c.b16 %v3153, %v3152
  %v3247 = vpack.c.b16 %v3155, %v3154
  %v3248 = vpack.c.b16 %v3157, %v3156
  %v3249 = vpack.c.b16 %v3159, %v3158
  %v3250 = vpack.c.b16 %v3161, %v3160
  %v3251 = vpack.c.b16 %v3163, %v3162
  %v3252 = vpack.c.b16 %v3165, %v3164
  %v3253 = vpack.c.b16 %v3167, %v3166
  %v3254 = vpack.c.b16 %v3169, %v3168
  %v3255 = vpack.c.b16 %v3171, %v3170
  %v3256 = vpack.c.b16 %v3173, %v3172
  %v3257 = vpack.c.b16 %v3175, %v3174
  %v3258 = vpack.c.b16 %v3177, %v3176
  %v3259 = vpack.c.b16 %v3179, %v3178
  %v3260 = vpack.c.b16 %v3181, %v3180
  %v3261 = vpack.c.b16 %v3183, %v3182
  %v3262 = vpack.c.b16 %v3185, %v3184
  %v3263 = vpack.c.b16 %v3187, %v3186
  %v3264 = vpack.c.b16 %v3189, %v3188
  %v3265 = vpack.c.b16 %v3191, %v3190
  %v3266 = vpack.c.b16 %v3193, %v3192
  %v3267 = vpack.c.b16 %v3195, %v3194
  %v3268 = vpack.c.b16 %v3197, %v3196
  %v3269 = vpack.c.b16 %v3199, %v3198
  %v3270 = vpack.c.b16 %v3201, %v3200
  %v3271 = vpack.c.b16 %v3203, %v3202
  %v3272 = vpack.c.b16 %v3205, %v3204
  %v3273 = vpack.c.b16 %v3207, %v3206
  %v3274 = vpack.c.b16 %v3209, %v3208
  %v3275 = vpack.c.b16 %v3211, %v3210
  %3340 = vmatprep.subr.bf16.mxu0 0
  %3341 = vmatpush1.bf16.msra.mxu0 %v3212
  %3342 = vmatprep.subr.bf16.mxu0 0
  %3343 = vmatpush1.bf16.msra.mxu0 %v3213
  %3344 = vmatprep.subr.bf16.mxu0 0
  %3345 = vmatpush1.bf16.msra.mxu0 %v3214
  %3346 = vmatprep.subr.bf16.mxu0 0
  %3347 = vmatpush1.bf16.msra.mxu0 %v3215
  %3348 = vmatprep.subr.bf16.mxu0 0
  %3349 = vmatpush1.bf16.msra.mxu0 %v3216
  %3350 = vmatprep.subr.bf16.mxu0 0
  %3351 = vmatpush1.bf16.msra.mxu0 %v3217
  %3352 = vmatprep.subr.bf16.mxu0 0
  %3353 = vmatpush1.bf16.msra.mxu0 %v3218
  %3354 = vmatprep.subr.bf16.mxu0 0
  %3355 = vmatpush1.bf16.msra.mxu0 %v3219
  %3356 = vmatprep.subr.bf16.mxu0 0
  %3357 = vmatpush1.bf16.msra.mxu0 %v3220
  %3358 = vmatprep.subr.bf16.mxu0 0
  %3359 = vmatpush1.bf16.msra.mxu0 %v3221
  %3360 = vmatprep.subr.bf16.mxu0 0
  %3361 = vmatpush1.bf16.msra.mxu0 %v3222
  %3362 = vmatprep.subr.bf16.mxu0 0
  %3363 = vmatpush1.bf16.msra.mxu0 %v3223
  %3364 = vmatprep.subr.bf16.mxu0 0
  %3365 = vmatpush1.bf16.msra.mxu0 %v3224
  %3366 = vmatprep.subr.bf16.mxu0 0
  %3367 = vmatpush1.bf16.msra.mxu0 %v3225
  %3368 = vmatprep.subr.bf16.mxu0 0
  %3369 = vmatpush1.bf16.msra.mxu0 %v3226
  %3370 = vmatprep.subr.bf16.mxu0 0
  %3371 = vmatpush1.bf16.msra.mxu0 %v3227
  %3372 = vmatprep.mubr.bf16.mxu0 %v2821
  %3373 = vmatmul.mubr.bf16.gmra.mrb[0].mxu0 %v2820
  %v3374 = vpop.f32.mrb[0].mxu0
  %v3375 = vadd.f32 0.0, %v3374
  %v3376 = vpop.f32.mrb[0].mxu0
  %v3377 = vpop.f32.mrb[0].mxu0
  %v3378 = vpop.f32.mrb[0].mxu0
  %3379 = vdwg.mxu0
  %3380 = vmatprep.subr.bf16.mxu0 0
  %3381 = vmatpush1.bf16.msra.mxu0 %v3228
  %3382 = vmatprep.subr.bf16.mxu0 0
  %3383 = vmatpush1.bf16.msra.mxu0 %v3229
  %3384 = vmatprep.subr.bf16.mxu0 0
  %3385 = vmatpush1.bf16.msra.mxu0 %v3230
  %3386 = vmatprep.subr.bf16.mxu0 0
  %3387 = vmatpush1.bf16.msra.mxu0 %v3231
  %3388 = vmatprep.subr.bf16.mxu0 0
  %3389 = vmatpush1.bf16.msra.mxu0 %v3232
  %3390 = vmatprep.subr.bf16.mxu0 0
  %3391 = vmatpush1.bf16.msra.mxu0 %v3233
  %3392 = vmatprep.subr.bf16.mxu0 0
  %3393 = vmatpush1.bf16.msra.mxu0 %v3234
  %3394 = vmatprep.subr.bf16.mxu0 0
  %3395 = vmatpush1.bf16.msra.mxu0 %v3235
  %3396 = vmatprep.subr.bf16.mxu0 0
  %3397 = vmatpush1.bf16.msra.mxu0 %v3236
  %3398 = vmatprep.subr.bf16.mxu0 0
  %3399 = vmatpush1.bf16.msra.mxu0 %v3237
  %3400 = vmatprep.subr.bf16.mxu0 0
  %3401 = vmatpush1.bf16.msra.mxu0 %v3238
  %3402 = vmatprep.subr.bf16.mxu0 0
  %3403 = vmatpush1.bf16.msra.mxu0 %v3239
  %3404 = vmatprep.subr.bf16.mxu0 0
  %3405 = vmatpush1.bf16.msra.mxu0 %v3240
  %3406 = vmatprep.subr.bf16.mxu0 0
  %3407 = vmatpush1.bf16.msra.mxu0 %v3241
  %3408 = vmatprep.subr.bf16.mxu0 0
  %3409 = vmatpush1.bf16.msra.mxu0 %v3242
  %3410 = vmatprep.subr.bf16.mxu0 0
  %3411 = vmatpush1.bf16.msra.mxu0 %v3243
  %3412 = vmatprep.mubr.bf16.mxu0 %v2823
  %3413 = vmatmul.mubr.bf16.gmra.mrb[0].mxu0 %v2822
  %v3414 = vpop.f32.mrb[0].mxu0
  %v3415 = vadd.f32 %v3375, %v3414
  %v3416 = vpop.f32.mrb[0].mxu0
  %v3417 = vpop.f32.mrb[0].mxu0
  %v3418 = vpop.f32.mrb[0].mxu0
  %3419 = vdwg.mxu0
  %3420 = vmatprep.subr.bf16.mxu0 0
  %3421 = vmatpush1.bf16.msra.mxu0 %v3244
  %3422 = vmatprep.subr.bf16.mxu0 0
  %3423 = vmatpush1.bf16.msra.mxu0 %v3245
  %3424 = vmatprep.subr.bf16.mxu0 0
  %3425 = vmatpush1.bf16.msra.mxu0 %v3246
  %3426 = vmatprep.subr.bf16.mxu0 0
  %3427 = vmatpush1.bf16.msra.mxu0 %v3247
  %3428 = vmatprep.subr.bf16.mxu0 0
  %3429 = vmatpush1.bf16.msra.mxu0 %v3248
  %3430 = vmatprep.subr.bf16.mxu0 0
  %3431 = vmatpush1.bf16.msra.mxu0 %v3249
  %3432 = vmatprep.subr.bf16.mxu0 0
  %3433 = vmatpush1.bf16.msra.mxu0 %v3250
  %3434 = vmatprep.subr.bf16.mxu0 0
  %3435 = vmatpush1.bf16.msra.mxu0 %v3251
  %3436 = vmatprep.subr.bf16.mxu0 0
  %3437 = vmatpush1.bf16.msra.mxu0 %v3252
  %3438 = vmatprep.subr.bf16.mxu0 0
  %3439 = vmatpush1.bf16.msra.mxu0 %v3253
  %3440 = vmatprep.subr.bf16.mxu0 0
  %3441 = vmatpush1.bf16.msra.mxu0 %v3254
  %3442 = vmatprep.subr.bf16.mxu0 0
  %3443 = vmatpush1.bf16.msra.mxu0 %v3255
  %3444 = vmatprep.subr.bf16.mxu0 0
  %3445 = vmatpush1.bf16.msra.mxu0 %v3256
  %3446 = vmatprep.subr.bf16.mxu0 0
  %3447 = vmatpush1.bf16.msra.mxu0 %v3257
  %3448 = vmatprep.subr.bf16.mxu0 0
  %3449 = vmatpush1.bf16.msra.mxu0 %v3258
  %3450 = vmatprep.subr.bf16.mxu0 0
  %3451 = vmatpush1.bf16.msra.mxu0 %v3259
  %3452 = vmatprep.mubr.bf16.mxu0 %v2825
  %3453 = vmatmul.mubr.bf16.gmra.mrb[0].mxu0 %v2824
  %v3454 = vpop.f32.mrb[0].mxu0
  %v3455 = vadd.f32 %v3415, %v3454
  %v3456 = vpop.f32.mrb[0].mxu0
  %v3457 = vpop.f32.mrb[0].mxu0
  %v3458 = vpop.f32.mrb[0].mxu0
  %3459 = vdwg.mxu0
  %3460 = vmatprep.subr.bf16.mxu0 0
  %3461 = vmatpush1.bf16.msra.mxu0 %v3260
  %3462 = vmatprep.subr.bf16.mxu0 0
  %3463 = vmatpush1.bf16.msra.mxu0 %v3261
  %3464 = vmatprep.subr.bf16.mxu0 0
  %3465 = vmatpush1.bf16.msra.mxu0 %v3262
  %3466 = vmatprep.subr.bf16.mxu0 0
  %3467 = vmatpush1.bf16.msra.mxu0 %v3263
  %3468 = vmatprep.subr.bf16.mxu0 0
  %3469 = vmatpush1.bf16.msra.mxu0 %v3264
  %3470 = vmatprep.subr.bf16.mxu0 0
  %3471 = vmatpush1.bf16.msra.mxu0 %v3265
  %3472 = vmatprep.subr.bf16.mxu0 0
  %3473 = vmatpush1.bf16.msra.mxu0 %v3266
  %3474 = vmatprep.subr.bf16.mxu0 0
  %3475 = vmatpush1.bf16.msra.mxu0 %v3267
  %3476 = vmatprep.subr.bf16.mxu0 0
  %3477 = vmatpush1.bf16.msra.mxu0 %v3268
  %3478 = vmatprep.subr.bf16.mxu0 0
  %3479 = vmatpush1.bf16.msra.mxu0 %v3269
  %3480 = vmatprep.subr.bf16.mxu0 0
  %3481 = vmatpush1.bf16.msra.mxu0 %v3270
  %3482 = vmatprep.subr.bf16.mxu0 0
  %3483 = vmatpush1.bf16.msra.mxu0 %v3271
  %3484 = vmatprep.subr.bf16.mxu0 0
  %3485 = vmatpush1.bf16.msra.mxu0 %v3272
  %3486 = vmatprep.subr.bf16.mxu0 0
  %3487 = vmatpush1.bf16.msra.mxu0 %v3273
  %3488 = vmatprep.subr.bf16.mxu0 0
  %3489 = vmatpush1.bf16.msra.mxu0 %v3274
  %3490 = vmatprep.subr.bf16.mxu0 0
  %3491 = vmatpush1.bf16.msra.mxu0 %v3275
  %3492 = vmatprep.mubr.bf16.mxu0 %v2827
  %3493 = vmatmul.mubr.bf16.gmra.mrb[0].mxu0 %v2826
  %v3494 = vpop.f32.mrb[0].mxu0
  %v3495 = vadd.f32 %v3455, %v3494
  %v3496 = vpop.f32.mrb[0].mxu0
  %v3497 = vpop.f32.mrb[0].mxu0
  %v3498 = vpop.f32.mrb[0].mxu0
  %3499 = vdwg.mxu0
  %v3500 = vadd.f32 %v2803, %v3495
  %v3501 = vld [vmem:[%s0 + $0x140] sm:$0xff]
  %v3502 = vld [vmem:[%s0 + $0x148] sm:$0xff]
  %v3503 = vld [vmem:[%s0 + $0x150] sm:$0xff]
  %v3504 = vld [vmem:[%s0 + $0x158] sm:$0xff]
  %v3505 = vld [vmem:[%s0 + $0x160] sm:$0xff]
  %v3506 = vld [vmem:[%s0 + $0x168] sm:$0xff]
  %v3507 = vld [vmem:[%s0 + $0x170] sm:$0xff]
  %v3508 = vld [vmem:[%s0 + $0x178] sm:$0xff]
  %v3509 = vcvt.s32.f32 %v3501
  %v3510 = vcvt.s32.f32 %v3502
  %v3511 = vcvt.s32.f32 %v3503
  %v3512 = vcvt.s32.f32 %v3504
  %v3513 = vcvt.s32.f32 %v3505
  %v3514 = vcvt.s32.f32 %v3506
  %v3515 = vcvt.s32.f32 %v3507
  %v3516 = vcvt.s32.f32 %v3508
  %v3517 = vpack.c.bf16 %v3509, %v3509
  %v3518 = vpack.c.bf16 %v3510, %v3510
  %v3519 = vpack.c.bf16 %v3511, %v3511
  %v3520 = vpack.c.bf16 %v3512, %v3512
  %v3521 = vpack.c.bf16 %v3513, %v3513
  %v3522 = vpack.c.bf16 %v3514, %v3514
  %v3523 = vpack.c.bf16 %v3515, %v3515
  %v3524 = vpack.c.bf16 %v3516, %v3516
  %v3525 = vld [vmem:[%s2 + $0xa00] sm:$0xf]
  %v3526 = vld [vmem:[%s2 + $0xa04] sm:$0xf]
  %v3527 = vld [vmem:[%s2 + $0xa08] sm:$0xf]
  %v3528 = vld [vmem:[%s2 + $0xa0c] sm:$0xf]
  %v3529 = vld [vmem:[%s2 + $0xa10] sm:$0xf]
  %v3530 = vld [vmem:[%s2 + $0xa14] sm:$0xf]
  %v3531 = vld [vmem:[%s2 + $0xa18] sm:$0xf]
  %v3532 = vld [vmem:[%s2 + $0xa1c] sm:$0xf]
  %v3533 = vld [vmem:[%s2 + $0xa20] sm:$0xf]
  %v3534 = vld [vmem:[%s2 + $0xa24] sm:$0xf]
  %v3535 = vld [vmem:[%s2 + $0xa28] sm:$0xf]
  %v3536 = vld [vmem:[%s2 + $0xa2c] sm:$0xf]
  %v3537 = vld [vmem:[%s2 + $0xa30] sm:$0xf]
  %v3538 = vld [vmem:[%s2 + $0xa34] sm:$0xf]
  %v3539 = vld [vmem:[%s2 + $0xa38] sm:$0xf]
  %v3540 = vld [vmem:[%s2 + $0xa3c] sm:$0xf]
  %v3541 = vld [vmem:[%s2 + $0xa40] sm:$0xf]
  %v3542 = vld [vmem:[%s2 + $0xa44] sm:$0xf]
  %v3543 = vld [vmem:[%s2 + $0xa48] sm:$0xf]
  %v3544 = vld [vmem:[%s2 + $0xa4c] sm:$0xf]
  %v3545 = vld [vmem:[%s2 + $0xa50] sm:$0xf]
  %v3546 = vld [vmem:[%s2 + $0xa54] sm:$0xf]
  %v3547 = vld [vmem:[%s2 + $0xa58] sm:$0xf]
  %v3548 = vld [vmem:[%s2 + $0xa5c] sm:$0xf]
  %v3549 = vld [vmem:[%s2 + $0xa60] sm:$0xf]
  %v3550 = vld [vmem:[%s2 + $0xa64] sm:$0xf]
  %v3551 = vld [vmem:[%s2 + $0xa68] sm:$0xf]
  %v3552 = vld [vmem:[%s2 + $0xa6c] sm:$0xf]
  %v3553 = vld [vmem:[%s2 + $0xa70] sm:$0xf]
  %v3554 = vld [vmem:[%s2 + $0xa74] sm:$0xf]
  %v3555 = vld [vmem:[%s2 + $0xa78] sm:$0xf]
  %v3556 = vld [vmem:[%s2 + $0xa7c] sm:$0xf]
  %v3557 = vld [vmem:[%s2 + $0xa80] sm:$0xf]
  %v3558 = vld [vmem:[%s2 + $0xa84] sm:$0xf]
  %v3559 = vld [vmem:[%s2 + $0xa88] sm:$0xf]
  %v3560 = vld [vmem:[%s2 + $0xa8c] sm:$0xf]
  %v3561 = vld [vmem:[%s2 + $0xa90] sm:$0xf]
  %v3562 = vld [vmem:[%s2 + $0xa94] sm:$0xf]
  %v3563 = vld [vmem:[%s2 + $0xa98] sm:$0xf]
  %v3564 = vld [vmem:[%s2 + $0xa9c] sm:$0xf]
  %v3565 = vld [vmem:[%s2 + $0xaa0] sm:$0xf]
  %v3566 = vld [vmem:[%s2 + $0xaa4] sm:$0xf]
  %v3567 = vld [vmem:[%s2 + $0xaa8] sm:$0xf]
  %v3568 = vld [vmem:[%s2 + $0xaac] sm:$0xf]
  %v3569 = vld [vmem:[%s2 + $0xab0] sm:$0xf]
  %v3570 = vld [vmem:[%s2 + $0xab4] sm:$0xf]
  %v3571 = vld [vmem:[%s2 + $0xab8] sm:$0xf]
  %v3572 = vld [vmem:[%s2 + $0xabc] sm:$0xf]
  %v3573 = vld [vmem:[%s2 + $0xac0] sm:$0xf]
  %v3574 = vld [vmem:[%s2 + $0xac4] sm:$0xf]
  %v3575 = vld [vmem:[%s2 + $0xac8] sm:$0xf]
  %v3576 = vld [vmem:[%s2 + $0xacc] sm:$0xf]
  %v3577 = vld [vmem:[%s2 + $0xad0] sm:$0xf]
  %v3578 = vld [vmem:[%s2 + $0xad4] sm:$0xf]
  %v3579 = vld [vmem:[%s2 + $0xad8] sm:$0xf]
  %v3580 = vld [vmem:[%s2 + $0xadc] sm:$0xf]
  %v3581 = vld [vmem:[%s2 + $0xae0] sm:$0xf]
  %v3582 = vld [vmem:[%s2 + $0xae4] sm:$0xf]
  %v3583 = vld [vmem:[%s2 + $0xae8] sm:$0xf]
  %v3584 = vld [vmem:[%s2 + $0xaec] sm:$0xf]
  %v3585 = vld [vmem:[%s2 + $0xaf0] sm:$0xf]
  %v3586 = vld [vmem:[%s2 + $0xaf4] sm:$0xf]
  %v3587 = vld [vmem:[%s2 + $0xaf8] sm:$0xf]
  %v3588 = vld [vmem:[%s2 + $0xafc] sm:$0xf]
  %v3589 = vld [vmem:[%s2 + $0xb00] sm:$0xf]
  %v3590 = vld [vmem:[%s2 + $0xb04] sm:$0xf]
  %v3591 = vld [vmem:[%s2 + $0xb08] sm:$0xf]
  %v3592 = vld [vmem:[%s2 + $0xb0c] sm:$0xf]
  %v3593 = vld [vmem:[%s2 + $0xb10] sm:$0xf]
  %v3594 = vld [vmem:[%s2 + $0xb14] sm:$0xf]
  %v3595 = vld [vmem:[%s2 + $0xb18] sm:$0xf]
  %v3596 = vld [vmem:[%s2 + $0xb1c] sm:$0xf]
  %v3597 = vld [vmem:[%s2 + $0xb20] sm:$0xf]
  %v3598 = vld [vmem:[%s2 + $0xb24] sm:$0xf]
  %v3599 = vld [vmem:[%s2 + $0xb28] sm:$0xf]
  %v3600 = vld [vmem:[%s2 + $0xb2c] sm:$0xf]
  %v3601 = vld [vmem:[%s2 + $0xb30] sm:$0xf]
  %v3602 = vld [vmem:[%s2 + $0xb34] sm:$0xf]
  %v3603 = vld [vmem:[%s2 + $0xb38] sm:$0xf]
  %v3604 = vld [vmem:[%s2 + $0xb3c] sm:$0xf]
  %v3605 = vld [vmem:[%s2 + $0xb40] sm:$0xf]
  %v3606 = vld [vmem:[%s2 + $0xb44] sm:$0xf]
  %v3607 = vld [vmem:[%s2 + $0xb48] sm:$0xf]
  %v3608 = vld [vmem:[%s2 + $0xb4c] sm:$0xf]
  %v3609 = vld [vmem:[%s2 + $0xb50] sm:$0xf]
  %v3610 = vld [vmem:[%s2 + $0xb54] sm:$0xf]
  %v3611 = vld [vmem:[%s2 + $0xb58] sm:$0xf]
  %v3612 = vld [vmem:[%s2 + $0xb5c] sm:$0xf]
  %v3613 = vld [vmem:[%s2 + $0xb60] sm:$0xf]
  %v3614 = vld [vmem:[%s2 + $0xb64] sm:$0xf]
  %v3615 = vld [vmem:[%s2 + $0xb68] sm:$0xf]
  %v3616 = vld [vmem:[%s2 + $0xb6c] sm:$0xf]
  %v3617 = vld [vmem:[%s2 + $0xb70] sm:$0xf]
  %v3618 = vld [vmem:[%s2 + $0xb74] sm:$0xf]
  %v3619 = vld [vmem:[%s2 + $0xb78] sm:$0xf]
  %v3620 = vld [vmem:[%s2 + $0xb7c] sm:$0xf]
  %v3621 = vld [vmem:[%s2 + $0xb80] sm:$0xf]
  %v3622 = vld [vmem:[%s2 + $0xb84] sm:$0xf]
  %v3623 = vld [vmem:[%s2 + $0xb88] sm:$0xf]
  %v3624 = vld [vmem:[%s2 + $0xb8c] sm:$0xf]
  %v3625 = vld [vmem:[%s2 + $0xb90] sm:$0xf]
  %v3626 = vld [vmem:[%s2 + $0xb94] sm:$0xf]
  %v3627 = vld [vmem:[%s2 + $0xb98] sm:$0xf]
  %v3628 = vld [vmem:[%s2 + $0xb9c] sm:$0xf]
  %v3629 = vld [vmem:[%s2 + $0xba0] sm:$0xf]
  %v3630 = vld [vmem:[%s2 + $0xba4] sm:$0xf]
  %v3631 = vld [vmem:[%s2 + $0xba8] sm:$0xf]
  %v3632 = vld [vmem:[%s2 + $0xbac] sm:$0xf]
  %v3633 = vld [vmem:[%s2 + $0xbb0] sm:$0xf]
  %v3634 = vld [vmem:[%s2 + $0xbb4] sm:$0xf]
  %v3635 = vld [vmem:[%s2 + $0xbb8] sm:$0xf]
  %v3636 = vld [vmem:[%s2 + $0xbbc] sm:$0xf]
  %v3637 = vld [vmem:[%s2 + $0xbc0] sm:$0xf]
  %v3638 = vld [vmem:[%s2 + $0xbc4] sm:$0xf]
  %v3639 = vld [vmem:[%s2 + $0xbc8] sm:$0xf]
  %v3640 = vld [vmem:[%s2 + $0xbcc] sm:$0xf]
  %v3641 = vld [vmem:[%s2 + $0xbd0] sm:$0xf]
  %v3642 = vld [vmem:[%s2 + $0xbd4] sm:$0xf]
  %v3643 = vld [vmem:[%s2 + $0xbd8] sm:$0xf]
  %v3644 = vld [vmem:[%s2 + $0xbdc] sm:$0xf]
  %v3645 = vld [vmem:[%s2 + $0xbe0] sm:$0xf]
  %v3646 = vld [vmem:[%s2 + $0xbe4] sm:$0xf]
  %v3647 = vld [vmem:[%s2 + $0xbe8] sm:$0xf]
  %v3648 = vld [vmem:[%s2 + $0xbec] sm:$0xf]
  %v3649 = vld [vmem:[%s2 + $0xbf0] sm:$0xf]
  %v3650 = vld [vmem:[%s2 + $0xbf4] sm:$0xf]
  %v3651 = vld [vmem:[%s2 + $0xbf8] sm:$0xf]
  %v3652 = vld [vmem:[%s2 + $0xbfc] sm:$0xf]
  %v3781 = vunpack.c.l.b16 %v3525
  %v3782 = vunpack.c.l.b16 %v3526
  %v3783 = vunpack.c.l.b16 %v3527
  %v3784 = vunpack.c.l.b16 %v3528
  %v3785 = vunpack.c.l.b16 %v3529
  %v3786 = vunpack.c.l.b16 %v3530
  %v3787 = vunpack.c.l.b16 %v3531
  %v3788 = vunpack.c.l.b16 %v3532
  %v3789 = vunpack.c.l.b16 %v3533
  %v3790 = vunpack.c.l.b16 %v3534
  %v3791 = vunpack.c.l.b16 %v3535
  %v3792 = vunpack.c.l.b16 %v3536
  %v3793 = vunpack.c.l.b16 %v3537
  %v3794 = vunpack.c.l.b16 %v3538
  %v3795 = vunpack.c.l.b16 %v3539
  %v3796 = vunpack.c.l.b16 %v3540
  %v3797 = vunpack.c.l.b16 %v3541
  %v3798 = vunpack.c.l.b16 %v3542
  %v3799 = vunpack.c.l.b16 %v3543
  %v3800 = vunpack.c.l.b16 %v3544
  %v3801 = vunpack.c.l.b16 %v3545
  %v3802 = vunpack.c.l.b16 %v3546
  %v3803 = vunpack.c.l.b16 %v3547
  %v3804 = vunpack.c.l.b16 %v3548
  %v3805 = vunpack.c.l.b16 %v3549
  %v3806 = vunpack.c.l.b16 %v3550
  %v3807 = vunpack.c.l.b16 %v3551
  %v3808 = vunpack.c.l.b16 %v3552
  %v3809 = vunpack.c.l.b16 %v3553
  %v3810 = vunpack.c.l.b16 %v3554
  %v3811 = vunpack.c.l.b16 %v3555
  %v3812 = vunpack.c.l.b16 %v3556
  %v3813 = vunpack.c.l.b16 %v3557
  %v3814 = vunpack.c.l.b16 %v3558
  %v3815 = vunpack.c.l.b16 %v3559
  %v3816 = vunpack.c.l.b16 %v3560
  %v3817 = vunpack.c.l.b16 %v3561
  %v3818 = vunpack.c.l.b16 %v3562
  %v3819 = vunpack.c.l.b16 %v3563
  %v3820 = vunpack.c.l.b16 %v3564
  %v3821 = vunpack.c.l.b16 %v3565
  %v3822 = vunpack.c.l.b16 %v3566
  %v3823 = vunpack.c.l.b16 %v3567
  %v3824 = vunpack.c.l.b16 %v3568
  %v3825 = vunpack.c.l.b16 %v3569
  %v3826 = vunpack.c.l.b16 %v3570
  %v3827 = vunpack.c.l.b16 %v3571
  %v3828 = vunpack.c.l.b16 %v3572
  %v3829 = vunpack.c.l.b16 %v3573
  %v3830 = vunpack.c.l.b16 %v3574
  %v3831 = vunpack.c.l.b16 %v3575
  %v3832 = vunpack.c.l.b16 %v3576
  %v3833 = vunpack.c.l.b16 %v3577
  %v3834 = vunpack.c.l.b16 %v3578
  %v3835 = vunpack.c.l.b16 %v3579
  %v3836 = vunpack.c.l.b16 %v3580
  %v3837 = vunpack.c.l.b16 %v3581
  %v3838 = vunpack.c.l.b16 %v3582
  %v3839 = vunpack.c.l.b16 %v3583
  %v3840 = vunpack.c.l.b16 %v3584
  %v3841 = vunpack.c.l.b16 %v3585
  %v3842 = vunpack.c.l.b16 %v3586
  %v3843 = vunpack.c.l.b16 %v3587
  %v3844 = vunpack.c.l.b16 %v3588
  %v3845 = vunpack.c.l.b16 %v3589
  %v3846 = vunpack.c.l.b16 %v3590
  %v3847 = vunpack.c.l.b16 %v3591
  %v3848 = vunpack.c.l.b16 %v3592
  %v3849 = vunpack.c.l.b16 %v3593
  %v3850 = vunpack.c.l.b16 %v3594
  %v3851 = vunpack.c.l.b16 %v3595
  %v3852 = vunpack.c.l.b16 %v3596
  %v3853 = vunpack.c.l.b16 %v3597
  %v3854 = vunpack.c.l.b16 %v3598
  %v3855 = vunpack.c.l.b16 %v3599
  %v3856 = vunpack.c.l.b16 %v3600
  %v3857 = vunpack.c.l.b16 %v3601
  %v3858 = vunpack.c.l.b16 %v3602
  %v3859 = vunpack.c.l.b16 %v3603
  %v3860 = vunpack.c.l.b16 %v3604
  %v3861 = vunpack.c.l.b16 %v3605
  %v3862 = vunpack.c.l.b16 %v3606
  %v3863 = vunpack.c.l.b16 %v3607
  %v3864 = vunpack.c.l.b16 %v3608
  %v3865 = vunpack.c.l.b16 %v3609
  %v3866 = vunpack.c.l.b16 %v3610
  %v3867 = vunpack.c.l.b16 %v3611
  %v3868 = vunpack.c.l.b16 %v3612
  %v3869 = vunpack.c.l.b16 %v3613
  %v3870 = vunpack.c.l.b16 %v3614
  %v3871 = vunpack.c.l.b16 %v3615
  %v3872 = vunpack.c.l.b16 %v3616
  %v3873 = vunpack.c.l.b16 %v3617
  %v3874 = vunpack.c.l.b16 %v3618
  %v3875 = vunpack.c.l.b16 %v3619
  %v3876 = vunpack.c.l.b16 %v3620
  %v3877 = vunpack.c.l.b16 %v3621
  %v3878 = vunpack.c.l.b16 %v3622
  %v3879 = vunpack.c.l.b16 %v3623
  %v3880 = vunpack.c.l.b16 %v3624
  %v3881 = vunpack.c.l.b16 %v3625
  %v3882 = vunpack.c.l.b16 %v3626
  %v3883 = vunpack.c.l.b16 %v3627
  %v3884 = vunpack.c.l.b16 %v3628
  %v3885 = vunpack.c.l.b16 %v3629
  %v3886 = vunpack.c.l.b16 %v3630
  %v3887 = vunpack.c.l.b16 %v3631
  %v3888 = vunpack.c.l.b16 %v3632
  %v3889 = vunpack.c.l.b16 %v3633
  %v3890 = vunpack.c.l.b16 %v3634
  %v3891 = vunpack.c.l.b16 %v3635
  %v3892 = vunpack.c.l.b16 %v3636
  %v3893 = vunpack.c.l.b16 %v3637
  %v3894 = vunpack.c.l.b16 %v3638
  %v3895 = vunpack.c.l.b16 %v3639
  %v3896 = vunpack.c.l.b16 %v3640
  %v3897 = vunpack.c.l.b16 %v3641
  %v3898 = vunpack.c.l.b16 %v3642
  %v3899 = vunpack.c.l.b16 %v3643
  %v3900 = vunpack.c.l.b16 %v3644
  %v3901 = vunpack.c.l.b16 %v3645
  %v3902 = vunpack.c.l.b16 %v3646
  %v3903 = vunpack.c.l.b16 %v3647
  %v3904 = vunpack.c.l.b16 %v3648
  %v3905 = vunpack.c.l.b16 %v3649
  %v3906 = vunpack.c.l.b16 %v3650
  %v3907 = vunpack.c.l.b16 %v3651
  %v3908 = vunpack.c.l.b16 %v3652
  %v3909 = vpack.c.b16 %v3782, %v3781
  %v3910 = vpack.c.b16 %v3784, %v3783
  %v3911 = vpack.c.b16 %v3786, %v3785
  %v3912 = vpack.c.b16 %v3788, %v3787
  %v3913 = vpack.c.b16 %v3790, %v3789
  %v3914 = vpack.c.b16 %v3792, %v3791
  %v3915 = vpack.c.b16 %v3794, %v3793
  %v3916 = vpack.c.b16 %v3796, %v3795
  %v3917 = vpack.c.b16 %v3798, %v3797
  %v3918 = vpack.c.b16 %v3800, %v3799
  %v3919 = vpack.c.b16 %v3802, %v3801
  %v3920 = vpack.c.b16 %v3804, %v3803
  %v3921 = vpack.c.b16 %v3806, %v3805
  %v3922 = vpack.c.b16 %v3808, %v3807
  %v3923 = vpack.c.b16 %v3810, %v3809
  %v3924 = vpack.c.b16 %v3812, %v3811
  %v3925 = vpack.c.b16 %v3814, %v3813
  %v3926 = vpack.c.b16 %v3816, %v3815
  %v3927 = vpack.c.b16 %v3818, %v3817
  %v3928 = vpack.c.b16 %v3820, %v3819
  %v3929 = vpack.c.b16 %v3822, %v3821
  %v3930 = vpack.c.b16 %v3824, %v3823
  %v3931 = vpack.c.b16 %v3826, %v3825
  %v3932 = vpack.c.b16 %v3828, %v3827
  %v3933 = vpack.c.b16 %v3830, %v3829
  %v3934 = vpack.c.b16 %v3832, %v3831
  %v3935 = vpack.c.b16 %v3834, %v3833
  %v3936 = vpack.c.b16 %v3836, %v3835
  %v3937 = vpack.c.b16 %v3838, %v3837
  %v3938 = vpack.c.b16 %v3840, %v3839
  %v3939 = vpack.c.b16 %v3842, %v3841
  %v3940 = vpack.c.b16 %v3844, %v3843
  %v3941 = vpack.c.b16 %v3846, %v3845
  %v3942 = vpack.c.b16 %v3848, %v3847
  %v3943 = vpack.c.b16 %v3850, %v3849
  %v3944 = vpack.c.b16 %v3852, %v3851
  %v3945 = vpack.c.b16 %v3854, %v3853
  %v3946 = vpack.c.b16 %v3856, %v3855
  %v3947 = vpack.c.b16 %v3858, %v3857
  %v3948 = vpack.c.b16 %v3860, %v3859
  %v3949 = vpack.c.b16 %v3862, %v3861
  %v3950 = vpack.c.b16 %v3864, %v3863
  %v3951 = vpack.c.b16 %v3866, %v3865
  %v3952 = vpack.c.b16 %v3868, %v3867
  %v3953 = vpack.c.b16 %v3870, %v3869
  %v3954 = vpack.c.b16 %v3872, %v3871
  %v3955 = vpack.c.b16 %v3874, %v3873
  %v3956 = vpack.c.b16 %v3876, %v3875
  %v3957 = vpack.c.b16 %v3878, %v3877
  %v3958 = vpack.c.b16 %v3880, %v3879
  %v3959 = vpack.c.b16 %v3882, %v3881
  %v3960 = vpack.c.b16 %v3884, %v3883
  %v3961 = vpack.c.b16 %v3886, %v3885
  %v3962 = vpack.c.b16 %v3888, %v3887
  %v3963 = vpack.c.b16 %v3890, %v3889
  %v3964 = vpack.c.b16 %v3892, %v3891
  %v3965 = vpack.c.b16 %v3894, %v3893
  %v3966 = vpack.c.b16 %v3896, %v3895
  %v3967 = vpack.c.b16 %v3898, %v3897
  %v3968 = vpack.c.b16 %v3900, %v3899
  %v3969 = vpack.c.b16 %v3902, %v3901
  %v3970 = vpack.c.b16 %v3904, %v3903
  %v3971 = vpack.c.b16 %v3906, %v3905
  %v3972 = vpack.c.b16 %v3908, %v3907
  %4037 = vmatprep.subr.bf16.mxu0 0
  %4038 = vmatpush1.bf16.msra.mxu0 %v3909
  %4039 = vmatprep.subr.bf16.mxu0 0
  %4040 = vmatpush1.bf16.msra.mxu0 %v3910
  %4041 = vmatprep.subr.bf16.mxu0 0
  %4042 = vmatpush1.bf16.msra.mxu0 %v3911
  %4043 = vmatprep.subr.bf16.mxu0 0
  %4044 = vmatpush1.bf16.msra.mxu0 %v3912
  %4045 = vmatprep.subr.bf16.mxu0 0
  %4046 = vmatpush1.bf16.msra.mxu0 %v3913
  %4047 = vmatprep.subr.bf16.mxu0 0
  %4048 = vmatpush1.bf16.msra.mxu0 %v3914
  %4049 = vmatprep.subr.bf16.mxu0 0
  %4050 = vmatpush1.bf16.msra.mxu0 %v3915
  %4051 = vmatprep.subr.bf16.mxu0 0
  %4052 = vmatpush1.bf16.msra.mxu0 %v3916
  %4053 = vmatprep.subr.bf16.mxu0 0
  %4054 = vmatpush1.bf16.msra.mxu0 %v3917
  %4055 = vmatprep.subr.bf16.mxu0 0
  %4056 = vmatpush1.bf16.msra.mxu0 %v3918
  %4057 = vmatprep.subr.bf16.mxu0 0
  %4058 = vmatpush1.bf16.msra.mxu0 %v3919
  %4059 = vmatprep.subr.bf16.mxu0 0
  %4060 = vmatpush1.bf16.msra.mxu0 %v3920
  %4061 = vmatprep.subr.bf16.mxu0 0
  %4062 = vmatpush1.bf16.msra.mxu0 %v3921
  %4063 = vmatprep.subr.bf16.mxu0 0
  %4064 = vmatpush1.bf16.msra.mxu0 %v3922
  %4065 = vmatprep.subr.bf16.mxu0 0
  %4066 = vmatpush1.bf16.msra.mxu0 %v3923
  %4067 = vmatprep.subr.bf16.mxu0 0
  %4068 = vmatpush1.bf16.msra.mxu0 %v3924
  %4069 = vmatprep.mubr.bf16.mxu0 %v3518
  %4070 = vmatmul.mubr.bf16.gmra.mrb[0].mxu0 %v3517
  %v4071 = vpop.f32.mrb[0].mxu0
  %v4072 = vadd.f32 0.0, %v4071
  %v4073 = vpop.f32.mrb[0].mxu0
  %v4074 = vpop.f32.mrb[0].mxu0
  %v4075 = vpop.f32.mrb[0].mxu0
  %4076 = vdwg.mxu0
  %4077 = vmatprep.subr.bf16.mxu0 0
  %4078 = vmatpush1.bf16.msra.mxu0 %v3925
  %4079 = vmatprep.subr.bf16.mxu0 0
  %4080 = vmatpush1.bf16.msra.mxu0 %v3926
  %4081 = vmatprep.subr.bf16.mxu0 0
  %4082 = vmatpush1.bf16.msra.mxu0 %v3927
  %4083 = vmatprep.subr.bf16.mxu0 0
  %4084 = vmatpush1.bf16.msra.mxu0 %v3928
  %4085 = vmatprep.subr.bf16.mxu0 0
  %4086 = vmatpush1.bf16.msra.mxu0 %v3929
  %4087 = vmatprep.subr.bf16.mxu0 0
  %4088 = vmatpush1.bf16.msra.mxu0 %v3930
  %4089 = vmatprep.subr.bf16.mxu0 0
  %4090 = vmatpush1.bf16.msra.mxu0 %v3931
  %4091 = vmatprep.subr.bf16.mxu0 0
  %4092 = vmatpush1.bf16.msra.mxu0 %v3932
  %4093 = vmatprep.subr.bf16.mxu0 0
  %4094 = vmatpush1.bf16.msra.mxu0 %v3933
  %4095 = vmatprep.subr.bf16.mxu0 0
  %4096 = vmatpush1.bf16.msra.mxu0 %v3934
  %4097 = vmatprep.subr.bf16.mxu0 0
  %4098 = vmatpush1.bf16.msra.mxu0 %v3935
  %4099 = vmatprep.subr.bf16.mxu0 0
  %4100 = vmatpush1.bf16.msra.mxu0 %v3936
  %4101 = vmatprep.subr.bf16.mxu0 0
  %4102 = vmatpush1.bf16.msra.mxu0 %v3937
  %4103 = vmatprep.subr.bf16.mxu0 0
  %4104 = vmatpush1.bf16.msra.mxu0 %v3938
  %4105 = vmatprep.subr.bf16.mxu0 0
  %4106 = vmatpush1.bf16.msra.mxu0 %v3939
  %4107 = vmatprep.subr.bf16.mxu0 0
  %4108 = vmatpush1.bf16.msra.mxu0 %v3940
  %4109 = vmatprep.mubr.bf16.mxu0 %v3520
  %4110 = vmatmul.mubr.bf16.gmra.mrb[0].mxu0 %v3519
  %v4111 = vpop.f32.mrb[0].mxu0
  %v4112 = vadd.f32 %v4072, %v4111
  %v4113 = vpop.f32.mrb[0].mxu0
  %v4114 = vpop.f32.mrb[0].mxu0
  %v4115 = vpop.f32.mrb[0].mxu0
  %4116 = vdwg.mxu0
  %4117 = vmatprep.subr.bf16.mxu0 0
  %4118 = vmatpush1.bf16.msra.mxu0 %v3941
  %4119 = vmatprep.subr.bf16.mxu0 0
  %4120 = vmatpush1.bf16.msra.mxu0 %v3942
  %4121 = vmatprep.subr.bf16.mxu0 0
  %4122 = vmatpush1.bf16.msra.mxu0 %v3943
  %4123 = vmatprep.subr.bf16.mxu0 0
  %4124 = vmatpush1.bf16.msra.mxu0 %v3944
  %4125 = vmatprep.subr.bf16.mxu0 0
  %4126 = vmatpush1.bf16.msra.mxu0 %v3945
  %4127 = vmatprep.subr.bf16.mxu0 0
  %4128 = vmatpush1.bf16.msra.mxu0 %v3946
  %4129 = vmatprep.subr.bf16.mxu0 0
  %4130 = vmatpush1.bf16.msra.mxu0 %v3947
  %4131 = vmatprep.subr.bf16.mxu0 0
  %4132 = vmatpush1.bf16.msra.mxu0 %v3948
  %4133 = vmatprep.subr.bf16.mxu0 0
  %4134 = vmatpush1.bf16.msra.mxu0 %v3949
  %4135 = vmatprep.subr.bf16.mxu0 0
  %4136 = vmatpush1.bf16.msra.mxu0 %v3950
  %4137 = vmatprep.subr.bf16.mxu0 0
  %4138 = vmatpush1.bf16.msra.mxu0 %v3951
  %4139 = vmatprep.subr.bf16.mxu0 0
  %4140 = vmatpush1.bf16.msra.mxu0 %v3952
  %4141 = vmatprep.subr.bf16.mxu0 0
  %4142 = vmatpush1.bf16.msra.mxu0 %v3953
  %4143 = vmatprep.subr.bf16.mxu0 0
  %4144 = vmatpush1.bf16.msra.mxu0 %v3954
  %4145 = vmatprep.subr.bf16.mxu0 0
  %4146 = vmatpush1.bf16.msra.mxu0 %v3955
  %4147 = vmatprep.subr.bf16.mxu0 0
  %4148 = vmatpush1.bf16.msra.mxu0 %v3956
  %4149 = vmatprep.mubr.bf16.mxu0 %v3522
  %4150 = vmatmul.mubr.bf16.gmra.mrb[0].mxu0 %v3521
  %v4151 = vpop.f32.mrb[0].mxu0
  %v4152 = vadd.f32 %v4112, %v4151
  %v4153 = vpop.f32.mrb[0].mxu0
  %v4154 = vpop.f32.mrb[0].mxu0
  %v4155 = vpop.f32.mrb[0].mxu0
  %4156 = vdwg.mxu0
  %4157 = vmatprep.subr.bf16.mxu0 0
  %4158 = vmatpush1.bf16.msra.mxu0 %v3957
  %4159 = vmatprep.subr.bf16.mxu0 0
  %4160 = vmatpush1.bf16.msra.mxu0 %v3958
  %4161 = vmatprep.subr.bf16.mxu0 0
  %4162 = vmatpush1.bf16.msra.mxu0 %v3959
  %4163 = vmatprep.subr.bf16.mxu0 0
  %4164 = vmatpush1.bf16.msra.mxu0 %v3960
  %4165 = vmatprep.subr.bf16.mxu0 0
  %4166 = vmatpush1.bf16.msra.mxu0 %v3961
  %4167 = vmatprep.subr.bf16.mxu0 0
  %4168 = vmatpush1.bf16.msra.mxu0 %v3962
  %4169 = vmatprep.subr.bf16.mxu0 0
  %4170 = vmatpush1.bf16.msra.mxu0 %v3963
  %4171 = vmatprep.subr.bf16.mxu0 0
  %4172 = vmatpush1.bf16.msra.mxu0 %v3964
  %4173 = vmatprep.subr.bf16.mxu0 0
  %4174 = vmatpush1.bf16.msra.mxu0 %v3965
  %4175 = vmatprep.subr.bf16.mxu0 0
  %4176 = vmatpush1.bf16.msra.mxu0 %v3966
  %4177 = vmatprep.subr.bf16.mxu0 0
  %4178 = vmatpush1.bf16.msra.mxu0 %v3967
  %4179 = vmatprep.subr.bf16.mxu0 0
  %4180 = vmatpush1.bf16.msra.mxu0 %v3968
  %4181 = vmatprep.subr.bf16.mxu0 0
  %4182 = vmatpush1.bf16.msra.mxu0 %v3969
  %4183 = vmatprep.subr.bf16.mxu0 0
  %4184 = vmatpush1.bf16.msra.mxu0 %v3970
  %4185 = vmatprep.subr.bf16.mxu0 0
  %4186 = vmatpush1.bf16.msra.mxu0 %v3971
  %4187 = vmatprep.subr.bf16.mxu0 0
  %4188 = vmatpush1.bf16.msra.mxu0 %v3972
  %4189 = vmatprep.mubr.bf16.mxu0 %v3524
  %4190 = vmatmul.mubr.bf16.gmra.mrb[0].mxu0 %v3523
  %v4191 = vpop.f32.mrb[0].mxu0
  %v4192 = vadd.f32 %v4152, %v4191
  %v4193 = vpop.f32.mrb[0].mxu0
  %v4194 = vpop.f32.mrb[0].mxu0
  %v4195 = vpop.f32.mrb[0].mxu0
  %4196 = vdwg.mxu0
  %v4197 = vadd.f32 %v3500, %v4192
  %v4198 = vld [vmem:[%s0 + $0x180] sm:$0xff]
  %v4199 = vld [vmem:[%s0 + $0x188] sm:$0xff]
  %v4200 = vld [vmem:[%s0 + $0x190] sm:$0xff]
  %v4201 = vld [vmem:[%s0 + $0x198] sm:$0xff]
  %v4202 = vld [vmem:[%s0 + $0x1a0] sm:$0xff]
  %v4203 = vld [vmem:[%s0 + $0x1a8] sm:$0xff]
  %v4204 = vld [vmem:[%s0 + $0x1b0] sm:$0xff]
  %v4205 = vld [vmem:[%s0 + $0x1b8] sm:$0xff]
  %v4206 = vcvt.s32.f32 %v4198
  %v4207 = vcvt.s32.f32 %v4199
  %v4208 = vcvt.s32.f32 %v4200
  %v4209 = vcvt.s32.f32 %v4201
  %v4210 = vcvt.s32.f32 %v4202
  %v4211 = vcvt.s32.f32 %v4203
  %v4212 = vcvt.s32.f32 %v4204
  %v4213 = vcvt.s32.f32 %v4205
  %v4214 = vpack.c.bf16 %v4206, %v4206
  %v4215 = vpack.c.bf16 %v4207, %v4207
  %v4216 = vpack.c.bf16 %v4208, %v4208
  %v4217 = vpack.c.bf16 %v4209, %v4209
  %v4218 = vpack.c.bf16 %v4210, %v4210
  %v4219 = vpack.c.bf16 %v4211, %v4211
  %v4220 = vpack.c.bf16 %v4212, %v4212
  %v4221 = vpack.c.bf16 %v4213, %v4213
  %v4222 = vld [vmem:[%s2 + $0xc00] sm:$0xf]
  %v4223 = vld [vmem:[%s2 + $0xc04] sm:$0xf]
  %v4224 = vld [vmem:[%s2 + $0xc08] sm:$0xf]
  %v4225 = vld [vmem:[%s2 + $0xc0c] sm:$0xf]
  %v4226 = vld [vmem:[%s2 + $0xc10] sm:$0xf]
  %v4227 = vld [vmem:[%s2 + $0xc14] sm:$0xf]
  %v4228 = vld [vmem:[%s2 + $0xc18] sm:$0xf]
  %v4229 = vld [vmem:[%s2 + $0xc1c] sm:$0xf]
  %v4230 = vld [vmem:[%s2 + $0xc20] sm:$0xf]
  %v4231 = vld [vmem:[%s2 + $0xc24] sm:$0xf]
  %v4232 = vld [vmem:[%s2 + $0xc28] sm:$0xf]
  %v4233 = vld [vmem:[%s2 + $0xc2c] sm:$0xf]
  %v4234 = vld [vmem:[%s2 + $0xc30] sm:$0xf]
  %v4235 = vld [vmem:[%s2 + $0xc34] sm:$0xf]
  %v4236 = vld [vmem:[%s2 + $0xc38] sm:$0xf]
  %v4237 = vld [vmem:[%s2 + $0xc3c] sm:$0xf]
  %v4238 = vld [vmem:[%s2 + $0xc40] sm:$0xf]
  %v4239 = vld [vmem:[%s2 + $0xc44] sm:$0xf]
  %v4240 = vld [vmem:[%s2 + $0xc48] sm:$0xf]
  %v4241 = vld [vmem:[%s2 + $0xc4c] sm:$0xf]
  %v4242 = vld [vmem:[%s2 + $0xc50] sm:$0xf]
  %v4243 = vld [vmem:[%s2 + $0xc54] sm:$0xf]
  %v4244 = vld [vmem:[%s2 + $0xc58] sm:$0xf]
  %v4245 = vld [vmem:[%s2 + $0xc5c] sm:$0xf]
  %v4246 = vld [vmem:[%s2 + $0xc60] sm:$0xf]
  %v4247 = vld [vmem:[%s2 + $0xc64] sm:$0xf]
  %v4248 = vld [vmem:[%s2 + $0xc68] sm:$0xf]
  %v4249 = vld [vmem:[%s2 + $0xc6c] sm:$0xf]
  %v4250 = vld [vmem:[%s2 + $0xc70] sm:$0xf]
  %v4251 = vld [vmem:[%s2 + $0xc74] sm:$0xf]
  %v4252 = vld [vmem:[%s2 + $0xc78] sm:$0xf]
  %v4253 = vld [vmem:[%s2 + $0xc7c] sm:$0xf]
  %v4254 = vld [vmem:[%s2 + $0xc80] sm:$0xf]
  %v4255 = vld [vmem:[%s2 + $0xc84] sm:$0xf]
  %v4256 = vld [vmem:[%s2 + $0xc88] sm:$0xf]
  %v4257 = vld [vmem:[%s2 + $0xc8c] sm:$0xf]
  %v4258 = vld [vmem:[%s2 + $0xc90] sm:$0xf]
  %v4259 = vld [vmem:[%s2 + $0xc94] sm:$0xf]
  %v4260 = vld [vmem:[%s2 + $0xc98] sm:$0xf]
  %v4261 = vld [vmem:[%s2 + $0xc9c] sm:$0xf]
  %v4262 = vld [vmem:[%s2 + $0xca0] sm:$0xf]
  %v4263 = vld [vmem:[%s2 + $0xca4] sm:$0xf]
  %v4264 = vld [vmem:[%s2 + $0xca8] sm:$0xf]
  %v4265 = vld [vmem:[%s2 + $0xcac] sm:$0xf]
  %v4266 = vld [vmem:[%s2 + $0xcb0] sm:$0xf]
  %v4267 = vld [vmem:[%s2 + $0xcb4] sm:$0xf]
  %v4268 = vld [vmem:[%s2 + $0xcb8] sm:$0xf]
  %v4269 = vld [vmem:[%s2 + $0xcbc] sm:$0xf]
  %v4270 = vld [vmem:[%s2 + $0xcc0] sm:$0xf]
  %v4271 = vld [vmem:[%s2 + $0xcc4] sm:$0xf]
  %v4272 = vld [vmem:[%s2 + $0xcc8] sm:$0xf]
  %v4273 = vld [vmem:[%s2 + $0xccc] sm:$0xf]
  %v4274 = vld [vmem:[%s2 + $0xcd0] sm:$0xf]
  %v4275 = vld [vmem:[%s2 + $0xcd4] sm:$0xf]
  %v4276 = vld [vmem:[%s2 + $0xcd8] sm:$0xf]
  %v4277 = vld [vmem:[%s2 + $0xcdc] sm:$0xf]
  %v4278 = vld [vmem:[%s2 + $0xce0] sm:$0xf]
  %v4279 = vld [vmem:[%s2 + $0xce4] sm:$0xf]
  %v4280 = vld [vmem:[%s2 + $0xce8] sm:$0xf]
  %v4281 = vld [vmem:[%s2 + $0xcec] sm:$0xf]
  %v4282 = vld [vmem:[%s2 + $0xcf0] sm:$0xf]
  %v4283 = vld [vmem:[%s2 + $0xcf4] sm:$0xf]
  %v4284 = vld [vmem:[%s2 + $0xcf8] sm:$0xf]
  %v4285 = vld [vmem:[%s2 + $0xcfc] sm:$0xf]
  %v4286 = vld [vmem:[%s2 + $0xd00] sm:$0xf]
  %v4287 = vld [vmem:[%s2 + $0xd04] sm:$0xf]
  %v4288 = vld [vmem:[%s2 + $0xd08] sm:$0xf]
  %v4289 = vld [vmem:[%s2 + $0xd0c] sm:$0xf]
  %v4290 = vld [vmem:[%s2 + $0xd10] sm:$0xf]
  %v4291 = vld [vmem:[%s2 + $0xd14] sm:$0xf]
  %v4292 = vld [vmem:[%s2 + $0xd18] sm:$0xf]
  %v4293 = vld [vmem:[%s2 + $0xd1c] sm:$0xf]
  %v4294 = vld [vmem:[%s2 + $0xd20] sm:$0xf]
  %v4295 = vld [vmem:[%s2 + $0xd24] sm:$0xf]
  %v4296 = vld [vmem:[%s2 + $0xd28] sm:$0xf]
  %v4297 = vld [vmem:[%s2 + $0xd2c] sm:$0xf]
  %v4298 = vld [vmem:[%s2 + $0xd30] sm:$0xf]
  %v4299 = vld [vmem:[%s2 + $0xd34] sm:$0xf]
  %v4300 = vld [vmem:[%s2 + $0xd38] sm:$0xf]
  %v4301 = vld [vmem:[%s2 + $0xd3c] sm:$0xf]
  %v4302 = vld [vmem:[%s2 + $0xd40] sm:$0xf]
  %v4303 = vld [vmem:[%s2 + $0xd44] sm:$0xf]
  %v4304 = vld [vmem:[%s2 + $0xd48] sm:$0xf]
  %v4305 = vld [vmem:[%s2 + $0xd4c] sm:$0xf]
  %v4306 = vld [vmem:[%s2 + $0xd50] sm:$0xf]
  %v4307 = vld [vmem:[%s2 + $0xd54] sm:$0xf]
  %v4308 = vld [vmem:[%s2 + $0xd58] sm:$0xf]
  %v4309 = vld [vmem:[%s2 + $0xd5c] sm:$0xf]
  %v4310 = vld [vmem:[%s2 + $0xd60] sm:$0xf]
  %v4311 = vld [vmem:[%s2 + $0xd64] sm:$0xf]
  %v4312 = vld [vmem:[%s2 + $0xd68] sm:$0xf]
  %v4313 = vld [vmem:[%s2 + $0xd6c] sm:$0xf]
  %v4314 = vld [vmem:[%s2 + $0xd70] sm:$0xf]
  %v4315 = vld [vmem:[%s2 + $0xd74] sm:$0xf]
  %v4316 = vld [vmem:[%s2 + $0xd78] sm:$0xf]
  %v4317 = vld [vmem:[%s2 + $0xd7c] sm:$0xf]
  %v4318 = vld [vmem:[%s2 + $0xd80] sm:$0xf]
  %v4319 = vld [vmem:[%s2 + $0xd84] sm:$0xf]
  %v4320 = vld [vmem:[%s2 + $0xd88] sm:$0xf]
  %v4321 = vld [vmem:[%s2 + $0xd8c] sm:$0xf]
  %v4322 = vld [vmem:[%s2 + $0xd90] sm:$0xf]
  %v4323 = vld [vmem:[%s2 + $0xd94] sm:$0xf]
  %v4324 = vld [vmem:[%s2 + $0xd98] sm:$0xf]
  %v4325 = vld [vmem:[%s2 + $0xd9c] sm:$0xf]
  %v4326 = vld [vmem:[%s2 + $0xda0] sm:$0xf]
  %v4327 = vld [vmem:[%s2 + $0xda4] sm:$0xf]
  %v4328 = vld [vmem:[%s2 + $0xda8] sm:$0xf]
  %v4329 = vld [vmem:[%s2 + $0xdac] sm:$0xf]
  %v4330 = vld [vmem:[%s2 + $0xdb0] sm:$0xf]
  %v4331 = vld [vmem:[%s2 + $0xdb4] sm:$0xf]
  %v4332 = vld [vmem:[%s2 + $0xdb8] sm:$0xf]
  %v4333 = vld [vmem:[%s2 + $0xdbc] sm:$0xf]
  %v4334 = vld [vmem:[%s2 + $0xdc0] sm:$0xf]
  %v4335 = vld [vmem:[%s2 + $0xdc4] sm:$0xf]
  %v4336 = vld [vmem:[%s2 + $0xdc8] sm:$0xf]
  %v4337 = vld [vmem:[%s2 + $0xdcc] sm:$0xf]
  %v4338 = vld [vmem:[%s2 + $0xdd0] sm:$0xf]
  %v4339 = vld [vmem:[%s2 + $0xdd4] sm:$0xf]
  %v4340 = vld [vmem:[%s2 + $0xdd8] sm:$0xf]
  %v4341 = vld [vmem:[%s2 + $0xddc] sm:$0xf]
  %v4342 = vld [vmem:[%s2 + $0xde0] sm:$0xf]
  %v4343 = vld [vmem:[%s2 + $0xde4] sm:$0xf]
  %v4344 = vld [vmem:[%s2 + $0xde8] sm:$0xf]
  %v4345 = vld [vmem:[%s2 + $0xdec] sm:$0xf]
  %v4346 = vld [vmem:[%s2 + $0xdf0] sm:$0xf]
  %v4347 = vld [vmem:[%s2 + $0xdf4] sm:$0xf]
  %v4348 = vld [vmem:[%s2 + $0xdf8] sm:$0xf]
  %v4349 = vld [vmem:[%s2 + $0xdfc] sm:$0xf]
  %v4478 = vunpack.c.l.b16 %v4222
  %v4479 = vunpack.c.l.b16 %v4223
  %v4480 = vunpack.c.l.b16 %v4224
  %v4481 = vunpack.c.l.b16 %v4225
  %v4482 = vunpack.c.l.b16 %v4226
  %v4483 = vunpack.c.l.b16 %v4227
  %v4484 = vunpack.c.l.b16 %v4228
  %v4485 = vunpack.c.l.b16 %v4229
  %v4486 = vunpack.c.l.b16 %v4230
  %v4487 = vunpack.c.l.b16 %v4231
  %v4488 = vunpack.c.l.b16 %v4232
  %v4489 = vunpack.c.l.b16 %v4233
  %v4490 = vunpack.c.l.b16 %v4234
  %v4491 = vunpack.c.l.b16 %v4235
  %v4492 = vunpack.c.l.b16 %v4236
  %v4493 = vunpack.c.l.b16 %v4237
  %v4494 = vunpack.c.l.b16 %v4238
  %v4495 = vunpack.c.l.b16 %v4239
  %v4496 = vunpack.c.l.b16 %v4240
  %v4497 = vunpack.c.l.b16 %v4241
  %v4498 = vunpack.c.l.b16 %v4242
  %v4499 = vunpack.c.l.b16 %v4243
  %v4500 = vunpack.c.l.b16 %v4244
  %v4501 = vunpack.c.l.b16 %v4245
  %v4502 = vunpack.c.l.b16 %v4246
  %v4503 = vunpack.c.l.b16 %v4247
  %v4504 = vunpack.c.l.b16 %v4248
  %v4505 = vunpack.c.l.b16 %v4249
  %v4506 = vunpack.c.l.b16 %v4250
  %v4507 = vunpack.c.l.b16 %v4251
  %v4508 = vunpack.c.l.b16 %v4252
  %v4509 = vunpack.c.l.b16 %v4253
  %v4510 = vunpack.c.l.b16 %v4254
  %v4511 = vunpack.c.l.b16 %v4255
  %v4512 = vunpack.c.l.b16 %v4256
  %v4513 = vunpack.c.l.b16 %v4257
  %v4514 = vunpack.c.l.b16 %v4258
  %v4515 = vunpack.c.l.b16 %v4259
  %v4516 = vunpack.c.l.b16 %v4260
  %v4517 = vunpack.c.l.b16 %v4261
  %v4518 = vunpack.c.l.b16 %v4262
  %v4519 = vunpack.c.l.b16 %v4263
  %v4520 = vunpack.c.l.b16 %v4264
  %v4521 = vunpack.c.l.b16 %v4265
  %v4522 = vunpack.c.l.b16 %v4266
  %v4523 = vunpack.c.l.b16 %v4267
  %v4524 = vunpack.c.l.b16 %v4268
  %v4525 = vunpack.c.l.b16 %v4269
  %v4526 = vunpack.c.l.b16 %v4270
  %v4527 = vunpack.c.l.b16 %v4271
  %v4528 = vunpack.c.l.b16 %v4272
  %v4529 = vunpack.c.l.b16 %v4273
  %v4530 = vunpack.c.l.b16 %v4274
  %v4531 = vunpack.c.l.b16 %v4275
  %v4532 = vunpack.c.l.b16 %v4276
  %v4533 = vunpack.c.l.b16 %v4277
  %v4534 = vunpack.c.l.b16 %v4278
  %v4535 = vunpack.c.l.b16 %v4279
  %v4536 = vunpack.c.l.b16 %v4280
  %v4537 = vunpack.c.l.b16 %v4281
  %v4538 = vunpack.c.l.b16 %v4282
  %v4539 = vunpack.c.l.b16 %v4283
  %v4540 = vunpack.c.l.b16 %v4284
  %v4541 = vunpack.c.l.b16 %v4285
  %v4542 = vunpack.c.l.b16 %v4286
  %v4543 = vunpack.c.l.b16 %v4287
  %v4544 = vunpack.c.l.b16 %v4288
  %v4545 = vunpack.c.l.b16 %v4289
  %v4546 = vunpack.c.l.b16 %v4290
  %v4547 = vunpack.c.l.b16 %v4291
  %v4548 = vunpack.c.l.b16 %v4292
  %v4549 = vunpack.c.l.b16 %v4293
  %v4550 = vunpack.c.l.b16 %v4294
  %v4551 = vunpack.c.l.b16 %v4295
  %v4552 = vunpack.c.l.b16 %v4296
  %v4553 = vunpack.c.l.b16 %v4297
  %v4554 = vunpack.c.l.b16 %v4298
  %v4555 = vunpack.c.l.b16 %v4299
  %v4556 = vunpack.c.l.b16 %v4300
  %v4557 = vunpack.c.l.b16 %v4301
  %v4558 = vunpack.c.l.b16 %v4302
  %v4559 = vunpack.c.l.b16 %v4303
  %v4560 = vunpack.c.l.b16 %v4304
  %v4561 = vunpack.c.l.b16 %v4305
  %v4562 = vunpack.c.l.b16 %v4306
  %v4563 = vunpack.c.l.b16 %v4307
  %v4564 = vunpack.c.l.b16 %v4308
  %v4565 = vunpack.c.l.b16 %v4309
  %v4566 = vunpack.c.l.b16 %v4310
  %v4567 = vunpack.c.l.b16 %v4311
  %v4568 = vunpack.c.l.b16 %v4312
  %v4569 = vunpack.c.l.b16 %v4313
  %v4570 = vunpack.c.l.b16 %v4314
  %v4571 = vunpack.c.l.b16 %v4315
  %v4572 = vunpack.c.l.b16 %v4316
  %v4573 = vunpack.c.l.b16 %v4317
  %v4574 = vunpack.c.l.b16 %v4318
  %v4575 = vunpack.c.l.b16 %v4319
  %v4576 = vunpack.c.l.b16 %v4320
  %v4577 = vunpack.c.l.b16 %v4321
  %v4578 = vunpack.c.l.b16 %v4322
  %v4579 = vunpack.c.l.b16 %v4323
  %v4580 = vunpack.c.l.b16 %v4324
  %v4581 = vunpack.c.l.b16 %v4325
  %v4582 = vunpack.c.l.b16 %v4326
  %v4583 = vunpack.c.l.b16 %v4327
  %v4584 = vunpack.c.l.b16 %v4328
  %v4585 = vunpack.c.l.b16 %v4329
  %v4586 = vunpack.c.l.b16 %v4330
  %v4587 = vunpack.c.l.b16 %v4331
  %v4588 = vunpack.c.l.b16 %v4332
  %v4589 = vunpack.c.l.b16 %v4333
  %v4590 = vunpack.c.l.b16 %v4334
  %v4591 = vunpack.c.l.b16 %v4335
  %v4592 = vunpack.c.l.b16 %v4336
  %v4593 = vunpack.c.l.b16 %v4337
  %v4594 = vunpack.c.l.b16 %v4338
  %v4595 = vunpack.c.l.b16 %v4339
  %v4596 = vunpack.c.l.b16 %v4340
  %v4597 = vunpack.c.l.b16 %v4341
  %v4598 = vunpack.c.l.b16 %v4342
  %v4599 = vunpack.c.l.b16 %v4343
  %v4600 = vunpack.c.l.b16 %v4344
  %v4601 = vunpack.c.l.b16 %v4345
  %v4602 = vunpack.c.l.b16 %v4346
  %v4603 = vunpack.c.l.b16 %v4347
  %v4604 = vunpack.c.l.b16 %v4348
  %v4605 = vunpack.c.l.b16 %v4349
  %v4606 = vpack.c.b16 %v4479, %v4478
  %v4607 = vpack.c.b16 %v4481, %v4480
  %v4608 = vpack.c.b16 %v4483, %v4482
  %v4609 = vpack.c.b16 %v4485, %v4484
  %v4610 = vpack.c.b16 %v4487, %v4486
  %v4611 = vpack.c.b16 %v4489, %v4488
  %v4612 = vpack.c.b16 %v4491, %v4490
  %v4613 = vpack.c.b16 %v4493, %v4492
  %v4614 = vpack.c.b16 %v4495, %v4494
  %v4615 = vpack.c.b16 %v4497, %v4496
  %v4616 = vpack.c.b16 %v4499, %v4498
  %v4617 = vpack.c.b16 %v4501, %v4500
  %v4618 = vpack.c.b16 %v4503, %v4502
  %v4619 = vpack.c.b16 %v4505, %v4504
  %v4620 = vpack.c.b16 %v4507, %v4506
  %v4621 = vpack.c.b16 %v4509, %v4508
  %v4622 = vpack.c.b16 %v4511, %v4510
  %v4623 = vpack.c.b16 %v4513, %v4512
  %v4624 = vpack.c.b16 %v4515, %v4514
  %v4625 = vpack.c.b16 %v4517, %v4516
  %v4626 = vpack.c.b16 %v4519, %v4518
  %v4627 = vpack.c.b16 %v4521, %v4520
  %v4628 = vpack.c.b16 %v4523, %v4522
  %v4629 = vpack.c.b16 %v4525, %v4524
  %v4630 = vpack.c.b16 %v4527, %v4526
  %v4631 = vpack.c.b16 %v4529, %v4528
  %v4632 = vpack.c.b16 %v4531, %v4530
  %v4633 = vpack.c.b16 %v4533, %v4532
  %v4634 = vpack.c.b16 %v4535, %v4534
  %v4635 = vpack.c.b16 %v4537, %v4536
  %v4636 = vpack.c.b16 %v4539, %v4538
  %v4637 = vpack.c.b16 %v4541, %v4540
  %v4638 = vpack.c.b16 %v4543, %v4542
  %v4639 = vpack.c.b16 %v4545, %v4544
  %v4640 = vpack.c.b16 %v4547, %v4546
  %v4641 = vpack.c.b16 %v4549, %v4548
  %v4642 = vpack.c.b16 %v4551, %v4550
  %v4643 = vpack.c.b16 %v4553, %v4552
  %v4644 = vpack.c.b16 %v4555, %v4554
  %v4645 = vpack.c.b16 %v4557, %v4556
  %v4646 = vpack.c.b16 %v4559, %v4558
  %v4647 = vpack.c.b16 %v4561, %v4560
  %v4648 = vpack.c.b16 %v4563, %v4562
  %v4649 = vpack.c.b16 %v4565, %v4564
  %v4650 = vpack.c.b16 %v4567, %v4566
  %v4651 = vpack.c.b16 %v4569, %v4568
  %v4652 = vpack.c.b16 %v4571, %v4570
  %v4653 = vpack.c.b16 %v4573, %v4572
  %v4654 = vpack.c.b16 %v4575, %v4574
  %v4655 = vpack.c.b16 %v4577, %v4576
  %v4656 = vpack.c.b16 %v4579, %v4578
  %v4657 = vpack.c.b16 %v4581, %v4580
  %v4658 = vpack.c.b16 %v4583, %v4582
  %v4659 = vpack.c.b16 %v4585, %v4584
  %v4660 = vpack.c.b16 %v4587, %v4586
  %v4661 = vpack.c.b16 %v4589, %v4588
  %v4662 = vpack.c.b16 %v4591, %v4590
  %v4663 = vpack.c.b16 %v4593, %v4592
  %v4664 = vpack.c.b16 %v4595, %v4594
  %v4665 = vpack.c.b16 %v4597, %v4596
  %v4666 = vpack.c.b16 %v4599, %v4598
  %v4667 = vpack.c.b16 %v4601, %v4600
  %v4668 = vpack.c.b16 %v4603, %v4602
  %v4669 = vpack.c.b16 %v4605, %v4604
  %4734 = vmatprep.subr.bf16.mxu0 0
  %4735 = vmatpush1.bf16.msra.mxu0 %v4606
  %4736 = vmatprep.subr.bf16.mxu0 0
  %4737 = vmatpush1.bf16.msra.mxu0 %v4607
  %4738 = vmatprep.subr.bf16.mxu0 0
  %4739 = vmatpush1.bf16.msra.mxu0 %v4608
  %4740 = vmatprep.subr.bf16.mxu0 0
  %4741 = vmatpush1.bf16.msra.mxu0 %v4609
  %4742 = vmatprep.subr.bf16.mxu0 0
  %4743 = vmatpush1.bf16.msra.mxu0 %v4610
  %4744 = vmatprep.subr.bf16.mxu0 0
  %4745 = vmatpush1.bf16.msra.mxu0 %v4611
  %4746 = vmatprep.subr.bf16.mxu0 0
  %4747 = vmatpush1.bf16.msra.mxu0 %v4612
  %4748 = vmatprep.subr.bf16.mxu0 0
  %4749 = vmatpush1.bf16.msra.mxu0 %v4613
  %4750 = vmatprep.subr.bf16.mxu0 0
  %4751 = vmatpush1.bf16.msra.mxu0 %v4614
  %4752 = vmatprep.subr.bf16.mxu0 0
  %4753 = vmatpush1.bf16.msra.mxu0 %v4615
  %4754 = vmatprep.subr.bf16.mxu0 0
  %4755 = vmatpush1.bf16.msra.mxu0 %v4616
  %4756 = vmatprep.subr.bf16.mxu0 0
  %4757 = vmatpush1.bf16.msra.mxu0 %v4617
  %4758 = vmatprep.subr.bf16.mxu0 0
  %4759 = vmatpush1.bf16.msra.mxu0 %v4618
  %4760 = vmatprep.subr.bf16.mxu0 0
  %4761 = vmatpush1.bf16.msra.mxu0 %v4619
  %4762 = vmatprep.subr.bf16.mxu0 0
  %4763 = vmatpush1.bf16.msra.mxu0 %v4620
  %4764 = vmatprep.subr.bf16.mxu0 0
  %4765 = vmatpush1.bf16.msra.mxu0 %v4621
  %4766 = vmatprep.mubr.bf16.mxu0 %v4215
  %4767 = vmatmul.mubr.bf16.gmra.mrb[0].mxu0 %v4214
  %v4768 = vpop.f32.mrb[0].mxu0
  %v4769 = vadd.f32 0.0, %v4768
  %v4770 = vpop.f32.mrb[0].mxu0
  %v4771 = vpop.f32.mrb[0].mxu0
  %v4772 = vpop.f32.mrb[0].mxu0
  %4773 = vdwg.mxu0
  %4774 = vmatprep.subr.bf16.mxu0 0
  %4775 = vmatpush1.bf16.msra.mxu0 %v4622
  %4776 = vmatprep.subr.bf16.mxu0 0
  %4777 = vmatpush1.bf16.msra.mxu0 %v4623
  %4778 = vmatprep.subr.bf16.mxu0 0
  %4779 = vmatpush1.bf16.msra.mxu0 %v4624
  %4780 = vmatprep.subr.bf16.mxu0 0
  %4781 = vmatpush1.bf16.msra.mxu0 %v4625
  %4782 = vmatprep.subr.bf16.mxu0 0
  %4783 = vmatpush1.bf16.msra.mxu0 %v4626
  %4784 = vmatprep.subr.bf16.mxu0 0
  %4785 = vmatpush1.bf16.msra.mxu0 %v4627
  %4786 = vmatprep.subr.bf16.mxu0 0
  %4787 = vmatpush1.bf16.msra.mxu0 %v4628
  %4788 = vmatprep.subr.bf16.mxu0 0
  %4789 = vmatpush1.bf16.msra.mxu0 %v4629
  %4790 = vmatprep.subr.bf16.mxu0 0
  %4791 = vmatpush1.bf16.msra.mxu0 %v4630
  %4792 = vmatprep.subr.bf16.mxu0 0
  %4793 = vmatpush1.bf16.msra.mxu0 %v4631
  %4794 = vmatprep.subr.bf16.mxu0 0
  %4795 = vmatpush1.bf16.msra.mxu0 %v4632
  %4796 = vmatprep.subr.bf16.mxu0 0
  %4797 = vmatpush1.bf16.msra.mxu0 %v4633
  %4798 = vmatprep.subr.bf16.mxu0 0
  %4799 = vmatpush1.bf16.msra.mxu0 %v4634
  %4800 = vmatprep.subr.bf16.mxu0 0
  %4801 = vmatpush1.bf16.msra.mxu0 %v4635
  %4802 = vmatprep.subr.bf16.mxu0 0
  %4803 = vmatpush1.bf16.msra.mxu0 %v4636
  %4804 = vmatprep.subr.bf16.mxu0 0
  %4805 = vmatpush1.bf16.msra.mxu0 %v4637
  %4806 = vmatprep.mubr.bf16.mxu0 %v4217
  %4807 = vmatmul.mubr.bf16.gmra.mrb[0].mxu0 %v4216
  %v4808 = vpop.f32.mrb[0].mxu0
  %v4809 = vadd.f32 %v4769, %v4808
  %v4810 = vpop.f32.mrb[0].mxu0
  %v4811 = vpop.f32.mrb[0].mxu0
  %v4812 = vpop.f32.mrb[0].mxu0
  %4813 = vdwg.mxu0
  %4814 = vmatprep.subr.bf16.mxu0 0
  %4815 = vmatpush1.bf16.msra.mxu0 %v4638
  %4816 = vmatprep.subr.bf16.mxu0 0
  %4817 = vmatpush1.bf16.msra.mxu0 %v4639
  %4818 = vmatprep.subr.bf16.mxu0 0
  %4819 = vmatpush1.bf16.msra.mxu0 %v4640
  %4820 = vmatprep.subr.bf16.mxu0 0
  %4821 = vmatpush1.bf16.msra.mxu0 %v4641
  %4822 = vmatprep.subr.bf16.mxu0 0
  %4823 = vmatpush1.bf16.msra.mxu0 %v4642
  %4824 = vmatprep.subr.bf16.mxu0 0
  %4825 = vmatpush1.bf16.msra.mxu0 %v4643
  %4826 = vmatprep.subr.bf16.mxu0 0
  %4827 = vmatpush1.bf16.msra.mxu0 %v4644
  %4828 = vmatprep.subr.bf16.mxu0 0
  %4829 = vmatpush1.bf16.msra.mxu0 %v4645
  %4830 = vmatprep.subr.bf16.mxu0 0
  %4831 = vmatpush1.bf16.msra.mxu0 %v4646
  %4832 = vmatprep.subr.bf16.mxu0 0
  %4833 = vmatpush1.bf16.msra.mxu0 %v4647
  %4834 = vmatprep.subr.bf16.mxu0 0
  %4835 = vmatpush1.bf16.msra.mxu0 %v4648
  %4836 = vmatprep.subr.bf16.mxu0 0
  %4837 = vmatpush1.bf16.msra.mxu0 %v4649
  %4838 = vmatprep.subr.bf16.mxu0 0
  %4839 = vmatpush1.bf16.msra.mxu0 %v4650
  %4840 = vmatprep.subr.bf16.mxu0 0
  %4841 = vmatpush1.bf16.msra.mxu0 %v4651
  %4842 = vmatprep.subr.bf16.mxu0 0
  %4843 = vmatpush1.bf16.msra.mxu0 %v4652
  %4844 = vmatprep.subr.bf16.mxu0 0
  %4845 = vmatpush1.bf16.msra.mxu0 %v4653
  %4846 = vmatprep.mubr.bf16.mxu0 %v4219
  %4847 = vmatmul.mubr.bf16.gmra.mrb[0].mxu0 %v4218
  %v4848 = vpop.f32.mrb[0].mxu0
  %v4849 = vadd.f32 %v4809, %v4848
  %v4850 = vpop.f32.mrb[0].mxu0
  %v4851 = vpop.f32.mrb[0].mxu0
  %v4852 = vpop.f32.mrb[0].mxu0
  %4853 = vdwg.mxu0
  %4854 = vmatprep.subr.bf16.mxu0 0
  %4855 = vmatpush1.bf16.msra.mxu0 %v4654
  %4856 = vmatprep.subr.bf16.mxu0 0
  %4857 = vmatpush1.bf16.msra.mxu0 %v4655
  %4858 = vmatprep.subr.bf16.mxu0 0
  %4859 = vmatpush1.bf16.msra.mxu0 %v4656
  %4860 = vmatprep.subr.bf16.mxu0 0
  %4861 = vmatpush1.bf16.msra.mxu0 %v4657
  %4862 = vmatprep.subr.bf16.mxu0 0
  %4863 = vmatpush1.bf16.msra.mxu0 %v4658
  %4864 = vmatprep.subr.bf16.mxu0 0
  %4865 = vmatpush1.bf16.msra.mxu0 %v4659
  %4866 = vmatprep.subr.bf16.mxu0 0
  %4867 = vmatpush1.bf16.msra.mxu0 %v4660
  %4868 = vmatprep.subr.bf16.mxu0 0
  %4869 = vmatpush1.bf16.msra.mxu0 %v4661
  %4870 = vmatprep.subr.bf16.mxu0 0
  %4871 = vmatpush1.bf16.msra.mxu0 %v4662
  %4872 = vmatprep.subr.bf16.mxu0 0
  %4873 = vmatpush1.bf16.msra.mxu0 %v4663
  %4874 = vmatprep.subr.bf16.mxu0 0
  %4875 = vmatpush1.bf16.msra.mxu0 %v4664
  %4876 = vmatprep.subr.bf16.mxu0 0
  %4877 = vmatpush1.bf16.msra.mxu0 %v4665
  %4878 = vmatprep.subr.bf16.mxu0 0
  %4879 = vmatpush1.bf16.msra.mxu0 %v4666
  %4880 = vmatprep.subr.bf16.mxu0 0
  %4881 = vmatpush1.bf16.msra.mxu0 %v4667
  %4882 = vmatprep.subr.bf16.mxu0 0
  %4883 = vmatpush1.bf16.msra.mxu0 %v4668
  %4884 = vmatprep.subr.bf16.mxu0 0
  %4885 = vmatpush1.bf16.msra.mxu0 %v4669
  %4886 = vmatprep.mubr.bf16.mxu0 %v4221
  %4887 = vmatmul.mubr.bf16.gmra.mrb[0].mxu0 %v4220
  %v4888 = vpop.f32.mrb[0].mxu0
  %v4889 = vadd.f32 %v4849, %v4888
  %v4890 = vpop.f32.mrb[0].mxu0
  %v4891 = vpop.f32.mrb[0].mxu0
  %v4892 = vpop.f32.mrb[0].mxu0
  %4893 = vdwg.mxu0
  %v4894 = vadd.f32 %v4197, %v4889
  %v4895 = vld [vmem:[%s0 + $0x1c0] sm:$0xff]
  %v4896 = vld [vmem:[%s0 + $0x1c8] sm:$0xff]
  %v4897 = vld [vmem:[%s0 + $0x1d0] sm:$0xff]
  %v4898 = vld [vmem:[%s0 + $0x1d8] sm:$0xff]
  %v4899 = vld [vmem:[%s0 + $0x1e0] sm:$0xff]
  %v4900 = vld [vmem:[%s0 + $0x1e8] sm:$0xff]
  %v4901 = vld [vmem:[%s0 + $0x1f0] sm:$0xff]
  %v4902 = vld [vmem:[%s0 + $0x1f8] sm:$0xff]
  %v4903 = vcvt.s32.f32 %v4895
  %v4904 = vcvt.s32.f32 %v4896
  %v4905 = vcvt.s32.f32 %v4897
  %v4906 = vcvt.s32.f32 %v4898
  %v4907 = vcvt.s32.f32 %v4899
  %v4908 = vcvt.s32.f32 %v4900
  %v4909 = vcvt.s32.f32 %v4901
  %v4910 = vcvt.s32.f32 %v4902
  %v4911 = vpack.c.bf16 %v4903, %v4903
  %v4912 = vpack.c.bf16 %v4904, %v4904
  %v4913 = vpack.c.bf16 %v4905, %v4905
  %v4914 = vpack.c.bf16 %v4906, %v4906
  %v4915 = vpack.c.bf16 %v4907, %v4907
  %v4916 = vpack.c.bf16 %v4908, %v4908
  %v4917 = vpack.c.bf16 %v4909, %v4909
  %v4918 = vpack.c.bf16 %v4910, %v4910
  %v4919 = vld [vmem:[%s2 + $0xe00] sm:$0xf]
  %v4920 = vld [vmem:[%s2 + $0xe04] sm:$0xf]
  %v4921 = vld [vmem:[%s2 + $0xe08] sm:$0xf]
  %v4922 = vld [vmem:[%s2 + $0xe0c] sm:$0xf]
  %v4923 = vld [vmem:[%s2 + $0xe10] sm:$0xf]
  %v4924 = vld [vmem:[%s2 + $0xe14] sm:$0xf]
  %v4925 = vld [vmem:[%s2 + $0xe18] sm:$0xf]
  %v4926 = vld [vmem:[%s2 + $0xe1c] sm:$0xf]
  %v4927 = vld [vmem:[%s2 + $0xe20] sm:$0xf]
  %v4928 = vld [vmem:[%s2 + $0xe24] sm:$0xf]
  %v4929 = vld [vmem:[%s2 + $0xe28] sm:$0xf]
  %v4930 = vld [vmem:[%s2 + $0xe2c] sm:$0xf]
  %v4931 = vld [vmem:[%s2 + $0xe30] sm:$0xf]
  %v4932 = vld [vmem:[%s2 + $0xe34] sm:$0xf]
  %v4933 = vld [vmem:[%s2 + $0xe38] sm:$0xf]
  %v4934 = vld [vmem:[%s2 + $0xe3c] sm:$0xf]
  %v4935 = vld [vmem:[%s2 + $0xe40] sm:$0xf]
  %v4936 = vld [vmem:[%s2 + $0xe44] sm:$0xf]
  %v4937 = vld [vmem:[%s2 + $0xe48] sm:$0xf]
  %v4938 = vld [vmem:[%s2 + $0xe4c] sm:$0xf]
  %v4939 = vld [vmem:[%s2 + $0xe50] sm:$0xf]
  %v4940 = vld [vmem:[%s2 + $0xe54] sm:$0xf]
  %v4941 = vld [vmem:[%s2 + $0xe58] sm:$0xf]
  %v4942 = vld [vmem:[%s2 + $0xe5c] sm:$0xf]
  %v4943 = vld [vmem:[%s2 + $0xe60] sm:$0xf]
  %v4944 = vld [vmem:[%s2 + $0xe64] sm:$0xf]
  %v4945 = vld [vmem:[%s2 + $0xe68] sm:$0xf]
  %v4946 = vld [vmem:[%s2 + $0xe6c] sm:$0xf]
  %v4947 = vld [vmem:[%s2 + $0xe70] sm:$0xf]
  %v4948 = vld [vmem:[%s2 + $0xe74] sm:$0xf]
  %v4949 = vld [vmem:[%s2 + $0xe78] sm:$0xf]
  %v4950 = vld [vmem:[%s2 + $0xe7c] sm:$0xf]
  %v4951 = vld [vmem:[%s2 + $0xe80] sm:$0xf]
  %v4952 = vld [vmem:[%s2 + $0xe84] sm:$0xf]
  %v4953 = vld [vmem:[%s2 + $0xe88] sm:$0xf]
  %v4954 = vld [vmem:[%s2 + $0xe8c] sm:$0xf]
  %v4955 = vld [vmem:[%s2 + $0xe90] sm:$0xf]
  %v4956 = vld [vmem:[%s2 + $0xe94] sm:$0xf]
  %v4957 = vld [vmem:[%s2 + $0xe98] sm:$0xf]
  %v4958 = vld [vmem:[%s2 + $0xe9c] sm:$0xf]
  %v4959 = vld [vmem:[%s2 + $0xea0] sm:$0xf]
  %v4960 = vld [vmem:[%s2 + $0xea4] sm:$0xf]
  %v4961 = vld [vmem:[%s2 + $0xea8] sm:$0xf]
  %v4962 = vld [vmem:[%s2 + $0xeac] sm:$0xf]
  %v4963 = vld [vmem:[%s2 + $0xeb0] sm:$0xf]
  %v4964 = vld [vmem:[%s2 + $0xeb4] sm:$0xf]
  %v4965 = vld [vmem:[%s2 + $0xeb8] sm:$0xf]
  %v4966 = vld [vmem:[%s2 + $0xebc] sm:$0xf]
  %v4967 = vld [vmem:[%s2 + $0xec0] sm:$0xf]
  %v4968 = vld [vmem:[%s2 + $0xec4] sm:$0xf]
  %v4969 = vld [vmem:[%s2 + $0xec8] sm:$0xf]
  %v4970 = vld [vmem:[%s2 + $0xecc] sm:$0xf]
  %v4971 = vld [vmem:[%s2 + $0xed0] sm:$0xf]
  %v4972 = vld [vmem:[%s2 + $0xed4] sm:$0xf]
  %v4973 = vld [vmem:[%s2 + $0xed8] sm:$0xf]
  %v4974 = vld [vmem:[%s2 + $0xedc] sm:$0xf]
  %v4975 = vld [vmem:[%s2 + $0xee0] sm:$0xf]
  %v4976 = vld [vmem:[%s2 + $0xee4] sm:$0xf]
  %v4977 = vld [vmem:[%s2 + $0xee8] sm:$0xf]
  %v4978 = vld [vmem:[%s2 + $0xeec] sm:$0xf]
  %v4979 = vld [vmem:[%s2 + $0xef0] sm:$0xf]
  %v4980 = vld [vmem:[%s2 + $0xef4] sm:$0xf]
  %v4981 = vld [vmem:[%s2 + $0xef8] sm:$0xf]
  %v4982 = vld [vmem:[%s2 + $0xefc] sm:$0xf]
  %v4983 = vld [vmem:[%s2 + $0xf00] sm:$0xf]
  %v4984 = vld [vmem:[%s2 + $0xf04] sm:$0xf]
  %v4985 = vld [vmem:[%s2 + $0xf08] sm:$0xf]
  %v4986 = vld [vmem:[%s2 + $0xf0c] sm:$0xf]
  %v4987 = vld [vmem:[%s2 + $0xf10] sm:$0xf]
  %v4988 = vld [vmem:[%s2 + $0xf14] sm:$0xf]
  %v4989 = vld [vmem:[%s2 + $0xf18] sm:$0xf]
  %v4990 = vld [vmem:[%s2 + $0xf1c] sm:$0xf]
  %v4991 = vld [vmem:[%s2 + $0xf20] sm:$0xf]
  %v4992 = vld [vmem:[%s2 + $0xf24] sm:$0xf]
  %v4993 = vld [vmem:[%s2 + $0xf28] sm:$0xf]
  %v4994 = vld [vmem:[%s2 + $0xf2c] sm:$0xf]
  %v4995 = vld [vmem:[%s2 + $0xf30] sm:$0xf]
  %v4996 = vld [vmem:[%s2 + $0xf34] sm:$0xf]
  %v4997 = vld [vmem:[%s2 + $0xf38] sm:$0xf]
  %v4998 = vld [vmem:[%s2 + $0xf3c] sm:$0xf]
  %v4999 = vld [vmem:[%s2 + $0xf40] sm:$0xf]
  %v5000 = vld [vmem:[%s2 + $0xf44] sm:$0xf]
  %v5001 = vld [vmem:[%s2 + $0xf48] sm:$0xf]
  %v5002 = vld [vmem:[%s2 + $0xf4c] sm:$0xf]
  %v5003 = vld [vmem:[%s2 + $0xf50] sm:$0xf]
  %v5004 = vld [vmem:[%s2 + $0xf54] sm:$0xf]
  %v5005 = vld [vmem:[%s2 + $0xf58] sm:$0xf]
  %v5006 = vld [vmem:[%s2 + $0xf5c] sm:$0xf]
  %v5007 = vld [vmem:[%s2 + $0xf60] sm:$0xf]
  %v5008 = vld [vmem:[%s2 + $0xf64] sm:$0xf]
  %v5009 = vld [vmem:[%s2 + $0xf68] sm:$0xf]
  %v5010 = vld [vmem:[%s2 + $0xf6c] sm:$0xf]
  %v5011 = vld [vmem:[%s2 + $0xf70] sm:$0xf]
  %v5012 = vld [vmem:[%s2 + $0xf74] sm:$0xf]
  %v5013 = vld [vmem:[%s2 + $0xf78] sm:$0xf]
  %v5014 = vld [vmem:[%s2 + $0xf7c] sm:$0xf]
  %v5015 = vld [vmem:[%s2 + $0xf80] sm:$0xf]
  %v5016 = vld [vmem:[%s2 + $0xf84] sm:$0xf]
  %v5017 = vld [vmem:[%s2 + $0xf88] sm:$0xf]
  %v5018 = vld [vmem:[%s2 + $0xf8c] sm:$0xf]
  %v5019 = vld [vmem:[%s2 + $0xf90] sm:$0xf]
  %v5020 = vld [vmem:[%s2 + $0xf94] sm:$0xf]
  %v5021 = vld [vmem:[%s2 + $0xf98] sm:$0xf]
  %v5022 = vld [vmem:[%s2 + $0xf9c] sm:$0xf]
  %v5023 = vld [vmem:[%s2 + $0xfa0] sm:$0xf]
  %v5024 = vld [vmem:[%s2 + $0xfa4] sm:$0xf]
  %v5025 = vld [vmem:[%s2 + $0xfa8] sm:$0xf]
  %v5026 = vld [vmem:[%s2 + $0xfac] sm:$0xf]
  %v5027 = vld [vmem:[%s2 + $0xfb0] sm:$0xf]
  %v5028 = vld [vmem:[%s2 + $0xfb4] sm:$0xf]
  %v5029 = vld [vmem:[%s2 + $0xfb8] sm:$0xf]
  %v5030 = vld [vmem:[%s2 + $0xfbc] sm:$0xf]
  %v5031 = vld [vmem:[%s2 + $0xfc0] sm:$0xf]
  %v5032 = vld [vmem:[%s2 + $0xfc4] sm:$0xf]
  %v5033 = vld [vmem:[%s2 + $0xfc8] sm:$0xf]
  %v5034 = vld [vmem:[%s2 + $0xfcc] sm:$0xf]
  %v5035 = vld [vmem:[%s2 + $0xfd0] sm:$0xf]
  %v5036 = vld [vmem:[%s2 + $0xfd4] sm:$0xf]
  %v5037 = vld [vmem:[%s2 + $0xfd8] sm:$0xf]
  %v5038 = vld [vmem:[%s2 + $0xfdc] sm:$0xf]
  %v5039 = vld [vmem:[%s2 + $0xfe0] sm:$0xf]
  %v5040 = vld [vmem:[%s2 + $0xfe4] sm:$0xf]
  %v5041 = vld [vmem:[%s2 + $0xfe8] sm:$0xf]
  %v5042 = vld [vmem:[%s2 + $0xfec] sm:$0xf]
  %v5043 = vld [vmem:[%s2 + $0xff0] sm:$0xf]
  %v5044 = vld [vmem:[%s2 + $0xff4] sm:$0xf]
  %v5045 = vld [vmem:[%s2 + $0xff8] sm:$0xf]
  %v5046 = vld [vmem:[%s2 + $0xffc] sm:$0xf]
  %v5175 = vunpack.c.l.b16 %v4919
  %v5176 = vunpack.c.l.b16 %v4920
  %v5177 = vunpack.c.l.b16 %v4921
  %v5178 = vunpack.c.l.b16 %v4922
  %v5179 = vunpack.c.l.b16 %v4923
  %v5180 = vunpack.c.l.b16 %v4924
  %v5181 = vunpack.c.l.b16 %v4925
  %v5182 = vunpack.c.l.b16 %v4926
  %v5183 = vunpack.c.l.b16 %v4927
  %v5184 = vunpack.c.l.b16 %v4928
  %v5185 = vunpack.c.l.b16 %v4929
  %v5186 = vunpack.c.l.b16 %v4930
  %v5187 = vunpack.c.l.b16 %v4931
  %v5188 = vunpack.c.l.b16 %v4932
  %v5189 = vunpack.c.l.b16 %v4933
  %v5190 = vunpack.c.l.b16 %v4934
  %v5191 = vunpack.c.l.b16 %v4935
  %v5192 = vunpack.c.l.b16 %v4936
  %v5193 = vunpack.c.l.b16 %v4937
  %v5194 = vunpack.c.l.b16 %v4938
  %v5195 = vunpack.c.l.b16 %v4939
  %v5196 = vunpack.c.l.b16 %v4940
  %v5197 = vunpack.c.l.b16 %v4941
  %v5198 = vunpack.c.l.b16 %v4942
  %v5199 = vunpack.c.l.b16 %v4943
  %v5200 = vunpack.c.l.b16 %v4944
  %v5201 = vunpack.c.l.b16 %v4945
  %v5202 = vunpack.c.l.b16 %v4946
  %v5203 = vunpack.c.l.b16 %v4947
  %v5204 = vunpack.c.l.b16 %v4948
  %v5205 = vunpack.c.l.b16 %v4949
  %v5206 = vunpack.c.l.b16 %v4950
  %v5207 = vunpack.c.l.b16 %v4951
  %v5208 = vunpack.c.l.b16 %v4952
  %v5209 = vunpack.c.l.b16 %v4953
  %v5210 = vunpack.c.l.b16 %v4954
  %v5211 = vunpack.c.l.b16 %v4955
  %v5212 = vunpack.c.l.b16 %v4956
  %v5213 = vunpack.c.l.b16 %v4957
  %v5214 = vunpack.c.l.b16 %v4958
  %v5215 = vunpack.c.l.b16 %v4959
  %v5216 = vunpack.c.l.b16 %v4960
  %v5217 = vunpack.c.l.b16 %v4961
  %v5218 = vunpack.c.l.b16 %v4962
  %v5219 = vunpack.c.l.b16 %v4963
  %v5220 = vunpack.c.l.b16 %v4964
  %v5221 = vunpack.c.l.b16 %v4965
  %v5222 = vunpack.c.l.b16 %v4966
  %v5223 = vunpack.c.l.b16 %v4967
  %v5224 = vunpack.c.l.b16 %v4968
  %v5225 = vunpack.c.l.b16 %v4969
  %v5226 = vunpack.c.l.b16 %v4970
  %v5227 = vunpack.c.l.b16 %v4971
  %v5228 = vunpack.c.l.b16 %v4972
  %v5229 = vunpack.c.l.b16 %v4973
  %v5230 = vunpack.c.l.b16 %v4974
  %v5231 = vunpack.c.l.b16 %v4975
  %v5232 = vunpack.c.l.b16 %v4976
  %v5233 = vunpack.c.l.b16 %v4977
  %v5234 = vunpack.c.l.b16 %v4978
  %v5235 = vunpack.c.l.b16 %v4979
  %v5236 = vunpack.c.l.b16 %v4980
  %v5237 = vunpack.c.l.b16 %v4981
  %v5238 = vunpack.c.l.b16 %v4982
  %v5239 = vunpack.c.l.b16 %v4983
  %v5240 = vunpack.c.l.b16 %v4984
  %v5241 = vunpack.c.l.b16 %v4985
  %v5242 = vunpack.c.l.b16 %v4986
  %v5243 = vunpack.c.l.b16 %v4987
  %v5244 = vunpack.c.l.b16 %v4988
  %v5245 = vunpack.c.l.b16 %v4989
  %v5246 = vunpack.c.l.b16 %v4990
  %v5247 = vunpack.c.l.b16 %v4991
  %v5248 = vunpack.c.l.b16 %v4992
  %v5249 = vunpack.c.l.b16 %v4993
  %v5250 = vunpack.c.l.b16 %v4994
  %v5251 = vunpack.c.l.b16 %v4995
  %v5252 = vunpack.c.l.b16 %v4996
  %v5253 = vunpack.c.l.b16 %v4997
  %v5254 = vunpack.c.l.b16 %v4998
  %v5255 = vunpack.c.l.b16 %v4999
  %v5256 = vunpack.c.l.b16 %v5000
  %v5257 = vunpack.c.l.b16 %v5001
  %v5258 = vunpack.c.l.b16 %v5002
  %v5259 = vunpack.c.l.b16 %v5003
  %v5260 = vunpack.c.l.b16 %v5004
  %v5261 = vunpack.c.l.b16 %v5005
  %v5262 = vunpack.c.l.b16 %v5006
  %v5263 = vunpack.c.l.b16 %v5007
  %v5264 = vunpack.c.l.b16 %v5008
  %v5265 = vunpack.c.l.b16 %v5009
  %v5266 = vunpack.c.l.b16 %v5010
  %v5267 = vunpack.c.l.b16 %v5011
  %v5268 = vunpack.c.l.b16 %v5012
  %v5269 = vunpack.c.l.b16 %v5013
  %v5270 = vunpack.c.l.b16 %v5014
  %v5271 = vunpack.c.l.b16 %v5015
  %v5272 = vunpack.c.l.b16 %v5016
  %v5273 = vunpack.c.l.b16 %v5017
  %v5274 = vunpack.c.l.b16 %v5018
  %v5275 = vunpack.c.l.b16 %v5019
  %v5276 = vunpack.c.l.b16 %v5020
  %v5277 = vunpack.c.l.b16 %v5021
  %v5278 = vunpack.c.l.b16 %v5022
  %v5279 = vunpack.c.l.b16 %v5023
  %v5280 = vunpack.c.l.b16 %v5024
  %v5281 = vunpack.c.l.b16 %v5025
  %v5282 = vunpack.c.l.b16 %v5026
  %v5283 = vunpack.c.l.b16 %v5027
  %v5284 = vunpack.c.l.b16 %v5028
  %v5285 = vunpack.c.l.b16 %v5029
  %v5286 = vunpack.c.l.b16 %v5030
  %v5287 = vunpack.c.l.b16 %v5031
  %v5288 = vunpack.c.l.b16 %v5032
  %v5289 = vunpack.c.l.b16 %v5033
  %v5290 = vunpack.c.l.b16 %v5034
  %v5291 = vunpack.c.l.b16 %v5035
  %v5292 = vunpack.c.l.b16 %v5036
  %v5293 = vunpack.c.l.b16 %v5037
  %v5294 = vunpack.c.l.b16 %v5038
  %v5295 = vunpack.c.l.b16 %v5039
  %v5296 = vunpack.c.l.b16 %v5040
  %v5297 = vunpack.c.l.b16 %v5041
  %v5298 = vunpack.c.l.b16 %v5042
  %v5299 = vunpack.c.l.b16 %v5043
  %v5300 = vunpack.c.l.b16 %v5044
  %v5301 = vunpack.c.l.b16 %v5045
  %v5302 = vunpack.c.l.b16 %v5046
  %v5303 = vpack.c.b16 %v5176, %v5175
  %v5304 = vpack.c.b16 %v5178, %v5177
  %v5305 = vpack.c.b16 %v5180, %v5179
  %v5306 = vpack.c.b16 %v5182, %v5181
  %v5307 = vpack.c.b16 %v5184, %v5183
  %v5308 = vpack.c.b16 %v5186, %v5185
  %v5309 = vpack.c.b16 %v5188, %v5187
  %v5310 = vpack.c.b16 %v5190, %v5189
  %v5311 = vpack.c.b16 %v5192, %v5191
  %v5312 = vpack.c.b16 %v5194, %v5193
  %v5313 = vpack.c.b16 %v5196, %v5195
  %v5314 = vpack.c.b16 %v5198, %v5197
  %v5315 = vpack.c.b16 %v5200, %v5199
  %v5316 = vpack.c.b16 %v5202, %v5201
  %v5317 = vpack.c.b16 %v5204, %v5203
  %v5318 = vpack.c.b16 %v5206, %v5205
  %v5319 = vpack.c.b16 %v5208, %v5207
  %v5320 = vpack.c.b16 %v5210, %v5209
  %v5321 = vpack.c.b16 %v5212, %v5211
  %v5322 = vpack.c.b16 %v5214, %v5213
  %v5323 = vpack.c.b16 %v5216, %v5215
  %v5324 = vpack.c.b16 %v5218, %v5217
  %v5325 = vpack.c.b16 %v5220, %v5219
  %v5326 = vpack.c.b16 %v5222, %v5221
  %v5327 = vpack.c.b16 %v5224, %v5223
  %v5328 = vpack.c.b16 %v5226, %v5225
  %v5329 = vpack.c.b16 %v5228, %v5227
  %v5330 = vpack.c.b16 %v5230, %v5229
  %v5331 = vpack.c.b16 %v5232, %v5231
  %v5332 = vpack.c.b16 %v5234, %v5233
  %v5333 = vpack.c.b16 %v5236, %v5235
  %v5334 = vpack.c.b16 %v5238, %v5237
  %v5335 = vpack.c.b16 %v5240, %v5239
  %v5336 = vpack.c.b16 %v5242, %v5241
  %v5337 = vpack.c.b16 %v5244, %v5243
  %v5338 = vpack.c.b16 %v5246, %v5245
  %v5339 = vpack.c.b16 %v5248, %v5247
  %v5340 = vpack.c.b16 %v5250, %v5249
  %v5341 = vpack.c.b16 %v5252, %v5251
  %v5342 = vpack.c.b16 %v5254, %v5253
  %v5343 = vpack.c.b16 %v5256, %v5255
  %v5344 = vpack.c.b16 %v5258, %v5257
  %v5345 = vpack.c.b16 %v5260, %v5259
  %v5346 = vpack.c.b16 %v5262, %v5261
  %v5347 = vpack.c.b16 %v5264, %v5263
  %v5348 = vpack.c.b16 %v5266, %v5265
  %v5349 = vpack.c.b16 %v5268, %v5267
  %v5350 = vpack.c.b16 %v5270, %v5269
  %v5351 = vpack.c.b16 %v5272, %v5271
  %v5352 = vpack.c.b16 %v5274, %v5273
  %v5353 = vpack.c.b16 %v5276, %v5275
  %v5354 = vpack.c.b16 %v5278, %v5277
  %v5355 = vpack.c.b16 %v5280, %v5279
  %v5356 = vpack.c.b16 %v5282, %v5281
  %v5357 = vpack.c.b16 %v5284, %v5283
  %v5358 = vpack.c.b16 %v5286, %v5285
  %v5359 = vpack.c.b16 %v5288, %v5287
  %v5360 = vpack.c.b16 %v5290, %v5289
  %v5361 = vpack.c.b16 %v5292, %v5291
  %v5362 = vpack.c.b16 %v5294, %v5293
  %v5363 = vpack.c.b16 %v5296, %v5295
  %v5364 = vpack.c.b16 %v5298, %v5297
  %v5365 = vpack.c.b16 %v5300, %v5299
  %v5366 = vpack.c.b16 %v5302, %v5301
  %5431 = vmatprep.subr.bf16.mxu0 0
  %5432 = vmatpush1.bf16.msra.mxu0 %v5303
  %5433 = vmatprep.subr.bf16.mxu0 0
  %5434 = vmatpush1.bf16.msra.mxu0 %v5304
  %5435 = vmatprep.subr.bf16.mxu0 0
  %5436 = vmatpush1.bf16.msra.mxu0 %v5305
  %5437 = vmatprep.subr.bf16.mxu0 0
  %5438 = vmatpush1.bf16.msra.mxu0 %v5306
  %5439 = vmatprep.subr.bf16.mxu0 0
  %5440 = vmatpush1.bf16.msra.mxu0 %v5307
  %5441 = vmatprep.subr.bf16.mxu0 0
  %5442 = vmatpush1.bf16.msra.mxu0 %v5308
  %5443 = vmatprep.subr.bf16.mxu0 0
  %5444 = vmatpush1.bf16.msra.mxu0 %v5309
  %5445 = vmatprep.subr.bf16.mxu0 0
  %5446 = vmatpush1.bf16.msra.mxu0 %v5310
  %5447 = vmatprep.subr.bf16.mxu0 0
  %5448 = vmatpush1.bf16.msra.mxu0 %v5311
  %5449 = vmatprep.subr.bf16.mxu0 0
  %5450 = vmatpush1.bf16.msra.mxu0 %v5312
  %5451 = vmatprep.subr.bf16.mxu0 0
  %5452 = vmatpush1.bf16.msra.mxu0 %v5313
  %5453 = vmatprep.subr.bf16.mxu0 0
  %5454 = vmatpush1.bf16.msra.mxu0 %v5314
  %5455 = vmatprep.subr.bf16.mxu0 0
  %5456 = vmatpush1.bf16.msra.mxu0 %v5315
  %5457 = vmatprep.subr.bf16.mxu0 0
  %5458 = vmatpush1.bf16.msra.mxu0 %v5316
  %5459 = vmatprep.subr.bf16.mxu0 0
  %5460 = vmatpush1.bf16.msra.mxu0 %v5317
  %5461 = vmatprep.subr.bf16.mxu0 0
  %5462 = vmatpush1.bf16.msra.mxu0 %v5318
  %5463 = vmatprep.mubr.bf16.mxu0 %v4912
  %5464 = vmatmul.mubr.bf16.gmra.mrb[0].mxu0 %v4911
  %v5465 = vpop.f32.mrb[0].mxu0
  %v5466 = vadd.f32 0.0, %v5465
  %v5467 = vpop.f32.mrb[0].mxu0
  %v5468 = vpop.f32.mrb[0].mxu0
  %v5469 = vpop.f32.mrb[0].mxu0
  %5470 = vdwg.mxu0
  %5471 = vmatprep.subr.bf16.mxu0 0
  %5472 = vmatpush1.bf16.msra.mxu0 %v5319
  %5473 = vmatprep.subr.bf16.mxu0 0
  %5474 = vmatpush1.bf16.msra.mxu0 %v5320
  %5475 = vmatprep.subr.bf16.mxu0 0
  %5476 = vmatpush1.bf16.msra.mxu0 %v5321
  %5477 = vmatprep.subr.bf16.mxu0 0
  %5478 = vmatpush1.bf16.msra.mxu0 %v5322
  %5479 = vmatprep.subr.bf16.mxu0 0
  %5480 = vmatpush1.bf16.msra.mxu0 %v5323
  %5481 = vmatprep.subr.bf16.mxu0 0
  %5482 = vmatpush1.bf16.msra.mxu0 %v5324
  %5483 = vmatprep.subr.bf16.mxu0 0
  %5484 = vmatpush1.bf16.msra.mxu0 %v5325
  %5485 = vmatprep.subr.bf16.mxu0 0
  %5486 = vmatpush1.bf16.msra.mxu0 %v5326
  %5487 = vmatprep.subr.bf16.mxu0 0
  %5488 = vmatpush1.bf16.msra.mxu0 %v5327
  %5489 = vmatprep.subr.bf16.mxu0 0
  %5490 = vmatpush1.bf16.msra.mxu0 %v5328
  %5491 = vmatprep.subr.bf16.mxu0 0
  %5492 = vmatpush1.bf16.msra.mxu0 %v5329
  %5493 = vmatprep.subr.bf16.mxu0 0
  %5494 = vmatpush1.bf16.msra.mxu0 %v5330
  %5495 = vmatprep.subr.bf16.mxu0 0
  %5496 = vmatpush1.bf16.msra.mxu0 %v5331
  %5497 = vmatprep.subr.bf16.mxu0 0
  %5498 = vmatpush1.bf16.msra.mxu0 %v5332
  %5499 = vmatprep.subr.bf16.mxu0 0
  %5500 = vmatpush1.bf16.msra.mxu0 %v5333
  %5501 = vmatprep.subr.bf16.mxu0 0
  %5502 = vmatpush1.bf16.msra.mxu0 %v5334
  %5503 = vmatprep.mubr.bf16.mxu0 %v4914
  %5504 = vmatmul.mubr.bf16.gmra.mrb[0].mxu0 %v4913
  %v5505 = vpop.f32.mrb[0].mxu0
  %v5506 = vadd.f32 %v5466, %v5505
  %v5507 = vpop.f32.mrb[0].mxu0
  %v5508 = vpop.f32.mrb[0].mxu0
  %v5509 = vpop.f32.mrb[0].mxu0
  %5510 = vdwg.mxu0
  %5511 = vmatprep.subr.bf16.mxu0 0
  %5512 = vmatpush1.bf16.msra.mxu0 %v5335
  %5513 = vmatprep.subr.bf16.mxu0 0
  %5514 = vmatpush1.bf16.msra.mxu0 %v5336
  %5515 = vmatprep.subr.bf16.mxu0 0
  %5516 = vmatpush1.bf16.msra.mxu0 %v5337
  %5517 = vmatprep.subr.bf16.mxu0 0
  %5518 = vmatpush1.bf16.msra.mxu0 %v5338
  %5519 = vmatprep.subr.bf16.mxu0 0
  %5520 = vmatpush1.bf16.msra.mxu0 %v5339
  %5521 = vmatprep.subr.bf16.mxu0 0
  %5522 = vmatpush1.bf16.msra.mxu0 %v5340
  %5523 = vmatprep.subr.bf16.mxu0 0
  %5524 = vmatpush1.bf16.msra.mxu0 %v5341
  %5525 = vmatprep.subr.bf16.mxu0 0
  %5526 = vmatpush1.bf16.msra.mxu0 %v5342
  %5527 = vmatprep.subr.bf16.mxu0 0
  %5528 = vmatpush1.bf16.msra.mxu0 %v5343
  %5529 = vmatprep.subr.bf16.mxu0 0
  %5530 = vmatpush1.bf16.msra.mxu0 %v5344
  %5531 = vmatprep.subr.bf16.mxu0 0
  %5532 = vmatpush1.bf16.msra.mxu0 %v5345
  %5533 = vmatprep.subr.bf16.mxu0 0
  %5534 = vmatpush1.bf16.msra.mxu0 %v5346
  %5535 = vmatprep.subr.bf16.mxu0 0
  %5536 = vmatpush1.bf16.msra.mxu0 %v5347
  %5537 = vmatprep.subr.bf16.mxu0 0
  %5538 = vmatpush1.bf16.msra.mxu0 %v5348
  %5539 = vmatprep.subr.bf16.mxu0 0
  %5540 = vmatpush1.bf16.msra.mxu0 %v5349
  %5541 = vmatprep.subr.bf16.mxu0 0
  %5542 = vmatpush1.bf16.msra.mxu0 %v5350
  %5543 = vmatprep.mubr.bf16.mxu0 %v4916
  %5544 = vmatmul.mubr.bf16.gmra.mrb[0].mxu0 %v4915
  %v5545 = vpop.f32.mrb[0].mxu0
  %v5546 = vadd.f32 %v5506, %v5545
  %v5547 = vpop.f32.mrb[0].mxu0
  %v5548 = vpop.f32.mrb[0].mxu0
  %v5549 = vpop.f32.mrb[0].mxu0
  %5550 = vdwg.mxu0
  %5551 = vmatprep.subr.bf16.mxu0 0
  %5552 = vmatpush1.bf16.msra.mxu0 %v5351
  %5553 = vmatprep.subr.bf16.mxu0 0
  %5554 = vmatpush1.bf16.msra.mxu0 %v5352
  %5555 = vmatprep.subr.bf16.mxu0 0
  %5556 = vmatpush1.bf16.msra.mxu0 %v5353
  %5557 = vmatprep.subr.bf16.mxu0 0
  %5558 = vmatpush1.bf16.msra.mxu0 %v5354
  %5559 = vmatprep.subr.bf16.mxu0 0
  %5560 = vmatpush1.bf16.msra.mxu0 %v5355
  %5561 = vmatprep.subr.bf16.mxu0 0
  %5562 = vmatpush1.bf16.msra.mxu0 %v5356
  %5563 = vmatprep.subr.bf16.mxu0 0
  %5564 = vmatpush1.bf16.msra.mxu0 %v5357
  %5565 = vmatprep.subr.bf16.mxu0 0
  %5566 = vmatpush1.bf16.msra.mxu0 %v5358
  %5567 = vmatprep.subr.bf16.mxu0 0
  %5568 = vmatpush1.bf16.msra.mxu0 %v5359
  %5569 = vmatprep.subr.bf16.mxu0 0
  %5570 = vmatpush1.bf16.msra.mxu0 %v5360
  %5571 = vmatprep.subr.bf16.mxu0 0
  %5572 = vmatpush1.bf16.msra.mxu0 %v5361
  %5573 = vmatprep.subr.bf16.mxu0 0
  %5574 = vmatpush1.bf16.msra.mxu0 %v5362
  %5575 = vmatprep.subr.bf16.mxu0 0
  %5576 = vmatpush1.bf16.msra.mxu0 %v5363
  %5577 = vmatprep.subr.bf16.mxu0 0
  %5578 = vmatpush1.bf16.msra.mxu0 %v5364
  %5579 = vmatprep.subr.bf16.mxu0 0
  %5580 = vmatpush1.bf16.msra.mxu0 %v5365
  %5581 = vmatprep.subr.bf16.mxu0 0
  %5582 = vmatpush1.bf16.msra.mxu0 %v5366
  %5583 = vmatprep.mubr.bf16.mxu0 %v4918
  %5584 = vmatmul.mubr.bf16.gmra.mrb[0].mxu0 %v4917
  %v5585 = vpop.f32.mrb[0].mxu0
  %v5586 = vadd.f32 %v5546, %v5585
  %v5587 = vpop.f32.mrb[0].mxu0
  %v5588 = vpop.f32.mrb[0].mxu0
  %v5589 = vpop.f32.mrb[0].mxu0
  %5590 = vdwg.mxu0
  %v5591 = vadd.f32 %v4894, %v5586
  %v5592 = vld [vmem:[%s0 + $0x200] sm:$0xff]
  %v5593 = vld [vmem:[%s0 + $0x208] sm:$0xff]
  %v5594 = vld [vmem:[%s0 + $0x210] sm:$0xff]
  %v5595 = vld [vmem:[%s0 + $0x218] sm:$0xff]
  %v5596 = vld [vmem:[%s0 + $0x220] sm:$0xff]
  %v5597 = vld [vmem:[%s0 + $0x228] sm:$0xff]
  %v5598 = vld [vmem:[%s0 + $0x230] sm:$0xff]
  %v5599 = vld [vmem:[%s0 + $0x238] sm:$0xff]
  %v5600 = vcvt.s32.f32 %v5592
  %v5601 = vcvt.s32.f32 %v5593
  %v5602 = vcvt.s32.f32 %v5594
  %v5603 = vcvt.s32.f32 %v5595
  %v5604 = vcvt.s32.f32 %v5596
  %v5605 = vcvt.s32.f32 %v5597
  %v5606 = vcvt.s32.f32 %v5598
  %v5607 = vcvt.s32.f32 %v5599
  %v5608 = vpack.c.bf16 %v5600, %v5600
  %v5609 = vpack.c.bf16 %v5601, %v5601
  %v5610 = vpack.c.bf16 %v5602, %v5602
  %v5611 = vpack.c.bf16 %v5603, %v5603
  %v5612 = vpack.c.bf16 %v5604, %v5604
  %v5613 = vpack.c.bf16 %v5605, %v5605
  %v5614 = vpack.c.bf16 %v5606, %v5606
  %v5615 = vpack.c.bf16 %v5607, %v5607
  %v5616 = vld [vmem:[%s2 + $0x1000] sm:$0xf]
  %v5617 = vld [vmem:[%s2 + $0x1004] sm:$0xf]
  %v5618 = vld [vmem:[%s2 + $0x1008] sm:$0xf]
  %v5619 = vld [vmem:[%s2 + $0x100c] sm:$0xf]
  %v5620 = vld [vmem:[%s2 + $0x1010] sm:$0xf]
  %v5621 = vld [vmem:[%s2 + $0x1014] sm:$0xf]
  %v5622 = vld [vmem:[%s2 + $0x1018] sm:$0xf]
  %v5623 = vld [vmem:[%s2 + $0x101c] sm:$0xf]
  %v5624 = vld [vmem:[%s2 + $0x1020] sm:$0xf]
  %v5625 = vld [vmem:[%s2 + $0x1024] sm:$0xf]
  %v5626 = vld [vmem:[%s2 + $0x1028] sm:$0xf]
  %v5627 = vld [vmem:[%s2 + $0x102c] sm:$0xf]
  %v5628 = vld [vmem:[%s2 + $0x1030] sm:$0xf]
  %v5629 = vld [vmem:[%s2 + $0x1034] sm:$0xf]
  %v5630 = vld [vmem:[%s2 + $0x1038] sm:$0xf]
  %v5631 = vld [vmem:[%s2 + $0x103c] sm:$0xf]
  %v5632 = vld [vmem:[%s2 + $0x1040] sm:$0xf]
  %v5633 = vld [vmem:[%s2 + $0x1044] sm:$0xf]
  %v5634 = vld [vmem:[%s2 + $0x1048] sm:$0xf]
  %v5635 = vld [vmem:[%s2 + $0x104c] sm:$0xf]
  %v5636 = vld [vmem:[%s2 + $0x1050] sm:$0xf]
  %v5637 = vld [vmem:[%s2 + $0x1054] sm:$0xf]
  %v5638 = vld [vmem:[%s2 + $0x1058] sm:$0xf]
  %v5639 = vld [vmem:[%s2 + $0x105c] sm:$0xf]
  %v5640 = vld [vmem:[%s2 + $0x1060] sm:$0xf]
  %v5641 = vld [vmem:[%s2 + $0x1064] sm:$0xf]
  %v5642 = vld [vmem:[%s2 + $0x1068] sm:$0xf]
  %v5643 = vld [vmem:[%s2 + $0x106c] sm:$0xf]
  %v5644 = vld [vmem:[%s2 + $0x1070] sm:$0xf]
  %v5645 = vld [vmem:[%s2 + $0x1074] sm:$0xf]
  %v5646 = vld [vmem:[%s2 + $0x1078] sm:$0xf]
  %v5647 = vld [vmem:[%s2 + $0x107c] sm:$0xf]
  %v5648 = vld [vmem:[%s2 + $0x1080] sm:$0xf]
  %v5649 = vld [vmem:[%s2 + $0x1084] sm:$0xf]
  %v5650 = vld [vmem:[%s2 + $0x1088] sm:$0xf]
  %v5651 = vld [vmem:[%s2 + $0x108c] sm:$0xf]
  %v5652 = vld [vmem:[%s2 + $0x1090] sm:$0xf]
  %v5653 = vld [vmem:[%s2 + $0x1094] sm:$0xf]
  %v5654 = vld [vmem:[%s2 + $0x1098] sm:$0xf]
  %v5655 = vld [vmem:[%s2 + $0x109c] sm:$0xf]
  %v5656 = vld [vmem:[%s2 + $0x10a0] sm:$0xf]
  %v5657 = vld [vmem:[%s2 + $0x10a4] sm:$0xf]
  %v5658 = vld [vmem:[%s2 + $0x10a8] sm:$0xf]
  %v5659 = vld [vmem:[%s2 + $0x10ac] sm:$0xf]
  %v5660 = vld [vmem:[%s2 + $0x10b0] sm:$0xf]
  %v5661 = vld [vmem:[%s2 + $0x10b4] sm:$0xf]
  %v5662 = vld [vmem:[%s2 + $0x10b8] sm:$0xf]
  %v5663 = vld [vmem:[%s2 + $0x10bc] sm:$0xf]
  %v5664 = vld [vmem:[%s2 + $0x10c0] sm:$0xf]
  %v5665 = vld [vmem:[%s2 + $0x10c4] sm:$0xf]
  %v5666 = vld [vmem:[%s2 + $0x10c8] sm:$0xf]
  %v5667 = vld [vmem:[%s2 + $0x10cc] sm:$0xf]
  %v5668 = vld [vmem:[%s2 + $0x10d0] sm:$0xf]
  %v5669 = vld [vmem:[%s2 + $0x10d4] sm:$0xf]
  %v5670 = vld [vmem:[%s2 + $0x10d8] sm:$0xf]
  %v5671 = vld [vmem:[%s2 + $0x10dc] sm:$0xf]
  %v5672 = vld [vmem:[%s2 + $0x10e0] sm:$0xf]
  %v5673 = vld [vmem:[%s2 + $0x10e4] sm:$0xf]
  %v5674 = vld [vmem:[%s2 + $0x10e8] sm:$0xf]
  %v5675 = vld [vmem:[%s2 + $0x10ec] sm:$0xf]
  %v5676 = vld [vmem:[%s2 + $0x10f0] sm:$0xf]
  %v5677 = vld [vmem:[%s2 + $0x10f4] sm:$0xf]
  %v5678 = vld [vmem:[%s2 + $0x10f8] sm:$0xf]
  %v5679 = vld [vmem:[%s2 + $0x10fc] sm:$0xf]
  %v5680 = vld [vmem:[%s2 + $0x1100] sm:$0xf]
  %v5681 = vld [vmem:[%s2 + $0x1104] sm:$0xf]
  %v5682 = vld [vmem:[%s2 + $0x1108] sm:$0xf]
  %v5683 = vld [vmem:[%s2 + $0x110c] sm:$0xf]
  %v5684 = vld [vmem:[%s2 + $0x1110] sm:$0xf]
  %v5685 = vld [vmem:[%s2 + $0x1114] sm:$0xf]
  %v5686 = vld [vmem:[%s2 + $0x1118] sm:$0xf]
  %v5687 = vld [vmem:[%s2 + $0x111c] sm:$0xf]
  %v5688 = vld [vmem:[%s2 + $0x1120] sm:$0xf]
  %v5689 = vld [vmem:[%s2 + $0x1124] sm:$0xf]
  %v5690 = vld [vmem:[%s2 + $0x1128] sm:$0xf]
  %v5691 = vld [vmem:[%s2 + $0x112c] sm:$0xf]
  %v5692 = vld [vmem:[%s2 + $0x1130] sm:$0xf]
  %v5693 = vld [vmem:[%s2 + $0x1134] sm:$0xf]
  %v5694 = vld [vmem:[%s2 + $0x1138] sm:$0xf]
  %v5695 = vld [vmem:[%s2 + $0x113c] sm:$0xf]
  %v5696 = vld [vmem:[%s2 + $0x1140] sm:$0xf]
  %v5697 = vld [vmem:[%s2 + $0x1144] sm:$0xf]
  %v5698 = vld [vmem:[%s2 + $0x1148] sm:$0xf]
  %v5699 = vld [vmem:[%s2 + $0x114c] sm:$0xf]
  %v5700 = vld [vmem:[%s2 + $0x1150] sm:$0xf]
  %v5701 = vld [vmem:[%s2 + $0x1154] sm:$0xf]
  %v5702 = vld [vmem:[%s2 + $0x1158] sm:$0xf]
  %v5703 = vld [vmem:[%s2 + $0x115c] sm:$0xf]
  %v5704 = vld [vmem:[%s2 + $0x1160] sm:$0xf]
  %v5705 = vld [vmem:[%s2 + $0x1164] sm:$0xf]
  %v5706 = vld [vmem:[%s2 + $0x1168] sm:$0xf]
  %v5707 = vld [vmem:[%s2 + $0x116c] sm:$0xf]
  %v5708 = vld [vmem:[%s2 + $0x1170] sm:$0xf]
  %v5709 = vld [vmem:[%s2 + $0x1174] sm:$0xf]
  %v5710 = vld [vmem:[%s2 + $0x1178] sm:$0xf]
  %v5711 = vld [vmem:[%s2 + $0x117c] sm:$0xf]
  %v5712 = vld [vmem:[%s2 + $0x1180] sm:$0xf]
  %v5713 = vld [vmem:[%s2 + $0x1184] sm:$0xf]
  %v5714 = vld [vmem:[%s2 + $0x1188] sm:$0xf]
  %v5715 = vld [vmem:[%s2 + $0x118c] sm:$0xf]
  %v5716 = vld [vmem:[%s2 + $0x1190] sm:$0xf]
  %v5717 = vld [vmem:[%s2 + $0x1194] sm:$0xf]
  %v5718 = vld [vmem:[%s2 + $0x1198] sm:$0xf]
  %v5719 = vld [vmem:[%s2 + $0x119c] sm:$0xf]
  %v5720 = vld [vmem:[%s2 + $0x11a0] sm:$0xf]
  %v5721 = vld [vmem:[%s2 + $0x11a4] sm:$0xf]
  %v5722 = vld [vmem:[%s2 + $0x11a8] sm:$0xf]
  %v5723 = vld [vmem:[%s2 + $0x11ac] sm:$0xf]
  %v5724 = vld [vmem:[%s2 + $0x11b0] sm:$0xf]
  %v5725 = vld [vmem:[%s2 + $0x11b4] sm:$0xf]
  %v5726 = vld [vmem:[%s2 + $0x11b8] sm:$0xf]
  %v5727 = vld [vmem:[%s2 + $0x11bc] sm:$0xf]
  %v5728 = vld [vmem:[%s2 + $0x11c0] sm:$0xf]
  %v5729 = vld [vmem:[%s2 + $0x11c4] sm:$0xf]
  %v5730 = vld [vmem:[%s2 + $0x11c8] sm:$0xf]
  %v5731 = vld [vmem:[%s2 + $0x11cc] sm:$0xf]
  %v5732 = vld [vmem:[%s2 + $0x11d0] sm:$0xf]
  %v5733 = vld [vmem:[%s2 + $0x11d4] sm:$0xf]
  %v5734 = vld [vmem:[%s2 + $0x11d8] sm:$0xf]
  %v5735 = vld [vmem:[%s2 + $0x11dc] sm:$0xf]
  %v5736 = vld [vmem:[%s2 + $0x11e0] sm:$0xf]
  %v5737 = vld [vmem:[%s2 + $0x11e4] sm:$0xf]
  %v5738 = vld [vmem:[%s2 + $0x11e8] sm:$0xf]
  %v5739 = vld [vmem:[%s2 + $0x11ec] sm:$0xf]
  %v5740 = vld [vmem:[%s2 + $0x11f0] sm:$0xf]
  %v5741 = vld [vmem:[%s2 + $0x11f4] sm:$0xf]
  %v5742 = vld [vmem:[%s2 + $0x11f8] sm:$0xf]
  %v5743 = vld [vmem:[%s2 + $0x11fc] sm:$0xf]
  %v5872 = vunpack.c.l.b16 %v5616
  %v5873 = vunpack.c.l.b16 %v5617
  %v5874 = vunpack.c.l.b16 %v5618
  %v5875 = vunpack.c.l.b16 %v5619
  %v5876 = vunpack.c.l.b16 %v5620
  %v5877 = vunpack.c.l.b16 %v5621
  %v5878 = vunpack.c.l.b16 %v5622
  %v5879 = vunpack.c.l.b16 %v5623
  %v5880 = vunpack.c.l.b16 %v5624
  %v5881 = vunpack.c.l.b16 %v5625
  %v5882 = vunpack.c.l.b16 %v5626
  %v5883 = vunpack.c.l.b16 %v5627
  %v5884 = vunpack.c.l.b16 %v5628
  %v5885 = vunpack.c.l.b16 %v5629
  %v5886 = vunpack.c.l.b16 %v5630
  %v5887 = vunpack.c.l.b16 %v5631
  %v5888 = vunpack.c.l.b16 %v5632
  %v5889 = vunpack.c.l.b16 %v5633
  %v5890 = vunpack.c.l.b16 %v5634
  %v5891 = vunpack.c.l.b16 %v5635
  %v5892 = vunpack.c.l.b16 %v5636
  %v5893 = vunpack.c.l.b16 %v5637
  %v5894 = vunpack.c.l.b16 %v5638
  %v5895 = vunpack.c.l.b16 %v5639
  %v5896 = vunpack.c.l.b16 %v5640
  %v5897 = vunpack.c.l.b16 %v5641
  %v5898 = vunpack.c.l.b16 %v5642
  %v5899 = vunpack.c.l.b16 %v5643
  %v5900 = vunpack.c.l.b16 %v5644
  %v5901 = vunpack.c.l.b16 %v5645
  %v5902 = vunpack.c.l.b16 %v5646
  %v5903 = vunpack.c.l.b16 %v5647
  %v5904 = vunpack.c.l.b16 %v5648
  %v5905 = vunpack.c.l.b16 %v5649
  %v5906 = vunpack.c.l.b16 %v5650
  %v5907 = vunpack.c.l.b16 %v5651
  %v5908 = vunpack.c.l.b16 %v5652
  %v5909 = vunpack.c.l.b16 %v5653
  %v5910 = vunpack.c.l.b16 %v5654
  %v5911 = vunpack.c.l.b16 %v5655
  %v5912 = vunpack.c.l.b16 %v5656
  %v5913 = vunpack.c.l.b16 %v5657
  %v5914 = vunpack.c.l.b16 %v5658
  %v5915 = vunpack.c.l.b16 %v5659
  %v5916 = vunpack.c.l.b16 %v5660
  %v5917 = vunpack.c.l.b16 %v5661
  %v5918 = vunpack.c.l.b16 %v5662
  %v5919 = vunpack.c.l.b16 %v5663
  %v5920 = vunpack.c.l.b16 %v5664
  %v5921 = vunpack.c.l.b16 %v5665
  %v5922 = vunpack.c.l.b16 %v5666
  %v5923 = vunpack.c.l.b16 %v5667
  %v5924 = vunpack.c.l.b16 %v5668
  %v5925 = vunpack.c.l.b16 %v5669
  %v5926 = vunpack.c.l.b16 %v5670
  %v5927 = vunpack.c.l.b16 %v5671
  %v5928 = vunpack.c.l.b16 %v5672
  %v5929 = vunpack.c.l.b16 %v5673
  %v5930 = vunpack.c.l.b16 %v5674
  %v5931 = vunpack.c.l.b16 %v5675
  %v5932 = vunpack.c.l.b16 %v5676
  %v5933 = vunpack.c.l.b16 %v5677
  %v5934 = vunpack.c.l.b16 %v5678
  %v5935 = vunpack.c.l.b16 %v5679
  %v5936 = vunpack.c.l.b16 %v5680
  %v5937 = vunpack.c.l.b16 %v5681
  %v5938 = vunpack.c.l.b16 %v5682
  %v5939 = vunpack.c.l.b16 %v5683
  %v5940 = vunpack.c.l.b16 %v5684
  %v5941 = vunpack.c.l.b16 %v5685
  %v5942 = vunpack.c.l.b16 %v5686
  %v5943 = vunpack.c.l.b16 %v5687
  %v5944 = vunpack.c.l.b16 %v5688
  %v5945 = vunpack.c.l.b16 %v5689
  %v5946 = vunpack.c.l.b16 %v5690
  %v5947 = vunpack.c.l.b16 %v5691
  %v5948 = vunpack.c.l.b16 %v5692
  %v5949 = vunpack.c.l.b16 %v5693
  %v5950 = vunpack.c.l.b16 %v5694
  %v5951 = vunpack.c.l.b16 %v5695
  %v5952 = vunpack.c.l.b16 %v5696
  %v5953 = vunpack.c.l.b16 %v5697
  %v5954 = vunpack.c.l.b16 %v5698
  %v5955 = vunpack.c.l.b16 %v5699
  %v5956 = vunpack.c.l.b16 %v5700
  %v5957 = vunpack.c.l.b16 %v5701
  %v5958 = vunpack.c.l.b16 %v5702
  %v5959 = vunpack.c.l.b16 %v5703
  %v5960 = vunpack.c.l.b16 %v5704
  %v5961 = vunpack.c.l.b16 %v5705
  %v5962 = vunpack.c.l.b16 %v5706
  %v5963 = vunpack.c.l.b16 %v5707
  %v5964 = vunpack.c.l.b16 %v5708
  %v5965 = vunpack.c.l.b16 %v5709
  %v5966 = vunpack.c.l.b16 %v5710
  %v5967 = vunpack.c.l.b16 %v5711
  %v5968 = vunpack.c.l.b16 %v5712
  %v5969 = vunpack.c.l.b16 %v5713
  %v5970 = vunpack.c.l.b16 %v5714
  %v5971 = vunpack.c.l.b16 %v5715
  %v5972 = vunpack.c.l.b16 %v5716
  %v5973 = vunpack.c.l.b16 %v5717
  %v5974 = vunpack.c.l.b16 %v5718
  %v5975 = vunpack.c.l.b16 %v5719
  %v5976 = vunpack.c.l.b16 %v5720
  %v5977 = vunpack.c.l.b16 %v5721
  %v5978 = vunpack.c.l.b16 %v5722
  %v5979 = vunpack.c.l.b16 %v5723
  %v5980 = vunpack.c.l.b16 %v5724
  %v5981 = vunpack.c.l.b16 %v5725
  %v5982 = vunpack.c.l.b16 %v5726
  %v5983 = vunpack.c.l.b16 %v5727
  %v5984 = vunpack.c.l.b16 %v5728
  %v5985 = vunpack.c.l.b16 %v5729
  %v5986 = vunpack.c.l.b16 %v5730
  %v5987 = vunpack.c.l.b16 %v5731
  %v5988 = vunpack.c.l.b16 %v5732
  %v5989 = vunpack.c.l.b16 %v5733
  %v5990 = vunpack.c.l.b16 %v5734
  %v5991 = vunpack.c.l.b16 %v5735
  %v5992 = vunpack.c.l.b16 %v5736
  %v5993 = vunpack.c.l.b16 %v5737
  %v5994 = vunpack.c.l.b16 %v5738
  %v5995 = vunpack.c.l.b16 %v5739
  %v5996 = vunpack.c.l.b16 %v5740
  %v5997 = vunpack.c.l.b16 %v5741
  %v5998 = vunpack.c.l.b16 %v5742
  %v5999 = vunpack.c.l.b16 %v5743
  %v6000 = vpack.c.b16 %v5873, %v5872
  %v6001 = vpack.c.b16 %v5875, %v5874
  %v6002 = vpack.c.b16 %v5877, %v5876
  %v6003 = vpack.c.b16 %v5879, %v5878
  %v6004 = vpack.c.b16 %v5881, %v5880
  %v6005 = vpack.c.b16 %v5883, %v5882
  %v6006 = vpack.c.b16 %v5885, %v5884
  %v6007 = vpack.c.b16 %v5887, %v5886
  %v6008 = vpack.c.b16 %v5889, %v5888
  %v6009 = vpack.c.b16 %v5891, %v5890
  %v6010 = vpack.c.b16 %v5893, %v5892
  %v6011 = vpack.c.b16 %v5895, %v5894
  %v6012 = vpack.c.b16 %v5897, %v5896
  %v6013 = vpack.c.b16 %v5899, %v5898
  %v6014 = vpack.c.b16 %v5901, %v5900
  %v6015 = vpack.c.b16 %v5903, %v5902
  %v6016 = vpack.c.b16 %v5905, %v5904
  %v6017 = vpack.c.b16 %v5907, %v5906
  %v6018 = vpack.c.b16 %v5909, %v5908
  %v6019 = vpack.c.b16 %v5911, %v5910
  %v6020 = vpack.c.b16 %v5913, %v5912
  %v6021 = vpack.c.b16 %v5915, %v5914
  %v6022 = vpack.c.b16 %v5917, %v5916
  %v6023 = vpack.c.b16 %v5919, %v5918
  %v6024 = vpack.c.b16 %v5921, %v5920
  %v6025 = vpack.c.b16 %v5923, %v5922
  %v6026 = vpack.c.b16 %v5925, %v5924
  %v6027 = vpack.c.b16 %v5927, %v5926
  %v6028 = vpack.c.b16 %v5929, %v5928
  %v6029 = vpack.c.b16 %v5931, %v5930
  %v6030 = vpack.c.b16 %v5933, %v5932
  %v6031 = vpack.c.b16 %v5935, %v5934
  %v6032 = vpack.c.b16 %v5937, %v5936
  %v6033 = vpack.c.b16 %v5939, %v5938
  %v6034 = vpack.c.b16 %v5941, %v5940
  %v6035 = vpack.c.b16 %v5943, %v5942
  %v6036 = vpack.c.b16 %v5945, %v5944
  %v6037 = vpack.c.b16 %v5947, %v5946
  %v6038 = vpack.c.b16 %v5949, %v5948
  %v6039 = vpack.c.b16 %v5951, %v5950
  %v6040 = vpack.c.b16 %v5953, %v5952
  %v6041 = vpack.c.b16 %v5955, %v5954
  %v6042 = vpack.c.b16 %v5957, %v5956
  %v6043 = vpack.c.b16 %v5959, %v5958
  %v6044 = vpack.c.b16 %v5961, %v5960
  %v6045 = vpack.c.b16 %v5963, %v5962
  %v6046 = vpack.c.b16 %v5965, %v5964
  %v6047 = vpack.c.b16 %v5967, %v5966
  %v6048 = vpack.c.b16 %v5969, %v5968
  %v6049 = vpack.c.b16 %v5971, %v5970
  %v6050 = vpack.c.b16 %v5973, %v5972
  %v6051 = vpack.c.b16 %v5975, %v5974
  %v6052 = vpack.c.b16 %v5977, %v5976
  %v6053 = vpack.c.b16 %v5979, %v5978
  %v6054 = vpack.c.b16 %v5981, %v5980
  %v6055 = vpack.c.b16 %v5983, %v5982
  %v6056 = vpack.c.b16 %v5985, %v5984
  %v6057 = vpack.c.b16 %v5987, %v5986
  %v6058 = vpack.c.b16 %v5989, %v5988
  %v6059 = vpack.c.b16 %v5991, %v5990
  %v6060 = vpack.c.b16 %v5993, %v5992
  %v6061 = vpack.c.b16 %v5995, %v5994
  %v6062 = vpack.c.b16 %v5997, %v5996
  %v6063 = vpack.c.b16 %v5999, %v5998
  %6128 = vmatprep.subr.bf16.mxu0 0
  %6129 = vmatpush1.bf16.msra.mxu0 %v6000
  %6130 = vmatprep.subr.bf16.mxu0 0
  %6131 = vmatpush1.bf16.msra.mxu0 %v6001
  %6132 = vmatprep.subr.bf16.mxu0 0
  %6133 = vmatpush1.bf16.msra.mxu0 %v6002
  %6134 = vmatprep.subr.bf16.mxu0 0
  %6135 = vmatpush1.bf16.msra.mxu0 %v6003
  %6136 = vmatprep.subr.bf16.mxu0 0
  %6137 = vmatpush1.bf16.msra.mxu0 %v6004
  %6138 = vmatprep.subr.bf16.mxu0 0
  %6139 = vmatpush1.bf16.msra.mxu0 %v6005
  %6140 = vmatprep.subr.bf16.mxu0 0
  %6141 = vmatpush1.bf16.msra.mxu0 %v6006
  %6142 = vmatprep.subr.bf16.mxu0 0
  %6143 = vmatpush1.bf16.msra.mxu0 %v6007
  %6144 = vmatprep.subr.bf16.mxu0 0
  %6145 = vmatpush1.bf16.msra.mxu0 %v6008
  %6146 = vmatprep.subr.bf16.mxu0 0
  %6147 = vmatpush1.bf16.msra.mxu0 %v6009
  %6148 = vmatprep.subr.bf16.mxu0 0
  %6149 = vmatpush1.bf16.msra.mxu0 %v6010
  %6150 = vmatprep.subr.bf16.mxu0 0
  %6151 = vmatpush1.bf16.msra.mxu0 %v6011
  %6152 = vmatprep.subr.bf16.mxu0 0
  %6153 = vmatpush1.bf16.msra.mxu0 %v6012
  %6154 = vmatprep.subr.bf16.mxu0 0
  %6155 = vmatpush1.bf16.msra.mxu0 %v6013
  %6156 = vmatprep.subr.bf16.mxu0 0
  %6157 = vmatpush1.bf16.msra.mxu0 %v6014
  %6158 = vmatprep.subr.bf16.mxu0 0
  %6159 = vmatpush1.bf16.msra.mxu0 %v6015
  %6160 = vmatprep.mubr.bf16.mxu0 %v5609
  %6161 = vmatmul.mubr.bf16.gmra.mrb[0].mxu0 %v5608
  %v6162 = vpop.f32.mrb[0].mxu0
  %v6163 = vadd.f32 0.0, %v6162
  %v6164 = vpop.f32.mrb[0].mxu0
  %v6165 = vpop.f32.mrb[0].mxu0
  %v6166 = vpop.f32.mrb[0].mxu0
  %6167 = vdwg.mxu0
  %6168 = vmatprep.subr.bf16.mxu0 0
  %6169 = vmatpush1.bf16.msra.mxu0 %v6016
  %6170 = vmatprep.subr.bf16.mxu0 0
  %6171 = vmatpush1.bf16.msra.mxu0 %v6017
  %6172 = vmatprep.subr.bf16.mxu0 0
  %6173 = vmatpush1.bf16.msra.mxu0 %v6018
  %6174 = vmatprep.subr.bf16.mxu0 0
  %6175 = vmatpush1.bf16.msra.mxu0 %v6019
  %6176 = vmatprep.subr.bf16.mxu0 0
  %6177 = vmatpush1.bf16.msra.mxu0 %v6020
  %6178 = vmatprep.subr.bf16.mxu0 0
  %6179 = vmatpush1.bf16.msra.mxu0 %v6021
  %6180 = vmatprep.subr.bf16.mxu0 0
  %6181 = vmatpush1.bf16.msra.mxu0 %v6022
  %6182 = vmatprep.subr.bf16.mxu0 0
  %6183 = vmatpush1.bf16.msra.mxu0 %v6023
  %6184 = vmatprep.subr.bf16.mxu0 0
  %6185 = vmatpush1.bf16.msra.mxu0 %v6024
  %6186 = vmatprep.subr.bf16.mxu0 0
  %6187 = vmatpush1.bf16.msra.mxu0 %v6025
  %6188 = vmatprep.subr.bf16.mxu0 0
  %6189 = vmatpush1.bf16.msra.mxu0 %v6026
  %6190 = vmatprep.subr.bf16.mxu0 0
  %6191 = vmatpush1.bf16.msra.mxu0 %v6027
  %6192 = vmatprep.subr.bf16.mxu0 0
  %6193 = vmatpush1.bf16.msra.mxu0 %v6028
  %6194 = vmatprep.subr.bf16.mxu0 0
  %6195 = vmatpush1.bf16.msra.mxu0 %v6029
  %6196 = vmatprep.subr.bf16.mxu0 0
  %6197 = vmatpush1.bf16.msra.mxu0 %v6030
  %6198 = vmatprep.subr.bf16.mxu0 0
  %6199 = vmatpush1.bf16.msra.mxu0 %v6031
  %6200 = vmatprep.mubr.bf16.mxu0 %v5611
  %6201 = vmatmul.mubr.bf16.gmra.mrb[0].mxu0 %v5610
  %v6202 = vpop.f32.mrb[0].mxu0
  %v6203 = vadd.f32 %v6163, %v6202
  %v6204 = vpop.f32.mrb[0].mxu0
  %v6205 = vpop.f32.mrb[0].mxu0
  %v6206 = vpop.f32.mrb[0].mxu0
  %6207 = vdwg.mxu0
  %6208 = vmatprep.subr.bf16.mxu0 0
  %6209 = vmatpush1.bf16.msra.mxu0 %v6032
  %6210 = vmatprep.subr.bf16.mxu0 0
  %6211 = vmatpush1.bf16.msra.mxu0 %v6033
  %6212 = vmatprep.subr.bf16.mxu0 0
  %6213 = vmatpush1.bf16.msra.mxu0 %v6034
  %6214 = vmatprep.subr.bf16.mxu0 0
  %6215 = vmatpush1.bf16.msra.mxu0 %v6035
  %6216 = vmatprep.subr.bf16.mxu0 0
  %6217 = vmatpush1.bf16.msra.mxu0 %v6036
  %6218 = vmatprep.subr.bf16.mxu0 0
  %6219 = vmatpush1.bf16.msra.mxu0 %v6037
  %6220 = vmatprep.subr.bf16.mxu0 0
  %6221 = vmatpush1.bf16.msra.mxu0 %v6038
  %6222 = vmatprep.subr.bf16.mxu0 0
  %6223 = vmatpush1.bf16.msra.mxu0 %v6039
  %6224 = vmatprep.subr.bf16.mxu0 0
  %6225 = vmatpush1.bf16.msra.mxu0 %v6040
  %6226 = vmatprep.subr.bf16.mxu0 0
  %6227 = vmatpush1.bf16.msra.mxu0 %v6041
  %6228 = vmatprep.subr.bf16.mxu0 0
  %6229 = vmatpush1.bf16.msra.mxu0 %v6042
  %6230 = vmatprep.subr.bf16.mxu0 0
  %6231 = vmatpush1.bf16.msra.mxu0 %v6043
  %6232 = vmatprep.subr.bf16.mxu0 0
  %6233 = vmatpush1.bf16.msra.mxu0 %v6044
  %6234 = vmatprep.subr.bf16.mxu0 0
  %6235 = vmatpush1.bf16.msra.mxu0 %v6045
  %6236 = vmatprep.subr.bf16.mxu0 0
  %6237 = vmatpush1.bf16.msra.mxu0 %v6046
  %6238 = vmatprep.subr.bf16.mxu0 0
  %6239 = vmatpush1.bf16.msra.mxu0 %v6047
  %6240 = vmatprep.mubr.bf16.mxu0 %v5613
  %6241 = vmatmul.mubr.bf16.gmra.mrb[0].mxu0 %v5612
  %v6242 = vpop.f32.mrb[0].mxu0
  %v6243 = vadd.f32 %v6203, %v6242
  %v6244 = vpop.f32.mrb[0].mxu0
  %v6245 = vpop.f32.mrb[0].mxu0
  %v6246 = vpop.f32.mrb[0].mxu0
  %6247 = vdwg.mxu0
  %6248 = vmatprep.subr.bf16.mxu0 0
  %6249 = vmatpush1.bf16.msra.mxu0 %v6048
  %6250 = vmatprep.subr.bf16.mxu0 0
  %6251 = vmatpush1.bf16.msra.mxu0 %v6049
  %6252 = vmatprep.subr.bf16.mxu0 0
  %6253 = vmatpush1.bf16.msra.mxu0 %v6050
  %6254 = vmatprep.subr.bf16.mxu0 0
  %6255 = vmatpush1.bf16.msra.mxu0 %v6051
  %6256 = vmatprep.subr.bf16.mxu0 0
  %6257 = vmatpush1.bf16.msra.mxu0 %v6052
  %6258 = vmatprep.subr.bf16.mxu0 0
  %6259 = vmatpush1.bf16.msra.mxu0 %v6053
  %6260 = vmatprep.subr.bf16.mxu0 0
  %6261 = vmatpush1.bf16.msra.mxu0 %v6054
  %6262 = vmatprep.subr.bf16.mxu0 0
  %6263 = vmatpush1.bf16.msra.mxu0 %v6055
  %6264 = vmatprep.subr.bf16.mxu0 0
  %6265 = vmatpush1.bf16.msra.mxu0 %v6056
  %6266 = vmatprep.subr.bf16.mxu0 0
  %6267 = vmatpush1.bf16.msra.mxu0 %v6057
  %6268 = vmatprep.subr.bf16.mxu0 0
  %6269 = vmatpush1.bf16.msra.mxu0 %v6058
  %6270 = vmatprep.subr.bf16.mxu0 0
  %6271 = vmatpush1.bf16.msra.mxu0 %v6059
  %6272 = vmatprep.subr.bf16.mxu0 0
  %6273 = vmatpush1.bf16.msra.mxu0 %v6060
  %6274 = vmatprep.subr.bf16.mxu0 0
  %6275 = vmatpush1.bf16.msra.mxu0 %v6061
  %6276 = vmatprep.subr.bf16.mxu0 0
  %6277 = vmatpush1.bf16.msra.mxu0 %v6062
  %6278 = vmatprep.subr.bf16.mxu0 0
  %6279 = vmatpush1.bf16.msra.mxu0 %v6063
  %6280 = vmatprep.mubr.bf16.mxu0 %v5615
  %6281 = vmatmul.mubr.bf16.gmra.mrb[0].mxu0 %v5614
  %v6282 = vpop.f32.mrb[0].mxu0
  %v6283 = vadd.f32 %v6243, %v6282
  %v6284 = vpop.f32.mrb[0].mxu0
  %v6285 = vpop.f32.mrb[0].mxu0
  %v6286 = vpop.f32.mrb[0].mxu0
  %6287 = vdwg.mxu0
  %v6288 = vadd.f32 %v5591, %v6283
  %v6289 = vld [vmem:[%s0 + $0x240] sm:$0xff]
  %v6290 = vld [vmem:[%s0 + $0x248] sm:$0xff]
  %v6291 = vld [vmem:[%s0 + $0x250] sm:$0xff]
  %v6292 = vld [vmem:[%s0 + $0x258] sm:$0xff]
  %v6293 = vld [vmem:[%s0 + $0x260] sm:$0xff]
  %v6294 = vld [vmem:[%s0 + $0x268] sm:$0xff]
  %v6295 = vld [vmem:[%s0 + $0x270] sm:$0xff]
  %v6296 = vld [vmem:[%s0 + $0x278] sm:$0xff]
  %v6297 = vcvt.s32.f32 %v6289
  %v6298 = vcvt.s32.f32 %v6290
  %v6299 = vcvt.s32.f32 %v6291
  %v6300 = vcvt.s32.f32 %v6292
  %v6301 = vcvt.s32.f32 %v6293
  %v6302 = vcvt.s32.f32 %v6294
  %v6303 = vcvt.s32.f32 %v6295
  %v6304 = vcvt.s32.f32 %v6296
  %v6305 = vpack.c.bf16 %v6297, %v6297
  %v6306 = vpack.c.bf16 %v6298, %v6298
  %v6307 = vpack.c.bf16 %v6299, %v6299
  %v6308 = vpack.c.bf16 %v6300, %v6300
  %v6309 = vpack.c.bf16 %v6301, %v6301
  %v6310 = vpack.c.bf16 %v6302, %v6302
  %v6311 = vpack.c.bf16 %v6303, %v6303
  %v6312 = vpack.c.bf16 %v6304, %v6304
  %v6313 = vld [vmem:[%s2 + $0x1200] sm:$0xf]
  %v6314 = vld [vmem:[%s2 + $0x1204] sm:$0xf]
  %v6315 = vld [vmem:[%s2 + $0x1208] sm:$0xf]
  %v6316 = vld [vmem:[%s2 + $0x120c] sm:$0xf]
  %v6317 = vld [vmem:[%s2 + $0x1210] sm:$0xf]
  %v6318 = vld [vmem:[%s2 + $0x1214] sm:$0xf]
  %v6319 = vld [vmem:[%s2 + $0x1218] sm:$0xf]
  %v6320 = vld [vmem:[%s2 + $0x121c] sm:$0xf]
  %v6321 = vld [vmem:[%s2 + $0x1220] sm:$0xf]
  %v6322 = vld [vmem:[%s2 + $0x1224] sm:$0xf]
  %v6323 = vld [vmem:[%s2 + $0x1228] sm:$0xf]
  %v6324 = vld [vmem:[%s2 + $0x122c] sm:$0xf]
  %v6325 = vld [vmem:[%s2 + $0x1230] sm:$0xf]
  %v6326 = vld [vmem:[%s2 + $0x1234] sm:$0xf]
  %v6327 = vld [vmem:[%s2 + $0x1238] sm:$0xf]
  %v6328 = vld [vmem:[%s2 + $0x123c] sm:$0xf]
  %v6329 = vld [vmem:[%s2 + $0x1240] sm:$0xf]
  %v6330 = vld [vmem:[%s2 + $0x1244] sm:$0xf]
  %v6331 = vld [vmem:[%s2 + $0x1248] sm:$0xf]
  %v6332 = vld [vmem:[%s2 + $0x124c] sm:$0xf]
  %v6333 = vld [vmem:[%s2 + $0x1250] sm:$0xf]
  %v6334 = vld [vmem:[%s2 + $0x1254] sm:$0xf]
  %v6335 = vld [vmem:[%s2 + $0x1258] sm:$0xf]
  %v6336 = vld [vmem:[%s2 + $0x125c] sm:$0xf]
  %v6337 = vld [vmem:[%s2 + $0x1260] sm:$0xf]
  %v6338 = vld [vmem:[%s2 + $0x1264] sm:$0xf]
  %v6339 = vld [vmem:[%s2 + $0x1268] sm:$0xf]
  %v6340 = vld [vmem:[%s2 + $0x126c] sm:$0xf]
  %v6341 = vld [vmem:[%s2 + $0x1270] sm:$0xf]
  %v6342 = vld [vmem:[%s2 + $0x1274] sm:$0xf]
  %v6343 = vld [vmem:[%s2 + $0x1278] sm:$0xf]
  %v6344 = vld [vmem:[%s2 + $0x127c] sm:$0xf]
  %v6345 = vld [vmem:[%s2 + $0x1280] sm:$0xf]
  %v6346 = vld [vmem:[%s2 + $0x1284] sm:$0xf]
  %v6347 = vld [vmem:[%s2 + $0x1288] sm:$0xf]
  %v6348 = vld [vmem:[%s2 + $0x128c] sm:$0xf]
  %v6349 = vld [vmem:[%s2 + $0x1290] sm:$0xf]
  %v6350 = vld [vmem:[%s2 + $0x1294] sm:$0xf]
  %v6351 = vld [vmem:[%s2 + $0x1298] sm:$0xf]
  %v6352 = vld [vmem:[%s2 + $0x129c] sm:$0xf]
  %v6353 = vld [vmem:[%s2 + $0x12a0] sm:$0xf]
  %v6354 = vld [vmem:[%s2 + $0x12a4] sm:$0xf]
  %v6355 = vld [vmem:[%s2 + $0x12a8] sm:$0xf]
  %v6356 = vld [vmem:[%s2 + $0x12ac] sm:$0xf]
  %v6357 = vld [vmem:[%s2 + $0x12b0] sm:$0xf]
  %v6358 = vld [vmem:[%s2 + $0x12b4] sm:$0xf]
  %v6359 = vld [vmem:[%s2 + $0x12b8] sm:$0xf]
  %v6360 = vld [vmem:[%s2 + $0x12bc] sm:$0xf]
  %v6361 = vld [vmem:[%s2 + $0x12c0] sm:$0xf]
  %v6362 = vld [vmem:[%s2 + $0x12c4] sm:$0xf]
  %v6363 = vld [vmem:[%s2 + $0x12c8] sm:$0xf]
  %v6364 = vld [vmem:[%s2 + $0x12cc] sm:$0xf]
  %v6365 = vld [vmem:[%s2 + $0x12d0] sm:$0xf]
  %v6366 = vld [vmem:[%s2 + $0x12d4] sm:$0xf]
  %v6367 = vld [vmem:[%s2 + $0x12d8] sm:$0xf]
  %v6368 = vld [vmem:[%s2 + $0x12dc] sm:$0xf]
  %v6369 = vld [vmem:[%s2 + $0x12e0] sm:$0xf]
  %v6370 = vld [vmem:[%s2 + $0x12e4] sm:$0xf]
  %v6371 = vld [vmem:[%s2 + $0x12e8] sm:$0xf]
  %v6372 = vld [vmem:[%s2 + $0x12ec] sm:$0xf]
  %v6373 = vld [vmem:[%s2 + $0x12f0] sm:$0xf]
  %v6374 = vld [vmem:[%s2 + $0x12f4] sm:$0xf]
  %v6375 = vld [vmem:[%s2 + $0x12f8] sm:$0xf]
  %v6376 = vld [vmem:[%s2 + $0x12fc] sm:$0xf]
  %v6377 = vld [vmem:[%s2 + $0x1300] sm:$0xf]
  %v6378 = vld [vmem:[%s2 + $0x1304] sm:$0xf]
  %v6379 = vld [vmem:[%s2 + $0x1308] sm:$0xf]
  %v6380 = vld [vmem:[%s2 + $0x130c] sm:$0xf]
  %v6381 = vld [vmem:[%s2 + $0x1310] sm:$0xf]
  %v6382 = vld [vmem:[%s2 + $0x1314] sm:$0xf]
  %v6383 = vld [vmem:[%s2 + $0x1318] sm:$0xf]
  %v6384 = vld [vmem:[%s2 + $0x131c] sm:$0xf]
  %v6385 = vld [vmem:[%s2 + $0x1320] sm:$0xf]
  %v6386 = vld [vmem:[%s2 + $0x1324] sm:$0xf]
  %v6387 = vld [vmem:[%s2 + $0x1328] sm:$0xf]
  %v6388 = vld [vmem:[%s2 + $0x132c] sm:$0xf]
  %v6389 = vld [vmem:[%s2 + $0x1330] sm:$0xf]
  %v6390 = vld [vmem:[%s2 + $0x1334] sm:$0xf]
  %v6391 = vld [vmem:[%s2 + $0x1338] sm:$0xf]
  %v6392 = vld [vmem:[%s2 + $0x133c] sm:$0xf]
  %v6393 = vld [vmem:[%s2 + $0x1340] sm:$0xf]
  %v6394 = vld [vmem:[%s2 + $0x1344] sm:$0xf]
  %v6395 = vld [vmem:[%s2 + $0x1348] sm:$0xf]
  %v6396 = vld [vmem:[%s2 + $0x134c] sm:$0xf]
  %v6397 = vld [vmem:[%s2 + $0x1350] sm:$0xf]
  %v6398 = vld [vmem:[%s2 + $0x1354] sm:$0xf]
  %v6399 = vld [vmem:[%s2 + $0x1358] sm:$0xf]
  %v6400 = vld [vmem:[%s2 + $0x135c] sm:$0xf]
  %v6401 = vld [vmem:[%s2 + $0x1360] sm:$0xf]
  %v6402 = vld [vmem:[%s2 + $0x1364] sm:$0xf]
  %v6403 = vld [vmem:[%s2 + $0x1368] sm:$0xf]
  %v6404 = vld [vmem:[%s2 + $0x136c] sm:$0xf]
  %v6405 = vld [vmem:[%s2 + $0x1370] sm:$0xf]
  %v6406 = vld [vmem:[%s2 + $0x1374] sm:$0xf]
  %v6407 = vld [vmem:[%s2 + $0x1378] sm:$0xf]
  %v6408 = vld [vmem:[%s2 + $0x137c] sm:$0xf]
  %v6409 = vld [vmem:[%s2 + $0x1380] sm:$0xf]
  %v6410 = vld [vmem:[%s2 + $0x1384] sm:$0xf]
  %v6411 = vld [vmem:[%s2 + $0x1388] sm:$0xf]
  %v6412 = vld [vmem:[%s2 + $0x138c] sm:$0xf]
  %v6413 = vld [vmem:[%s2 + $0x1390] sm:$0xf]
  %v6414 = vld [vmem:[%s2 + $0x1394] sm:$0xf]
  %v6415 = vld [vmem:[%s2 + $0x1398] sm:$0xf]
  %v6416 = vld [vmem:[%s2 + $0x139c] sm:$0xf]
  %v6417 = vld [vmem:[%s2 + $0x13a0] sm:$0xf]
  %v6418 = vld [vmem:[%s2 + $0x13a4] sm:$0xf]
  %v6419 = vld [vmem:[%s2 + $0x13a8] sm:$0xf]
  %v6420 = vld [vmem:[%s2 + $0x13ac] sm:$0xf]
  %v6421 = vld [vmem:[%s2 + $0x13b0] sm:$0xf]
  %v6422 = vld [vmem:[%s2 + $0x13b4] sm:$0xf]
  %v6423 = vld [vmem:[%s2 + $0x13b8] sm:$0xf]
  %v6424 = vld [vmem:[%s2 + $0x13bc] sm:$0xf]
  %v6425 = vld [vmem:[%s2 + $0x13c0] sm:$0xf]
  %v6426 = vld [vmem:[%s2 + $0x13c4] sm:$0xf]
  %v6427 = vld [vmem:[%s2 + $0x13c8] sm:$0xf]
  %v6428 = vld [vmem:[%s2 + $0x13cc] sm:$0xf]
  %v6429 = vld [vmem:[%s2 + $0x13d0] sm:$0xf]
  %v6430 = vld [vmem:[%s2 + $0x13d4] sm:$0xf]
  %v6431 = vld [vmem:[%s2 + $0x13d8] sm:$0xf]
  %v6432 = vld [vmem:[%s2 + $0x13dc] sm:$0xf]
  %v6433 = vld [vmem:[%s2 + $0x13e0] sm:$0xf]
  %v6434 = vld [vmem:[%s2 + $0x13e4] sm:$0xf]
  %v6435 = vld [vmem:[%s2 + $0x13e8] sm:$0xf]
  %v6436 = vld [vmem:[%s2 + $0x13ec] sm:$0xf]
  %v6437 = vld [vmem:[%s2 + $0x13f0] sm:$0xf]
  %v6438 = vld [vmem:[%s2 + $0x13f4] sm:$0xf]
  %v6439 = vld [vmem:[%s2 + $0x13f8] sm:$0xf]
  %v6440 = vld [vmem:[%s2 + $0x13fc] sm:$0xf]
  %v6569 = vunpack.c.l.b16 %v6313
  %v6570 = vunpack.c.l.b16 %v6314
  %v6571 = vunpack.c.l.b16 %v6315
  %v6572 = vunpack.c.l.b16 %v6316
  %v6573 = vunpack.c.l.b16 %v6317
  %v6574 = vunpack.c.l.b16 %v6318
  %v6575 = vunpack.c.l.b16 %v6319
  %v6576 = vunpack.c.l.b16 %v6320
  %v6577 = vunpack.c.l.b16 %v6321
  %v6578 = vunpack.c.l.b16 %v6322
  %v6579 = vunpack.c.l.b16 %v6323
  %v6580 = vunpack.c.l.b16 %v6324
  %v6581 = vunpack.c.l.b16 %v6325
  %v6582 = vunpack.c.l.b16 %v6326
  %v6583 = vunpack.c.l.b16 %v6327
  %v6584 = vunpack.c.l.b16 %v6328
  %v6585 = vunpack.c.l.b16 %v6329
  %v6586 = vunpack.c.l.b16 %v6330
  %v6587 = vunpack.c.l.b16 %v6331
  %v6588 = vunpack.c.l.b16 %v6332
  %v6589 = vunpack.c.l.b16 %v6333
  %v6590 = vunpack.c.l.b16 %v6334
  %v6591 = vunpack.c.l.b16 %v6335
  %v6592 = vunpack.c.l.b16 %v6336
  %v6593 = vunpack.c.l.b16 %v6337
  %v6594 = vunpack.c.l.b16 %v6338
  %v6595 = vunpack.c.l.b16 %v6339
  %v6596 = vunpack.c.l.b16 %v6340
  %v6597 = vunpack.c.l.b16 %v6341
  %v6598 = vunpack.c.l.b16 %v6342
  %v6599 = vunpack.c.l.b16 %v6343
  %v6600 = vunpack.c.l.b16 %v6344
  %v6601 = vunpack.c.l.b16 %v6345
  %v6602 = vunpack.c.l.b16 %v6346
  %v6603 = vunpack.c.l.b16 %v6347
  %v6604 = vunpack.c.l.b16 %v6348
  %v6605 = vunpack.c.l.b16 %v6349
  %v6606 = vunpack.c.l.b16 %v6350
  %v6607 = vunpack.c.l.b16 %v6351
  %v6608 = vunpack.c.l.b16 %v6352
  %v6609 = vunpack.c.l.b16 %v6353
  %v6610 = vunpack.c.l.b16 %v6354
  %v6611 = vunpack.c.l.b16 %v6355
  %v6612 = vunpack.c.l.b16 %v6356
  %v6613 = vunpack.c.l.b16 %v6357
  %v6614 = vunpack.c.l.b16 %v6358
  %v6615 = vunpack.c.l.b16 %v6359
  %v6616 = vunpack.c.l.b16 %v6360
  %v6617 = vunpack.c.l.b16 %v6361
  %v6618 = vunpack.c.l.b16 %v6362
  %v6619 = vunpack.c.l.b16 %v6363
  %v6620 = vunpack.c.l.b16 %v6364
  %v6621 = vunpack.c.l.b16 %v6365
  %v6622 = vunpack.c.l.b16 %v6366
  %v6623 = vunpack.c.l.b16 %v6367
  %v6624 = vunpack.c.l.b16 %v6368
  %v6625 = vunpack.c.l.b16 %v6369
  %v6626 = vunpack.c.l.b16 %v6370
  %v6627 = vunpack.c.l.b16 %v6371
  %v6628 = vunpack.c.l.b16 %v6372
  %v6629 = vunpack.c.l.b16 %v6373
  %v6630 = vunpack.c.l.b16 %v6374
  %v6631 = vunpack.c.l.b16 %v6375
  %v6632 = vunpack.c.l.b16 %v6376
  %v6633 = vunpack.c.l.b16 %v6377
  %v6634 = vunpack.c.l.b16 %v6378
  %v6635 = vunpack.c.l.b16 %v6379
  %v6636 = vunpack.c.l.b16 %v6380
  %v6637 = vunpack.c.l.b16 %v6381
  %v6638 = vunpack.c.l.b16 %v6382
  %v6639 = vunpack.c.l.b16 %v6383
  %v6640 = vunpack.c.l.b16 %v6384
  %v6641 = vunpack.c.l.b16 %v6385
  %v6642 = vunpack.c.l.b16 %v6386
  %v6643 = vunpack.c.l.b16 %v6387
  %v6644 = vunpack.c.l.b16 %v6388
  %v6645 = vunpack.c.l.b16 %v6389
  %v6646 = vunpack.c.l.b16 %v6390
  %v6647 = vunpack.c.l.b16 %v6391
  %v6648 = vunpack.c.l.b16 %v6392
  %v6649 = vunpack.c.l.b16 %v6393
  %v6650 = vunpack.c.l.b16 %v6394
  %v6651 = vunpack.c.l.b16 %v6395
  %v6652 = vunpack.c.l.b16 %v6396
  %v6653 = vunpack.c.l.b16 %v6397
  %v6654 = vunpack.c.l.b16 %v6398
  %v6655 = vunpack.c.l.b16 %v6399
  %v6656 = vunpack.c.l.b16 %v6400
  %v6657 = vunpack.c.l.b16 %v6401
  %v6658 = vunpack.c.l.b16 %v6402
  %v6659 = vunpack.c.l.b16 %v6403
  %v6660 = vunpack.c.l.b16 %v6404
  %v6661 = vunpack.c.l.b16 %v6405
  %v6662 = vunpack.c.l.b16 %v6406
  %v6663 = vunpack.c.l.b16 %v6407
  %v6664 = vunpack.c.l.b16 %v6408
  %v6665 = vunpack.c.l.b16 %v6409
  %v6666 = vunpack.c.l.b16 %v6410
  %v6667 = vunpack.c.l.b16 %v6411
  %v6668 = vunpack.c.l.b16 %v6412
  %v6669 = vunpack.c.l.b16 %v6413
  %v6670 = vunpack.c.l.b16 %v6414
  %v6671 = vunpack.c.l.b16 %v6415
  %v6672 = vunpack.c.l.b16 %v6416
  %v6673 = vunpack.c.l.b16 %v6417
  %v6674 = vunpack.c.l.b16 %v6418
  %v6675 = vunpack.c.l.b16 %v6419
  %v6676 = vunpack.c.l.b16 %v6420
  %v6677 = vunpack.c.l.b16 %v6421
  %v6678 = vunpack.c.l.b16 %v6422
  %v6679 = vunpack.c.l.b16 %v6423
  %v6680 = vunpack.c.l.b16 %v6424
  %v6681 = vunpack.c.l.b16 %v6425
  %v6682 = vunpack.c.l.b16 %v6426
  %v6683 = vunpack.c.l.b16 %v6427
  %v6684 = vunpack.c.l.b16 %v6428
  %v6685 = vunpack.c.l.b16 %v6429
  %v6686 = vunpack.c.l.b16 %v6430
  %v6687 = vunpack.c.l.b16 %v6431
  %v6688 = vunpack.c.l.b16 %v6432
  %v6689 = vunpack.c.l.b16 %v6433
  %v6690 = vunpack.c.l.b16 %v6434
  %v6691 = vunpack.c.l.b16 %v6435
  %v6692 = vunpack.c.l.b16 %v6436
  %v6693 = vunpack.c.l.b16 %v6437
  %v6694 = vunpack.c.l.b16 %v6438
  %v6695 = vunpack.c.l.b16 %v6439
  %v6696 = vunpack.c.l.b16 %v6440
  %v6697 = vpack.c.b16 %v6570, %v6569
  %v6698 = vpack.c.b16 %v6572, %v6571
  %v6699 = vpack.c.b16 %v6574, %v6573
  %v6700 = vpack.c.b16 %v6576, %v6575
  %v6701 = vpack.c.b16 %v6578, %v6577
  %v6702 = vpack.c.b16 %v6580, %v6579
  %v6703 = vpack.c.b16 %v6582, %v6581
  %v6704 = vpack.c.b16 %v6584, %v6583
  %v6705 = vpack.c.b16 %v6586, %v6585
  %v6706 = vpack.c.b16 %v6588, %v6587
  %v6707 = vpack.c.b16 %v6590, %v6589
  %v6708 = vpack.c.b16 %v6592, %v6591
  %v6709 = vpack.c.b16 %v6594, %v6593
  %v6710 = vpack.c.b16 %v6596, %v6595
  %v6711 = vpack.c.b16 %v6598, %v6597
  %v6712 = vpack.c.b16 %v6600, %v6599
  %v6713 = vpack.c.b16 %v6602, %v6601
  %v6714 = vpack.c.b16 %v6604, %v6603
  %v6715 = vpack.c.b16 %v6606, %v6605
  %v6716 = vpack.c.b16 %v6608, %v6607
  %v6717 = vpack.c.b16 %v6610, %v6609
  %v6718 = vpack.c.b16 %v6612, %v6611
  %v6719 = vpack.c.b16 %v6614, %v6613
  %v6720 = vpack.c.b16 %v6616, %v6615
  %v6721 = vpack.c.b16 %v6618, %v6617
  %v6722 = vpack.c.b16 %v6620, %v6619
  %v6723 = vpack.c.b16 %v6622, %v6621
  %v6724 = vpack.c.b16 %v6624, %v6623
  %v6725 = vpack.c.b16 %v6626, %v6625
  %v6726 = vpack.c.b16 %v6628, %v6627
  %v6727 = vpack.c.b16 %v6630, %v6629
  %v6728 = vpack.c.b16 %v6632, %v6631
  %v6729 = vpack.c.b16 %v6634, %v6633
  %v6730 = vpack.c.b16 %v6636, %v6635
  %v6731 = vpack.c.b16 %v6638, %v6637
  %v6732 = vpack.c.b16 %v6640, %v6639
  %v6733 = vpack.c.b16 %v6642, %v6641
  %v6734 = vpack.c.b16 %v6644, %v6643
  %v6735 = vpack.c.b16 %v6646, %v6645
  %v6736 = vpack.c.b16 %v6648, %v6647
  %v6737 = vpack.c.b16 %v6650, %v6649
  %v6738 = vpack.c.b16 %v6652, %v6651
  %v6739 = vpack.c.b16 %v6654, %v6653
  %v6740 = vpack.c.b16 %v6656, %v6655
  %v6741 = vpack.c.b16 %v6658, %v6657
  %v6742 = vpack.c.b16 %v6660, %v6659
  %v6743 = vpack.c.b16 %v6662, %v6661
  %v6744 = vpack.c.b16 %v6664, %v6663
  %v6745 = vpack.c.b16 %v6666, %v6665
  %v6746 = vpack.c.b16 %v6668, %v6667
  %v6747 = vpack.c.b16 %v6670, %v6669
  %v6748 = vpack.c.b16 %v6672, %v6671
  %v6749 = vpack.c.b16 %v6674, %v6673
  %v6750 = vpack.c.b16 %v6676, %v6675
  %v6751 = vpack.c.b16 %v6678, %v6677
  %v6752 = vpack.c.b16 %v6680, %v6679
  %v6753 = vpack.c.b16 %v6682, %v6681
  %v6754 = vpack.c.b16 %v6684, %v6683
  %v6755 = vpack.c.b16 %v6686, %v6685
  %v6756 = vpack.c.b16 %v6688, %v6687
  %v6757 = vpack.c.b16 %v6690, %v6689
  %v6758 = vpack.c.b16 %v6692, %v6691
  %v6759 = vpack.c.b16 %v6694, %v6693
  %v6760 = vpack.c.b16 %v6696, %v6695
  %6825 = vmatprep.subr.bf16.mxu0 0
  %6826 = vmatpush1.bf16.msra.mxu0 %v6697
  %6827 = vmatprep.subr.bf16.mxu0 0
  %6828 = vmatpush1.bf16.msra.mxu0 %v6698
  %6829 = vmatprep.subr.bf16.mxu0 0
  %6830 = vmatpush1.bf16.msra.mxu0 %v6699
  %6831 = vmatprep.subr.bf16.mxu0 0
  %6832 = vmatpush1.bf16.msra.mxu0 %v6700
  %6833 = vmatprep.subr.bf16.mxu0 0
  %6834 = vmatpush1.bf16.msra.mxu0 %v6701
  %6835 = vmatprep.subr.bf16.mxu0 0
  %6836 = vmatpush1.bf16.msra.mxu0 %v6702
  %6837 = vmatprep.subr.bf16.mxu0 0
  %6838 = vmatpush1.bf16.msra.mxu0 %v6703
  %6839 = vmatprep.subr.bf16.mxu0 0
  %6840 = vmatpush1.bf16.msra.mxu0 %v6704
  %6841 = vmatprep.subr.bf16.mxu0 0
  %6842 = vmatpush1.bf16.msra.mxu0 %v6705
  %6843 = vmatprep.subr.bf16.mxu0 0
  %6844 = vmatpush1.bf16.msra.mxu0 %v6706
  %6845 = vmatprep.subr.bf16.mxu0 0
  %6846 = vmatpush1.bf16.msra.mxu0 %v6707
  %6847 = vmatprep.subr.bf16.mxu0 0
  %6848 = vmatpush1.bf16.msra.mxu0 %v6708
  %6849 = vmatprep.subr.bf16.mxu0 0
  %6850 = vmatpush1.bf16.msra.mxu0 %v6709
  %6851 = vmatprep.subr.bf16.mxu0 0
  %6852 = vmatpush1.bf16.msra.mxu0 %v6710
  %6853 = vmatprep.subr.bf16.mxu0 0
  %6854 = vmatpush1.bf16.msra.mxu0 %v6711
  %6855 = vmatprep.subr.bf16.mxu0 0
  %6856 = vmatpush1.bf16.msra.mxu0 %v6712
  %6857 = vmatprep.mubr.bf16.mxu0 %v6306
  %6858 = vmatmul.mubr.bf16.gmra.mrb[0].mxu0 %v6305
  %v6859 = vpop.f32.mrb[0].mxu0
  %v6860 = vadd.f32 0.0, %v6859
  %v6861 = vpop.f32.mrb[0].mxu0
  %v6862 = vpop.f32.mrb[0].mxu0
  %v6863 = vpop.f32.mrb[0].mxu0
  %6864 = vdwg.mxu0
  %6865 = vmatprep.subr.bf16.mxu0 0
  %6866 = vmatpush1.bf16.msra.mxu0 %v6713
  %6867 = vmatprep.subr.bf16.mxu0 0
  %6868 = vmatpush1.bf16.msra.mxu0 %v6714
  %6869 = vmatprep.subr.bf16.mxu0 0
  %6870 = vmatpush1.bf16.msra.mxu0 %v6715
  %6871 = vmatprep.subr.bf16.mxu0 0
  %6872 = vmatpush1.bf16.msra.mxu0 %v6716
  %6873 = vmatprep.subr.bf16.mxu0 0
  %6874 = vmatpush1.bf16.msra.mxu0 %v6717
  %6875 = vmatprep.subr.bf16.mxu0 0
  %6876 = vmatpush1.bf16.msra.mxu0 %v6718
  %6877 = vmatprep.subr.bf16.mxu0 0
  %6878 = vmatpush1.bf16.msra.mxu0 %v6719
  %6879 = vmatprep.subr.bf16.mxu0 0
  %6880 = vmatpush1.bf16.msra.mxu0 %v6720
  %6881 = vmatprep.subr.bf16.mxu0 0
  %6882 = vmatpush1.bf16.msra.mxu0 %v6721
  %6883 = vmatprep.subr.bf16.mxu0 0
  %6884 = vmatpush1.bf16.msra.mxu0 %v6722
  %6885 = vmatprep.subr.bf16.mxu0 0
  %6886 = vmatpush1.bf16.msra.mxu0 %v6723
  %6887 = vmatprep.subr.bf16.mxu0 0
  %6888 = vmatpush1.bf16.msra.mxu0 %v6724
  %6889 = vmatprep.subr.bf16.mxu0 0
  %6890 = vmatpush1.bf16.msra.mxu0 %v6725
  %6891 = vmatprep.subr.bf16.mxu0 0
  %6892 = vmatpush1.bf16.msra.mxu0 %v6726
  %6893 = vmatprep.subr.bf16.mxu0 0
  %6894 = vmatpush1.bf16.msra.mxu0 %v6727
  %6895 = vmatprep.subr.bf16.mxu0 0
  %6896 = vmatpush1.bf16.msra.mxu0 %v6728
  %6897 = vmatprep.mubr.bf16.mxu0 %v6308
  %6898 = vmatmul.mubr.bf16.gmra.mrb[0].mxu0 %v6307
  %v6899 = vpop.f32.mrb[0].mxu0
  %v6900 = vadd.f32 %v6860, %v6899
  %v6901 = vpop.f32.mrb[0].mxu0
  %v6902 = vpop.f32.mrb[0].mxu0
  %v6903 = vpop.f32.mrb[0].mxu0
  %6904 = vdwg.mxu0
  %6905 = vmatprep.subr.bf16.mxu0 0
  %6906 = vmatpush1.bf16.msra.mxu0 %v6729
  %6907 = vmatprep.subr.bf16.mxu0 0
  %6908 = vmatpush1.bf16.msra.mxu0 %v6730
  %6909 = vmatprep.subr.bf16.mxu0 0
  %6910 = vmatpush1.bf16.msra.mxu0 %v6731
  %6911 = vmatprep.subr.bf16.mxu0 0
  %6912 = vmatpush1.bf16.msra.mxu0 %v6732
  %6913 = vmatprep.subr.bf16.mxu0 0
  %6914 = vmatpush1.bf16.msra.mxu0 %v6733
  %6915 = vmatprep.subr.bf16.mxu0 0
  %6916 = vmatpush1.bf16.msra.mxu0 %v6734
  %6917 = vmatprep.subr.bf16.mxu0 0
  %6918 = vmatpush1.bf16.msra.mxu0 %v6735
  %6919 = vmatprep.subr.bf16.mxu0 0
  %6920 = vmatpush1.bf16.msra.mxu0 %v6736
  %6921 = vmatprep.subr.bf16.mxu0 0
  %6922 = vmatpush1.bf16.msra.mxu0 %v6737
  %6923 = vmatprep.subr.bf16.mxu0 0
  %6924 = vmatpush1.bf16.msra.mxu0 %v6738
  %6925 = vmatprep.subr.bf16.mxu0 0
  %6926 = vmatpush1.bf16.msra.mxu0 %v6739
  %6927 = vmatprep.subr.bf16.mxu0 0
  %6928 = vmatpush1.bf16.msra.mxu0 %v6740
  %6929 = vmatprep.subr.bf16.mxu0 0
  %6930 = vmatpush1.bf16.msra.mxu0 %v6741
  %6931 = vmatprep.subr.bf16.mxu0 0
  %6932 = vmatpush1.bf16.msra.mxu0 %v6742
  %6933 = vmatprep.subr.bf16.mxu0 0
  %6934 = vmatpush1.bf16.msra.mxu0 %v6743
  %6935 = vmatprep.subr.bf16.mxu0 0
  %6936 = vmatpush1.bf16.msra.mxu0 %v6744
  %6937 = vmatprep.mubr.bf16.mxu0 %v6310
  %6938 = vmatmul.mubr.bf16.gmra.mrb[0].mxu0 %v6309
  %v6939 = vpop.f32.mrb[0].mxu0
  %v6940 = vadd.f32 %v6900, %v6939
  %v6941 = vpop.f32.mrb[0].mxu0
  %v6942 = vpop.f32.mrb[0].mxu0
  %v6943 = vpop.f32.mrb[0].mxu0
  %6944 = vdwg.mxu0
  %6945 = vmatprep.subr.bf16.mxu0 0
  %6946 = vmatpush1.bf16.msra.mxu0 %v6745
  %6947 = vmatprep.subr.bf16.mxu0 0
  %6948 = vmatpush1.bf16.msra.mxu0 %v6746
  %6949 = vmatprep.subr.bf16.mxu0 0
  %6950 = vmatpush1.bf16.msra.mxu0 %v6747
  %6951 = vmatprep.subr.bf16.mxu0 0
  %6952 = vmatpush1.bf16.msra.mxu0 %v6748
  %6953 = vmatprep.subr.bf16.mxu0 0
  %6954 = vmatpush1.bf16.msra.mxu0 %v6749
  %6955 = vmatprep.subr.bf16.mxu0 0
  %6956 = vmatpush1.bf16.msra.mxu0 %v6750
  %6957 = vmatprep.subr.bf16.mxu0 0
  %6958 = vmatpush1.bf16.msra.mxu0 %v6751
  %6959 = vmatprep.subr.bf16.mxu0 0
  %6960 = vmatpush1.bf16.msra.mxu0 %v6752
  %6961 = vmatprep.subr.bf16.mxu0 0
  %6962 = vmatpush1.bf16.msra.mxu0 %v6753
  %6963 = vmatprep.subr.bf16.mxu0 0
  %6964 = vmatpush1.bf16.msra.mxu0 %v6754
  %6965 = vmatprep.subr.bf16.mxu0 0
  %6966 = vmatpush1.bf16.msra.mxu0 %v6755
  %6967 = vmatprep.subr.bf16.mxu0 0
  %6968 = vmatpush1.bf16.msra.mxu0 %v6756
  %6969 = vmatprep.subr.bf16.mxu0 0
  %6970 = vmatpush1.bf16.msra.mxu0 %v6757
  %6971 = vmatprep.subr.bf16.mxu0 0
  %6972 = vmatpush1.bf16.msra.mxu0 %v6758
  %6973 = vmatprep.subr.bf16.mxu0 0
  %6974 = vmatpush1.bf16.msra.mxu0 %v6759
  %6975 = vmatprep.subr.bf16.mxu0 0
  %6976 = vmatpush1.bf16.msra.mxu0 %v6760
  %6977 = vmatprep.mubr.bf16.mxu0 %v6312
  %6978 = vmatmul.mubr.bf16.gmra.mrb[0].mxu0 %v6311
  %v6979 = vpop.f32.mrb[0].mxu0
  %v6980 = vadd.f32 %v6940, %v6979
  %v6981 = vpop.f32.mrb[0].mxu0
  %v6982 = vpop.f32.mrb[0].mxu0
  %v6983 = vpop.f32.mrb[0].mxu0
  %6984 = vdwg.mxu0
  %v6985 = vadd.f32 %v6288, %v6980
  %v6986 = vld [vmem:[%s0 + $0x280] sm:$0xff]
  %v6987 = vcvt.s32.f32 %v6986
  %v6988 = vld [vmem:[%s2 + $0x1400] sm:$0x1]
  %v6989 = vunpack.c.l.bf16 %v6988
  %6991 = vset.pattern.permute.xlu0 0
  %6992 = vperm.xlu0 %6991, %v6987
  %v6993 = vpop.permute.xlu0 %6992
  %v6995 = vlaneseq
  %v6996 = vshrl.u32 %v6995, 7
  %v6997 = vsub.s32 0, %v6996
  %v6998 = vrot.slane %v6989, %v6997
  %v6999 = vmul.f32 %v6993, %v6998
  %v7000 = vadd.f32 %v6985, %v6999
  %7001 = vset.pattern.permute.xlu0 1
  %7002 = vperm.xlu0 %7001, %v6987
  %v7003 = vpop.permute.xlu0 %7002
  %v7005 = vlaneseq
  %v7006 = vshrl.u32 %v7005, 7
  %v7007 = vsub.s32 1, %v7006
  %v7008 = vrot.slane %v6989, %v7007
  %v7009 = vmul.f32 %v7003, %v7008
  %v7010 = vadd.f32 %v7000, %v7009
  %v7011 = vmax.f32 %v7010, 1.0
  %v7012 = vrcp.pop %v7011
  %7014 = vset.pattern.permute.xlu0 24
  %7015 = vperm.xlu0 %7014, %v7012
  %v7016 = vpop.permute.xlu0 %7015
  %v7018 = vmul.f32 %v7010, %v7016
  %7019 = vset.pattern.permute.xlu0 25
  %7020 = vperm.xlu0 %7019, %v7012
  %v7021 = vpop.permute.xlu0 %7020
  %v7023 = vmul.f32 %v7010, %v7021
  %7024 = vset.pattern.permute.xlu0 26
  %7025 = vperm.xlu0 %7024, %v7012
  %v7026 = vpop.permute.xlu0 %7025
  %v7028 = vmul.f32 %v7010, %v7026
  %v7029 = vld [vmem:[%s1] sm:$0xff]
  %v7030 = vld [vmem:[%s3] sm:$0xff]
  %v7031 = vld [vmem:[%s3 + $0x8] sm:$0xff]
  %v7032 = vld [vmem:[%s3 + $0x10] sm:$0xff]
  %v7033 = vld [vmem:[%s3 + $0x18] sm:$0xff]
  %v7034 = vld [vmem:[%s3 + $0x20] sm:$0xff]
  %v7035 = vld [vmem:[%s3 + $0x28] sm:$0xff]
  %vm7036 = vcmask 64512
  %v7038 = vsel %vm7036, %v7018, 0
  %7040 = vmatprep.subr.mxu0 0.0
  %7041 = vmatpush1.msra.mxu0 %v7035
  %7042 = vmatprep.subr.mxu0 0.0
  %7043 = vmatpush1.msra.mxu0 0.0
  %7044 = vmatprep.subr.mxu0 0.0
  %7045 = vmatpush1.msra.mxu0 0.0
  %7046 = vmatprep.subr.mxu0 0.0
  %7047 = vmatpush1.msra.mxu0 0.0
  %7048 = vmatprep.subr.mxu0 0.0
  %7049 = vmatpush1.msra.mxu0 0.0
  %7050 = vmatprep.subr.mxu0 0.0
  %7051 = vmatpush1.msra.mxu0 0.0
  %7052 = vmatprep.subr.mxu0 0.0
  %7053 = vmatpush1.msra.mxu0 0.0
  %7054 = vmatprep.subr.mxu0 0.0
  %7055 = vmatpush1.msra.mxu0 0.0
  %7056 = vmatprep.subr.mxu0 0.0
  %7057 = vmatpush1.msra.mxu0 0.0
  %7058 = vmatprep.subr.mxu0 0.0
  %7059 = vmatpush1.msra.mxu0 0.0
  %7060 = vmatprep.subr.mxu0 0.0
  %7061 = vmatpush1.msra.mxu0 0.0
  %7062 = vmatprep.subr.mxu0 0.0
  %7063 = vmatpush1.msra.mxu0 0.0
  %7064 = vmatprep.subr.mxu0 0.0
  %7065 = vmatpush1.msra.mxu0 0.0
  %7066 = vmatprep.subr.mxu0 0.0
  %7067 = vmatpush1.msra.mxu0 0.0
  %7068 = vmatprep.subr.mxu0 0.0
  %7069 = vmatpush1.msra.mxu0 0.0
  %7070 = vmatprep.subr.mxu0 0.0
  %7071 = vmatpush1.msra.mxu0 0.0
  %7072 = vmatprep.subr.mxu0 0.0
  %7073 = vmatpush1.msra.mxu0 0.0
  %7074 = vmatprep.subr.mxu0 0.0
  %7075 = vmatpush1.msra.mxu0 0.0
  %7076 = vmatprep.subr.mxu0 0.0
  %7077 = vmatpush1.msra.mxu0 0.0
  %7078 = vmatprep.subr.mxu0 0.0
  %7079 = vmatpush1.msra.mxu0 0.0
  %7080 = vmatprep.subr.mxu0 0.0
  %7081 = vmatpush1.msra.mxu0 0.0
  %7082 = vmatprep.subr.mxu0 0.0
  %7083 = vmatpush1.msra.mxu0 0.0
  %7084 = vmatprep.subr.mxu0 0.0
  %7085 = vmatpush1.msra.mxu0 0.0
  %7086 = vmatprep.subr.mxu0 0.0
  %7087 = vmatpush1.msra.mxu0 0.0
  %7088 = vmatprep.subr.mxu0 0.0
  %7089 = vmatpush1.msra.mxu0 0.0
  %7090 = vmatprep.subr.mxu0 0.0
  %7091 = vmatpush1.msra.mxu0 0.0
  %7092 = vmatprep.subr.mxu0 0.0
  %7093 = vmatpush1.msra.mxu0 0.0
  %7094 = vmatprep.subr.mxu0 0.0
  %7095 = vmatpush1.msra.mxu0 0.0
  %7096 = vmatprep.subr.mxu0 0.0
  %7097 = vmatpush1.msra.mxu0 0.0
  %7098 = vmatprep.subr.mxu0 0.0
  %7099 = vmatpush1.msra.mxu0 0.0
  %7100 = vmatprep.subr.mxu0 0.0
  %7101 = vmatpush1.msra.mxu0 0.0
  %7102 = vmatprep.subr.mxu0 0.0
  %7103 = vmatpush1.msra.mxu0 0.0
  %7104 = vmatprep.mubr.f32.mxu0 0.0
  %7105 = vmatmul.mubr.f32.gmra.mrb[0].mxu0 %v7038
  %v7106 = vpop.f32.mrb[0].mxu0
  %v7107 = vadd.f32 0.0, %v7106
  %v7108 = vpop.f32.mrb[0].mxu0
  %7109 = vdwg.mxu0
  %vm7110 = vcmask 326656
  %v7112 = vsel %vm7110, %v7029, 0
  %7114 = vmatprep.subr.mxu0 0.0
  %7115 = vmatpush1.msra.mxu0 %v7030
  %7116 = vmatprep.subr.mxu0 0.0
  %7117 = vmatpush1.msra.mxu0 %v7031
  %7118 = vmatprep.subr.mxu0 0.0
  %7119 = vmatpush1.msra.mxu0 %v7032
  %7120 = vmatprep.subr.mxu0 0.0
  %7121 = vmatpush1.msra.mxu0 %v7033
  %7122 = vmatprep.subr.mxu0 0.0
  %7123 = vmatpush1.msra.mxu0 %v7034
  %7124 = vmatprep.subr.mxu0 0.0
  %7125 = vmatpush1.msra.mxu0 0.0
  %7126 = vmatprep.subr.mxu0 0.0
  %7127 = vmatpush1.msra.mxu0 0.0
  %7128 = vmatprep.subr.mxu0 0.0
  %7129 = vmatpush1.msra.mxu0 0.0
  %7130 = vmatprep.subr.mxu0 0.0
  %7131 = vmatpush1.msra.mxu0 0.0
  %7132 = vmatprep.subr.mxu0 0.0
  %7133 = vmatpush1.msra.mxu0 0.0
  %7134 = vmatprep.subr.mxu0 0.0
  %7135 = vmatpush1.msra.mxu0 0.0
  %7136 = vmatprep.subr.mxu0 0.0
  %7137 = vmatpush1.msra.mxu0 0.0
  %7138 = vmatprep.subr.mxu0 0.0
  %7139 = vmatpush1.msra.mxu0 0.0
  %7140 = vmatprep.subr.mxu0 0.0
  %7141 = vmatpush1.msra.mxu0 0.0
  %7142 = vmatprep.subr.mxu0 0.0
  %7143 = vmatpush1.msra.mxu0 0.0
  %7144 = vmatprep.subr.mxu0 0.0
  %7145 = vmatpush1.msra.mxu0 0.0
  %7146 = vmatprep.subr.mxu0 0.0
  %7147 = vmatpush1.msra.mxu0 0.0
  %7148 = vmatprep.subr.mxu0 0.0
  %7149 = vmatpush1.msra.mxu0 0.0
  %7150 = vmatprep.subr.mxu0 0.0
  %7151 = vmatpush1.msra.mxu0 0.0
  %7152 = vmatprep.subr.mxu0 0.0
  %7153 = vmatpush1.msra.mxu0 0.0
  %7154 = vmatprep.subr.mxu0 0.0
  %7155 = vmatpush1.msra.mxu0 0.0
  %7156 = vmatprep.subr.mxu0 0.0
  %7157 = vmatpush1.msra.mxu0 0.0
  %7158 = vmatprep.subr.mxu0 0.0
  %7159 = vmatpush1.msra.mxu0 0.0
  %7160 = vmatprep.subr.mxu0 0.0
  %7161 = vmatpush1.msra.mxu0 0.0
  %7162 = vmatprep.subr.mxu0 0.0
  %7163 = vmatpush1.msra.mxu0 0.0
  %7164 = vmatprep.subr.mxu0 0.0
  %7165 = vmatpush1.msra.mxu0 0.0
  %7166 = vmatprep.subr.mxu0 0.0
  %7167 = vmatpush1.msra.mxu0 0.0
  %7168 = vmatprep.subr.mxu0 0.0
  %7169 = vmatpush1.msra.mxu0 0.0
  %7170 = vmatprep.subr.mxu0 0.0
  %7171 = vmatpush1.msra.mxu0 0.0
  %7172 = vmatprep.subr.mxu0 0.0
  %7173 = vmatpush1.msra.mxu0 0.0
  %7174 = vmatprep.subr.mxu0 0.0
  %7175 = vmatpush1.msra.mxu0 0.0
  %7176 = vmatprep.subr.mxu0 0.0
  %7177 = vmatpush1.msra.mxu0 0.0
  %7178 = vmatprep.mubr.f32.mxu0 0.0
  %7179 = vmatmul.mubr.f32.gmra.mrb[0].mxu0 %v7112
  %v7180 = vpop.f32.mrb[0].mxu0
  %v7181 = vadd.f32 %v7107, %v7180
  %v7182 = vpop.f32.mrb[0].mxu0
  %7183 = vdwg.mxu0
  %v7184 = vld [vmem:[%s3 + $0x30] sm:$0xff]
  %7186 = vrot.lane.b32.xlu0 %v7023, 120
  %v7187 = vpop.permute.xlu0 %7186
  %v7188 = vsel %vm7036, %v7187, 0
  %7190 = vmatprep.subr.mxu0 0.0
  %7191 = vmatpush1.msra.mxu0 %v7184
  %7192 = vmatprep.subr.mxu0 0.0
  %7193 = vmatpush1.msra.mxu0 0.0
  %7194 = vmatprep.subr.mxu0 0.0
  %7195 = vmatpush1.msra.mxu0 0.0
  %7196 = vmatprep.subr.mxu0 0.0
  %7197 = vmatpush1.msra.mxu0 0.0
  %7198 = vmatprep.subr.mxu0 0.0
  %7199 = vmatpush1.msra.mxu0 0.0
  %7200 = vmatprep.subr.mxu0 0.0
  %7201 = vmatpush1.msra.mxu0 0.0
  %7202 = vmatprep.subr.mxu0 0.0
  %7203 = vmatpush1.msra.mxu0 0.0
  %7204 = vmatprep.subr.mxu0 0.0
  %7205 = vmatpush1.msra.mxu0 0.0
  %7206 = vmatprep.subr.mxu0 0.0
  %7207 = vmatpush1.msra.mxu0 0.0
  %7208 = vmatprep.subr.mxu0 0.0
  %7209 = vmatpush1.msra.mxu0 0.0
  %7210 = vmatprep.subr.mxu0 0.0
  %7211 = vmatpush1.msra.mxu0 0.0
  %7212 = vmatprep.subr.mxu0 0.0
  %7213 = vmatpush1.msra.mxu0 0.0
  %7214 = vmatprep.subr.mxu0 0.0
  %7215 = vmatpush1.msra.mxu0 0.0
  %7216 = vmatprep.subr.mxu0 0.0
  %7217 = vmatpush1.msra.mxu0 0.0
  %7218 = vmatprep.subr.mxu0 0.0
  %7219 = vmatpush1.msra.mxu0 0.0
  %7220 = vmatprep.subr.mxu0 0.0
  %7221 = vmatpush1.msra.mxu0 0.0
  %7222 = vmatprep.subr.mxu0 0.0
  %7223 = vmatpush1.msra.mxu0 0.0
  %7224 = vmatprep.subr.mxu0 0.0
  %7225 = vmatpush1.msra.mxu0 0.0
  %7226 = vmatprep.subr.mxu0 0.0
  %7227 = vmatpush1.msra.mxu0 0.0
  %7228 = vmatprep.subr.mxu0 0.0
  %7229 = vmatpush1.msra.mxu0 0.0
  %7230 = vmatprep.subr.mxu0 0.0
  %7231 = vmatpush1.msra.mxu0 0.0
  %7232 = vmatprep.subr.mxu0 0.0
  %7233 = vmatpush1.msra.mxu0 0.0
  %7234 = vmatprep.subr.mxu0 0.0
  %7235 = vmatpush1.msra.mxu0 0.0
  %7236 = vmatprep.subr.mxu0 0.0
  %7237 = vmatpush1.msra.mxu0 0.0
  %7238 = vmatprep.subr.mxu0 0.0
  %7239 = vmatpush1.msra.mxu0 0.0
  %7240 = vmatprep.subr.mxu0 0.0
  %7241 = vmatpush1.msra.mxu0 0.0
  %7242 = vmatprep.subr.mxu0 0.0
  %7243 = vmatpush1.msra.mxu0 0.0
  %7244 = vmatprep.subr.mxu0 0.0
  %7245 = vmatpush1.msra.mxu0 0.0
  %7246 = vmatprep.subr.mxu0 0.0
  %7247 = vmatpush1.msra.mxu0 0.0
  %7248 = vmatprep.subr.mxu0 0.0
  %7249 = vmatpush1.msra.mxu0 0.0
  %7250 = vmatprep.subr.mxu0 0.0
  %7251 = vmatpush1.msra.mxu0 0.0
  %7252 = vmatprep.subr.mxu0 0.0
  %7253 = vmatpush1.msra.mxu0 0.0
  %7254 = vmatprep.mubr.f32.mxu0 0.0
  %7255 = vmatmul.mubr.f32.gmra.mrb[0].mxu0 %v7188
  %v7256 = vpop.f32.mrb[0].mxu0
  %v7257 = vadd.f32 0.0, %v7256
  %v7258 = vpop.f32.mrb[0].mxu0
  %7259 = vdwg.mxu0
  %v7260 = vadd.f32 %v7181, %v7257
  %v7261 = vld [vmem:[%s3 + $0x38] sm:$0xff]
  %7263 = vrot.lane.b32.xlu0 %v7028, 112
  %v7264 = vpop.permute.xlu0 %7263
  %v7265 = vsel %vm7036, %v7264, 0
  %7267 = vmatprep.subr.mxu0 0.0
  %7268 = vmatpush1.msra.mxu0 %v7261
  %7269 = vmatprep.subr.mxu0 0.0
  %7270 = vmatpush1.msra.mxu0 0.0
  %7271 = vmatprep.subr.mxu0 0.0
  %7272 = vmatpush1.msra.mxu0 0.0
  %7273 = vmatprep.subr.mxu0 0.0
  %7274 = vmatpush1.msra.mxu0 0.0
  %7275 = vmatprep.subr.mxu0 0.0
  %7276 = vmatpush1.msra.mxu0 0.0
  %7277 = vmatprep.subr.mxu0 0.0
  %7278 = vmatpush1.msra.mxu0 0.0
  %7279 = vmatprep.subr.mxu0 0.0
  %7280 = vmatpush1.msra.mxu0 0.0
  %7281 = vmatprep.subr.mxu0 0.0
  %7282 = vmatpush1.msra.mxu0 0.0
  %7283 = vmatprep.subr.mxu0 0.0
  %7284 = vmatpush1.msra.mxu0 0.0
  %7285 = vmatprep.subr.mxu0 0.0
  %7286 = vmatpush1.msra.mxu0 0.0
  %7287 = vmatprep.subr.mxu0 0.0
  %7288 = vmatpush1.msra.mxu0 0.0
  %7289 = vmatprep.subr.mxu0 0.0
  %7290 = vmatpush1.msra.mxu0 0.0
  %7291 = vmatprep.subr.mxu0 0.0
  %7292 = vmatpush1.msra.mxu0 0.0
  %7293 = vmatprep.subr.mxu0 0.0
  %7294 = vmatpush1.msra.mxu0 0.0
  %7295 = vmatprep.subr.mxu0 0.0
  %7296 = vmatpush1.msra.mxu0 0.0
  %7297 = vmatprep.subr.mxu0 0.0
  %7298 = vmatpush1.msra.mxu0 0.0
  %7299 = vmatprep.subr.mxu0 0.0
  %7300 = vmatpush1.msra.mxu0 0.0
  %7301 = vmatprep.subr.mxu0 0.0
  %7302 = vmatpush1.msra.mxu0 0.0
  %7303 = vmatprep.subr.mxu0 0.0
  %7304 = vmatpush1.msra.mxu0 0.0
  %7305 = vmatprep.subr.mxu0 0.0
  %7306 = vmatpush1.msra.mxu0 0.0
  %7307 = vmatprep.subr.mxu0 0.0
  %7308 = vmatpush1.msra.mxu0 0.0
  %7309 = vmatprep.subr.mxu0 0.0
  %7310 = vmatpush1.msra.mxu0 0.0
  %7311 = vmatprep.subr.mxu0 0.0
  %7312 = vmatpush1.msra.mxu0 0.0
  %7313 = vmatprep.subr.mxu0 0.0
  %7314 = vmatpush1.msra.mxu0 0.0
  %7315 = vmatprep.subr.mxu0 0.0
  %7316 = vmatpush1.msra.mxu0 0.0
  %7317 = vmatprep.subr.mxu0 0.0
  %7318 = vmatpush1.msra.mxu0 0.0
  %7319 = vmatprep.subr.mxu0 0.0
  %7320 = vmatpush1.msra.mxu0 0.0
  %7321 = vmatprep.subr.mxu0 0.0
  %7322 = vmatpush1.msra.mxu0 0.0
  %7323 = vmatprep.subr.mxu0 0.0
  %7324 = vmatpush1.msra.mxu0 0.0
  %7325 = vmatprep.subr.mxu0 0.0
  %7326 = vmatpush1.msra.mxu0 0.0
  %7327 = vmatprep.subr.mxu0 0.0
  %7328 = vmatpush1.msra.mxu0 0.0
  %7329 = vmatprep.subr.mxu0 0.0
  %7330 = vmatpush1.msra.mxu0 0.0
  %7331 = vmatprep.mubr.f32.mxu0 0.0
  %7332 = vmatmul.mubr.f32.gmra.mrb[0].mxu0 %v7265
  %v7333 = vpop.f32.mrb[0].mxu0
  %v7334 = vadd.f32 0.0, %v7333
  %v7335 = vpop.f32.mrb[0].mxu0
  %7336 = vdwg.mxu0
  %v7337 = vadd.f32 %v7260, %v7334
  %v7338 = vld [vmem:[%s3 + $0x40] sm:$0x1]
  %v7339 = vlaneseq
  %v7340 = vshrl.u32 %v7339, 7
  %v7341 = vsub.s32 0, %v7340
  %v7342 = vrot.slane %v7338, %v7341
  %v7343 = vadd.f32 %v7337, %v7342
  %v7344 = vmax.f32 %v7343, 0.0
  %v7345 = vld [vmem:[%s3 + $0x48] sm:$0xff]
  %v7346 = vld [vmem:[%s3 + $0x50] sm:$0xff]
  %v7347 = vld [vmem:[%s3 + $0x58] sm:$0xff]
  %v7348 = vld [vmem:[%s3 + $0x60] sm:$0xff]
  %v7349 = vld [vmem:[%s3 + $0x68] sm:$0xff]
  %v7350 = vld [vmem:[%s3 + $0x70] sm:$0xff]
  %v7351 = vld [vmem:[%s3 + $0x78] sm:$0xff]
  %v7352 = vld [vmem:[%s3 + $0x80] sm:$0xff]
  %v7353 = vld [vmem:[%s3 + $0x88] sm:$0xff]
  %v7354 = vld [vmem:[%s3 + $0x90] sm:$0xff]
  %v7355 = vld [vmem:[%s3 + $0x98] sm:$0xff]
  %v7356 = vld [vmem:[%s3 + $0xa0] sm:$0xff]
  %v7357 = vld [vmem:[%s3 + $0xa8] sm:$0xff]
  %v7358 = vld [vmem:[%s3 + $0xb0] sm:$0xff]
  %v7359 = vld [vmem:[%s3 + $0xb8] sm:$0xff]
  %v7360 = vld [vmem:[%s3 + $0xc0] sm:$0xff]
  %v7361 = vld [vmem:[%s3 + $0xc8] sm:$0x1]
  %v7362 = vlaneseq
  %v7363 = vshrl.u32 %v7362, 7
  %v7364 = vsub.s32 0, %v7363
  %v7365 = vrot.slane %v7361, %v7364
  %7366 = vmatprep.subr.mxu0 0.0
  %7367 = vmatpush1.msra.mxu0 %v7345
  %7368 = vmatprep.subr.mxu0 0.0
  %7369 = vmatpush1.msra.mxu0 %v7346
  %7370 = vmatprep.subr.mxu0 0.0
  %7371 = vmatpush1.msra.mxu0 %v7347
  %7372 = vmatprep.subr.mxu0 0.0
  %7373 = vmatpush1.msra.mxu0 %v7348
  %7374 = vmatprep.subr.mxu0 0.0
  %7375 = vmatpush1.msra.mxu0 %v7349
  %7376 = vmatprep.subr.mxu0 0.0
  %7377 = vmatpush1.msra.mxu0 %v7350
  %7378 = vmatprep.subr.mxu0 0.0
  %7379 = vmatpush1.msra.mxu0 %v7351
  %7380 = vmatprep.subr.mxu0 0.0
  %7381 = vmatpush1.msra.mxu0 %v7352
  %7382 = vmatprep.subr.mxu0 0.0
  %7383 = vmatpush1.msra.mxu0 %v7353
  %7384 = vmatprep.subr.mxu0 0.0
  %7385 = vmatpush1.msra.mxu0 %v7354
  %7386 = vmatprep.subr.mxu0 0.0
  %7387 = vmatpush1.msra.mxu0 %v7355
  %7388 = vmatprep.subr.mxu0 0.0
  %7389 = vmatpush1.msra.mxu0 %v7356
  %7390 = vmatprep.subr.mxu0 0.0
  %7391 = vmatpush1.msra.mxu0 %v7357
  %7392 = vmatprep.subr.mxu0 0.0
  %7393 = vmatpush1.msra.mxu0 %v7358
  %7394 = vmatprep.subr.mxu0 0.0
  %7395 = vmatpush1.msra.mxu0 %v7359
  %7396 = vmatprep.subr.mxu0 0.0
  %7397 = vmatpush1.msra.mxu0 %v7360
  %7398 = vmatprep.subr.mxu0 0.0
  %7399 = vmatpush1.msra.mxu0 0.0
  %7400 = vmatprep.subr.mxu0 0.0
  %7401 = vmatpush1.msra.mxu0 0.0
  %7402 = vmatprep.subr.mxu0 0.0
  %7403 = vmatpush1.msra.mxu0 0.0
  %7404 = vmatprep.subr.mxu0 0.0
  %7405 = vmatpush1.msra.mxu0 0.0
  %7406 = vmatprep.subr.mxu0 0.0
  %7407 = vmatpush1.msra.mxu0 0.0
  %7408 = vmatprep.subr.mxu0 0.0
  %7409 = vmatpush1.msra.mxu0 0.0
  %7410 = vmatprep.subr.mxu0 0.0
  %7411 = vmatpush1.msra.mxu0 0.0
  %7412 = vmatprep.subr.mxu0 0.0
  %7413 = vmatpush1.msra.mxu0 0.0
  %7414 = vmatprep.subr.mxu0 0.0
  %7415 = vmatpush1.msra.mxu0 0.0
  %7416 = vmatprep.subr.mxu0 0.0
  %7417 = vmatpush1.msra.mxu0 0.0
  %7418 = vmatprep.subr.mxu0 0.0
  %7419 = vmatpush1.msra.mxu0 0.0
  %7420 = vmatprep.subr.mxu0 0.0
  %7421 = vmatpush1.msra.mxu0 0.0
  %7422 = vmatprep.subr.mxu0 0.0
  %7423 = vmatpush1.msra.mxu0 0.0
  %7424 = vmatprep.subr.mxu0 0.0
  %7425 = vmatpush1.msra.mxu0 0.0
  %7426 = vmatprep.subr.mxu0 0.0
  %7427 = vmatpush1.msra.mxu0 0.0
  %7428 = vmatprep.subr.mxu0 0.0
  %7429 = vmatpush1.msra.mxu0 0.0
  %7430 = vmatprep.mubr.f32.mxu0 0.0
  %7431 = vmatmul.mubr.f32.gmra.mrb[0].mxu0 %v7344
  %v7432 = vpop.f32.mrb[0].mxu0
  %v7433 = vadd.f32 %v7365, %v7432
  %v7434 = vpop.f32.mrb[0].mxu0
  %7435 = vdwg.mxu0
  %v7436 = vmax.f32 %v7433, 0.0
  %v7437 = vld [vmem:[%s3 + $0xd0] sm:$0xff]
  %v7438 = vld [vmem:[%s3 + $0xd8] sm:$0xff]
  %v7439 = vld [vmem:[%s3 + $0xe0] sm:$0xff]
  %v7440 = vld [vmem:[%s3 + $0xe8] sm:$0xff]
  %v7441 = vld [vmem:[%s3 + $0xf0] sm:$0xff]
  %v7442 = vld [vmem:[%s3 + $0xf8] sm:$0xff]
  %v7443 = vld [vmem:[%s3 + $0x100] sm:$0xff]
  %v7444 = vld [vmem:[%s3 + $0x108] sm:$0xff]
  %v7445 = vld [vmem:[%s3 + $0x110] sm:$0xff]
  %v7446 = vld [vmem:[%s3 + $0x118] sm:$0xff]
  %v7447 = vld [vmem:[%s3 + $0x120] sm:$0xff]
  %v7448 = vld [vmem:[%s3 + $0x128] sm:$0xff]
  %v7449 = vld [vmem:[%s3 + $0x130] sm:$0xff]
  %v7450 = vld [vmem:[%s3 + $0x138] sm:$0xff]
  %v7451 = vld [vmem:[%s3 + $0x140] sm:$0xff]
  %v7452 = vld [vmem:[%s3 + $0x148] sm:$0xff]
  %v7453 = vld [vmem:[%s3 + $0x150] sm:$0x1]
  %v7454 = vlaneseq
  %v7455 = vshrl.u32 %v7454, 7
  %v7456 = vsub.s32 0, %v7455
  %v7457 = vrot.slane %v7453, %v7456
  %7458 = vmatprep.subr.mxu0 0.0
  %7459 = vmatpush1.msra.mxu0 %v7437
  %7460 = vmatprep.subr.mxu0 0.0
  %7461 = vmatpush1.msra.mxu0 %v7438
  %7462 = vmatprep.subr.mxu0 0.0
  %7463 = vmatpush1.msra.mxu0 %v7439
  %7464 = vmatprep.subr.mxu0 0.0
  %7465 = vmatpush1.msra.mxu0 %v7440
  %7466 = vmatprep.subr.mxu0 0.0
  %7467 = vmatpush1.msra.mxu0 %v7441
  %7468 = vmatprep.subr.mxu0 0.0
  %7469 = vmatpush1.msra.mxu0 %v7442
  %7470 = vmatprep.subr.mxu0 0.0
  %7471 = vmatpush1.msra.mxu0 %v7443
  %7472 = vmatprep.subr.mxu0 0.0
  %7473 = vmatpush1.msra.mxu0 %v7444
  %7474 = vmatprep.subr.mxu0 0.0
  %7475 = vmatpush1.msra.mxu0 %v7445
  %7476 = vmatprep.subr.mxu0 0.0
  %7477 = vmatpush1.msra.mxu0 %v7446
  %7478 = vmatprep.subr.mxu0 0.0
  %7479 = vmatpush1.msra.mxu0 %v7447
  %7480 = vmatprep.subr.mxu0 0.0
  %7481 = vmatpush1.msra.mxu0 %v7448
  %7482 = vmatprep.subr.mxu0 0.0
  %7483 = vmatpush1.msra.mxu0 %v7449
  %7484 = vmatprep.subr.mxu0 0.0
  %7485 = vmatpush1.msra.mxu0 %v7450
  %7486 = vmatprep.subr.mxu0 0.0
  %7487 = vmatpush1.msra.mxu0 %v7451
  %7488 = vmatprep.subr.mxu0 0.0
  %7489 = vmatpush1.msra.mxu0 %v7452
  %7490 = vmatprep.subr.mxu0 0.0
  %7491 = vmatpush1.msra.mxu0 0.0
  %7492 = vmatprep.subr.mxu0 0.0
  %7493 = vmatpush1.msra.mxu0 0.0
  %7494 = vmatprep.subr.mxu0 0.0
  %7495 = vmatpush1.msra.mxu0 0.0
  %7496 = vmatprep.subr.mxu0 0.0
  %7497 = vmatpush1.msra.mxu0 0.0
  %7498 = vmatprep.subr.mxu0 0.0
  %7499 = vmatpush1.msra.mxu0 0.0
  %7500 = vmatprep.subr.mxu0 0.0
  %7501 = vmatpush1.msra.mxu0 0.0
  %7502 = vmatprep.subr.mxu0 0.0
  %7503 = vmatpush1.msra.mxu0 0.0
  %7504 = vmatprep.subr.mxu0 0.0
  %7505 = vmatpush1.msra.mxu0 0.0
  %7506 = vmatprep.subr.mxu0 0.0
  %7507 = vmatpush1.msra.mxu0 0.0
  %7508 = vmatprep.subr.mxu0 0.0
  %7509 = vmatpush1.msra.mxu0 0.0
  %7510 = vmatprep.subr.mxu0 0.0
  %7511 = vmatpush1.msra.mxu0 0.0
  %7512 = vmatprep.subr.mxu0 0.0
  %7513 = vmatpush1.msra.mxu0 0.0
  %7514 = vmatprep.subr.mxu0 0.0
  %7515 = vmatpush1.msra.mxu0 0.0
  %7516 = vmatprep.subr.mxu0 0.0
  %7517 = vmatpush1.msra.mxu0 0.0
  %7518 = vmatprep.subr.mxu0 0.0
  %7519 = vmatpush1.msra.mxu0 0.0
  %7520 = vmatprep.subr.mxu0 0.0
  %7521 = vmatpush1.msra.mxu0 0.0
  %7522 = vmatprep.mubr.f32.mxu0 0.0
  %7523 = vmatmul.mubr.f32.gmra.mrb[0].mxu0 %v7436
  %v7524 = vpop.f32.mrb[0].mxu0
  %v7525 = vadd.f32 %v7457, %v7524
  %v7526 = vpop.f32.mrb[0].mxu0
  %7527 = vdwg.mxu0
  %7528 = vst [vmem:[%s4] sm:$0xff] %v7525
  // Predicated region
  $region18: #{melu_forward.1} parent=0 // pred_check
    _
  $region19: #{melu_forward.1} parent=0 // pred_check_branch
    %7530 = sbr.rel (0) target = $region21
  $region20: #{melu_forward.1} parent=0 // pred_region
    _
  $region21: #{melu_forward.1} parent=0 // pred_fallthru
    _
  // Predicated region
  $region22: #{melu_forward.1} parent=0 // pred_check
    _
  $region23: #{melu_forward.1} parent=0 // pred_check_branch
    %7532 = sbr.rel (0) target = $region25
  $region24: #{melu_forward.1} parent=0 // pred_region
    _
  $region25: #{melu_forward.1} parent=0 // pred_fallthru
    _

</llo_original>
